<compile_context>
chip_gen: v7x
topology: tpu7x:2x2x1
jax: 0.10.0
libtpu: 0.0.40
codegen_flags: <defaults>
</compile_context>

<pallas_src>
import functools
import math

import jax
import jax.numpy as jnp
from jax import lax
from jax.experimental import pallas as pl
from jax.experimental.pallas import tpu as pltpu

# Explicit scoped-VMEM budget: above the 16/32 MiB defaults, below v7x's 64 MiB.
_VMEM_LIMIT = 48 * 1024 * 1024


# ---------------------------------------------------------------------------
# helpers
# ---------------------------------------------------------------------------
def _round_up(x, m):
    return ((x + m - 1) // m) * m


def _pick_divisor(n, target):
    """Largest divisor of n that is <= target (>= 1)."""
    for cand in range(min(target, n), 0, -1):
        if n % cand == 0:
            return cand
    return 1


def _pick_batch_tile(n, cap=512):
    """Batch tile for the recurrence: full batch when small, else the largest
    multiple-of-8 divisor <= cap (gives a leading 'parallel' axis usable by
    v7x's two TensorCores)."""
    if n <= cap:
        return n
    for tn in range(cap, 7, -1):
        if n % tn == 0 and tn % 8 == 0:
            return tn
    return n


def _pad_rows(a, m_pad):
    m = a.shape[0]
    if m == m_pad:
        return a
    return jnp.pad(a, ((0, m_pad - m), (0, 0)))


# ---------------------------------------------------------------------------
# Kernel 1: fused bidirectional (rnn + gate) LSTM recurrence
#           (input projection folded in, time-blocked, batch-parallel)
# ---------------------------------------------------------------------------
def _bilstm_kernel(xf_ref, xb_ref, wihf_ref, wihb_ref, whhf_ref, whhb_ref,
                   bf_ref, bb_ref, of_ref, ob_ref,
                   hf_sc, cf_sc, hb_sc, cb_sc):
    # Reset (h, c) of all 4 streams at the start of every batch tile's time loop.
    @pl.when(pl.program_id(1) == 0)
    def _():
        hf_sc[...] = jnp.zeros_like(hf_sc)
        cf_sc[...] = jnp.zeros_like(cf_sc)
        hb_sc[...] = jnp.zeros_like(hb_sc)
        cb_sc[...] = jnp.zeros_like(cb_sc)

    tt = of_ref.shape[0]          # timesteps per grid step
    h2 = hf_sc.shape[1]           # 2H lanes: [rnn-stream(H) | gate-stream(H)]

    def lstm_step(x_bf, wih_ref, whh_ref, b_ref, h_sc, c_sc):
        # gates: (TN, 8H) = x @ W_ih + h @ W_hh + b  (W_hh block-diag over streams)
        gates = (jnp.dot(x_bf, wih_ref[...], preferred_element_type=jnp.float32)
                 + jnp.dot(h_sc[...].astype(jnp.bfloat16), whh_ref[...],
                           preferred_element_type=jnp.float32)
                 + b_ref[...])
        i = jax.nn.sigmoid(gates[:, 0:h2])
        f = jax.nn.sigmoid(gates[:, h2:2 * h2])
        g = jnp.tanh(gates[:, 2 * h2:3 * h2])
        o = jax.nn.sigmoid(gates[:, 3 * h2:4 * h2])
        c = f * c_sc[...] + i * g
        h = o * jnp.tanh(c)
        c_sc[...] = c
        h_sc[...] = h
        return h

    def body(s, carry):
        # forward direction: local step s (global time increases)
        hf = lstm_step(xf_ref[s].astype(jnp.bfloat16), wihf_ref, whhf_ref,
                       bf_ref, hf_sc, cf_sc)
        of_ref[s] = hf.astype(of_ref.dtype)
        # backward direction: local step tt-1-s (global time decreases); the
        # reversed BlockSpec index maps put the result back in forward order.
        r = tt - 1 - s
        hb = lstm_step(xb_ref[r].astype(jnp.bfloat16), wihb_ref, whhb_ref,
                       bb_ref, hb_sc, cb_sc)
        ob_ref[r] = hb.astype(ob_ref.dtype)
        return carry

    lax.fori_loop(0, tt, body, 0, unroll=(tt <= 8))


def bilstm_recurrence(x_seq, p, tt_target=8):
    """x_seq: (T, N, D) f32 -> hf, hb: (T, N, 2H) bf16 (forward time order).
    W_ih / W_hh / biases stay resident in VMEM; backward direction handled via
    reversed index maps (no materialized flips)."""
    t_len, n, d = x_seq.shape
    g = p['wih_f'].shape[1]       # 8H
    h2 = p['whh_f'].shape[0]      # 2H
    tt = _pick_divisor(t_len, tt_target)
    tn = _pick_batch_tile(n)
    nb, tb = n // tn, t_len // tt

    wmap = lambda ni, ti: (0, 0)
    return pl.pallas_call(
        _bilstm_kernel,
        out_shape=(jax.ShapeDtypeStruct((t_len, n, h2), jnp.bfloat16),
                   jax.ShapeDtypeStruct((t_len, n, h2), jnp.bfloat16)),
        grid_spec=pltpu.PrefetchScalarGridSpec(
            num_scalar_prefetch=0,
            grid=(nb, tb),
            in_specs=[
                pl.BlockSpec((tt, tn, d), lambda ni, ti: (ti, ni, 0)),
                pl.BlockSpec((tt, tn, d), lambda ni, ti: (tb - 1 - ti, ni, 0)),
                pl.BlockSpec((d, g), wmap),
                pl.BlockSpec((d, g), wmap),
                pl.BlockSpec((h2, g), wmap),
                pl.BlockSpec((h2, g), wmap),
                pl.BlockSpec((1, g), wmap),
                pl.BlockSpec((1, g), wmap),
            ],
            out_specs=[
                pl.BlockSpec((tt, tn, h2), lambda ni, ti: (ti, ni, 0)),
                pl.BlockSpec((tt, tn, h2), lambda ni, ti: (tb - 1 - ti, ni, 0)),
            ],
            scratch_shapes=[pltpu.VMEM((tn, h2), jnp.float32)] * 4),
        compiler_params=pltpu.CompilerParams(
            dimension_semantics=("parallel", "arbitrary"),
            vmem_limit_bytes=_VMEM_LIMIT),
    )(x_seq, x_seq, p['wih_f'], p['wih_b'], p['whh_f'], p['whh_b'],
      p['b_f'], p['b_b'])


# ---------------------------------------------------------------------------
# Kernel 2: fused projections + gating + block projection + residual
#           (+ optional fused PReLU + 1x1 conv head for the cols pass)
# ---------------------------------------------------------------------------
def _post_math(hf_ref, hb_ref, x_ref, af_ref, ab_ref, brg_ref, wb_ref, bbp_ref):
    d = x_ref.shape[-1]
    # rg: (TM, 2D) = [rnn_proj(h_rnn_f,h_rnn_b) | gate_rnn_proj(h_gate_f,h_gate_b)]
    rg = (jnp.dot(hf_ref[...], af_ref[...], preferred_element_type=jnp.float32)
          + jnp.dot(hb_ref[...], ab_ref[...], preferred_element_type=jnp.float32)
          + brg_ref[...])
    gated = rg[:, :d] * rg[:, d:]
    x = x_ref[...]
    if d % 128 == 0:
        # single K=2D MXU pass with the pre-concatenated block_projection weight
        cat = jnp.concatenate([gated, x], axis=-1).astype(jnp.bfloat16)
        y = jnp.dot(cat, wb_ref[...], preferred_element_type=jnp.float32)
    else:
        wb = wb_ref[...]
        y = (jnp.dot(gated.astype(jnp.bfloat16), wb[:d],
                     preferred_element_type=jnp.float32)
             + jnp.dot(x.astype(jnp.bfloat16), wb[d:],
                       preferred_element_type=jnp.float32))
    return y + bbp_ref[...] + x          # residual add fused


def _post_kernel(hf_ref, hb_ref, x_ref, af_ref, ab_ref, brg_ref,
                 wb_ref, bbp_ref, o_ref):
    o_ref[...] = _post_math(hf_ref, hb_ref, x_ref, af_ref, ab_ref,
                            brg_ref, wb_ref, bbp_ref)


def _post_head_kernel(hf_ref, hb_ref, x_ref, af_ref, ab_ref, brg_ref,
                      wb_ref, bbp_ref, a_ref, wc_ref, bc_ref, o_ref, z_ref):
    y = _post_math(hf_ref, hb_ref, x_ref, af_ref, ab_ref,
                   brg_ref, wb_ref, bbp_ref)
    o_ref[...] = y
    py = jnp.where(y >= 0, y, y * a_ref[...])                 # PReLU
    z_ref[...] = (jnp.dot(py.astype(jnp.bfloat16), wc_ref[...],
                          preferred_element_type=jnp.float32) + bc_ref[...])


def _row_tiled(kernel, row_ins, const_ins, out_widths, cap=1024):
    """Launch a row-tiled kernel over M rows, padding M to a tile multiple."""
    m = row_ins[0].shape[0]
    tm = min(cap, _round_up(m, 8))
    m_pad = _round_up(m, tm)
    row_ins = [_pad_rows(a, m_pad) for a in row_ins]

    def row_spec(w):
        return pl.BlockSpec((tm, w), lambda i: (i, 0))

    def const_spec(a):
        return pl.BlockSpec(a.shape, lambda i: (0, 0))

    outs = pl.pallas_call(
        kernel,
        out_shape=tuple(jax.ShapeDtypeStruct((m_pad, w), jnp.float32)
                        for w in out_widths),
        grid_spec=pltpu.PrefetchScalarGridSpec(
            num_scalar_prefetch=0,
            grid=(m_pad // tm,),
            in_specs=[row_spec(a.shape[1]) for a in row_ins]
                     + [const_spec(a) for a in const_ins],
            out_specs=[row_spec(w) for w in out_widths]),
        compiler_params=pltpu.CompilerParams(
            dimension_semantics=("parallel",),
            vmem_limit_bytes=_VMEM_LIMIT),
    )(*row_ins, *const_ins)
    return tuple(o[:m] for o in outs)


# ---------------------------------------------------------------------------
# Model glue (chunking / merging / layout) in plain JAX
# ---------------------------------------------------------------------------
def create_chunks(x, segment_size):
    """x: (B, D, L) -> segments (B, D, S, K), rest (python int)."""
    b, d, l = x.shape
    stride = segment_size // 2
    rest = segment_size - (stride + l % segment_size) % segment_size
    if rest > 0:
        x = jnp.concatenate([x, jnp.zeros((b, d, rest), x.dtype)], axis=2)
    pad_aux = jnp.zeros((b, d, stride), x.dtype)
    x = jnp.concatenate([pad_aux, x, pad_aux], axis=2)
    seg1 = x[:, :, :-stride].reshape(b, d, -1, segment_size)
    seg2 = x[:, :, stride:].reshape(b, d, -1, segment_size)
    segments = jnp.concatenate([seg1, seg2], axis=3).reshape(b, d, -1, segment_size)
    segments = jnp.transpose(segments, (0, 1, 3, 2))      # (B, D, S, K)
    return segments, rest


def merge_chunks(x, rest):
    """x: (B, C, S, K) -> (B, C, L) overlap-add."""
    b, c, s, k = x.shape
    stride = s // 2
    x = jnp.transpose(x, (0, 1, 3, 2)).reshape(b, c, -1, s * 2)
    x1 = x[:, :, :, :s].reshape(b, c, -1)[:, :, stride:]
    x2 = x[:, :, :, s:].reshape(b, c, -1)[:, :, :-stride]
    out = x1 + x2
    if rest > 0:
        out = out[:, :, :-rest]
    return out


def mulcat_pass(x_seq, p, head=None):
    """One MulCatBlock application on a (T, N, D) seq-major tensor.
    Returns the residual-added output (and the fused head output if `head`)."""
    t_len, n, d = x_seq.shape
    m = t_len * n
    hf, hb = bilstm_recurrence(x_seq, p)
    h2 = hf.shape[-1]
    hf2, hb2 = hf.reshape(m, h2), hb.reshape(m, h2)
    x_flat = x_seq.reshape(m, d)
    consts = [p['af'], p['ab'], p['brg'], p['wb'], p['bbp']]
    if head is None:
        (y,) = _row_tiled(_post_kernel, [hf2, hb2, x_flat], consts, [d])
        return y.reshape(t_len, n, d)
    consts = consts + [head['a'], head['wc'], head['bc']]
    c = head['wc'].shape[1]
    y, z = _row_tiled(_post_head_kernel, [hf2, hb2, x_flat], consts, [d, c])
    return y.reshape(t_len, n, d), z.reshape(t_len, n, c)


def dp_mulcat(xr, params, num_layers):
    """xr: rows-layout state (S, B, K, D).  Returns list of (B, C, S, K)."""
    s, b, k, d = xr.shape
    head = params['head']
    outs = []
    state_r = xr
    for i in range(num_layers):
        lp = params['layers'][i]
        # rows pass: sequence along S, batch (B, K); residual fused in post.
        yr = mulcat_pass(state_r.reshape(s, b * k, d), lp['rows']).reshape(s, b, k, d)
        # cols pass: sequence along K, batch (B, S); PReLU+conv head fused.
        # TODO(synk): fold this S<->K layout transpose into the recurrence's
        # BlockSpec index maps to avoid the full-activation HBM round trip.
        state_c = jnp.transpose(yr, (2, 1, 0, 3))                      # (K,B,S,D)
        yc, z = mulcat_pass(state_c.reshape(k, b * s, d), lp['cols'], head=head)
        yc = yc.reshape(k, b, s, d)
        c = z.shape[-1]
        outs.append(jnp.transpose(z.reshape(k, b, s, c), (1, 3, 2, 0)))  # (B,C,S,K)
        # next layer's rows input.
        state_r = jnp.transpose(yc, (2, 1, 0, 3))                      # (S,B,K,D)
    return outs


def separator_forward(x_bdl, params, segment_size, num_layers):
    segments, rest = create_chunks(x_bdl, segment_size)    # (B, D, S, K)
    xr = jnp.transpose(segments, (2, 0, 3, 1))             # (S, B, K, D)
    outs = dp_mulcat(xr, params, num_layers)
    return [merge_chunks(o, rest) for o in outs]


# ---------------------------------------------------------------------------
# Deterministic parameter init (fused layouts; shapes follow the PyTorch module)
# ---------------------------------------------------------------------------
def init_params(key, D, H, num_spk, num_layers):
    def u(k, shape, s):
        return jax.random.uniform(k, shape, jnp.float32, -s, s)

    bf16 = lambda a: a.astype(jnp.bfloat16)

    def fuse_ih(w_rnn, w_gate):
        # (Din,4H)+(Din,4H) -> (Din,8H) interleaved [i_r,i_g,f_r,f_g,g_r,g_g,o_r,o_g]
        din = w_rnn.shape[0]
        return jnp.stack([w_rnn.reshape(din, 4, H),
                          w_gate.reshape(din, 4, H)], axis=2).reshape(din, 8 * H)

    def fuse_hh(w_rnn, w_gate):
        # block-diag recurrent weight for h_cat = [h_rnn | h_gate]: (2H, 8H)
        W = jnp.zeros((2, H, 4, 2, H), jnp.float32)
        W = W.at[0, :, :, 0, :].set(w_rnn.reshape(H, 4, H))
        W = W.at[1, :, :, 1, :].set(w_gate.reshape(H, 4, H))
        return W.reshape(2 * H, 8 * H)

    def fuse_proj(wr_half, wg_half):
        # maps [h_rnn | h_gate] -> [rnn_proj contrib | gate_rnn_proj contrib]
        A = jnp.zeros((2, H, 2, D), jnp.float32)
        A = A.at[0, :, 0, :].set(wr_half)
        A = A.at[1, :, 1, :].set(wg_half)
        return A.reshape(2 * H, 2 * D)

    def lstm_raw(k):
        k1, k2, k3, k4 = jax.random.split(k, 4)
        s = 1.0 / math.sqrt(H)
        return (u(k1, (D, 4 * H), s),                         # w_ih (stored as x @ W)
                u(k2, (H, 4 * H), s),                         # w_hh
                u(k3, (1, 4 * H), s) + u(k4, (1, 4 * H), s))  # b_ih + b_hh

    def make_pass(k):
        ks = jax.random.split(k, 10)
        rnn_f, gate_f = lstm_raw(ks[0]), lstm_raw(ks[1])
        rnn_b, gate_b = lstm_raw(ks[2]), lstm_raw(ks[3])
        sp = 1.0 / math.sqrt(2 * H)
        sb = 1.0 / math.sqrt(2 * D)
        wr, br = u(ks[4], (2 * H, D), sp), u(ks[5], (1, D), sp)
        wg, bg = u(ks[6], (2 * H, D), sp), u(ks[7], (1, D), sp)
        wb, bbp = u(ks[8], (2 * D, D), sb), u(ks[9], (1, D), sb)
        return dict(
            wih_f=bf16(fuse_ih(rnn_f[0], gate_f[0])),
            wih_b=bf16(fuse_ih(rnn_b[0], gate_b[0])),
            b_f=fuse_ih(rnn_f[2], gate_f[2]),
            b_b=fuse_ih(rnn_b[2], gate_b[2]),
            whh_f=bf16(fuse_hh(rnn_f[1], gate_f[1])),
            whh_b=bf16(fuse_hh(rnn_b[1], gate_b[1])),
            af=bf16(fuse_proj(wr[:H], wg[:H])),
            ab=bf16(fuse_proj(wr[H:], wg[H:])),
            brg=jnp.concatenate([br, bg], axis=1),
            wb=bf16(wb),                 # pre-concatenated block_projection weight
            bbp=bbp,
        )

    keys = jax.random.split(key, 2 * num_layers + 2)
    layers = [dict(rows=make_pass(keys[2 * i]), cols=make_pass(keys[2 * i + 1]))
              for i in range(num_layers)]
    sh = 1.0 / math.sqrt(D)
    head = dict(
        # nn.PReLU() uses one scalar (0.25 at init); replicated across channels
        # here (numerically identical at init).
        a=jnp.full((1, D), 0.25, jnp.float32),
        wc=bf16(u(keys[-2], (D, D * num_spk), sh)),
        bc=u(keys[-1], (1, D * num_spk), sh),
    )
    return dict(layers=layers, head=head)


# ---------------------------------------------------------------------------
if __name__ == "__main__":
    # Small, module-consistent shapes:
    #   feature_dim D=16, hidden_dim H=32, num_spk=2, layer=2, segment_size=8
    #   input (batch=2, feature_dim=16, seq_len=20)
    B, D, L = 2, 16, 20
    H = 32
    num_spk = 2
    num_layers = 2
    segment_size = 8

    key = jax.random.PRNGKey(0)
    kx, kp = jax.random.split(key)
    x = jax.random.normal(kx, (B, D, L), jnp.float32)
    params = init_params(kp, D, H, num_spk, num_layers)

    fwd = jax.jit(functools.partial(separator_forward,
                                    segment_size=segment_size,
                                    num_layers=num_layers))
    outs = fwd(x, params)
    outs = jax.block_until_ready(outs)

    expected = (B, D * num_spk, L)
    assert len(outs) == num_layers, (len(outs), num_layers)
    for o in outs:
        assert o.shape == expected, (o.shape, expected)
        assert bool(jnp.all(jnp.isfinite(o)))
    print("KERNEL_OK")
</pallas_src>

<mosaic_0001>
module attributes {stable_mosaic.version = 11 : i64} {
  func.func @_post_kernel(%arg0: i32, %arg1: memref<128x64xbf16, #tpu.memory_space<vmem>>, %arg2: memref<128x64xbf16, #tpu.memory_space<vmem>>, %arg3: memref<128x16xf32, #tpu.memory_space<vmem>>, %arg4: memref<64x32xbf16, #tpu.memory_space<vmem>>, %arg5: memref<64x32xbf16, #tpu.memory_space<vmem>>, %arg6: memref<1x32xf32, #tpu.memory_space<vmem>>, %arg7: memref<32x16xbf16, #tpu.memory_space<vmem>>, %arg8: memref<1x16xf32, #tpu.memory_space<vmem>>, %arg9: memref<128x16xf32, #tpu.memory_space<vmem>>) attributes {dimension_semantics = [#tpu.dimension_semantics<parallel>], iteration_bounds = array<i64: 1>, scalar_prefetch = 0 : i64, scratch_operands = 0 : i64, tpu.core_type = #tpu.core_type<tc>, window_params = [{transform_indices = @transform_0, window_bounds = array<i64: 128, 64>}, {transform_indices = @transform_1, window_bounds = array<i64: 128, 64>}, {transform_indices = @transform_2, window_bounds = array<i64: 128, 16>}, {pipeline_mode = #tpu.pipeline_mode<synchronous>, transform_indices = @transform_3, window_bounds = array<i64: 64, 32>}, {pipeline_mode = #tpu.pipeline_mode<synchronous>, transform_indices = @transform_4, window_bounds = array<i64: 64, 32>}, {pipeline_mode = #tpu.pipeline_mode<synchronous>, transform_indices = @transform_5, window_bounds = array<i64: 1, 32>}, {pipeline_mode = #tpu.pipeline_mode<synchronous>, transform_indices = @transform_6, window_bounds = array<i64: 32, 16>}, {pipeline_mode = #tpu.pipeline_mode<synchronous>, transform_indices = @transform_7, window_bounds = array<i64: 1, 16>}, {transform_indices = @transform_8, window_bounds = array<i64: 128, 16>}]} {
    %c0 = arith.constant 0 : index
    %c0_0 = arith.constant 0 : index
    %0 = vector.load %arg1[%c0, %c0_0] : memref<128x64xbf16, #tpu.memory_space<vmem>>, vector<128x64xbf16>
    %c0_1 = arith.constant 0 : index
    %c0_2 = arith.constant 0 : index
    %1 = vector.load %arg4[%c0_1, %c0_2] : memref<64x32xbf16, #tpu.memory_space<vmem>>, vector<64x32xbf16>
    %cst = arith.constant dense<0.000000e+00> : vector<128x32xf32>
    %2 = tpu.matmul %0, %1, %cst {dimension_numbers = #tpu.dot_dimension_numbers<[1], [0], [0], [1], [0, 0, 1, 1], [], []>} : vector<128x64xbf16>, vector<64x32xbf16>, vector<128x32xf32> -> vector<128x32xf32>
    %c0_3 = arith.constant 0 : index
    %c0_4 = arith.constant 0 : index
    %3 = vector.load %arg2[%c0_3, %c0_4] : memref<128x64xbf16, #tpu.memory_space<vmem>>, vector<128x64xbf16>
    %c0_5 = arith.constant 0 : index
    %c0_6 = arith.constant 0 : index
    %4 = vector.load %arg5[%c0_5, %c0_6] : memref<64x32xbf16, #tpu.memory_space<vmem>>, vector<64x32xbf16>
    %cst_7 = arith.constant dense<0.000000e+00> : vector<128x32xf32>
    %5 = tpu.matmul %3, %4, %cst_7 {dimension_numbers = #tpu.dot_dimension_numbers<[1], [0], [0], [1], [0, 0, 1, 1], [], []>} : vector<128x64xbf16>, vector<64x32xbf16>, vector<128x32xf32> -> vector<128x32xf32>
    %6 = arith.addf %2, %5 : vector<128x32xf32>
    %c0_8 = arith.constant 0 : index
    %c0_9 = arith.constant 0 : index
    %7 = vector.load %arg6[%c0_8, %c0_9] : memref<1x32xf32, #tpu.memory_space<vmem>>, vector<1x32xf32>
    %8 = vector.broadcast %7 : vector<1x32xf32> to vector<128x32xf32>
    %9 = arith.addf %6, %8 : vector<128x32xf32>
    %10 = vector.extract_strided_slice %9 {offsets = [0, 0], sizes = [128, 16], strides = [1, 1]} : vector<128x32xf32> to vector<128x16xf32>
    %11 = vector.extract_strided_slice %9 {offsets = [0, 16], sizes = [128, 16], strides = [1, 1]} : vector<128x32xf32> to vector<128x16xf32>
    %12 = arith.mulf %10, %11 : vector<128x16xf32>
    %c0_10 = arith.constant 0 : index
    %c0_11 = arith.constant 0 : index
    %13 = vector.load %arg3[%c0_10, %c0_11] : memref<128x16xf32, #tpu.memory_space<vmem>>, vector<128x16xf32>
    %c0_12 = arith.constant 0 : index
    %c0_13 = arith.constant 0 : index
    %14 = vector.load %arg7[%c0_12, %c0_13] : memref<32x16xbf16, #tpu.memory_space<vmem>>, vector<32x16xbf16>
    %15 = arith.truncf %12 : vector<128x16xf32> to vector<128x16xbf16>
    %16 = vector.extract_strided_slice %14 {offsets = [0, 0], sizes = [16, 16], strides = [1, 1]} : vector<32x16xbf16> to vector<16x16xbf16>
    %cst_14 = arith.constant dense<0.000000e+00> : vector<128x16xf32>
    %17 = tpu.matmul %15, %16, %cst_14 {dimension_numbers = #tpu.dot_dimension_numbers<[1], [0], [0], [1], [0, 0, 1, 1], [], []>} : vector<128x16xbf16>, vector<16x16xbf16>, vector<128x16xf32> -> vector<128x16xf32>
    %18 = arith.truncf %13 : vector<128x16xf32> to vector<128x16xbf16>
    %19 = vector.extract_strided_slice %14 {offsets = [16, 0], sizes = [16, 16], strides = [1, 1]} : vector<32x16xbf16> to vector<16x16xbf16>
    %cst_15 = arith.constant dense<0.000000e+00> : vector<128x16xf32>
    %20 = tpu.matmul %18, %19, %cst_15 {dimension_numbers = #tpu.dot_dimension_numbers<[1], [0], [0], [1], [0, 0, 1, 1], [], []>} : vector<128x16xbf16>, vector<16x16xbf16>, vector<128x16xf32> -> vector<128x16xf32>
    %21 = arith.addf %17, %20 : vector<128x16xf32>
    %c0_16 = arith.constant 0 : index
    %c0_17 = arith.constant 0 : index
    %22 = vector.load %arg8[%c0_16, %c0_17] : memref<1x16xf32, #tpu.memory_space<vmem>>, vector<1x16xf32>
    %23 = vector.broadcast %22 : vector<1x16xf32> to vector<128x16xf32>
    %24 = arith.addf %21, %23 : vector<128x16xf32>
    %25 = arith.addf %24, %13 : vector<128x16xf32>
    %c0_18 = arith.constant 0 : index
    %c0_19 = arith.constant 0 : index
    %26 = vector.load %arg9[%c0_18, %c0_19] : memref<128x16xf32, #tpu.memory_space<vmem>>, vector<128x16xf32>
    tpu.vector_store %arg9[%c0_18, %c0_19], %25 {strides = array<i32>} : memref<128x16xf32, #tpu.memory_space<vmem>>, vector<128x16xf32>,
    return
  }
  func.func @transform_0(%arg0: i32) -> (i32, i32) {
    %c0_i32 = arith.constant 0 : i32
    %c0_i32_0 = arith.constant 0 : i32
    return %arg0, %c0_i32 : i32, i32
  }
  func.func @transform_1(%arg0: i32) -> (i32, i32) {
    %c0_i32 = arith.constant 0 : i32
    %c0_i32_0 = arith.constant 0 : i32
    return %arg0, %c0_i32 : i32, i32
  }
  func.func @transform_2(%arg0: i32) -> (i32, i32) {
    %c0_i32 = arith.constant 0 : i32
    %c0_i32_0 = arith.constant 0 : i32
    return %arg0, %c0_i32 : i32, i32
  }
  func.func @transform_3(%arg0: i32) -> (i32, i32) {
    %c0_i32 = arith.constant 0 : i32
    %c0_i32_0 = arith.constant 0 : i32
    %c0_i32_1 = arith.constant 0 : i32
    return %c0_i32, %c0_i32_0 : i32, i32
  }
  func.func @transform_4(%arg0: i32) -> (i32, i32) {
    %c0_i32 = arith.constant 0 : i32
    %c0_i32_0 = arith.constant 0 : i32
    %c0_i32_1 = arith.constant 0 : i32
    return %c0_i32, %c0_i32_0 : i32, i32
  }
  func.func @transform_5(%arg0: i32) -> (i32, i32) {
    %c0_i32 = arith.constant 0 : i32
    %c0_i32_0 = arith.constant 0 : i32
    %c0_i32_1 = arith.constant 0 : i32
    return %c0_i32, %c0_i32_0 : i32, i32
  }
  func.func @transform_6(%arg0: i32) -> (i32, i32) {
    %c0_i32 = arith.constant 0 : i32
    %c0_i32_0 = arith.constant 0 : i32
    %c0_i32_1 = arith.constant 0 : i32
    return %c0_i32, %c0_i32_0 : i32, i32
  }
  func.func @transform_7(%arg0: i32) -> (i32, i32) {
    %c0_i32 = arith.constant 0 : i32
    %c0_i32_0 = arith.constant 0 : i32
    %c0_i32_1 = arith.constant 0 : i32
    return %c0_i32, %c0_i32_0 : i32, i32
  }
  func.func @transform_8(%arg0: i32) -> (i32, i32) {
    %c0_i32 = arith.constant 0 : i32
    %c0_i32_0 = arith.constant 0 : i32
    return %arg0, %c0_i32 : i32, i32
  }
}

module attributes {stable_mosaic.version = 11 : i64} {
  func.func @_post_head_kernel(%arg0: i32, %arg1: memref<128x64xbf16, #tpu.memory_space<vmem>>, %arg2: memref<128x64xbf16, #tpu.memory_space<vmem>>, %arg3: memref<128x16xf32, #tpu.memory_space<vmem>>, %arg4: memref<64x32xbf16, #tpu.memory_space<vmem>>, %arg5: memref<64x32xbf16, #tpu.memory_space<vmem>>, %arg6: memref<1x32xf32, #tpu.memory_space<vmem>>, %arg7: memref<32x16xbf16, #tpu.memory_space<vmem>>, %arg8: memref<1x16xf32, #tpu.memory_space<vmem>>, %arg9: memref<1x16xf32, #tpu.memory_space<vmem>>, %arg10: memref<16x32xbf16, #tpu.memory_space<vmem>>, %arg11: memref<1x32xf32, #tpu.memory_space<vmem>>, %arg12: memref<128x16xf32, #tpu.memory_space<vmem>>, %arg13: memref<128x32xf32, #tpu.memory_space<vmem>>) attributes {dimension_semantics = [#tpu.dimension_semantics<parallel>], iteration_bounds = array<i64: 1>, scalar_prefetch = 0 : i64, scratch_operands = 0 : i64, tpu.core_type = #tpu.core_type<tc>, window_params = [{transform_indices = @transform_0, window_bounds = array<i64: 128, 64>}, {transform_indices = @transform_1, window_bounds = array<i64: 128, 64>}, {transform_indices = @transform_2, window_bounds = array<i64: 128, 16>}, {pipeline_mode = #tpu.pipeline_mode<synchronous>, transform_indices = @transform_3, window_bounds = array<i64: 64, 32>}, {pipeline_mode = #tpu.pipeline_mode<synchronous>, transform_indices = @transform_4, window_bounds = array<i64: 64, 32>}, {pipeline_mode = #tpu.pipeline_mode<synchronous>, transform_indices = @transform_5, window_bounds = array<i64: 1, 32>}, {pipeline_mode = #tpu.pipeline_mode<synchronous>, transform_indices = @transform_6, window_bounds = array<i64: 32, 16>}, {pipeline_mode = #tpu.pipeline_mode<synchronous>, transform_indices = @transform_7, window_bounds = array<i64: 1, 16>}, {pipeline_mode = #tpu.pipeline_mode<synchronous>, transform_indices = @transform_8, window_bounds = array<i64: 1, 16>}, {pipeline_mode = #tpu.pipeline_mode<synchronous>, transform_indices = @transform_9, window_bounds = array<i64: 16, 32>}, {pipeline_mode = #tpu.pipeline_mode<synchronous>, transform_indices = @transform_10, window_bounds = array<i64: 1, 32>}, {transform_indices = @transform_11, window_bounds = array<i64: 128, 16>}, {transform_indices = @transform_12, window_bounds = array<i64: 128, 32>}]} {
    %c0 = arith.constant 0 : index
    %c0_0 = arith.constant 0 : index
    %0 = vector.load %arg1[%c0, %c0_0] : memref<128x64xbf16, #tpu.memory_space<vmem>>, vector<128x64xbf16>
    %c0_1 = arith.constant 0 : index
    %c0_2 = arith.constant 0 : index
    %1 = vector.load %arg4[%c0_1, %c0_2] : memref<64x32xbf16, #tpu.memory_space<vmem>>, vector<64x32xbf16>
    %cst = arith.constant dense<0.000000e+00> : vector<128x32xf32>
    %2 = tpu.matmul %0, %1, %cst {dimension_numbers = #tpu.dot_dimension_numbers<[1], [0], [0], [1], [0, 0, 1, 1], [], []>} : vector<128x64xbf16>, vector<64x32xbf16>, vector<128x32xf32> -> vector<128x32xf32>
    %c0_3 = arith.constant 0 : index
    %c0_4 = arith.constant 0 : index
    %3 = vector.load %arg2[%c0_3, %c0_4] : memref<128x64xbf16, #tpu.memory_space<vmem>>, vector<128x64xbf16>
    %c0_5 = arith.constant 0 : index
    %c0_6 = arith.constant 0 : index
    %4 = vector.load %arg5[%c0_5, %c0_6] : memref<64x32xbf16, #tpu.memory_space<vmem>>, vector<64x32xbf16>
    %cst_7 = arith.constant dense<0.000000e+00> : vector<128x32xf32>
    %5 = tpu.matmul %3, %4, %cst_7 {dimension_numbers = #tpu.dot_dimension_numbers<[1], [0], [0], [1], [0, 0, 1, 1], [], []>} : vector<128x64xbf16>, vector<64x32xbf16>, vector<128x32xf32> -> vector<128x32xf32>
    %6 = arith.addf %2, %5 : vector<128x32xf32>
    %c0_8 = arith.constant 0 : index
    %c0_9 = arith.constant 0 : index
    %7 = vector.load %arg6[%c0_8, %c0_9] : memref<1x32xf32, #tpu.memory_space<vmem>>, vector<1x32xf32>
    %8 = vector.broadcast %7 : vector<1x32xf32> to vector<128x32xf32>
    %9 = arith.addf %6, %8 : vector<128x32xf32>
    %10 = vector.extract_strided_slice %9 {offsets = [0, 0], sizes = [128, 16], strides = [1, 1]} : vector<128x32xf32> to vector<128x16xf32>
    %11 = vector.extract_strided_slice %9 {offsets = [0, 16], sizes = [128, 16], strides = [1, 1]} : vector<128x32xf32> to vector<128x16xf32>
    %12 = arith.mulf %10, %11 : vector<128x16xf32>
    %c0_10 = arith.constant 0 : index
    %c0_11 = arith.constant 0 : index
    %13 = vector.load %arg3[%c0_10, %c0_11] : memref<128x16xf32, #tpu.memory_space<vmem>>, vector<128x16xf32>
    %c0_12 = arith.constant 0 : index
    %c0_13 = arith.constant 0 : index
    %14 = vector.load %arg7[%c0_12, %c0_13] : memref<32x16xbf16, #tpu.memory_space<vmem>>, vector<32x16xbf16>
    %15 = arith.truncf %12 : vector<128x16xf32> to vector<128x16xbf16>
    %16 = vector.extract_strided_slice %14 {offsets = [0, 0], sizes = [16, 16], strides = [1, 1]} : vector<32x16xbf16> to vector<16x16xbf16>
    %cst_14 = arith.constant dense<0.000000e+00> : vector<128x16xf32>
    %17 = tpu.matmul %15, %16, %cst_14 {dimension_numbers = #tpu.dot_dimension_numbers<[1], [0], [0], [1], [0, 0, 1, 1], [], []>} : vector<128x16xbf16>, vector<16x16xbf16>, vector<128x16xf32> -> vector<128x16xf32>
    %18 = arith.truncf %13 : vector<128x16xf32> to vector<128x16xbf16>
    %19 = vector.extract_strided_slice %14 {offsets = [16, 0], sizes = [16, 16], strides = [1, 1]} : vector<32x16xbf16> to vector<16x16xbf16>
    %cst_15 = arith.constant dense<0.000000e+00> : vector<128x16xf32>
    %20 = tpu.matmul %18, %19, %cst_15 {dimension_numbers = #tpu.dot_dimension_numbers<[1], [0], [0], [1], [0, 0, 1, 1], [], []>} : vector<128x16xbf16>, vector<16x16xbf16>, vector<128x16xf32> -> vector<128x16xf32>
    %21 = arith.addf %17, %20 : vector<128x16xf32>
    %c0_16 = arith.constant 0 : index
    %c0_17 = arith.constant 0 : index
    %22 = vector.load %arg8[%c0_16, %c0_17] : memref<1x16xf32, #tpu.memory_space<vmem>>, vector<1x16xf32>
    %23 = vector.broadcast %22 : vector<1x16xf32> to vector<128x16xf32>
    %24 = arith.addf %21, %23 : vector<128x16xf32>
    %25 = arith.addf %24, %13 : vector<128x16xf32>
    %c0_18 = arith.constant 0 : index
    %c0_19 = arith.constant 0 : index
    %26 = vector.load %arg12[%c0_18, %c0_19] : memref<128x16xf32, #tpu.memory_space<vmem>>, vector<128x16xf32>
    tpu.vector_store %arg12[%c0_18, %c0_19], %25 {strides = array<i32>} : memref<128x16xf32, #tpu.memory_space<vmem>>, vector<128x16xf32>,
    %cst_20 = arith.constant 0.000000e+00 : f32
    %27 = vector.broadcast %cst_20 : f32 to vector<128x16xf32>
    %28 = arith.cmpf oge, %25, %27 : vector<128x16xf32>
    %c0_21 = arith.constant 0 : index
    %c0_22 = arith.constant 0 : index
    %29 = vector.load %arg9[%c0_21, %c0_22] : memref<1x16xf32, #tpu.memory_space<vmem>>, vector<1x16xf32>
    %30 = vector.broadcast %29 : vector<1x16xf32> to vector<128x16xf32>
    %31 = arith.mulf %25, %30 : vector<128x16xf32>
    %32 = arith.select %28, %25, %31 : vector<128x16xi1>, vector<128x16xf32>
    %33 = arith.truncf %32 : vector<128x16xf32> to vector<128x16xbf16>
    %c0_23 = arith.constant 0 : index
    %c0_24 = arith.constant 0 : index
    %34 = vector.load %arg10[%c0_23, %c0_24] : memref<16x32xbf16, #tpu.memory_space<vmem>>, vector<16x32xbf16>
    %cst_25 = arith.constant dense<0.000000e+00> : vector<128x32xf32>
    %35 = tpu.matmul %33, %34, %cst_25 {dimension_numbers = #tpu.dot_dimension_numbers<[1], [0], [0], [1], [0, 0, 1, 1], [], []>} : vector<128x16xbf16>, vector<16x32xbf16>, vector<128x32xf32> -> vector<128x32xf32>
    %c0_26 = arith.constant 0 : index
    %c0_27 = arith.constant 0 : index
    %36 = vector.load %arg11[%c0_26, %c0_27] : memref<1x32xf32, #tpu.memory_space<vmem>>, vector<1x32xf32>
    %37 = vector.broadcast %36 : vector<1x32xf32> to vector<128x32xf32>
    %38 = arith.addf %35, %37 : vector<128x32xf32>
    %c0_28 = arith.constant 0 : index
    %c0_29 = arith.constant 0 : index
    %39 = vector.load %arg13[%c0_28, %c0_29] : memref<128x32xf32, #tpu.memory_space<vmem>>, vector<128x32xf32>
    tpu.vector_store %arg13[%c0_28, %c0_29], %38 {strides = array<i32>} : memref<128x32xf32, #tpu.memory_space<vmem>>, vector<128x32xf32>,
    return
  }
  func.func @transform_0(%arg0: i32) -> (i32, i32) {
    %c0_i32 = arith.constant 0 : i32
    %c0_i32_0 = arith.constant 0 : i32
    return %arg0, %c0_i32 : i32, i32
  }
  func.func @transform_1(%arg0: i32) -> (i32, i32) {
    %c0_i32 = arith.constant 0 : i32
    %c0_i32_0 = arith.constant 0 : i32
    return %arg0, %c0_i32 : i32, i32
  }
  func.func @transform_2(%arg0: i32) -> (i32, i32) {
    %c0_i32 = arith.constant 0 : i32
    %c0_i32_0 = arith.constant 0 : i32
    return %arg0, %c0_i32 : i32, i32
  }
  func.func @transform_3(%arg0: i32) -> (i32, i32) {
    %c0_i32 = arith.constant 0 : i32
    %c0_i32_0 = arith.constant 0 : i32
    %c0_i32_1 = arith.constant 0 : i32
    return %c0_i32, %c0_i32_0 : i32, i32
  }
  func.func @transform_4(%arg0: i32) -> (i32, i32) {
    %c0_i32 = arith.constant 0 : i32
    %c0_i32_0 = arith.constant 0 : i32
    %c0_i32_1 = arith.constant 0 : i32
    return %c0_i32, %c0_i32_0 : i32, i32
  }
  func.func @transform_5(%arg0: i32) -> (i32, i32) {
    %c0_i32 = arith.constant 0 : i32
    %c0_i32_0 = arith.constant 0 : i32
    %c0_i32_1 = arith.constant 0 : i32
    return %c0_i32, %c0_i32_0 : i32, i32
  }
  func.func @transform_6(%arg0: i32) -> (i32, i32) {
    %c0_i32 = arith.constant 0 : i32
    %c0_i32_0 = arith.constant 0 : i32
    %c0_i32_1 = arith.constant 0 : i32
    return %c0_i32, %c0_i32_0 : i32, i32
  }
  func.func @transform_7(%arg0: i32) -> (i32, i32) {
    %c0_i32 = arith.constant 0 : i32
    %c0_i32_0 = arith.constant 0 : i32
    %c0_i32_1 = arith.constant 0 : i32
    return %c0_i32, %c0_i32_0 : i32, i32
  }
  func.func @transform_8(%arg0: i32) -> (i32, i32) {
    %c0_i32 = arith.constant 0 : i32
    %c0_i32_0 = arith.constant 0 : i32
    %c0_i32_1 = arith.constant 0 : i32
    return %c0_i32, %c0_i32_0 : i32, i32
  }
  func.func @transform_9(%arg0: i32) -> (i32, i32) {
    %c0_i32 = arith.constant 0 : i32
    %c0_i32_0 = arith.constant 0 : i32
    %c0_i32_1 = arith.constant 0 : i32
    return %c0_i32, %c0_i32_0 : i32, i32
  }
  func.func @transform_10(%arg0: i32) -> (i32, i32) {
    %c0_i32 = arith.constant 0 : i32
    %c0_i32_0 = arith.constant 0 : i32
    %c0_i32_1 = arith.constant 0 : i32
    return %c0_i32, %c0_i32_0 : i32, i32
  }
  func.func @transform_11(%arg0: i32) -> (i32, i32) {
    %c0_i32 = arith.constant 0 : i32
    %c0_i32_0 = arith.constant 0 : i32
    return %arg0, %c0_i32 : i32, i32
  }
  func.func @transform_12(%arg0: i32) -> (i32, i32) {
    %c0_i32 = arith.constant 0 : i32
    %c0_i32_0 = arith.constant 0 : i32
    return %arg0, %c0_i32 : i32, i32
  }
}

module attributes {stable_mosaic.version = 11 : i64} {
  func.func @_post_head_kernel(%arg0: i32, %arg1: memref<128x64xbf16, #tpu.memory_space<vmem>>, %arg2: memref<128x64xbf16, #tpu.memory_space<vmem>>, %arg3: memref<128x16xf32, #tpu.memory_space<vmem>>, %arg4: memref<64x32xbf16, #tpu.memory_space<vmem>>, %arg5: memref<64x32xbf16, #tpu.memory_space<vmem>>, %arg6: memref<1x32xf32, #tpu.memory_space<vmem>>, %arg7: memref<32x16xbf16, #tpu.memory_space<vmem>>, %arg8: memref<1x16xf32, #tpu.memory_space<vmem>>, %arg9: memref<1x16xf32, #tpu.memory_space<vmem>>, %arg10: memref<16x32xbf16, #tpu.memory_space<vmem>>, %arg11: memref<1x32xf32, #tpu.memory_space<vmem>>, %arg12: memref<128x16xf32, #tpu.memory_space<vmem>>, %arg13: memref<128x32xf32, #tpu.memory_space<vmem>>) attributes {dimension_semantics = [#tpu.dimension_semantics<parallel>], iteration_bounds = array<i64: 1>, scalar_prefetch = 0 : i64, scratch_operands = 0 : i64, tpu.core_type = #tpu.core_type<tc>, window_params = [{transform_indices = @transform_0, window_bounds = array<i64: 128, 64>}, {transform_indices = @transform_1, window_bounds = array<i64: 128, 64>}, {transform_indices = @transform_2, window_bounds = array<i64: 128, 16>}, {pipeline_mode = #tpu.pipeline_mode<synchronous>, transform_indices = @transform_3, window_bounds = array<i64: 64, 32>}, {pipeline_mode = #tpu.pipeline_mode<synchronous>, transform_indices = @transform_4, window_bounds = array<i64: 64, 32>}, {pipeline_mode = #tpu.pipeline_mode<synchronous>, transform_indices = @transform_5, window_bounds = array<i64: 1, 32>}, {pipeline_mode = #tpu.pipeline_mode<synchronous>, transform_indices = @transform_6, window_bounds = array<i64: 32, 16>}, {pipeline_mode = #tpu.pipeline_mode<synchronous>, transform_indices = @transform_7, window_bounds = array<i64: 1, 16>}, {pipeline_mode = #tpu.pipeline_mode<synchronous>, transform_indices = @transform_8, window_bounds = array<i64: 1, 16>}, {pipeline_mode = #tpu.pipeline_mode<synchronous>, transform_indices = @transform_9, window_bounds = array<i64: 16, 32>}, {pipeline_mode = #tpu.pipeline_mode<synchronous>, transform_indices = @transform_10, window_bounds = array<i64: 1, 32>}, {transform_indices = @transform_11, window_bounds = array<i64: 128, 16>}, {transform_indices = @transform_12, window_bounds = array<i64: 128, 32>}]} {
    %c0 = arith.constant 0 : index
    %c0_0 = arith.constant 0 : index
    %0 = vector.load %arg1[%c0, %c0_0] : memref<128x64xbf16, #tpu.memory_space<vmem>>, vector<128x64xbf16>
    %c0_1 = arith.constant 0 : index
    %c0_2 = arith.constant 0 : index
    %1 = vector.load %arg4[%c0_1, %c0_2] : memref<64x32xbf16, #tpu.memory_space<vmem>>, vector<64x32xbf16>
    %cst = arith.constant dense<0.000000e+00> : vector<128x32xf32>
    %2 = tpu.matmul %0, %1, %cst {dimension_numbers = #tpu.dot_dimension_numbers<[1], [0], [0], [1], [0, 0, 1, 1], [], []>} : vector<128x64xbf16>, vector<64x32xbf16>, vector<128x32xf32> -> vector<128x32xf32>
    %c0_3 = arith.constant 0 : index
    %c0_4 = arith.constant 0 : index
    %3 = vector.load %arg2[%c0_3, %c0_4] : memref<128x64xbf16, #tpu.memory_space<vmem>>, vector<128x64xbf16>
    %c0_5 = arith.constant 0 : index
    %c0_6 = arith.constant 0 : index
    %4 = vector.load %arg5[%c0_5, %c0_6] : memref<64x32xbf16, #tpu.memory_space<vmem>>, vector<64x32xbf16>
    %cst_7 = arith.constant dense<0.000000e+00> : vector<128x32xf32>
    %5 = tpu.matmul %3, %4, %cst_7 {dimension_numbers = #tpu.dot_dimension_numbers<[1], [0], [0], [1], [0, 0, 1, 1], [], []>} : vector<128x64xbf16>, vector<64x32xbf16>, vector<128x32xf32> -> vector<128x32xf32>
    %6 = arith.addf %2, %5 : vector<128x32xf32>
    %c0_8 = arith.constant 0 : index
    %c0_9 = arith.constant 0 : index
    %7 = vector.load %arg6[%c0_8, %c0_9] : memref<1x32xf32, #tpu.memory_space<vmem>>, vector<1x32xf32>
    %8 = vector.broadcast %7 : vector<1x32xf32> to vector<128x32xf32>
    %9 = arith.addf %6, %8 : vector<128x32xf32>
    %10 = vector.extract_strided_slice %9 {offsets = [0, 0], sizes = [128, 16], strides = [1, 1]} : vector<128x32xf32> to vector<128x16xf32>
    %11 = vector.extract_strided_slice %9 {offsets = [0, 16], sizes = [128, 16], strides = [1, 1]} : vector<128x32xf32> to vector<128x16xf32>
    %12 = arith.mulf %10, %11 : vector<128x16xf32>
    %c0_10 = arith.constant 0 : index
    %c0_11 = arith.constant 0 : index
    %13 = vector.load %arg3[%c0_10, %c0_11] : memref<128x16xf32, #tpu.memory_space<vmem>>, vector<128x16xf32>
    %c0_12 = arith.constant 0 : index
    %c0_13 = arith.constant 0 : index
    %14 = vector.load %arg7[%c0_12, %c0_13] : memref<32x16xbf16, #tpu.memory_space<vmem>>, vector<32x16xbf16>
    %15 = arith.truncf %12 : vector<128x16xf32> to vector<128x16xbf16>
    %16 = vector.extract_strided_slice %14 {offsets = [0, 0], sizes = [16, 16], strides = [1, 1]} : vector<32x16xbf16> to vector<16x16xbf16>
    %cst_14 = arith.constant dense<0.000000e+00> : vector<128x16xf32>
    %17 = tpu.matmul %15, %16, %cst_14 {dimension_numbers = #tpu.dot_dimension_numbers<[1], [0], [0], [1], [0, 0, 1, 1], [], []>} : vector<128x16xbf16>, vector<16x16xbf16>, vector<128x16xf32> -> vector<128x16xf32>
    %18 = arith.truncf %13 : vector<128x16xf32> to vector<128x16xbf16>
    %19 = vector.extract_strided_slice %14 {offsets = [16, 0], sizes = [16, 16], strides = [1, 1]} : vector<32x16xbf16> to vector<16x16xbf16>
    %cst_15 = arith.constant dense<0.000000e+00> : vector<128x16xf32>
    %20 = tpu.matmul %18, %19, %cst_15 {dimension_numbers = #tpu.dot_dimension_numbers<[1], [0], [0], [1], [0, 0, 1, 1], [], []>} : vector<128x16xbf16>, vector<16x16xbf16>, vector<128x16xf32> -> vector<128x16xf32>
    %21 = arith.addf %17, %20 : vector<128x16xf32>
    %c0_16 = arith.constant 0 : index
    %c0_17 = arith.constant 0 : index
    %22 = vector.load %arg8[%c0_16, %c0_17] : memref<1x16xf32, #tpu.memory_space<vmem>>, vector<1x16xf32>
    %23 = vector.broadcast %22 : vector<1x16xf32> to vector<128x16xf32>
    %24 = arith.addf %21, %23 : vector<128x16xf32>
    %25 = arith.addf %24, %13 : vector<128x16xf32>
    %c0_18 = arith.constant 0 : index
    %c0_19 = arith.constant 0 : index
    %26 = vector.load %arg12[%c0_18, %c0_19] : memref<128x16xf32, #tpu.memory_space<vmem>>, vector<128x16xf32>
    tpu.vector_store %arg12[%c0_18, %c0_19], %25 {strides = array<i32>} : memref<128x16xf32, #tpu.memory_space<vmem>>, vector<128x16xf32>,
    %cst_20 = arith.constant 0.000000e+00 : f32
    %27 = vector.broadcast %cst_20 : f32 to vector<128x16xf32>
    %28 = arith.cmpf oge, %25, %27 : vector<128x16xf32>
    %c0_21 = arith.constant 0 : index
    %c0_22 = arith.constant 0 : index
    %29 = vector.load %arg9[%c0_21, %c0_22] : memref<1x16xf32, #tpu.memory_space<vmem>>, vector<1x16xf32>
    %30 = vector.broadcast %29 : vector<1x16xf32> to vector<128x16xf32>
    %31 = arith.mulf %25, %30 : vector<128x16xf32>
    %32 = arith.select %28, %25, %31 : vector<128x16xi1>, vector<128x16xf32>
    %33 = arith.truncf %32 : vector<128x16xf32> to vector<128x16xbf16>
    %c0_23 = arith.constant 0 : index
    %c0_24 = arith.constant 0 : index
    %34 = vector.load %arg10[%c0_23, %c0_24] : memref<16x32xbf16, #tpu.memory_space<vmem>>, vector<16x32xbf16>
    %cst_25 = arith.constant dense<0.000000e+00> : vector<128x32xf32>
    %35 = tpu.matmul %33, %34, %cst_25 {dimension_numbers = #tpu.dot_dimension_numbers<[1], [0], [0], [1], [0, 0, 1, 1], [], []>} : vector<128x16xbf16>, vector<16x32xbf16>, vector<128x32xf32> -> vector<128x32xf32>
    %c0_26 = arith.constant 0 : index
    %c0_27 = arith.constant 0 : index
    %36 = vector.load %arg11[%c0_26, %c0_27] : memref<1x32xf32, #tpu.memory_space<vmem>>, vector<1x32xf32>
    %37 = vector.broadcast %36 : vector<1x32xf32> to vector<128x32xf32>
    %38 = arith.addf %35, %37 : vector<128x32xf32>
    %c0_28 = arith.constant 0 : index
    %c0_29 = arith.constant 0 : index
    %39 = vector.load %arg13[%c0_28, %c0_29] : memref<128x32xf32, #tpu.memory_space<vmem>>, vector<128x32xf32>
    tpu.vector_store %arg13[%c0_28, %c0_29], %38 {strides = array<i32>} : memref<128x32xf32, #tpu.memory_space<vmem>>, vector<128x32xf32>,
    return
  }
  func.func @transform_0(%arg0: i32) -> (i32, i32) {
    %c0_i32 = arith.constant 0 : i32
    %c0_i32_0 = arith.constant 0 : i32
    return %arg0, %c0_i32 : i32, i32
  }
  func.func @transform_1(%arg0: i32) -> (i32, i32) {
    %c0_i32 = arith.constant 0 : i32
    %c0_i32_0 = arith.constant 0 : i32
    return %arg0, %c0_i32 : i32, i32
  }
  func.func @transform_2(%arg0: i32) -> (i32, i32) {
    %c0_i32 = arith.constant 0 : i32
    %c0_i32_0 = arith.constant 0 : i32
    return %arg0, %c0_i32 : i32, i32
  }
  func.func @transform_3(%arg0: i32) -> (i32, i32) {
    %c0_i32 = arith.constant 0 : i32
    %c0_i32_0 = arith.constant 0 : i32
    %c0_i32_1 = arith.constant 0 : i32
    return %c0_i32, %c0_i32_0 : i32, i32
  }
  func.func @transform_4(%arg0: i32) -> (i32, i32) {
    %c0_i32 = arith.constant 0 : i32
    %c0_i32_0 = arith.constant 0 : i32
    %c0_i32_1 = arith.constant 0 : i32
    return %c0_i32, %c0_i32_0 : i32, i32
  }
  func.func @transform_5(%arg0: i32) -> (i32, i32) {
    %c0_i32 = arith.constant 0 : i32
    %c0_i32_0 = arith.constant 0 : i32
    %c0_i32_1 = arith.constant 0 : i32
    return %c0_i32, %c0_i32_0 : i32, i32
  }
  func.func @transform_6(%arg0: i32) -> (i32, i32) {
    %c0_i32 = arith.constant 0 : i32
    %c0_i32_0 = arith.constant 0 : i32
    %c0_i32_1 = arith.constant 0 : i32
    return %c0_i32, %c0_i32_0 : i32, i32
  }
  func.func @transform_7(%arg0: i32) -> (i32, i32) {
    %c0_i32 = arith.constant 0 : i32
    %c0_i32_0 = arith.constant 0 : i32
    %c0_i32_1 = arith.constant 0 : i32
    return %c0_i32, %c0_i32_0 : i32, i32
  }
  func.func @transform_8(%arg0: i32) -> (i32, i32) {
    %c0_i32 = arith.constant 0 : i32
    %c0_i32_0 = arith.constant 0 : i32
    %c0_i32_1 = arith.constant 0 : i32
    return %c0_i32, %c0_i32_0 : i32, i32
  }
  func.func @transform_9(%arg0: i32) -> (i32, i32) {
    %c0_i32 = arith.constant 0 : i32
    %c0_i32_0 = arith.constant 0 : i32
    %c0_i32_1 = arith.constant 0 : i32
    return %c0_i32, %c0_i32_0 : i32, i32
  }
  func.func @transform_10(%arg0: i32) -> (i32, i32) {
    %c0_i32 = arith.constant 0 : i32
    %c0_i32_0 = arith.constant 0 : i32
    %c0_i32_1 = arith.constant 0 : i32
    return %c0_i32, %c0_i32_0 : i32, i32
  }
  func.func @transform_11(%arg0: i32) -> (i32, i32) {
    %c0_i32 = arith.constant 0 : i32
    %c0_i32_0 = arith.constant 0 : i32
    return %arg0, %c0_i32 : i32, i32
  }
  func.func @transform_12(%arg0: i32) -> (i32, i32) {
    %c0_i32 = arith.constant 0 : i32
    %c0_i32_0 = arith.constant 0 : i32
    return %arg0, %c0_i32 : i32, i32
  }
}

module attributes {stable_mosaic.version = 11 : i64} {
  func.func @_bilstm_kernel(%arg0: i32, %arg1: i32, %arg2: memref<8x16x16xf32, #tpu.memory_space<vmem>>, %arg3: memref<8x16x16xf32, #tpu.memory_space<vmem>>, %arg4: memref<16x256xbf16, #tpu.memory_space<vmem>>, %arg5: memref<16x256xbf16, #tpu.memory_space<vmem>>, %arg6: memref<64x256xbf16, #tpu.memory_space<vmem>>, %arg7: memref<64x256xbf16, #tpu.memory_space<vmem>>, %arg8: memref<1x256xf32, #tpu.memory_space<vmem>>, %arg9: memref<1x256xf32, #tpu.memory_space<vmem>>, %arg10: memref<8x16x64xbf16, #tpu.memory_space<vmem>>, %arg11: memref<8x16x64xbf16, #tpu.memory_space<vmem>>, %arg12: memref<16x64xf32, #tpu.memory_space<vmem>>, %arg13: memref<16x64xf32, #tpu.memory_space<vmem>>, %arg14: memref<16x64xf32, #tpu.memory_space<vmem>>, %arg15: memref<16x64xf32, #tpu.memory_space<vmem>>) attributes {dimension_semantics = [#tpu.dimension_semantics<parallel>, #tpu.dimension_semantics<arbitrary>], iteration_bounds = array<i64: 1, 1>, scalar_prefetch = 0 : i64, scratch_operands = 4 : i64, tpu.core_type = #tpu.core_type<tc>, window_params = [{transform_indices = @transform_0, window_bounds = array<i64: 8, 16, 16>}, {transform_indices = @transform_1, window_bounds = array<i64: 8, 16, 16>}, {pipeline_mode = #tpu.pipeline_mode<synchronous>, transform_indices = @transform_2, window_bounds = array<i64: 16, 256>}, {pipeline_mode = #tpu.pipeline_mode<synchronous>, transform_indices = @transform_3, window_bounds = array<i64: 16, 256>}, {pipeline_mode = #tpu.pipeline_mode<synchronous>, transform_indices = @transform_4, window_bounds = array<i64: 64, 256>}, {pipeline_mode = #tpu.pipeline_mode<synchronous>, transform_indices = @transform_5, window_bounds = array<i64: 64, 256>}, {pipeline_mode = #tpu.pipeline_mode<synchronous>, transform_indices = @transform_6, window_bounds = array<i64: 1, 256>}, {pipeline_mode = #tpu.pipeline_mode<synchronous>, transform_indices = @transform_7, window_bounds = array<i64: 1, 256>}, {transform_indices = @transform_8, window_bounds = array<i64: 8, 16, 64>}, {transform_indices = @transform_9, window_bounds = array<i64: 8, 16, 64>}]} {
    %c0_i32 = arith.constant 0 : i32
    %0 = arith.cmpi eq, %arg1, %c0_i32 : i32
    %1 = arith.extui %0 : i1 to i32
    %c0_i32_0 = arith.constant 0 : i32
    %2 = arith.cmpi ne, %1, %c0_i32_0 : i32
    scf.if %2 {
      %cst_376 = arith.constant 0.000000e+00 : f32
      %763 = vector.broadcast %cst_376 : f32 to vector<16x64xf32>
      %c0_377 = arith.constant 0 : index
      %c0_378 = arith.constant 0 : index
      %764 = vector.load %arg12[%c0_377, %c0_378] : memref<16x64xf32, #tpu.memory_space<vmem>>, vector<16x64xf32>
      tpu.vector_store %arg12[%c0_377, %c0_378], %763 {strides = array<i32>} : memref<16x64xf32, #tpu.memory_space<vmem>>, vector<16x64xf32>,
      %cst_379 = arith.constant 0.000000e+00 : f32
      %765 = vector.broadcast %cst_379 : f32 to vector<16x64xf32>
      %c0_380 = arith.constant 0 : index
      %c0_381 = arith.constant 0 : index
      %766 = vector.load %arg13[%c0_380, %c0_381] : memref<16x64xf32, #tpu.memory_space<vmem>>, vector<16x64xf32>
      tpu.vector_store %arg13[%c0_380, %c0_381], %765 {strides = array<i32>} : memref<16x64xf32, #tpu.memory_space<vmem>>, vector<16x64xf32>,
      %cst_382 = arith.constant 0.000000e+00 : f32
      %767 = vector.broadcast %cst_382 : f32 to vector<16x64xf32>
      %c0_383 = arith.constant 0 : index
      %c0_384 = arith.constant 0 : index
      %768 = vector.load %arg14[%c0_383, %c0_384] : memref<16x64xf32, #tpu.memory_space<vmem>>, vector<16x64xf32>
      tpu.vector_store %arg14[%c0_383, %c0_384], %767 {strides = array<i32>} : memref<16x64xf32, #tpu.memory_space<vmem>>, vector<16x64xf32>,
      %cst_385 = arith.constant 0.000000e+00 : f32
      %769 = vector.broadcast %cst_385 : f32 to vector<16x64xf32>
      %c0_386 = arith.constant 0 : index
      %c0_387 = arith.constant 0 : index
      %770 = vector.load %arg15[%c0_386, %c0_387] : memref<16x64xf32, #tpu.memory_space<vmem>>, vector<16x64xf32>
      tpu.vector_store %arg15[%c0_386, %c0_387], %769 {strides = array<i32>} : memref<16x64xf32, #tpu.memory_space<vmem>>, vector<16x64xf32>,
    } else {
    }
    %c0_i32_1 = arith.constant 0 : i32
    %3 = arith.index_cast %c0_i32_1 : i32 to index
    %c0 = arith.constant 0 : index
    %c0_2 = arith.constant 0 : index
    %4 = vector.load %arg2[%3, %c0, %c0_2] : memref<8x16x16xf32, #tpu.memory_space<vmem>>, vector<1x16x16xf32>
    %5 = vector.shape_cast %4 : vector<1x16x16xf32> to vector<16x16xf32>
    %6 = arith.truncf %5 : vector<16x16xf32> to vector<16x16xbf16>
    %c0_3 = arith.constant 0 : index
    %c0_4 = arith.constant 0 : index
    %7 = vector.load %arg4[%c0_3, %c0_4] : memref<16x256xbf16, #tpu.memory_space<vmem>>, vector<16x256xbf16>
    %cst = arith.constant dense<0.000000e+00> : vector<16x256xf32>
    %8 = tpu.matmul %6, %7, %cst {dimension_numbers = #tpu.dot_dimension_numbers<[1], [0], [0], [1], [0, 0, 1, 1], [], []>} : vector<16x16xbf16>, vector<16x256xbf16>, vector<16x256xf32> -> vector<16x256xf32>
    %c0_5 = arith.constant 0 : index
    %c0_6 = arith.constant 0 : index
    %9 = vector.load %arg12[%c0_5, %c0_6] : memref<16x64xf32, #tpu.memory_space<vmem>>, vector<16x64xf32>
    %10 = arith.truncf %9 : vector<16x64xf32> to vector<16x64xbf16>
    %c0_7 = arith.constant 0 : index
    %c0_8 = arith.constant 0 : index
    %11 = vector.load %arg6[%c0_7, %c0_8] : memref<64x256xbf16, #tpu.memory_space<vmem>>, vector<64x256xbf16>
    %cst_9 = arith.constant dense<0.000000e+00> : vector<16x256xf32>
    %12 = tpu.matmul %10, %11, %cst_9 {dimension_numbers = #tpu.dot_dimension_numbers<[1], [0], [0], [1], [0, 0, 1, 1], [], []>} : vector<16x64xbf16>, vector<64x256xbf16>, vector<16x256xf32> -> vector<16x256xf32>
    %13 = arith.addf %8, %12 : vector<16x256xf32>
    %c0_10 = arith.constant 0 : index
    %c0_11 = arith.constant 0 : index
    %14 = vector.load %arg8[%c0_10, %c0_11] : memref<1x256xf32, #tpu.memory_space<vmem>>, vector<1x256xf32>
    %15 = vector.broadcast %14 : vector<1x256xf32> to vector<16x256xf32>
    %16 = arith.addf %13, %15 : vector<16x256xf32>
    %17 = vector.extract_strided_slice %16 {offsets = [0, 0], sizes = [16, 64], strides = [1, 1]} : vector<16x256xf32> to vector<16x64xf32>
    %18 = arith.negf %17 : vector<16x64xf32>
    %19 = math.exp %18 : vector<16x64xf32>
    %cst_12 = arith.constant 1.000000e+00 : f32
    %20 = vector.broadcast %cst_12 : f32 to vector<16x64xf32>
    %21 = arith.addf %20, %19 : vector<16x64xf32>
    %22 = arith.divf %20, %21 : vector<16x64xf32>
    %23 = vector.extract_strided_slice %16 {offsets = [0, 64], sizes = [16, 64], strides = [1, 1]} : vector<16x256xf32> to vector<16x64xf32>
    %24 = arith.negf %23 : vector<16x64xf32>
    %25 = math.exp %24 : vector<16x64xf32>
    %cst_13 = arith.constant 1.000000e+00 : f32
    %26 = vector.broadcast %cst_13 : f32 to vector<16x64xf32>
    %27 = arith.addf %26, %25 : vector<16x64xf32>
    %28 = arith.divf %26, %27 : vector<16x64xf32>
    %29 = vector.extract_strided_slice %16 {offsets = [0, 128], sizes = [16, 64], strides = [1, 1]} : vector<16x256xf32> to vector<16x64xf32>
    %30 = math.tanh %29 : vector<16x64xf32>
    %31 = vector.extract_strided_slice %16 {offsets = [0, 192], sizes = [16, 64], strides = [1, 1]} : vector<16x256xf32> to vector<16x64xf32>
    %32 = arith.negf %31 : vector<16x64xf32>
    %33 = math.exp %32 : vector<16x64xf32>
    %cst_14 = arith.constant 1.000000e+00 : f32
    %34 = vector.broadcast %cst_14 : f32 to vector<16x64xf32>
    %35 = arith.addf %34, %33 : vector<16x64xf32>
    %36 = arith.divf %34, %35 : vector<16x64xf32>
    %c0_15 = arith.constant 0 : index
    %c0_16 = arith.constant 0 : index
    %37 = vector.load %arg13[%c0_15, %c0_16] : memref<16x64xf32, #tpu.memory_space<vmem>>, vector<16x64xf32>
    %38 = arith.mulf %28, %37 : vector<16x64xf32>
    %39 = arith.mulf %22, %30 : vector<16x64xf32>
    %40 = arith.addf %38, %39 : vector<16x64xf32>
    %41 = math.tanh %40 : vector<16x64xf32>
    %42 = arith.mulf %36, %41 : vector<16x64xf32>
    %c0_17 = arith.constant 0 : index
    %c0_18 = arith.constant 0 : index
    %43 = vector.load %arg13[%c0_17, %c0_18] : memref<16x64xf32, #tpu.memory_space<vmem>>, vector<16x64xf32>
    tpu.vector_store %arg13[%c0_17, %c0_18], %40 {strides = array<i32>} : memref<16x64xf32, #tpu.memory_space<vmem>>, vector<16x64xf32>,
    %c0_19 = arith.constant 0 : index
    %c0_20 = arith.constant 0 : index
    %44 = vector.load %arg12[%c0_19, %c0_20] : memref<16x64xf32, #tpu.memory_space<vmem>>, vector<16x64xf32>
    tpu.vector_store %arg12[%c0_19, %c0_20], %42 {strides = array<i32>} : memref<16x64xf32, #tpu.memory_space<vmem>>, vector<16x64xf32>,
    %45 = arith.truncf %42 : vector<16x64xf32> to vector<16x64xbf16>
    %46 = arith.index_cast %c0_i32_1 : i32 to index
    %c0_21 = arith.constant 0 : index
    %c0_22 = arith.constant 0 : index
    %47 = vector.load %arg10[%46, %c0_21, %c0_22] : memref<8x16x64xbf16, #tpu.memory_space<vmem>>, vector<1x16x64xbf16>
    %48 = vector.shape_cast %47 : vector<1x16x64xbf16> to vector<16x64xbf16>
    %49 = vector.shape_cast %45 : vector<16x64xbf16> to vector<1x16x64xbf16>
    tpu.vector_store %arg10[%46, %c0_21, %c0_22], %49 {strides = array<i32>} : memref<8x16x64xbf16, #tpu.memory_space<vmem>>, vector<1x16x64xbf16>,
    %c7_i32 = arith.constant 7 : i32
    %50 = arith.subi %c7_i32, %c0_i32_1 : i32
    %51 = arith.index_cast %50 : i32 to index
    %c0_23 = arith.constant 0 : index
    %c0_24 = arith.constant 0 : index
    %52 = vector.load %arg3[%51, %c0_23, %c0_24] : memref<8x16x16xf32, #tpu.memory_space<vmem>>, vector<1x16x16xf32>
    %53 = vector.shape_cast %52 : vector<1x16x16xf32> to vector<16x16xf32>
    %54 = arith.truncf %53 : vector<16x16xf32> to vector<16x16xbf16>
    %c0_25 = arith.constant 0 : index
    %c0_26 = arith.constant 0 : index
    %55 = vector.load %arg5[%c0_25, %c0_26] : memref<16x256xbf16, #tpu.memory_space<vmem>>, vector<16x256xbf16>
    %cst_27 = arith.constant dense<0.000000e+00> : vector<16x256xf32>
    %56 = tpu.matmul %54, %55, %cst_27 {dimension_numbers = #tpu.dot_dimension_numbers<[1], [0], [0], [1], [0, 0, 1, 1], [], []>} : vector<16x16xbf16>, vector<16x256xbf16>, vector<16x256xf32> -> vector<16x256xf32>
    %c0_28 = arith.constant 0 : index
    %c0_29 = arith.constant 0 : index
    %57 = vector.load %arg14[%c0_28, %c0_29] : memref<16x64xf32, #tpu.memory_space<vmem>>, vector<16x64xf32>
    %58 = arith.truncf %57 : vector<16x64xf32> to vector<16x64xbf16>
    %c0_30 = arith.constant 0 : index
    %c0_31 = arith.constant 0 : index
    %59 = vector.load %arg7[%c0_30, %c0_31] : memref<64x256xbf16, #tpu.memory_space<vmem>>, vector<64x256xbf16>
    %cst_32 = arith.constant dense<0.000000e+00> : vector<16x256xf32>
    %60 = tpu.matmul %58, %59, %cst_32 {dimension_numbers = #tpu.dot_dimension_numbers<[1], [0], [0], [1], [0, 0, 1, 1], [], []>} : vector<16x64xbf16>, vector<64x256xbf16>, vector<16x256xf32> -> vector<16x256xf32>
    %61 = arith.addf %56, %60 : vector<16x256xf32>
    %c0_33 = arith.constant 0 : index
    %c0_34 = arith.constant 0 : index
    %62 = vector.load %arg9[%c0_33, %c0_34] : memref<1x256xf32, #tpu.memory_space<vmem>>, vector<1x256xf32>
    %63 = vector.broadcast %62 : vector<1x256xf32> to vector<16x256xf32>
    %64 = arith.addf %61, %63 : vector<16x256xf32>
    %65 = vector.extract_strided_slice %64 {offsets = [0, 0], sizes = [16, 64], strides = [1, 1]} : vector<16x256xf32> to vector<16x64xf32>
    %66 = arith.negf %65 : vector<16x64xf32>
    %67 = math.exp %66 : vector<16x64xf32>
    %cst_35 = arith.constant 1.000000e+00 : f32
    %68 = vector.broadcast %cst_35 : f32 to vector<16x64xf32>
    %69 = arith.addf %68, %67 : vector<16x64xf32>
    %70 = arith.divf %68, %69 : vector<16x64xf32>
    %71 = vector.extract_strided_slice %64 {offsets = [0, 64], sizes = [16, 64], strides = [1, 1]} : vector<16x256xf32> to vector<16x64xf32>
    %72 = arith.negf %71 : vector<16x64xf32>
    %73 = math.exp %72 : vector<16x64xf32>
    %cst_36 = arith.constant 1.000000e+00 : f32
    %74 = vector.broadcast %cst_36 : f32 to vector<16x64xf32>
    %75 = arith.addf %74, %73 : vector<16x64xf32>
    %76 = arith.divf %74, %75 : vector<16x64xf32>
    %77 = vector.extract_strided_slice %64 {offsets = [0, 128], sizes = [16, 64], strides = [1, 1]} : vector<16x256xf32> to vector<16x64xf32>
    %78 = math.tanh %77 : vector<16x64xf32>
    %79 = vector.extract_strided_slice %64 {offsets = [0, 192], sizes = [16, 64], strides = [1, 1]} : vector<16x256xf32> to vector<16x64xf32>
    %80 = arith.negf %79 : vector<16x64xf32>
    %81 = math.exp %80 : vector<16x64xf32>
    %cst_37 = arith.constant 1.000000e+00 : f32
    %82 = vector.broadcast %cst_37 : f32 to vector<16x64xf32>
    %83 = arith.addf %82, %81 : vector<16x64xf32>
    %84 = arith.divf %82, %83 : vector<16x64xf32>
    %c0_38 = arith.constant 0 : index
    %c0_39 = arith.constant 0 : index
    %85 = vector.load %arg15[%c0_38, %c0_39] : memref<16x64xf32, #tpu.memory_space<vmem>>, vector<16x64xf32>
    %86 = arith.mulf %76, %85 : vector<16x64xf32>
    %87 = arith.mulf %70, %78 : vector<16x64xf32>
    %88 = arith.addf %86, %87 : vector<16x64xf32>
    %89 = math.tanh %88 : vector<16x64xf32>
    %90 = arith.mulf %84, %89 : vector<16x64xf32>
    %c0_40 = arith.constant 0 : index
    %c0_41 = arith.constant 0 : index
    %91 = vector.load %arg15[%c0_40, %c0_41] : memref<16x64xf32, #tpu.memory_space<vmem>>, vector<16x64xf32>
    tpu.vector_store %arg15[%c0_40, %c0_41], %88 {strides = array<i32>} : memref<16x64xf32, #tpu.memory_space<vmem>>, vector<16x64xf32>,
    %c0_42 = arith.constant 0 : index
    %c0_43 = arith.constant 0 : index
    %92 = vector.load %arg14[%c0_42, %c0_43] : memref<16x64xf32, #tpu.memory_space<vmem>>, vector<16x64xf32>
    tpu.vector_store %arg14[%c0_42, %c0_43], %90 {strides = array<i32>} : memref<16x64xf32, #tpu.memory_space<vmem>>, vector<16x64xf32>,
    %93 = arith.truncf %90 : vector<16x64xf32> to vector<16x64xbf16>
    %94 = arith.index_cast %50 : i32 to index
    %c0_44 = arith.constant 0 : index
    %c0_45 = arith.constant 0 : index
    %95 = vector.load %arg11[%94, %c0_44, %c0_45] : memref<8x16x64xbf16, #tpu.memory_space<vmem>>, vector<1x16x64xbf16>
    %96 = vector.shape_cast %95 : vector<1x16x64xbf16> to vector<16x64xbf16>
    %97 = vector.shape_cast %93 : vector<16x64xbf16> to vector<1x16x64xbf16>
    tpu.vector_store %arg11[%94, %c0_44, %c0_45], %97 {strides = array<i32>} : memref<8x16x64xbf16, #tpu.memory_space<vmem>>, vector<1x16x64xbf16>,
    %c1_i32 = arith.constant 1 : i32
    %98 = arith.index_cast %c1_i32 : i32 to index
    %c0_46 = arith.constant 0 : index
    %c0_47 = arith.constant 0 : index
    %99 = vector.load %arg2[%98, %c0_46, %c0_47] : memref<8x16x16xf32, #tpu.memory_space<vmem>>, vector<1x16x16xf32>
    %100 = vector.shape_cast %99 : vector<1x16x16xf32> to vector<16x16xf32>
    %101 = arith.truncf %100 : vector<16x16xf32> to vector<16x16xbf16>
    %c0_48 = arith.constant 0 : index
    %c0_49 = arith.constant 0 : index
    %102 = vector.load %arg4[%c0_48, %c0_49] : memref<16x256xbf16, #tpu.memory_space<vmem>>, vector<16x256xbf16>
    %cst_50 = arith.constant dense<0.000000e+00> : vector<16x256xf32>
    %103 = tpu.matmul %101, %102, %cst_50 {dimension_numbers = #tpu.dot_dimension_numbers<[1], [0], [0], [1], [0, 0, 1, 1], [], []>} : vector<16x16xbf16>, vector<16x256xbf16>, vector<16x256xf32> -> vector<16x256xf32>
    %c0_51 = arith.constant 0 : index
    %c0_52 = arith.constant 0 : index
    %104 = vector.load %arg12[%c0_51, %c0_52] : memref<16x64xf32, #tpu.memory_space<vmem>>, vector<16x64xf32>
    %105 = arith.truncf %104 : vector<16x64xf32> to vector<16x64xbf16>
    %c0_53 = arith.constant 0 : index
    %c0_54 = arith.constant 0 : index
    %106 = vector.load %arg6[%c0_53, %c0_54] : memref<64x256xbf16, #tpu.memory_space<vmem>>, vector<64x256xbf16>
    %cst_55 = arith.constant dense<0.000000e+00> : vector<16x256xf32>
    %107 = tpu.matmul %105, %106, %cst_55 {dimension_numbers = #tpu.dot_dimension_numbers<[1], [0], [0], [1], [0, 0, 1, 1], [], []>} : vector<16x64xbf16>, vector<64x256xbf16>, vector<16x256xf32> -> vector<16x256xf32>
    %108 = arith.addf %103, %107 : vector<16x256xf32>
    %c0_56 = arith.constant 0 : index
    %c0_57 = arith.constant 0 : index
    %109 = vector.load %arg8[%c0_56, %c0_57] : memref<1x256xf32, #tpu.memory_space<vmem>>, vector<1x256xf32>
    %110 = vector.broadcast %109 : vector<1x256xf32> to vector<16x256xf32>
    %111 = arith.addf %108, %110 : vector<16x256xf32>
    %112 = vector.extract_strided_slice %111 {offsets = [0, 0], sizes = [16, 64], strides = [1, 1]} : vector<16x256xf32> to vector<16x64xf32>
    %113 = arith.negf %112 : vector<16x64xf32>
    %114 = math.exp %113 : vector<16x64xf32>
    %cst_58 = arith.constant 1.000000e+00 : f32
    %115 = vector.broadcast %cst_58 : f32 to vector<16x64xf32>
    %116 = arith.addf %115, %114 : vector<16x64xf32>
    %117 = arith.divf %115, %116 : vector<16x64xf32>
    %118 = vector.extract_strided_slice %111 {offsets = [0, 64], sizes = [16, 64], strides = [1, 1]} : vector<16x256xf32> to vector<16x64xf32>
    %119 = arith.negf %118 : vector<16x64xf32>
    %120 = math.exp %119 : vector<16x64xf32>
    %cst_59 = arith.constant 1.000000e+00 : f32
    %121 = vector.broadcast %cst_59 : f32 to vector<16x64xf32>
    %122 = arith.addf %121, %120 : vector<16x64xf32>
    %123 = arith.divf %121, %122 : vector<16x64xf32>
    %124 = vector.extract_strided_slice %111 {offsets = [0, 128], sizes = [16, 64], strides = [1, 1]} : vector<16x256xf32> to vector<16x64xf32>
    %125 = math.tanh %124 : vector<16x64xf32>
    %126 = vector.extract_strided_slice %111 {offsets = [0, 192], sizes = [16, 64], strides = [1, 1]} : vector<16x256xf32> to vector<16x64xf32>
    %127 = arith.negf %126 : vector<16x64xf32>
    %128 = math.exp %127 : vector<16x64xf32>
    %cst_60 = arith.constant 1.000000e+00 : f32
    %129 = vector.broadcast %cst_60 : f32 to vector<16x64xf32>
    %130 = arith.addf %129, %128 : vector<16x64xf32>
    %131 = arith.divf %129, %130 : vector<16x64xf32>
    %c0_61 = arith.constant 0 : index
    %c0_62 = arith.constant 0 : index
    %132 = vector.load %arg13[%c0_61, %c0_62] : memref<16x64xf32, #tpu.memory_space<vmem>>, vector<16x64xf32>
    %133 = arith.mulf %123, %132 : vector<16x64xf32>
    %134 = arith.mulf %117, %125 : vector<16x64xf32>
    %135 = arith.addf %133, %134 : vector<16x64xf32>
    %136 = math.tanh %135 : vector<16x64xf32>
    %137 = arith.mulf %131, %136 : vector<16x64xf32>
    %c0_63 = arith.constant 0 : index
    %c0_64 = arith.constant 0 : index
    %138 = vector.load %arg13[%c0_63, %c0_64] : memref<16x64xf32, #tpu.memory_space<vmem>>, vector<16x64xf32>
    tpu.vector_store %arg13[%c0_63, %c0_64], %135 {strides = array<i32>} : memref<16x64xf32, #tpu.memory_space<vmem>>, vector<16x64xf32>,
    %c0_65 = arith.constant 0 : index
    %c0_66 = arith.constant 0 : index
    %139 = vector.load %arg12[%c0_65, %c0_66] : memref<16x64xf32, #tpu.memory_space<vmem>>, vector<16x64xf32>
    tpu.vector_store %arg12[%c0_65, %c0_66], %137 {strides = array<i32>} : memref<16x64xf32, #tpu.memory_space<vmem>>, vector<16x64xf32>,
    %140 = arith.truncf %137 : vector<16x64xf32> to vector<16x64xbf16>
    %141 = arith.index_cast %c1_i32 : i32 to index
    %c0_67 = arith.constant 0 : index
    %c0_68 = arith.constant 0 : index
    %142 = vector.load %arg10[%141, %c0_67, %c0_68] : memref<8x16x64xbf16, #tpu.memory_space<vmem>>, vector<1x16x64xbf16>
    %143 = vector.shape_cast %142 : vector<1x16x64xbf16> to vector<16x64xbf16>
    %144 = vector.shape_cast %140 : vector<16x64xbf16> to vector<1x16x64xbf16>
    tpu.vector_store %arg10[%141, %c0_67, %c0_68], %144 {strides = array<i32>} : memref<8x16x64xbf16, #tpu.memory_space<vmem>>, vector<1x16x64xbf16>,
    %c7_i32_69 = arith.constant 7 : i32
    %145 = arith.subi %c7_i32_69, %c1_i32 : i32
    %146 = arith.index_cast %145 : i32 to index
    %c0_70 = arith.constant 0 : index
    %c0_71 = arith.constant 0 : index
    %147 = vector.load %arg3[%146, %c0_70, %c0_71] : memref<8x16x16xf32, #tpu.memory_space<vmem>>, vector<1x16x16xf32>
    %148 = vector.shape_cast %147 : vector<1x16x16xf32> to vector<16x16xf32>
    %149 = arith.truncf %148 : vector<16x16xf32> to vector<16x16xbf16>
    %c0_72 = arith.constant 0 : index
    %c0_73 = arith.constant 0 : index
    %150 = vector.load %arg5[%c0_72, %c0_73] : memref<16x256xbf16, #tpu.memory_space<vmem>>, vector<16x256xbf16>
    %cst_74 = arith.constant dense<0.000000e+00> : vector<16x256xf32>
    %151 = tpu.matmul %149, %150, %cst_74 {dimension_numbers = #tpu.dot_dimension_numbers<[1], [0], [0], [1], [0, 0, 1, 1], [], []>} : vector<16x16xbf16>, vector<16x256xbf16>, vector<16x256xf32> -> vector<16x256xf32>
    %c0_75 = arith.constant 0 : index
    %c0_76 = arith.constant 0 : index
    %152 = vector.load %arg14[%c0_75, %c0_76] : memref<16x64xf32, #tpu.memory_space<vmem>>, vector<16x64xf32>
    %153 = arith.truncf %152 : vector<16x64xf32> to vector<16x64xbf16>
    %c0_77 = arith.constant 0 : index
    %c0_78 = arith.constant 0 : index
    %154 = vector.load %arg7[%c0_77, %c0_78] : memref<64x256xbf16, #tpu.memory_space<vmem>>, vector<64x256xbf16>
    %cst_79 = arith.constant dense<0.000000e+00> : vector<16x256xf32>
    %155 = tpu.matmul %153, %154, %cst_79 {dimension_numbers = #tpu.dot_dimension_numbers<[1], [0], [0], [1], [0, 0, 1, 1], [], []>} : vector<16x64xbf16>, vector<64x256xbf16>, vector<16x256xf32> -> vector<16x256xf32>
    %156 = arith.addf %151, %155 : vector<16x256xf32>
    %c0_80 = arith.constant 0 : index
    %c0_81 = arith.constant 0 : index
    %157 = vector.load %arg9[%c0_80, %c0_81] : memref<1x256xf32, #tpu.memory_space<vmem>>, vector<1x256xf32>
    %158 = vector.broadcast %157 : vector<1x256xf32> to vector<16x256xf32>
    %159 = arith.addf %156, %158 : vector<16x256xf32>
    %160 = vector.extract_strided_slice %159 {offsets = [0, 0], sizes = [16, 64], strides = [1, 1]} : vector<16x256xf32> to vector<16x64xf32>
    %161 = arith.negf %160 : vector<16x64xf32>
    %162 = math.exp %161 : vector<16x64xf32>
    %cst_82 = arith.constant 1.000000e+00 : f32
    %163 = vector.broadcast %cst_82 : f32 to vector<16x64xf32>
    %164 = arith.addf %163, %162 : vector<16x64xf32>
    %165 = arith.divf %163, %164 : vector<16x64xf32>
    %166 = vector.extract_strided_slice %159 {offsets = [0, 64], sizes = [16, 64], strides = [1, 1]} : vector<16x256xf32> to vector<16x64xf32>
    %167 = arith.negf %166 : vector<16x64xf32>
    %168 = math.exp %167 : vector<16x64xf32>
    %cst_83 = arith.constant 1.000000e+00 : f32
    %169 = vector.broadcast %cst_83 : f32 to vector<16x64xf32>
    %170 = arith.addf %169, %168 : vector<16x64xf32>
    %171 = arith.divf %169, %170 : vector<16x64xf32>
    %172 = vector.extract_strided_slice %159 {offsets = [0, 128], sizes = [16, 64], strides = [1, 1]} : vector<16x256xf32> to vector<16x64xf32>
    %173 = math.tanh %172 : vector<16x64xf32>
    %174 = vector.extract_strided_slice %159 {offsets = [0, 192], sizes = [16, 64], strides = [1, 1]} : vector<16x256xf32> to vector<16x64xf32>
    %175 = arith.negf %174 : vector<16x64xf32>
    %176 = math.exp %175 : vector<16x64xf32>
    %cst_84 = arith.constant 1.000000e+00 : f32
    %177 = vector.broadcast %cst_84 : f32 to vector<16x64xf32>
    %178 = arith.addf %177, %176 : vector<16x64xf32>
    %179 = arith.divf %177, %178 : vector<16x64xf32>
    %c0_85 = arith.constant 0 : index
    %c0_86 = arith.constant 0 : index
    %180 = vector.load %arg15[%c0_85, %c0_86] : memref<16x64xf32, #tpu.memory_space<vmem>>, vector<16x64xf32>
    %181 = arith.mulf %171, %180 : vector<16x64xf32>
    %182 = arith.mulf %165, %173 : vector<16x64xf32>
    %183 = arith.addf %181, %182 : vector<16x64xf32>
    %184 = math.tanh %183 : vector<16x64xf32>
    %185 = arith.mulf %179, %184 : vector<16x64xf32>
    %c0_87 = arith.constant 0 : index
    %c0_88 = arith.constant 0 : index
    %186 = vector.load %arg15[%c0_87, %c0_88] : memref<16x64xf32, #tpu.memory_space<vmem>>, vector<16x64xf32>
    tpu.vector_store %arg15[%c0_87, %c0_88], %183 {strides = array<i32>} : memref<16x64xf32, #tpu.memory_space<vmem>>, vector<16x64xf32>,
    %c0_89 = arith.constant 0 : index
    %c0_90 = arith.constant 0 : index
    %187 = vector.load %arg14[%c0_89, %c0_90] : memref<16x64xf32, #tpu.memory_space<vmem>>, vector<16x64xf32>
    tpu.vector_store %arg14[%c0_89, %c0_90], %185 {strides = array<i32>} : memref<16x64xf32, #tpu.memory_space<vmem>>, vector<16x64xf32>,
    %188 = arith.truncf %185 : vector<16x64xf32> to vector<16x64xbf16>
    %189 = arith.index_cast %145 : i32 to index
    %c0_91 = arith.constant 0 : index
    %c0_92 = arith.constant 0 : index
    %190 = vector.load %arg11[%189, %c0_91, %c0_92] : memref<8x16x64xbf16, #tpu.memory_space<vmem>>, vector<1x16x64xbf16>
    %191 = vector.shape_cast %190 : vector<1x16x64xbf16> to vector<16x64xbf16>
    %192 = vector.shape_cast %188 : vector<16x64xbf16> to vector<1x16x64xbf16>
    tpu.vector_store %arg11[%189, %c0_91, %c0_92], %192 {strides = array<i32>} : memref<8x16x64xbf16, #tpu.memory_space<vmem>>, vector<1x16x64xbf16>,
    %c2_i32 = arith.constant 2 : i32
    %193 = arith.index_cast %c2_i32 : i32 to index
    %c0_93 = arith.constant 0 : index
    %c0_94 = arith.constant 0 : index
    %194 = vector.load %arg2[%193, %c0_93, %c0_94] : memref<8x16x16xf32, #tpu.memory_space<vmem>>, vector<1x16x16xf32>
    %195 = vector.shape_cast %194 : vector<1x16x16xf32> to vector<16x16xf32>
    %196 = arith.truncf %195 : vector<16x16xf32> to vector<16x16xbf16>
    %c0_95 = arith.constant 0 : index
    %c0_96 = arith.constant 0 : index
    %197 = vector.load %arg4[%c0_95, %c0_96] : memref<16x256xbf16, #tpu.memory_space<vmem>>, vector<16x256xbf16>
    %cst_97 = arith.constant dense<0.000000e+00> : vector<16x256xf32>
    %198 = tpu.matmul %196, %197, %cst_97 {dimension_numbers = #tpu.dot_dimension_numbers<[1], [0], [0], [1], [0, 0, 1, 1], [], []>} : vector<16x16xbf16>, vector<16x256xbf16>, vector<16x256xf32> -> vector<16x256xf32>
    %c0_98 = arith.constant 0 : index
    %c0_99 = arith.constant 0 : index
    %199 = vector.load %arg12[%c0_98, %c0_99] : memref<16x64xf32, #tpu.memory_space<vmem>>, vector<16x64xf32>
    %200 = arith.truncf %199 : vector<16x64xf32> to vector<16x64xbf16>
    %c0_100 = arith.constant 0 : index
    %c0_101 = arith.constant 0 : index
    %201 = vector.load %arg6[%c0_100, %c0_101] : memref<64x256xbf16, #tpu.memory_space<vmem>>, vector<64x256xbf16>
    %cst_102 = arith.constant dense<0.000000e+00> : vector<16x256xf32>
    %202 = tpu.matmul %200, %201, %cst_102 {dimension_numbers = #tpu.dot_dimension_numbers<[1], [0], [0], [1], [0, 0, 1, 1], [], []>} : vector<16x64xbf16>, vector<64x256xbf16>, vector<16x256xf32> -> vector<16x256xf32>
    %203 = arith.addf %198, %202 : vector<16x256xf32>
    %c0_103 = arith.constant 0 : index
    %c0_104 = arith.constant 0 : index
    %204 = vector.load %arg8[%c0_103, %c0_104] : memref<1x256xf32, #tpu.memory_space<vmem>>, vector<1x256xf32>
    %205 = vector.broadcast %204 : vector<1x256xf32> to vector<16x256xf32>
    %206 = arith.addf %203, %205 : vector<16x256xf32>
    %207 = vector.extract_strided_slice %206 {offsets = [0, 0], sizes = [16, 64], strides = [1, 1]} : vector<16x256xf32> to vector<16x64xf32>
    %208 = arith.negf %207 : vector<16x64xf32>
    %209 = math.exp %208 : vector<16x64xf32>
    %cst_105 = arith.constant 1.000000e+00 : f32
    %210 = vector.broadcast %cst_105 : f32 to vector<16x64xf32>
    %211 = arith.addf %210, %209 : vector<16x64xf32>
    %212 = arith.divf %210, %211 : vector<16x64xf32>
    %213 = vector.extract_strided_slice %206 {offsets = [0, 64], sizes = [16, 64], strides = [1, 1]} : vector<16x256xf32> to vector<16x64xf32>
    %214 = arith.negf %213 : vector<16x64xf32>
    %215 = math.exp %214 : vector<16x64xf32>
    %cst_106 = arith.constant 1.000000e+00 : f32
    %216 = vector.broadcast %cst_106 : f32 to vector<16x64xf32>
    %217 = arith.addf %216, %215 : vector<16x64xf32>
    %218 = arith.divf %216, %217 : vector<16x64xf32>
    %219 = vector.extract_strided_slice %206 {offsets = [0, 128], sizes = [16, 64], strides = [1, 1]} : vector<16x256xf32> to vector<16x64xf32>
    %220 = math.tanh %219 : vector<16x64xf32>
    %221 = vector.extract_strided_slice %206 {offsets = [0, 192], sizes = [16, 64], strides = [1, 1]} : vector<16x256xf32> to vector<16x64xf32>
    %222 = arith.negf %221 : vector<16x64xf32>
    %223 = math.exp %222 : vector<16x64xf32>
    %cst_107 = arith.constant 1.000000e+00 : f32
    %224 = vector.broadcast %cst_107 : f32 to vector<16x64xf32>
    %225 = arith.addf %224, %223 : vector<16x64xf32>
    %226 = arith.divf %224, %225 : vector<16x64xf32>
    %c0_108 = arith.constant 0 : index
    %c0_109 = arith.constant 0 : index
    %227 = vector.load %arg13[%c0_108, %c0_109] : memref<16x64xf32, #tpu.memory_space<vmem>>, vector<16x64xf32>
    %228 = arith.mulf %218, %227 : vector<16x64xf32>
    %229 = arith.mulf %212, %220 : vector<16x64xf32>
    %230 = arith.addf %228, %229 : vector<16x64xf32>
    %231 = math.tanh %230 : vector<16x64xf32>
    %232 = arith.mulf %226, %231 : vector<16x64xf32>
    %c0_110 = arith.constant 0 : index
    %c0_111 = arith.constant 0 : index
    %233 = vector.load %arg13[%c0_110, %c0_111] : memref<16x64xf32, #tpu.memory_space<vmem>>, vector<16x64xf32>
    tpu.vector_store %arg13[%c0_110, %c0_111], %230 {strides = array<i32>} : memref<16x64xf32, #tpu.memory_space<vmem>>, vector<16x64xf32>,
    %c0_112 = arith.constant 0 : index
    %c0_113 = arith.constant 0 : index
    %234 = vector.load %arg12[%c0_112, %c0_113] : memref<16x64xf32, #tpu.memory_space<vmem>>, vector<16x64xf32>
    tpu.vector_store %arg12[%c0_112, %c0_113], %232 {strides = array<i32>} : memref<16x64xf32, #tpu.memory_space<vmem>>, vector<16x64xf32>,
    %235 = arith.truncf %232 : vector<16x64xf32> to vector<16x64xbf16>
    %236 = arith.index_cast %c2_i32 : i32 to index
    %c0_114 = arith.constant 0 : index
    %c0_115 = arith.constant 0 : index
    %237 = vector.load %arg10[%236, %c0_114, %c0_115] : memref<8x16x64xbf16, #tpu.memory_space<vmem>>, vector<1x16x64xbf16>
    %238 = vector.shape_cast %237 : vector<1x16x64xbf16> to vector<16x64xbf16>
    %239 = vector.shape_cast %235 : vector<16x64xbf16> to vector<1x16x64xbf16>
    tpu.vector_store %arg10[%236, %c0_114, %c0_115], %239 {strides = array<i32>} : memref<8x16x64xbf16, #tpu.memory_space<vmem>>, vector<1x16x64xbf16>,
    %c7_i32_116 = arith.constant 7 : i32
    %240 = arith.subi %c7_i32_116, %c2_i32 : i32
    %241 = arith.index_cast %240 : i32 to index
    %c0_117 = arith.constant 0 : index
    %c0_118 = arith.constant 0 : index
    %242 = vector.load %arg3[%241, %c0_117, %c0_118] : memref<8x16x16xf32, #tpu.memory_space<vmem>>, vector<1x16x16xf32>
    %243 = vector.shape_cast %242 : vector<1x16x16xf32> to vector<16x16xf32>
    %244 = arith.truncf %243 : vector<16x16xf32> to vector<16x16xbf16>
    %c0_119 = arith.constant 0 : index
    %c0_120 = arith.constant 0 : index
    %245 = vector.load %arg5[%c0_119, %c0_120] : memref<16x256xbf16, #tpu.memory_space<vmem>>, vector<16x256xbf16>
    %cst_121 = arith.constant dense<0.000000e+00> : vector<16x256xf32>
    %246 = tpu.matmul %244, %245, %cst_121 {dimension_numbers = #tpu.dot_dimension_numbers<[1], [0], [0], [1], [0, 0, 1, 1], [], []>} : vector<16x16xbf16>, vector<16x256xbf16>, vector<16x256xf32> -> vector<16x256xf32>
    %c0_122 = arith.constant 0 : index
    %c0_123 = arith.constant 0 : index
    %247 = vector.load %arg14[%c0_122, %c0_123] : memref<16x64xf32, #tpu.memory_space<vmem>>, vector<16x64xf32>
    %248 = arith.truncf %247 : vector<16x64xf32> to vector<16x64xbf16>
    %c0_124 = arith.constant 0 : index
    %c0_125 = arith.constant 0 : index
    %249 = vector.load %arg7[%c0_124, %c0_125] : memref<64x256xbf16, #tpu.memory_space<vmem>>, vector<64x256xbf16>
    %cst_126 = arith.constant dense<0.000000e+00> : vector<16x256xf32>
    %250 = tpu.matmul %248, %249, %cst_126 {dimension_numbers = #tpu.dot_dimension_numbers<[1], [0], [0], [1], [0, 0, 1, 1], [], []>} : vector<16x64xbf16>, vector<64x256xbf16>, vector<16x256xf32> -> vector<16x256xf32>
    %251 = arith.addf %246, %250 : vector<16x256xf32>
    %c0_127 = arith.constant 0 : index
    %c0_128 = arith.constant 0 : index
    %252 = vector.load %arg9[%c0_127, %c0_128] : memref<1x256xf32, #tpu.memory_space<vmem>>, vector<1x256xf32>
    %253 = vector.broadcast %252 : vector<1x256xf32> to vector<16x256xf32>
    %254 = arith.addf %251, %253 : vector<16x256xf32>
    %255 = vector.extract_strided_slice %254 {offsets = [0, 0], sizes = [16, 64], strides = [1, 1]} : vector<16x256xf32> to vector<16x64xf32>
    %256 = arith.negf %255 : vector<16x64xf32>
    %257 = math.exp %256 : vector<16x64xf32>
    %cst_129 = arith.constant 1.000000e+00 : f32
    %258 = vector.broadcast %cst_129 : f32 to vector<16x64xf32>
    %259 = arith.addf %258, %257 : vector<16x64xf32>
    %260 = arith.divf %258, %259 : vector<16x64xf32>
    %261 = vector.extract_strided_slice %254 {offsets = [0, 64], sizes = [16, 64], strides = [1, 1]} : vector<16x256xf32> to vector<16x64xf32>
    %262 = arith.negf %261 : vector<16x64xf32>
    %263 = math.exp %262 : vector<16x64xf32>
    %cst_130 = arith.constant 1.000000e+00 : f32
    %264 = vector.broadcast %cst_130 : f32 to vector<16x64xf32>
    %265 = arith.addf %264, %263 : vector<16x64xf32>
    %266 = arith.divf %264, %265 : vector<16x64xf32>
    %267 = vector.extract_strided_slice %254 {offsets = [0, 128], sizes = [16, 64], strides = [1, 1]} : vector<16x256xf32> to vector<16x64xf32>
    %268 = math.tanh %267 : vector<16x64xf32>
    %269 = vector.extract_strided_slice %254 {offsets = [0, 192], sizes = [16, 64], strides = [1, 1]} : vector<16x256xf32> to vector<16x64xf32>
    %270 = arith.negf %269 : vector<16x64xf32>
    %271 = math.exp %270 : vector<16x64xf32>
    %cst_131 = arith.constant 1.000000e+00 : f32
    %272 = vector.broadcast %cst_131 : f32 to vector<16x64xf32>
    %273 = arith.addf %272, %271 : vector<16x64xf32>
    %274 = arith.divf %272, %273 : vector<16x64xf32>
    %c0_132 = arith.constant 0 : index
    %c0_133 = arith.constant 0 : index
    %275 = vector.load %arg15[%c0_132, %c0_133] : memref<16x64xf32, #tpu.memory_space<vmem>>, vector<16x64xf32>
    %276 = arith.mulf %266, %275 : vector<16x64xf32>
    %277 = arith.mulf %260, %268 : vector<16x64xf32>
    %278 = arith.addf %276, %277 : vector<16x64xf32>
    %279 = math.tanh %278 : vector<16x64xf32>
    %280 = arith.mulf %274, %279 : vector<16x64xf32>
    %c0_134 = arith.constant 0 : index
    %c0_135 = arith.constant 0 : index
    %281 = vector.load %arg15[%c0_134, %c0_135] : memref<16x64xf32, #tpu.memory_space<vmem>>, vector<16x64xf32>
    tpu.vector_store %arg15[%c0_134, %c0_135], %278 {strides = array<i32>} : memref<16x64xf32, #tpu.memory_space<vmem>>, vector<16x64xf32>,
    %c0_136 = arith.constant 0 : index
    %c0_137 = arith.constant 0 : index
    %282 = vector.load %arg14[%c0_136, %c0_137] : memref<16x64xf32, #tpu.memory_space<vmem>>, vector<16x64xf32>
    tpu.vector_store %arg14[%c0_136, %c0_137], %280 {strides = array<i32>} : memref<16x64xf32, #tpu.memory_space<vmem>>, vector<16x64xf32>,
    %283 = arith.truncf %280 : vector<16x64xf32> to vector<16x64xbf16>
    %284 = arith.index_cast %240 : i32 to index
    %c0_138 = arith.constant 0 : index
    %c0_139 = arith.constant 0 : index
    %285 = vector.load %arg11[%284, %c0_138, %c0_139] : memref<8x16x64xbf16, #tpu.memory_space<vmem>>, vector<1x16x64xbf16>
    %286 = vector.shape_cast %285 : vector<1x16x64xbf16> to vector<16x64xbf16>
    %287 = vector.shape_cast %283 : vector<16x64xbf16> to vector<1x16x64xbf16>
    tpu.vector_store %arg11[%284, %c0_138, %c0_139], %287 {strides = array<i32>} : memref<8x16x64xbf16, #tpu.memory_space<vmem>>, vector<1x16x64xbf16>,
    %c3_i32 = arith.constant 3 : i32
    %288 = arith.index_cast %c3_i32 : i32 to index
    %c0_140 = arith.constant 0 : index
    %c0_141 = arith.constant 0 : index
    %289 = vector.load %arg2[%288, %c0_140, %c0_141] : memref<8x16x16xf32, #tpu.memory_space<vmem>>, vector<1x16x16xf32>
    %290 = vector.shape_cast %289 : vector<1x16x16xf32> to vector<16x16xf32>
    %291 = arith.truncf %290 : vector<16x16xf32> to vector<16x16xbf16>
    %c0_142 = arith.constant 0 : index
    %c0_143 = arith.constant 0 : index
    %292 = vector.load %arg4[%c0_142, %c0_143] : memref<16x256xbf16, #tpu.memory_space<vmem>>, vector<16x256xbf16>
    %cst_144 = arith.constant dense<0.000000e+00> : vector<16x256xf32>
    %293 = tpu.matmul %291, %292, %cst_144 {dimension_numbers = #tpu.dot_dimension_numbers<[1], [0], [0], [1], [0, 0, 1, 1], [], []>} : vector<16x16xbf16>, vector<16x256xbf16>, vector<16x256xf32> -> vector<16x256xf32>
    %c0_145 = arith.constant 0 : index
    %c0_146 = arith.constant 0 : index
    %294 = vector.load %arg12[%c0_145, %c0_146] : memref<16x64xf32, #tpu.memory_space<vmem>>, vector<16x64xf32>
    %295 = arith.truncf %294 : vector<16x64xf32> to vector<16x64xbf16>
    %c0_147 = arith.constant 0 : index
    %c0_148 = arith.constant 0 : index
    %296 = vector.load %arg6[%c0_147, %c0_148] : memref<64x256xbf16, #tpu.memory_space<vmem>>, vector<64x256xbf16>
    %cst_149 = arith.constant dense<0.000000e+00> : vector<16x256xf32>
    %297 = tpu.matmul %295, %296, %cst_149 {dimension_numbers = #tpu.dot_dimension_numbers<[1], [0], [0], [1], [0, 0, 1, 1], [], []>} : vector<16x64xbf16>, vector<64x256xbf16>, vector<16x256xf32> -> vector<16x256xf32>
    %298 = arith.addf %293, %297 : vector<16x256xf32>
    %c0_150 = arith.constant 0 : index
    %c0_151 = arith.constant 0 : index
    %299 = vector.load %arg8[%c0_150, %c0_151] : memref<1x256xf32, #tpu.memory_space<vmem>>, vector<1x256xf32>
    %300 = vector.broadcast %299 : vector<1x256xf32> to vector<16x256xf32>
    %301 = arith.addf %298, %300 : vector<16x256xf32>
    %302 = vector.extract_strided_slice %301 {offsets = [0, 0], sizes = [16, 64], strides = [1, 1]} : vector<16x256xf32> to vector<16x64xf32>
    %303 = arith.negf %302 : vector<16x64xf32>
    %304 = math.exp %303 : vector<16x64xf32>
    %cst_152 = arith.constant 1.000000e+00 : f32
    %305 = vector.broadcast %cst_152 : f32 to vector<16x64xf32>
    %306 = arith.addf %305, %304 : vector<16x64xf32>
    %307 = arith.divf %305, %306 : vector<16x64xf32>
    %308 = vector.extract_strided_slice %301 {offsets = [0, 64], sizes = [16, 64], strides = [1, 1]} : vector<16x256xf32> to vector<16x64xf32>
    %309 = arith.negf %308 : vector<16x64xf32>
    %310 = math.exp %309 : vector<16x64xf32>
    %cst_153 = arith.constant 1.000000e+00 : f32
    %311 = vector.broadcast %cst_153 : f32 to vector<16x64xf32>
    %312 = arith.addf %311, %310 : vector<16x64xf32>
    %313 = arith.divf %311, %312 : vector<16x64xf32>
    %314 = vector.extract_strided_slice %301 {offsets = [0, 128], sizes = [16, 64], strides = [1, 1]} : vector<16x256xf32> to vector<16x64xf32>
    %315 = math.tanh %314 : vector<16x64xf32>
    %316 = vector.extract_strided_slice %301 {offsets = [0, 192], sizes = [16, 64], strides = [1, 1]} : vector<16x256xf32> to vector<16x64xf32>
    %317 = arith.negf %316 : vector<16x64xf32>
    %318 = math.exp %317 : vector<16x64xf32>
    %cst_154 = arith.constant 1.000000e+00 : f32
    %319 = vector.broadcast %cst_154 : f32 to vector<16x64xf32>
    %320 = arith.addf %319, %318 : vector<16x64xf32>
    %321 = arith.divf %319, %320 : vector<16x64xf32>
    %c0_155 = arith.constant 0 : index
    %c0_156 = arith.constant 0 : index
    %322 = vector.load %arg13[%c0_155, %c0_156] : memref<16x64xf32, #tpu.memory_space<vmem>>, vector<16x64xf32>
    %323 = arith.mulf %313, %322 : vector<16x64xf32>
    %324 = arith.mulf %307, %315 : vector<16x64xf32>
    %325 = arith.addf %323, %324 : vector<16x64xf32>
    %326 = math.tanh %325 : vector<16x64xf32>
    %327 = arith.mulf %321, %326 : vector<16x64xf32>
    %c0_157 = arith.constant 0 : index
    %c0_158 = arith.constant 0 : index
    %328 = vector.load %arg13[%c0_157, %c0_158] : memref<16x64xf32, #tpu.memory_space<vmem>>, vector<16x64xf32>
    tpu.vector_store %arg13[%c0_157, %c0_158], %325 {strides = array<i32>} : memref<16x64xf32, #tpu.memory_space<vmem>>, vector<16x64xf32>,
    %c0_159 = arith.constant 0 : index
    %c0_160 = arith.constant 0 : index
    %329 = vector.load %arg12[%c0_159, %c0_160] : memref<16x64xf32, #tpu.memory_space<vmem>>, vector<16x64xf32>
    tpu.vector_store %arg12[%c0_159, %c0_160], %327 {strides = array<i32>} : memref<16x64xf32, #tpu.memory_space<vmem>>, vector<16x64xf32>,
    %330 = arith.truncf %327 : vector<16x64xf32> to vector<16x64xbf16>
    %331 = arith.index_cast %c3_i32 : i32 to index
    %c0_161 = arith.constant 0 : index
    %c0_162 = arith.constant 0 : index
    %332 = vector.load %arg10[%331, %c0_161, %c0_162] : memref<8x16x64xbf16, #tpu.memory_space<vmem>>, vector<1x16x64xbf16>
    %333 = vector.shape_cast %332 : vector<1x16x64xbf16> to vector<16x64xbf16>
    %334 = vector.shape_cast %330 : vector<16x64xbf16> to vector<1x16x64xbf16>
    tpu.vector_store %arg10[%331, %c0_161, %c0_162], %334 {strides = array<i32>} : memref<8x16x64xbf16, #tpu.memory_space<vmem>>, vector<1x16x64xbf16>,
    %c7_i32_163 = arith.constant 7 : i32
    %335 = arith.subi %c7_i32_163, %c3_i32 : i32
    %336 = arith.index_cast %335 : i32 to index
    %c0_164 = arith.constant 0 : index
    %c0_165 = arith.constant 0 : index
    %337 = vector.load %arg3[%336, %c0_164, %c0_165] : memref<8x16x16xf32, #tpu.memory_space<vmem>>, vector<1x16x16xf32>
    %338 = vector.shape_cast %337 : vector<1x16x16xf32> to vector<16x16xf32>
    %339 = arith.truncf %338 : vector<16x16xf32> to vector<16x16xbf16>
    %c0_166 = arith.constant 0 : index
    %c0_167 = arith.constant 0 : index
    %340 = vector.load %arg5[%c0_166, %c0_167] : memref<16x256xbf16, #tpu.memory_space<vmem>>, vector<16x256xbf16>
    %cst_168 = arith.constant dense<0.000000e+00> : vector<16x256xf32>
    %341 = tpu.matmul %339, %340, %cst_168 {dimension_numbers = #tpu.dot_dimension_numbers<[1], [0], [0], [1], [0, 0, 1, 1], [], []>} : vector<16x16xbf16>, vector<16x256xbf16>, vector<16x256xf32> -> vector<16x256xf32>
    %c0_169 = arith.constant 0 : index
    %c0_170 = arith.constant 0 : index
    %342 = vector.load %arg14[%c0_169, %c0_170] : memref<16x64xf32, #tpu.memory_space<vmem>>, vector<16x64xf32>
    %343 = arith.truncf %342 : vector<16x64xf32> to vector<16x64xbf16>
    %c0_171 = arith.constant 0 : index
    %c0_172 = arith.constant 0 : index
    %344 = vector.load %arg7[%c0_171, %c0_172] : memref<64x256xbf16, #tpu.memory_space<vmem>>, vector<64x256xbf16>
    %cst_173 = arith.constant dense<0.000000e+00> : vector<16x256xf32>
    %345 = tpu.matmul %343, %344, %cst_173 {dimension_numbers = #tpu.dot_dimension_numbers<[1], [0], [0], [1], [0, 0, 1, 1], [], []>} : vector<16x64xbf16>, vector<64x256xbf16>, vector<16x256xf32> -> vector<16x256xf32>
    %346 = arith.addf %341, %345 : vector<16x256xf32>
    %c0_174 = arith.constant 0 : index
    %c0_175 = arith.constant 0 : index
    %347 = vector.load %arg9[%c0_174, %c0_175] : memref<1x256xf32, #tpu.memory_space<vmem>>, vector<1x256xf32>
    %348 = vector.broadcast %347 : vector<1x256xf32> to vector<16x256xf32>
    %349 = arith.addf %346, %348 : vector<16x256xf32>
    %350 = vector.extract_strided_slice %349 {offsets = [0, 0], sizes = [16, 64], strides = [1, 1]} : vector<16x256xf32> to vector<16x64xf32>
    %351 = arith.negf %350 : vector<16x64xf32>
    %352 = math.exp %351 : vector<16x64xf32>
    %cst_176 = arith.constant 1.000000e+00 : f32
    %353 = vector.broadcast %cst_176 : f32 to vector<16x64xf32>
    %354 = arith.addf %353, %352 : vector<16x64xf32>
    %355 = arith.divf %353, %354 : vector<16x64xf32>
    %356 = vector.extract_strided_slice %349 {offsets = [0, 64], sizes = [16, 64], strides = [1, 1]} : vector<16x256xf32> to vector<16x64xf32>
    %357 = arith.negf %356 : vector<16x64xf32>
    %358 = math.exp %357 : vector<16x64xf32>
    %cst_177 = arith.constant 1.000000e+00 : f32
    %359 = vector.broadcast %cst_177 : f32 to vector<16x64xf32>
    %360 = arith.addf %359, %358 : vector<16x64xf32>
    %361 = arith.divf %359, %360 : vector<16x64xf32>
    %362 = vector.extract_strided_slice %349 {offsets = [0, 128], sizes = [16, 64], strides = [1, 1]} : vector<16x256xf32> to vector<16x64xf32>
    %363 = math.tanh %362 : vector<16x64xf32>
    %364 = vector.extract_strided_slice %349 {offsets = [0, 192], sizes = [16, 64], strides = [1, 1]} : vector<16x256xf32> to vector<16x64xf32>
    %365 = arith.negf %364 : vector<16x64xf32>
    %366 = math.exp %365 : vector<16x64xf32>
    %cst_178 = arith.constant 1.000000e+00 : f32
    %367 = vector.broadcast %cst_178 : f32 to vector<16x64xf32>
    %368 = arith.addf %367, %366 : vector<16x64xf32>
    %369 = arith.divf %367, %368 : vector<16x64xf32>
    %c0_179 = arith.constant 0 : index
    %c0_180 = arith.constant 0 : index
    %370 = vector.load %arg15[%c0_179, %c0_180] : memref<16x64xf32, #tpu.memory_space<vmem>>, vector<16x64xf32>
    %371 = arith.mulf %361, %370 : vector<16x64xf32>
    %372 = arith.mulf %355, %363 : vector<16x64xf32>
    %373 = arith.addf %371, %372 : vector<16x64xf32>
    %374 = math.tanh %373 : vector<16x64xf32>
    %375 = arith.mulf %369, %374 : vector<16x64xf32>
    %c0_181 = arith.constant 0 : index
    %c0_182 = arith.constant 0 : index
    %376 = vector.load %arg15[%c0_181, %c0_182] : memref<16x64xf32, #tpu.memory_space<vmem>>, vector<16x64xf32>
    tpu.vector_store %arg15[%c0_181, %c0_182], %373 {strides = array<i32>} : memref<16x64xf32, #tpu.memory_space<vmem>>, vector<16x64xf32>,
    %c0_183 = arith.constant 0 : index
    %c0_184 = arith.constant 0 : index
    %377 = vector.load %arg14[%c0_183, %c0_184] : memref<16x64xf32, #tpu.memory_space<vmem>>, vector<16x64xf32>
    tpu.vector_store %arg14[%c0_183, %c0_184], %375 {strides = array<i32>} : memref<16x64xf32, #tpu.memory_space<vmem>>, vector<16x64xf32>,
    %378 = arith.truncf %375 : vector<16x64xf32> to vector<16x64xbf16>
    %379 = arith.index_cast %335 : i32 to index
    %c0_185 = arith.constant 0 : index
    %c0_186 = arith.constant 0 : index
    %380 = vector.load %arg11[%379, %c0_185, %c0_186] : memref<8x16x64xbf16, #tpu.memory_space<vmem>>, vector<1x16x64xbf16>
    %381 = vector.shape_cast %380 : vector<1x16x64xbf16> to vector<16x64xbf16>
    %382 = vector.shape_cast %378 : vector<16x64xbf16> to vector<1x16x64xbf16>
    tpu.vector_store %arg11[%379, %c0_185, %c0_186], %382 {strides = array<i32>} : memref<8x16x64xbf16, #tpu.memory_space<vmem>>, vector<1x16x64xbf16>,
    %c4_i32 = arith.constant 4 : i32
    %383 = arith.index_cast %c4_i32 : i32 to index
    %c0_187 = arith.constant 0 : index
    %c0_188 = arith.constant 0 : index
    %384 = vector.load %arg2[%383, %c0_187, %c0_188] : memref<8x16x16xf32, #tpu.memory_space<vmem>>, vector<1x16x16xf32>
    %385 = vector.shape_cast %384 : vector<1x16x16xf32> to vector<16x16xf32>
    %386 = arith.truncf %385 : vector<16x16xf32> to vector<16x16xbf16>
    %c0_189 = arith.constant 0 : index
    %c0_190 = arith.constant 0 : index
    %387 = vector.load %arg4[%c0_189, %c0_190] : memref<16x256xbf16, #tpu.memory_space<vmem>>, vector<16x256xbf16>
    %cst_191 = arith.constant dense<0.000000e+00> : vector<16x256xf32>
    %388 = tpu.matmul %386, %387, %cst_191 {dimension_numbers = #tpu.dot_dimension_numbers<[1], [0], [0], [1], [0, 0, 1, 1], [], []>} : vector<16x16xbf16>, vector<16x256xbf16>, vector<16x256xf32> -> vector<16x256xf32>
    %c0_192 = arith.constant 0 : index
    %c0_193 = arith.constant 0 : index
    %389 = vector.load %arg12[%c0_192, %c0_193] : memref<16x64xf32, #tpu.memory_space<vmem>>, vector<16x64xf32>
    %390 = arith.truncf %389 : vector<16x64xf32> to vector<16x64xbf16>
    %c0_194 = arith.constant 0 : index
    %c0_195 = arith.constant 0 : index
    %391 = vector.load %arg6[%c0_194, %c0_195] : memref<64x256xbf16, #tpu.memory_space<vmem>>, vector<64x256xbf16>
    %cst_196 = arith.constant dense<0.000000e+00> : vector<16x256xf32>
    %392 = tpu.matmul %390, %391, %cst_196 {dimension_numbers = #tpu.dot_dimension_numbers<[1], [0], [0], [1], [0, 0, 1, 1], [], []>} : vector<16x64xbf16>, vector<64x256xbf16>, vector<16x256xf32> -> vector<16x256xf32>
    %393 = arith.addf %388, %392 : vector<16x256xf32>
    %c0_197 = arith.constant 0 : index
    %c0_198 = arith.constant 0 : index
    %394 = vector.load %arg8[%c0_197, %c0_198] : memref<1x256xf32, #tpu.memory_space<vmem>>, vector<1x256xf32>
    %395 = vector.broadcast %394 : vector<1x256xf32> to vector<16x256xf32>
    %396 = arith.addf %393, %395 : vector<16x256xf32>
    %397 = vector.extract_strided_slice %396 {offsets = [0, 0], sizes = [16, 64], strides = [1, 1]} : vector<16x256xf32> to vector<16x64xf32>
    %398 = arith.negf %397 : vector<16x64xf32>
    %399 = math.exp %398 : vector<16x64xf32>
    %cst_199 = arith.constant 1.000000e+00 : f32
    %400 = vector.broadcast %cst_199 : f32 to vector<16x64xf32>
    %401 = arith.addf %400, %399 : vector<16x64xf32>
    %402 = arith.divf %400, %401 : vector<16x64xf32>
    %403 = vector.extract_strided_slice %396 {offsets = [0, 64], sizes = [16, 64], strides = [1, 1]} : vector<16x256xf32> to vector<16x64xf32>
    %404 = arith.negf %403 : vector<16x64xf32>
    %405 = math.exp %404 : vector<16x64xf32>
    %cst_200 = arith.constant 1.000000e+00 : f32
    %406 = vector.broadcast %cst_200 : f32 to vector<16x64xf32>
    %407 = arith.addf %406, %405 : vector<16x64xf32>
    %408 = arith.divf %406, %407 : vector<16x64xf32>
    %409 = vector.extract_strided_slice %396 {offsets = [0, 128], sizes = [16, 64], strides = [1, 1]} : vector<16x256xf32> to vector<16x64xf32>
    %410 = math.tanh %409 : vector<16x64xf32>
    %411 = vector.extract_strided_slice %396 {offsets = [0, 192], sizes = [16, 64], strides = [1, 1]} : vector<16x256xf32> to vector<16x64xf32>
    %412 = arith.negf %411 : vector<16x64xf32>
    %413 = math.exp %412 : vector<16x64xf32>
    %cst_201 = arith.constant 1.000000e+00 : f32
    %414 = vector.broadcast %cst_201 : f32 to vector<16x64xf32>
    %415 = arith.addf %414, %413 : vector<16x64xf32>
    %416 = arith.divf %414, %415 : vector<16x64xf32>
    %c0_202 = arith.constant 0 : index
    %c0_203 = arith.constant 0 : index
    %417 = vector.load %arg13[%c0_202, %c0_203] : memref<16x64xf32, #tpu.memory_space<vmem>>, vector<16x64xf32>
    %418 = arith.mulf %408, %417 : vector<16x64xf32>
    %419 = arith.mulf %402, %410 : vector<16x64xf32>
    %420 = arith.addf %418, %419 : vector<16x64xf32>
    %421 = math.tanh %420 : vector<16x64xf32>
    %422 = arith.mulf %416, %421 : vector<16x64xf32>
    %c0_204 = arith.constant 0 : index
    %c0_205 = arith.constant 0 : index
    %423 = vector.load %arg13[%c0_204, %c0_205] : memref<16x64xf32, #tpu.memory_space<vmem>>, vector<16x64xf32>
    tpu.vector_store %arg13[%c0_204, %c0_205], %420 {strides = array<i32>} : memref<16x64xf32, #tpu.memory_space<vmem>>, vector<16x64xf32>,
    %c0_206 = arith.constant 0 : index
    %c0_207 = arith.constant 0 : index
    %424 = vector.load %arg12[%c0_206, %c0_207] : memref<16x64xf32, #tpu.memory_space<vmem>>, vector<16x64xf32>
    tpu.vector_store %arg12[%c0_206, %c0_207], %422 {strides = array<i32>} : memref<16x64xf32, #tpu.memory_space<vmem>>, vector<16x64xf32>,
    %425 = arith.truncf %422 : vector<16x64xf32> to vector<16x64xbf16>
    %426 = arith.index_cast %c4_i32 : i32 to index
    %c0_208 = arith.constant 0 : index
    %c0_209 = arith.constant 0 : index
    %427 = vector.load %arg10[%426, %c0_208, %c0_209] : memref<8x16x64xbf16, #tpu.memory_space<vmem>>, vector<1x16x64xbf16>
    %428 = vector.shape_cast %427 : vector<1x16x64xbf16> to vector<16x64xbf16>
    %429 = vector.shape_cast %425 : vector<16x64xbf16> to vector<1x16x64xbf16>
    tpu.vector_store %arg10[%426, %c0_208, %c0_209], %429 {strides = array<i32>} : memref<8x16x64xbf16, #tpu.memory_space<vmem>>, vector<1x16x64xbf16>,
    %c7_i32_210 = arith.constant 7 : i32
    %430 = arith.subi %c7_i32_210, %c4_i32 : i32
    %431 = arith.index_cast %430 : i32 to index
    %c0_211 = arith.constant 0 : index
    %c0_212 = arith.constant 0 : index
    %432 = vector.load %arg3[%431, %c0_211, %c0_212] : memref<8x16x16xf32, #tpu.memory_space<vmem>>, vector<1x16x16xf32>
    %433 = vector.shape_cast %432 : vector<1x16x16xf32> to vector<16x16xf32>
    %434 = arith.truncf %433 : vector<16x16xf32> to vector<16x16xbf16>
    %c0_213 = arith.constant 0 : index
    %c0_214 = arith.constant 0 : index
    %435 = vector.load %arg5[%c0_213, %c0_214] : memref<16x256xbf16, #tpu.memory_space<vmem>>, vector<16x256xbf16>
    %cst_215 = arith.constant dense<0.000000e+00> : vector<16x256xf32>
    %436 = tpu.matmul %434, %435, %cst_215 {dimension_numbers = #tpu.dot_dimension_numbers<[1], [0], [0], [1], [0, 0, 1, 1], [], []>} : vector<16x16xbf16>, vector<16x256xbf16>, vector<16x256xf32> -> vector<16x256xf32>
    %c0_216 = arith.constant 0 : index
    %c0_217 = arith.constant 0 : index
    %437 = vector.load %arg14[%c0_216, %c0_217] : memref<16x64xf32, #tpu.memory_space<vmem>>, vector<16x64xf32>
    %438 = arith.truncf %437 : vector<16x64xf32> to vector<16x64xbf16>
    %c0_218 = arith.constant 0 : index
    %c0_219 = arith.constant 0 : index
    %439 = vector.load %arg7[%c0_218, %c0_219] : memref<64x256xbf16, #tpu.memory_space<vmem>>, vector<64x256xbf16>
    %cst_220 = arith.constant dense<0.000000e+00> : vector<16x256xf32>
    %440 = tpu.matmul %438, %439, %cst_220 {dimension_numbers = #tpu.dot_dimension_numbers<[1], [0], [0], [1], [0, 0, 1, 1], [], []>} : vector<16x64xbf16>, vector<64x256xbf16>, vector<16x256xf32> -> vector<16x256xf32>
    %441 = arith.addf %436, %440 : vector<16x256xf32>
    %c0_221 = arith.constant 0 : index
    %c0_222 = arith.constant 0 : index
    %442 = vector.load %arg9[%c0_221, %c0_222] : memref<1x256xf32, #tpu.memory_space<vmem>>, vector<1x256xf32>
    %443 = vector.broadcast %442 : vector<1x256xf32> to vector<16x256xf32>
    %444 = arith.addf %441, %443 : vector<16x256xf32>
    %445 = vector.extract_strided_slice %444 {offsets = [0, 0], sizes = [16, 64], strides = [1, 1]} : vector<16x256xf32> to vector<16x64xf32>
    %446 = arith.negf %445 : vector<16x64xf32>
    %447 = math.exp %446 : vector<16x64xf32>
    %cst_223 = arith.constant 1.000000e+00 : f32
    %448 = vector.broadcast %cst_223 : f32 to vector<16x64xf32>
    %449 = arith.addf %448, %447 : vector<16x64xf32>
    %450 = arith.divf %448, %449 : vector<16x64xf32>
    %451 = vector.extract_strided_slice %444 {offsets = [0, 64], sizes = [16, 64], strides = [1, 1]} : vector<16x256xf32> to vector<16x64xf32>
    %452 = arith.negf %451 : vector<16x64xf32>
    %453 = math.exp %452 : vector<16x64xf32>
    %cst_224 = arith.constant 1.000000e+00 : f32
    %454 = vector.broadcast %cst_224 : f32 to vector<16x64xf32>
    %455 = arith.addf %454, %453 : vector<16x64xf32>
    %456 = arith.divf %454, %455 : vector<16x64xf32>
    %457 = vector.extract_strided_slice %444 {offsets = [0, 128], sizes = [16, 64], strides = [1, 1]} : vector<16x256xf32> to vector<16x64xf32>
    %458 = math.tanh %457 : vector<16x64xf32>
    %459 = vector.extract_strided_slice %444 {offsets = [0, 192], sizes = [16, 64], strides = [1, 1]} : vector<16x256xf32> to vector<16x64xf32>
    %460 = arith.negf %459 : vector<16x64xf32>
    %461 = math.exp %460 : vector<16x64xf32>
    %cst_225 = arith.constant 1.000000e+00 : f32
    %462 = vector.broadcast %cst_225 : f32 to vector<16x64xf32>
    %463 = arith.addf %462, %461 : vector<16x64xf32>
    %464 = arith.divf %462, %463 : vector<16x64xf32>
    %c0_226 = arith.constant 0 : index
    %c0_227 = arith.constant 0 : index
    %465 = vector.load %arg15[%c0_226, %c0_227] : memref<16x64xf32, #tpu.memory_space<vmem>>, vector<16x64xf32>
    %466 = arith.mulf %456, %465 : vector<16x64xf32>
    %467 = arith.mulf %450, %458 : vector<16x64xf32>
    %468 = arith.addf %466, %467 : vector<16x64xf32>
    %469 = math.tanh %468 : vector<16x64xf32>
    %470 = arith.mulf %464, %469 : vector<16x64xf32>
    %c0_228 = arith.constant 0 : index
    %c0_229 = arith.constant 0 : index
    %471 = vector.load %arg15[%c0_228, %c0_229] : memref<16x64xf32, #tpu.memory_space<vmem>>, vector<16x64xf32>
    tpu.vector_store %arg15[%c0_228, %c0_229], %468 {strides = array<i32>} : memref<16x64xf32, #tpu.memory_space<vmem>>, vector<16x64xf32>,
    %c0_230 = arith.constant 0 : index
    %c0_231 = arith.constant 0 : index
    %472 = vector.load %arg14[%c0_230, %c0_231] : memref<16x64xf32, #tpu.memory_space<vmem>>, vector<16x64xf32>
    tpu.vector_store %arg14[%c0_230, %c0_231], %470 {strides = array<i32>} : memref<16x64xf32, #tpu.memory_space<vmem>>, vector<16x64xf32>,
    %473 = arith.truncf %470 : vector<16x64xf32> to vector<16x64xbf16>
    %474 = arith.index_cast %430 : i32 to index
    %c0_232 = arith.constant 0 : index
    %c0_233 = arith.constant 0 : index
    %475 = vector.load %arg11[%474, %c0_232, %c0_233] : memref<8x16x64xbf16, #tpu.memory_space<vmem>>, vector<1x16x64xbf16>
    %476 = vector.shape_cast %475 : vector<1x16x64xbf16> to vector<16x64xbf16>
    %477 = vector.shape_cast %473 : vector<16x64xbf16> to vector<1x16x64xbf16>
    tpu.vector_store %arg11[%474, %c0_232, %c0_233], %477 {strides = array<i32>} : memref<8x16x64xbf16, #tpu.memory_space<vmem>>, vector<1x16x64xbf16>,
    %c5_i32 = arith.constant 5 : i32
    %478 = arith.index_cast %c5_i32 : i32 to index
    %c0_234 = arith.constant 0 : index
    %c0_235 = arith.constant 0 : index
    %479 = vector.load %arg2[%478, %c0_234, %c0_235] : memref<8x16x16xf32, #tpu.memory_space<vmem>>, vector<1x16x16xf32>
    %480 = vector.shape_cast %479 : vector<1x16x16xf32> to vector<16x16xf32>
    %481 = arith.truncf %480 : vector<16x16xf32> to vector<16x16xbf16>
    %c0_236 = arith.constant 0 : index
    %c0_237 = arith.constant 0 : index
    %482 = vector.load %arg4[%c0_236, %c0_237] : memref<16x256xbf16, #tpu.memory_space<vmem>>, vector<16x256xbf16>
    %cst_238 = arith.constant dense<0.000000e+00> : vector<16x256xf32>
    %483 = tpu.matmul %481, %482, %cst_238 {dimension_numbers = #tpu.dot_dimension_numbers<[1], [0], [0], [1], [0, 0, 1, 1], [], []>} : vector<16x16xbf16>, vector<16x256xbf16>, vector<16x256xf32> -> vector<16x256xf32>
    %c0_239 = arith.constant 0 : index
    %c0_240 = arith.constant 0 : index
    %484 = vector.load %arg12[%c0_239, %c0_240] : memref<16x64xf32, #tpu.memory_space<vmem>>, vector<16x64xf32>
    %485 = arith.truncf %484 : vector<16x64xf32> to vector<16x64xbf16>
    %c0_241 = arith.constant 0 : index
    %c0_242 = arith.constant 0 : index
    %486 = vector.load %arg6[%c0_241, %c0_242] : memref<64x256xbf16, #tpu.memory_space<vmem>>, vector<64x256xbf16>
    %cst_243 = arith.constant dense<0.000000e+00> : vector<16x256xf32>
    %487 = tpu.matmul %485, %486, %cst_243 {dimension_numbers = #tpu.dot_dimension_numbers<[1], [0], [0], [1], [0, 0, 1, 1], [], []>} : vector<16x64xbf16>, vector<64x256xbf16>, vector<16x256xf32> -> vector<16x256xf32>
    %488 = arith.addf %483, %487 : vector<16x256xf32>
    %c0_244 = arith.constant 0 : index
    %c0_245 = arith.constant 0 : index
    %489 = vector.load %arg8[%c0_244, %c0_245] : memref<1x256xf32, #tpu.memory_space<vmem>>, vector<1x256xf32>
    %490 = vector.broadcast %489 : vector<1x256xf32> to vector<16x256xf32>
    %491 = arith.addf %488, %490 : vector<16x256xf32>
    %492 = vector.extract_strided_slice %491 {offsets = [0, 0], sizes = [16, 64], strides = [1, 1]} : vector<16x256xf32> to vector<16x64xf32>
    %493 = arith.negf %492 : vector<16x64xf32>
    %494 = math.exp %493 : vector<16x64xf32>
    %cst_246 = arith.constant 1.000000e+00 : f32
    %495 = vector.broadcast %cst_246 : f32 to vector<16x64xf32>
    %496 = arith.addf %495, %494 : vector<16x64xf32>
    %497 = arith.divf %495, %496 : vector<16x64xf32>
    %498 = vector.extract_strided_slice %491 {offsets = [0, 64], sizes = [16, 64], strides = [1, 1]} : vector<16x256xf32> to vector<16x64xf32>
    %499 = arith.negf %498 : vector<16x64xf32>
    %500 = math.exp %499 : vector<16x64xf32>
    %cst_247 = arith.constant 1.000000e+00 : f32
    %501 = vector.broadcast %cst_247 : f32 to vector<16x64xf32>
    %502 = arith.addf %501, %500 : vector<16x64xf32>
    %503 = arith.divf %501, %502 : vector<16x64xf32>
    %504 = vector.extract_strided_slice %491 {offsets = [0, 128], sizes = [16, 64], strides = [1, 1]} : vector<16x256xf32> to vector<16x64xf32>
    %505 = math.tanh %504 : vector<16x64xf32>
    %506 = vector.extract_strided_slice %491 {offsets = [0, 192], sizes = [16, 64], strides = [1, 1]} : vector<16x256xf32> to vector<16x64xf32>
    %507 = arith.negf %506 : vector<16x64xf32>
    %508 = math.exp %507 : vector<16x64xf32>
    %cst_248 = arith.constant 1.000000e+00 : f32
    %509 = vector.broadcast %cst_248 : f32 to vector<16x64xf32>
    %510 = arith.addf %509, %508 : vector<16x64xf32>
    %511 = arith.divf %509, %510 : vector<16x64xf32>
    %c0_249 = arith.constant 0 : index
    %c0_250 = arith.constant 0 : index
    %512 = vector.load %arg13[%c0_249, %c0_250] : memref<16x64xf32, #tpu.memory_space<vmem>>, vector<16x64xf32>
    %513 = arith.mulf %503, %512 : vector<16x64xf32>
    %514 = arith.mulf %497, %505 : vector<16x64xf32>
    %515 = arith.addf %513, %514 : vector<16x64xf32>
    %516 = math.tanh %515 : vector<16x64xf32>
    %517 = arith.mulf %511, %516 : vector<16x64xf32>
    %c0_251 = arith.constant 0 : index
    %c0_252 = arith.constant 0 : index
    %518 = vector.load %arg13[%c0_251, %c0_252] : memref<16x64xf32, #tpu.memory_space<vmem>>, vector<16x64xf32>
    tpu.vector_store %arg13[%c0_251, %c0_252], %515 {strides = array<i32>} : memref<16x64xf32, #tpu.memory_space<vmem>>, vector<16x64xf32>,
    %c0_253 = arith.constant 0 : index
    %c0_254 = arith.constant 0 : index
    %519 = vector.load %arg12[%c0_253, %c0_254] : memref<16x64xf32, #tpu.memory_space<vmem>>, vector<16x64xf32>
    tpu.vector_store %arg12[%c0_253, %c0_254], %517 {strides = array<i32>} : memref<16x64xf32, #tpu.memory_space<vmem>>, vector<16x64xf32>,
    %520 = arith.truncf %517 : vector<16x64xf32> to vector<16x64xbf16>
    %521 = arith.index_cast %c5_i32 : i32 to index
    %c0_255 = arith.constant 0 : index
    %c0_256 = arith.constant 0 : index
    %522 = vector.load %arg10[%521, %c0_255, %c0_256] : memref<8x16x64xbf16, #tpu.memory_space<vmem>>, vector<1x16x64xbf16>
    %523 = vector.shape_cast %522 : vector<1x16x64xbf16> to vector<16x64xbf16>
    %524 = vector.shape_cast %520 : vector<16x64xbf16> to vector<1x16x64xbf16>
    tpu.vector_store %arg10[%521, %c0_255, %c0_256], %524 {strides = array<i32>} : memref<8x16x64xbf16, #tpu.memory_space<vmem>>, vector<1x16x64xbf16>,
    %c7_i32_257 = arith.constant 7 : i32
    %525 = arith.subi %c7_i32_257, %c5_i32 : i32
    %526 = arith.index_cast %525 : i32 to index
    %c0_258 = arith.constant 0 : index
    %c0_259 = arith.constant 0 : index
    %527 = vector.load %arg3[%526, %c0_258, %c0_259] : memref<8x16x16xf32, #tpu.memory_space<vmem>>, vector<1x16x16xf32>
    %528 = vector.shape_cast %527 : vector<1x16x16xf32> to vector<16x16xf32>
    %529 = arith.truncf %528 : vector<16x16xf32> to vector<16x16xbf16>
    %c0_260 = arith.constant 0 : index
    %c0_261 = arith.constant 0 : index
    %530 = vector.load %arg5[%c0_260, %c0_261] : memref<16x256xbf16, #tpu.memory_space<vmem>>, vector<16x256xbf16>
    %cst_262 = arith.constant dense<0.000000e+00> : vector<16x256xf32>
    %531 = tpu.matmul %529, %530, %cst_262 {dimension_numbers = #tpu.dot_dimension_numbers<[1], [0], [0], [1], [0, 0, 1, 1], [], []>} : vector<16x16xbf16>, vector<16x256xbf16>, vector<16x256xf32> -> vector<16x256xf32>
    %c0_263 = arith.constant 0 : index
    %c0_264 = arith.constant 0 : index
    %532 = vector.load %arg14[%c0_263, %c0_264] : memref<16x64xf32, #tpu.memory_space<vmem>>, vector<16x64xf32>
    %533 = arith.truncf %532 : vector<16x64xf32> to vector<16x64xbf16>
    %c0_265 = arith.constant 0 : index
    %c0_266 = arith.constant 0 : index
    %534 = vector.load %arg7[%c0_265, %c0_266] : memref<64x256xbf16, #tpu.memory_space<vmem>>, vector<64x256xbf16>
    %cst_267 = arith.constant dense<0.000000e+00> : vector<16x256xf32>
    %535 = tpu.matmul %533, %534, %cst_267 {dimension_numbers = #tpu.dot_dimension_numbers<[1], [0], [0], [1], [0, 0, 1, 1], [], []>} : vector<16x64xbf16>, vector<64x256xbf16>, vector<16x256xf32> -> vector<16x256xf32>
    %536 = arith.addf %531, %535 : vector<16x256xf32>
    %c0_268 = arith.constant 0 : index
    %c0_269 = arith.constant 0 : index
    %537 = vector.load %arg9[%c0_268, %c0_269] : memref<1x256xf32, #tpu.memory_space<vmem>>, vector<1x256xf32>
    %538 = vector.broadcast %537 : vector<1x256xf32> to vector<16x256xf32>
    %539 = arith.addf %536, %538 : vector<16x256xf32>
    %540 = vector.extract_strided_slice %539 {offsets = [0, 0], sizes = [16, 64], strides = [1, 1]} : vector<16x256xf32> to vector<16x64xf32>
    %541 = arith.negf %540 : vector<16x64xf32>
    %542 = math.exp %541 : vector<16x64xf32>
    %cst_270 = arith.constant 1.000000e+00 : f32
    %543 = vector.broadcast %cst_270 : f32 to vector<16x64xf32>
    %544 = arith.addf %543, %542 : vector<16x64xf32>
    %545 = arith.divf %543, %544 : vector<16x64xf32>
    %546 = vector.extract_strided_slice %539 {offsets = [0, 64], sizes = [16, 64], strides = [1, 1]} : vector<16x256xf32> to vector<16x64xf32>
    %547 = arith.negf %546 : vector<16x64xf32>
    %548 = math.exp %547 : vector<16x64xf32>
    %cst_271 = arith.constant 1.000000e+00 : f32
    %549 = vector.broadcast %cst_271 : f32 to vector<16x64xf32>
    %550 = arith.addf %549, %548 : vector<16x64xf32>
    %551 = arith.divf %549, %550 : vector<16x64xf32>
    %552 = vector.extract_strided_slice %539 {offsets = [0, 128], sizes = [16, 64], strides = [1, 1]} : vector<16x256xf32> to vector<16x64xf32>
    %553 = math.tanh %552 : vector<16x64xf32>
    %554 = vector.extract_strided_slice %539 {offsets = [0, 192], sizes = [16, 64], strides = [1, 1]} : vector<16x256xf32> to vector<16x64xf32>
    %555 = arith.negf %554 : vector<16x64xf32>
    %556 = math.exp %555 : vector<16x64xf32>
    %cst_272 = arith.constant 1.000000e+00 : f32
    %557 = vector.broadcast %cst_272 : f32 to vector<16x64xf32>
    %558 = arith.addf %557, %556 : vector<16x64xf32>
    %559 = arith.divf %557, %558 : vector<16x64xf32>
    %c0_273 = arith.constant 0 : index
    %c0_274 = arith.constant 0 : index
    %560 = vector.load %arg15[%c0_273, %c0_274] : memref<16x64xf32, #tpu.memory_space<vmem>>, vector<16x64xf32>
    %561 = arith.mulf %551, %560 : vector<16x64xf32>
    %562 = arith.mulf %545, %553 : vector<16x64xf32>
    %563 = arith.addf %561, %562 : vector<16x64xf32>
    %564 = math.tanh %563 : vector<16x64xf32>
    %565 = arith.mulf %559, %564 : vector<16x64xf32>
    %c0_275 = arith.constant 0 : index
    %c0_276 = arith.constant 0 : index
    %566 = vector.load %arg15[%c0_275, %c0_276] : memref<16x64xf32, #tpu.memory_space<vmem>>, vector<16x64xf32>
    tpu.vector_store %arg15[%c0_275, %c0_276], %563 {strides = array<i32>} : memref<16x64xf32, #tpu.memory_space<vmem>>, vector<16x64xf32>,
    %c0_277 = arith.constant 0 : index
    %c0_278 = arith.constant 0 : index
    %567 = vector.load %arg14[%c0_277, %c0_278] : memref<16x64xf32, #tpu.memory_space<vmem>>, vector<16x64xf32>
    tpu.vector_store %arg14[%c0_277, %c0_278], %565 {strides = array<i32>} : memref<16x64xf32, #tpu.memory_space<vmem>>, vector<16x64xf32>,
    %568 = arith.truncf %565 : vector<16x64xf32> to vector<16x64xbf16>
    %569 = arith.index_cast %525 : i32 to index
    %c0_279 = arith.constant 0 : index
    %c0_280 = arith.constant 0 : index
    %570 = vector.load %arg11[%569, %c0_279, %c0_280] : memref<8x16x64xbf16, #tpu.memory_space<vmem>>, vector<1x16x64xbf16>
    %571 = vector.shape_cast %570 : vector<1x16x64xbf16> to vector<16x64xbf16>
    %572 = vector.shape_cast %568 : vector<16x64xbf16> to vector<1x16x64xbf16>
    tpu.vector_store %arg11[%569, %c0_279, %c0_280], %572 {strides = array<i32>} : memref<8x16x64xbf16, #tpu.memory_space<vmem>>, vector<1x16x64xbf16>,
    %c6_i32 = arith.constant 6 : i32
    %573 = arith.index_cast %c6_i32 : i32 to index
    %c0_281 = arith.constant 0 : index
    %c0_282 = arith.constant 0 : index
    %574 = vector.load %arg2[%573, %c0_281, %c0_282] : memref<8x16x16xf32, #tpu.memory_space<vmem>>, vector<1x16x16xf32>
    %575 = vector.shape_cast %574 : vector<1x16x16xf32> to vector<16x16xf32>
    %576 = arith.truncf %575 : vector<16x16xf32> to vector<16x16xbf16>
    %c0_283 = arith.constant 0 : index
    %c0_284 = arith.constant 0 : index
    %577 = vector.load %arg4[%c0_283, %c0_284] : memref<16x256xbf16, #tpu.memory_space<vmem>>, vector<16x256xbf16>
    %cst_285 = arith.constant dense<0.000000e+00> : vector<16x256xf32>
    %578 = tpu.matmul %576, %577, %cst_285 {dimension_numbers = #tpu.dot_dimension_numbers<[1], [0], [0], [1], [0, 0, 1, 1], [], []>} : vector<16x16xbf16>, vector<16x256xbf16>, vector<16x256xf32> -> vector<16x256xf32>
    %c0_286 = arith.constant 0 : index
    %c0_287 = arith.constant 0 : index
    %579 = vector.load %arg12[%c0_286, %c0_287] : memref<16x64xf32, #tpu.memory_space<vmem>>, vector<16x64xf32>
    %580 = arith.truncf %579 : vector<16x64xf32> to vector<16x64xbf16>
    %c0_288 = arith.constant 0 : index
    %c0_289 = arith.constant 0 : index
    %581 = vector.load %arg6[%c0_288, %c0_289] : memref<64x256xbf16, #tpu.memory_space<vmem>>, vector<64x256xbf16>
    %cst_290 = arith.constant dense<0.000000e+00> : vector<16x256xf32>
    %582 = tpu.matmul %580, %581, %cst_290 {dimension_numbers = #tpu.dot_dimension_numbers<[1], [0], [0], [1], [0, 0, 1, 1], [], []>} : vector<16x64xbf16>, vector<64x256xbf16>, vector<16x256xf32> -> vector<16x256xf32>
    %583 = arith.addf %578, %582 : vector<16x256xf32>
    %c0_291 = arith.constant 0 : index
    %c0_292 = arith.constant 0 : index
    %584 = vector.load %arg8[%c0_291, %c0_292] : memref<1x256xf32, #tpu.memory_space<vmem>>, vector<1x256xf32>
    %585 = vector.broadcast %584 : vector<1x256xf32> to vector<16x256xf32>
    %586 = arith.addf %583, %585 : vector<16x256xf32>
    %587 = vector.extract_strided_slice %586 {offsets = [0, 0], sizes = [16, 64], strides = [1, 1]} : vector<16x256xf32> to vector<16x64xf32>
    %588 = arith.negf %587 : vector<16x64xf32>
    %589 = math.exp %588 : vector<16x64xf32>
    %cst_293 = arith.constant 1.000000e+00 : f32
    %590 = vector.broadcast %cst_293 : f32 to vector<16x64xf32>
    %591 = arith.addf %590, %589 : vector<16x64xf32>
    %592 = arith.divf %590, %591 : vector<16x64xf32>
    %593 = vector.extract_strided_slice %586 {offsets = [0, 64], sizes = [16, 64], strides = [1, 1]} : vector<16x256xf32> to vector<16x64xf32>
    %594 = arith.negf %593 : vector<16x64xf32>
    %595 = math.exp %594 : vector<16x64xf32>
    %cst_294 = arith.constant 1.000000e+00 : f32
    %596 = vector.broadcast %cst_294 : f32 to vector<16x64xf32>
    %597 = arith.addf %596, %595 : vector<16x64xf32>
    %598 = arith.divf %596, %597 : vector<16x64xf32>
    %599 = vector.extract_strided_slice %586 {offsets = [0, 128], sizes = [16, 64], strides = [1, 1]} : vector<16x256xf32> to vector<16x64xf32>
    %600 = math.tanh %599 : vector<16x64xf32>
    %601 = vector.extract_strided_slice %586 {offsets = [0, 192], sizes = [16, 64], strides = [1, 1]} : vector<16x256xf32> to vector<16x64xf32>
    %602 = arith.negf %601 : vector<16x64xf32>
    %603 = math.exp %602 : vector<16x64xf32>
    %cst_295 = arith.constant 1.000000e+00 : f32
    %604 = vector.broadcast %cst_295 : f32 to vector<16x64xf32>
    %605 = arith.addf %604, %603 : vector<16x64xf32>
    %606 = arith.divf %604, %605 : vector<16x64xf32>
    %c0_296 = arith.constant 0 : index
    %c0_297 = arith.constant 0 : index
    %607 = vector.load %arg13[%c0_296, %c0_297] : memref<16x64xf32, #tpu.memory_space<vmem>>, vector<16x64xf32>
    %608 = arith.mulf %598, %607 : vector<16x64xf32>
    %609 = arith.mulf %592, %600 : vector<16x64xf32>
    %610 = arith.addf %608, %609 : vector<16x64xf32>
    %611 = math.tanh %610 : vector<16x64xf32>
    %612 = arith.mulf %606, %611 : vector<16x64xf32>
    %c0_298 = arith.constant 0 : index
    %c0_299 = arith.constant 0 : index
    %613 = vector.load %arg13[%c0_298, %c0_299] : memref<16x64xf32, #tpu.memory_space<vmem>>, vector<16x64xf32>
    tpu.vector_store %arg13[%c0_298, %c0_299], %610 {strides = array<i32>} : memref<16x64xf32, #tpu.memory_space<vmem>>, vector<16x64xf32>,
    %c0_300 = arith.constant 0 : index
    %c0_301 = arith.constant 0 : index
    %614 = vector.load %arg12[%c0_300, %c0_301] : memref<16x64xf32, #tpu.memory_space<vmem>>, vector<16x64xf32>
    tpu.vector_store %arg12[%c0_300, %c0_301], %612 {strides = array<i32>} : memref<16x64xf32, #tpu.memory_space<vmem>>, vector<16x64xf32>,
    %615 = arith.truncf %612 : vector<16x64xf32> to vector<16x64xbf16>
    %616 = arith.index_cast %c6_i32 : i32 to index
    %c0_302 = arith.constant 0 : index
    %c0_303 = arith.constant 0 : index
    %617 = vector.load %arg10[%616, %c0_302, %c0_303] : memref<8x16x64xbf16, #tpu.memory_space<vmem>>, vector<1x16x64xbf16>
    %618 = vector.shape_cast %617 : vector<1x16x64xbf16> to vector<16x64xbf16>
    %619 = vector.shape_cast %615 : vector<16x64xbf16> to vector<1x16x64xbf16>
    tpu.vector_store %arg10[%616, %c0_302, %c0_303], %619 {strides = array<i32>} : memref<8x16x64xbf16, #tpu.memory_space<vmem>>, vector<1x16x64xbf16>,
    %c7_i32_304 = arith.constant 7 : i32
    %620 = arith.subi %c7_i32_304, %c6_i32 : i32
    %621 = arith.index_cast %620 : i32 to index
    %c0_305 = arith.constant 0 : index
    %c0_306 = arith.constant 0 : index
    %622 = vector.load %arg3[%621, %c0_305, %c0_306] : memref<8x16x16xf32, #tpu.memory_space<vmem>>, vector<1x16x16xf32>
    %623 = vector.shape_cast %622 : vector<1x16x16xf32> to vector<16x16xf32>
    %624 = arith.truncf %623 : vector<16x16xf32> to vector<16x16xbf16>
    %c0_307 = arith.constant 0 : index
    %c0_308 = arith.constant 0 : index
    %625 = vector.load %arg5[%c0_307, %c0_308] : memref<16x256xbf16, #tpu.memory_space<vmem>>, vector<16x256xbf16>
    %cst_309 = arith.constant dense<0.000000e+00> : vector<16x256xf32>
    %626 = tpu.matmul %624, %625, %cst_309 {dimension_numbers = #tpu.dot_dimension_numbers<[1], [0], [0], [1], [0, 0, 1, 1], [], []>} : vector<16x16xbf16>, vector<16x256xbf16>, vector<16x256xf32> -> vector<16x256xf32>
    %c0_310 = arith.constant 0 : index
    %c0_311 = arith.constant 0 : index
    %627 = vector.load %arg14[%c0_310, %c0_311] : memref<16x64xf32, #tpu.memory_space<vmem>>, vector<16x64xf32>
    %628 = arith.truncf %627 : vector<16x64xf32> to vector<16x64xbf16>
    %c0_312 = arith.constant 0 : index
    %c0_313 = arith.constant 0 : index
    %629 = vector.load %arg7[%c0_312, %c0_313] : memref<64x256xbf16, #tpu.memory_space<vmem>>, vector<64x256xbf16>
    %cst_314 = arith.constant dense<0.000000e+00> : vector<16x256xf32>
    %630 = tpu.matmul %628, %629, %cst_314 {dimension_numbers = #tpu.dot_dimension_numbers<[1], [0], [0], [1], [0, 0, 1, 1], [], []>} : vector<16x64xbf16>, vector<64x256xbf16>, vector<16x256xf32> -> vector<16x256xf32>
    %631 = arith.addf %626, %630 : vector<16x256xf32>
    %c0_315 = arith.constant 0 : index
    %c0_316 = arith.constant 0 : index
    %632 = vector.load %arg9[%c0_315, %c0_316] : memref<1x256xf32, #tpu.memory_space<vmem>>, vector<1x256xf32>
    %633 = vector.broadcast %632 : vector<1x256xf32> to vector<16x256xf32>
    %634 = arith.addf %631, %633 : vector<16x256xf32>
    %635 = vector.extract_strided_slice %634 {offsets = [0, 0], sizes = [16, 64], strides = [1, 1]} : vector<16x256xf32> to vector<16x64xf32>
    %636 = arith.negf %635 : vector<16x64xf32>
    %637 = math.exp %636 : vector<16x64xf32>
    %cst_317 = arith.constant 1.000000e+00 : f32
    %638 = vector.broadcast %cst_317 : f32 to vector<16x64xf32>
    %639 = arith.addf %638, %637 : vector<16x64xf32>
    %640 = arith.divf %638, %639 : vector<16x64xf32>
    %641 = vector.extract_strided_slice %634 {offsets = [0, 64], sizes = [16, 64], strides = [1, 1]} : vector<16x256xf32> to vector<16x64xf32>
    %642 = arith.negf %641 : vector<16x64xf32>
    %643 = math.exp %642 : vector<16x64xf32>
    %cst_318 = arith.constant 1.000000e+00 : f32
    %644 = vector.broadcast %cst_318 : f32 to vector<16x64xf32>
    %645 = arith.addf %644, %643 : vector<16x64xf32>
    %646 = arith.divf %644, %645 : vector<16x64xf32>
    %647 = vector.extract_strided_slice %634 {offsets = [0, 128], sizes = [16, 64], strides = [1, 1]} : vector<16x256xf32> to vector<16x64xf32>
    %648 = math.tanh %647 : vector<16x64xf32>
    %649 = vector.extract_strided_slice %634 {offsets = [0, 192], sizes = [16, 64], strides = [1, 1]} : vector<16x256xf32> to vector<16x64xf32>
    %650 = arith.negf %649 : vector<16x64xf32>
    %651 = math.exp %650 : vector<16x64xf32>
    %cst_319 = arith.constant 1.000000e+00 : f32
    %652 = vector.broadcast %cst_319 : f32 to vector<16x64xf32>
    %653 = arith.addf %652, %651 : vector<16x64xf32>
    %654 = arith.divf %652, %653 : vector<16x64xf32>
    %c0_320 = arith.constant 0 : index
    %c0_321 = arith.constant 0 : index
    %655 = vector.load %arg15[%c0_320, %c0_321] : memref<16x64xf32, #tpu.memory_space<vmem>>, vector<16x64xf32>
    %656 = arith.mulf %646, %655 : vector<16x64xf32>
    %657 = arith.mulf %640, %648 : vector<16x64xf32>
    %658 = arith.addf %656, %657 : vector<16x64xf32>
    %659 = math.tanh %658 : vector<16x64xf32>
    %660 = arith.mulf %654, %659 : vector<16x64xf32>
    %c0_322 = arith.constant 0 : index
    %c0_323 = arith.constant 0 : index
    %661 = vector.load %arg15[%c0_322, %c0_323] : memref<16x64xf32, #tpu.memory_space<vmem>>, vector<16x64xf32>
    tpu.vector_store %arg15[%c0_322, %c0_323], %658 {strides = array<i32>} : memref<16x64xf32, #tpu.memory_space<vmem>>, vector<16x64xf32>,
    %c0_324 = arith.constant 0 : index
    %c0_325 = arith.constant 0 : index
    %662 = vector.load %arg14[%c0_324, %c0_325] : memref<16x64xf32, #tpu.memory_space<vmem>>, vector<16x64xf32>
    tpu.vector_store %arg14[%c0_324, %c0_325], %660 {strides = array<i32>} : memref<16x64xf32, #tpu.memory_space<vmem>>, vector<16x64xf32>,
    %663 = arith.truncf %660 : vector<16x64xf32> to vector<16x64xbf16>
    %664 = arith.index_cast %620 : i32 to index
    %c0_326 = arith.constant 0 : index
    %c0_327 = arith.constant 0 : index
    %665 = vector.load %arg11[%664, %c0_326, %c0_327] : memref<8x16x64xbf16, #tpu.memory_space<vmem>>, vector<1x16x64xbf16>
    %666 = vector.shape_cast %665 : vector<1x16x64xbf16> to vector<16x64xbf16>
    %667 = vector.shape_cast %663 : vector<16x64xbf16> to vector<1x16x64xbf16>
    tpu.vector_store %arg11[%664, %c0_326, %c0_327], %667 {strides = array<i32>} : memref<8x16x64xbf16, #tpu.memory_space<vmem>>, vector<1x16x64xbf16>,
    %c7_i32_328 = arith.constant 7 : i32
    %668 = arith.index_cast %c7_i32_328 : i32 to index
    %c0_329 = arith.constant 0 : index
    %c0_330 = arith.constant 0 : index
    %669 = vector.load %arg2[%668, %c0_329, %c0_330] : memref<8x16x16xf32, #tpu.memory_space<vmem>>, vector<1x16x16xf32>
    %670 = vector.shape_cast %669 : vector<1x16x16xf32> to vector<16x16xf32>
    %671 = arith.truncf %670 : vector<16x16xf32> to vector<16x16xbf16>
    %c0_331 = arith.constant 0 : index
    %c0_332 = arith.constant 0 : index
    %672 = vector.load %arg4[%c0_331, %c0_332] : memref<16x256xbf16, #tpu.memory_space<vmem>>, vector<16x256xbf16>
    %cst_333 = arith.constant dense<0.000000e+00> : vector<16x256xf32>
    %673 = tpu.matmul %671, %672, %cst_333 {dimension_numbers = #tpu.dot_dimension_numbers<[1], [0], [0], [1], [0, 0, 1, 1], [], []>} : vector<16x16xbf16>, vector<16x256xbf16>, vector<16x256xf32> -> vector<16x256xf32>
    %c0_334 = arith.constant 0 : index
    %c0_335 = arith.constant 0 : index
    %674 = vector.load %arg12[%c0_334, %c0_335] : memref<16x64xf32, #tpu.memory_space<vmem>>, vector<16x64xf32>
    %675 = arith.truncf %674 : vector<16x64xf32> to vector<16x64xbf16>
    %c0_336 = arith.constant 0 : index
    %c0_337 = arith.constant 0 : index
    %676 = vector.load %arg6[%c0_336, %c0_337] : memref<64x256xbf16, #tpu.memory_space<vmem>>, vector<64x256xbf16>
    %cst_338 = arith.constant dense<0.000000e+00> : vector<16x256xf32>
    %677 = tpu.matmul %675, %676, %cst_338 {dimension_numbers = #tpu.dot_dimension_numbers<[1], [0], [0], [1], [0, 0, 1, 1], [], []>} : vector<16x64xbf16>, vector<64x256xbf16>, vector<16x256xf32> -> vector<16x256xf32>
    %678 = arith.addf %673, %677 : vector<16x256xf32>
    %c0_339 = arith.constant 0 : index
    %c0_340 = arith.constant 0 : index
    %679 = vector.load %arg8[%c0_339, %c0_340] : memref<1x256xf32, #tpu.memory_space<vmem>>, vector<1x256xf32>
    %680 = vector.broadcast %679 : vector<1x256xf32> to vector<16x256xf32>
    %681 = arith.addf %678, %680 : vector<16x256xf32>
    %682 = vector.extract_strided_slice %681 {offsets = [0, 0], sizes = [16, 64], strides = [1, 1]} : vector<16x256xf32> to vector<16x64xf32>
    %683 = arith.negf %682 : vector<16x64xf32>
    %684 = math.exp %683 : vector<16x64xf32>
    %cst_341 = arith.constant 1.000000e+00 : f32
    %685 = vector.broadcast %cst_341 : f32 to vector<16x64xf32>
    %686 = arith.addf %685, %684 : vector<16x64xf32>
    %687 = arith.divf %685, %686 : vector<16x64xf32>
    %688 = vector.extract_strided_slice %681 {offsets = [0, 64], sizes = [16, 64], strides = [1, 1]} : vector<16x256xf32> to vector<16x64xf32>
    %689 = arith.negf %688 : vector<16x64xf32>
    %690 = math.exp %689 : vector<16x64xf32>
    %cst_342 = arith.constant 1.000000e+00 : f32
    %691 = vector.broadcast %cst_342 : f32 to vector<16x64xf32>
    %692 = arith.addf %691, %690 : vector<16x64xf32>
    %693 = arith.divf %691, %692 : vector<16x64xf32>
    %694 = vector.extract_strided_slice %681 {offsets = [0, 128], sizes = [16, 64], strides = [1, 1]} : vector<16x256xf32> to vector<16x64xf32>
    %695 = math.tanh %694 : vector<16x64xf32>
    %696 = vector.extract_strided_slice %681 {offsets = [0, 192], sizes = [16, 64], strides = [1, 1]} : vector<16x256xf32> to vector<16x64xf32>
    %697 = arith.negf %696 : vector<16x64xf32>
    %698 = math.exp %697 : vector<16x64xf32>
    %cst_343 = arith.constant 1.000000e+00 : f32
    %699 = vector.broadcast %cst_343 : f32 to vector<16x64xf32>
    %700 = arith.addf %699, %698 : vector<16x64xf32>
    %701 = arith.divf %699, %700 : vector<16x64xf32>
    %c0_344 = arith.constant 0 : index
    %c0_345 = arith.constant 0 : index
    %702 = vector.load %arg13[%c0_344, %c0_345] : memref<16x64xf32, #tpu.memory_space<vmem>>, vector<16x64xf32>
    %703 = arith.mulf %693, %702 : vector<16x64xf32>
    %704 = arith.mulf %687, %695 : vector<16x64xf32>
    %705 = arith.addf %703, %704 : vector<16x64xf32>
    %706 = math.tanh %705 : vector<16x64xf32>
    %707 = arith.mulf %701, %706 : vector<16x64xf32>
    %c0_346 = arith.constant 0 : index
    %c0_347 = arith.constant 0 : index
    %708 = vector.load %arg13[%c0_346, %c0_347] : memref<16x64xf32, #tpu.memory_space<vmem>>, vector<16x64xf32>
    tpu.vector_store %arg13[%c0_346, %c0_347], %705 {strides = array<i32>} : memref<16x64xf32, #tpu.memory_space<vmem>>, vector<16x64xf32>,
    %c0_348 = arith.constant 0 : index
    %c0_349 = arith.constant 0 : index
    %709 = vector.load %arg12[%c0_348, %c0_349] : memref<16x64xf32, #tpu.memory_space<vmem>>, vector<16x64xf32>
    tpu.vector_store %arg12[%c0_348, %c0_349], %707 {strides = array<i32>} : memref<16x64xf32, #tpu.memory_space<vmem>>, vector<16x64xf32>,
    %710 = arith.truncf %707 : vector<16x64xf32> to vector<16x64xbf16>
    %711 = arith.index_cast %c7_i32_328 : i32 to index
    %c0_350 = arith.constant 0 : index
    %c0_351 = arith.constant 0 : index
    %712 = vector.load %arg10[%711, %c0_350, %c0_351] : memref<8x16x64xbf16, #tpu.memory_space<vmem>>, vector<1x16x64xbf16>
    %713 = vector.shape_cast %712 : vector<1x16x64xbf16> to vector<16x64xbf16>
    %714 = vector.shape_cast %710 : vector<16x64xbf16> to vector<1x16x64xbf16>
    tpu.vector_store %arg10[%711, %c0_350, %c0_351], %714 {strides = array<i32>} : memref<8x16x64xbf16, #tpu.memory_space<vmem>>, vector<1x16x64xbf16>,
    %c7_i32_352 = arith.constant 7 : i32
    %715 = arith.subi %c7_i32_352, %c7_i32_328 : i32
    %716 = arith.index_cast %715 : i32 to index
    %c0_353 = arith.constant 0 : index
    %c0_354 = arith.constant 0 : index
    %717 = vector.load %arg3[%716, %c0_353, %c0_354] : memref<8x16x16xf32, #tpu.memory_space<vmem>>, vector<1x16x16xf32>
    %718 = vector.shape_cast %717 : vector<1x16x16xf32> to vector<16x16xf32>
    %719 = arith.truncf %718 : vector<16x16xf32> to vector<16x16xbf16>
    %c0_355 = arith.constant 0 : index
    %c0_356 = arith.constant 0 : index
    %720 = vector.load %arg5[%c0_355, %c0_356] : memref<16x256xbf16, #tpu.memory_space<vmem>>, vector<16x256xbf16>
    %cst_357 = arith.constant dense<0.000000e+00> : vector<16x256xf32>
    %721 = tpu.matmul %719, %720, %cst_357 {dimension_numbers = #tpu.dot_dimension_numbers<[1], [0], [0], [1], [0, 0, 1, 1], [], []>} : vector<16x16xbf16>, vector<16x256xbf16>, vector<16x256xf32> -> vector<16x256xf32>
    %c0_358 = arith.constant 0 : index
    %c0_359 = arith.constant 0 : index
    %722 = vector.load %arg14[%c0_358, %c0_359] : memref<16x64xf32, #tpu.memory_space<vmem>>, vector<16x64xf32>
    %723 = arith.truncf %722 : vector<16x64xf32> to vector<16x64xbf16>
    %c0_360 = arith.constant 0 : index
    %c0_361 = arith.constant 0 : index
    %724 = vector.load %arg7[%c0_360, %c0_361] : memref<64x256xbf16, #tpu.memory_space<vmem>>, vector<64x256xbf16>
    %cst_362 = arith.constant dense<0.000000e+00> : vector<16x256xf32>
    %725 = tpu.matmul %723, %724, %cst_362 {dimension_numbers = #tpu.dot_dimension_numbers<[1], [0], [0], [1], [0, 0, 1, 1], [], []>} : vector<16x64xbf16>, vector<64x256xbf16>, vector<16x256xf32> -> vector<16x256xf32>
    %726 = arith.addf %721, %725 : vector<16x256xf32>
    %c0_363 = arith.constant 0 : index
    %c0_364 = arith.constant 0 : index
    %727 = vector.load %arg9[%c0_363, %c0_364] : memref<1x256xf32, #tpu.memory_space<vmem>>, vector<1x256xf32>
    %728 = vector.broadcast %727 : vector<1x256xf32> to vector<16x256xf32>
    %729 = arith.addf %726, %728 : vector<16x256xf32>
    %730 = vector.extract_strided_slice %729 {offsets = [0, 0], sizes = [16, 64], strides = [1, 1]} : vector<16x256xf32> to vector<16x64xf32>
    %731 = arith.negf %730 : vector<16x64xf32>
    %732 = math.exp %731 : vector<16x64xf32>
    %cst_365 = arith.constant 1.000000e+00 : f32
    %733 = vector.broadcast %cst_365 : f32 to vector<16x64xf32>
    %734 = arith.addf %733, %732 : vector<16x64xf32>
    %735 = arith.divf %733, %734 : vector<16x64xf32>
    %736 = vector.extract_strided_slice %729 {offsets = [0, 64], sizes = [16, 64], strides = [1, 1]} : vector<16x256xf32> to vector<16x64xf32>
    %737 = arith.negf %736 : vector<16x64xf32>
    %738 = math.exp %737 : vector<16x64xf32>
    %cst_366 = arith.constant 1.000000e+00 : f32
    %739 = vector.broadcast %cst_366 : f32 to vector<16x64xf32>
    %740 = arith.addf %739, %738 : vector<16x64xf32>
    %741 = arith.divf %739, %740 : vector<16x64xf32>
    %742 = vector.extract_strided_slice %729 {offsets = [0, 128], sizes = [16, 64], strides = [1, 1]} : vector<16x256xf32> to vector<16x64xf32>
    %743 = math.tanh %742 : vector<16x64xf32>
    %744 = vector.extract_strided_slice %729 {offsets = [0, 192], sizes = [16, 64], strides = [1, 1]} : vector<16x256xf32> to vector<16x64xf32>
    %745 = arith.negf %744 : vector<16x64xf32>
    %746 = math.exp %745 : vector<16x64xf32>
    %cst_367 = arith.constant 1.000000e+00 : f32
    %747 = vector.broadcast %cst_367 : f32 to vector<16x64xf32>
    %748 = arith.addf %747, %746 : vector<16x64xf32>
    %749 = arith.divf %747, %748 : vector<16x64xf32>
    %c0_368 = arith.constant 0 : index
    %c0_369 = arith.constant 0 : index
    %750 = vector.load %arg15[%c0_368, %c0_369] : memref<16x64xf32, #tpu.memory_space<vmem>>, vector<16x64xf32>
    %751 = arith.mulf %741, %750 : vector<16x64xf32>
    %752 = arith.mulf %735, %743 : vector<16x64xf32>
    %753 = arith.addf %751, %752 : vector<16x64xf32>
    %754 = math.tanh %753 : vector<16x64xf32>
    %755 = arith.mulf %749, %754 : vector<16x64xf32>
    %c0_370 = arith.constant 0 : index
    %c0_371 = arith.constant 0 : index
    %756 = vector.load %arg15[%c0_370, %c0_371] : memref<16x64xf32, #tpu.memory_space<vmem>>, vector<16x64xf32>
    tpu.vector_store %arg15[%c0_370, %c0_371], %753 {strides = array<i32>} : memref<16x64xf32, #tpu.memory_space<vmem>>, vector<16x64xf32>,
    %c0_372 = arith.constant 0 : index
    %c0_373 = arith.constant 0 : index
    %757 = vector.load %arg14[%c0_372, %c0_373] : memref<16x64xf32, #tpu.memory_space<vmem>>, vector<16x64xf32>
    tpu.vector_store %arg14[%c0_372, %c0_373], %755 {strides = array<i32>} : memref<16x64xf32, #tpu.memory_space<vmem>>, vector<16x64xf32>,
    %758 = arith.truncf %755 : vector<16x64xf32> to vector<16x64xbf16>
    %759 = arith.index_cast %715 : i32 to index
    %c0_374 = arith.constant 0 : index
    %c0_375 = arith.constant 0 : index
    %760 = vector.load %arg11[%759, %c0_374, %c0_375] : memref<8x16x64xbf16, #tpu.memory_space<vmem>>, vector<1x16x64xbf16>
    %761 = vector.shape_cast %760 : vector<1x16x64xbf16> to vector<16x64xbf16>
    %762 = vector.shape_cast %758 : vector<16x64xbf16> to vector<1x16x64xbf16>
    tpu.vector_store %arg11[%759, %c0_374, %c0_375], %762 {strides = array<i32>} : memref<8x16x64xbf16, #tpu.memory_space<vmem>>, vector<1x16x64xbf16>,
    %c8_i32 = arith.constant 8 : i32
    return
  }
  func.func @transform_0(%arg0: i32, %arg1: i32) -> (i32, i32, i32) {
    %c0_i32 = arith.constant 0 : i32
    %c0_i32_0 = arith.constant 0 : i32
    return %arg1, %arg0, %c0_i32 : i32, i32, i32
  }
  func.func @transform_1(%arg0: i32, %arg1: i32) -> (i32, i32, i32) {
    %c0_i32 = arith.constant 0 : i32
    %0 = arith.subi %c0_i32, %arg1 : i32
    %c0_i32_0 = arith.constant 0 : i32
    %c0_i32_1 = arith.constant 0 : i32
    return %0, %arg0, %c0_i32_0 : i32, i32, i32
  }
  func.func @transform_2(%arg0: i32, %arg1: i32) -> (i32, i32) {
    %c0_i32 = arith.constant 0 : i32
    %c0_i32_0 = arith.constant 0 : i32
    %c0_i32_1 = arith.constant 0 : i32
    return %c0_i32, %c0_i32_0 : i32, i32
  }
  func.func @transform_3(%arg0: i32, %arg1: i32) -> (i32, i32) {
    %c0_i32 = arith.constant 0 : i32
    %c0_i32_0 = arith.constant 0 : i32
    %c0_i32_1 = arith.constant 0 : i32
    return %c0_i32, %c0_i32_0 : i32, i32
  }
  func.func @transform_4(%arg0: i32, %arg1: i32) -> (i32, i32) {
    %c0_i32 = arith.constant 0 : i32
    %c0_i32_0 = arith.constant 0 : i32
    %c0_i32_1 = arith.constant 0 : i32
    return %c0_i32, %c0_i32_0 : i32, i32
  }
  func.func @transform_5(%arg0: i32, %arg1: i32) -> (i32, i32) {
    %c0_i32 = arith.constant 0 : i32
    %c0_i32_0 = arith.constant 0 : i32
    %c0_i32_1 = arith.constant 0 : i32
    return %c0_i32, %c0_i32_0 : i32, i32
  }
  func.func @transform_6(%arg0: i32, %arg1: i32) -> (i32, i32) {
    %c0_i32 = arith.constant 0 : i32
    %c0_i32_0 = arith.constant 0 : i32
    %c0_i32_1 = arith.constant 0 : i32
    return %c0_i32, %c0_i32_0 : i32, i32
  }
  func.func @transform_7(%arg0: i32, %arg1: i32) -> (i32, i32) {
    %c0_i32 = arith.constant 0 : i32
    %c0_i32_0 = arith.constant 0 : i32
    %c0_i32_1 = arith.constant 0 : i32
    return %c0_i32, %c0_i32_0 : i32, i32
  }
  func.func @transform_8(%arg0: i32, %arg1: i32) -> (i32, i32, i32) {
    %c0_i32 = arith.constant 0 : i32
    %c0_i32_0 = arith.constant 0 : i32
    return %arg1, %arg0, %c0_i32 : i32, i32, i32
  }
  func.func @transform_9(%arg0: i32, %arg1: i32) -> (i32, i32, i32) {
    %c0_i32 = arith.constant 0 : i32
    %0 = arith.subi %c0_i32, %arg1 : i32
    %c0_i32_0 = arith.constant 0 : i32
    %c0_i32_1 = arith.constant 0 : i32
    return %0, %arg0, %c0_i32_0 : i32, i32, i32
  }
}

</mosaic_0001>

<llo_original>
// kernel: separator_forward.11
$region0: #{separator_forward.11}
  #allocation0 [shape = 'u32[]', space=smem, size = 0x4, offset = 0x4, fixed_abs, tag = 'smem constant byte address 0x4 - core index']
  #allocation1 [shape = 'u32[144,128]{1,0:T(1,128)}', space=vmem, size = 0x12000, scoped, tag = 'internal scratch']
  %s0 = inlined_call_operand.vmem [shape: bf16[128,64], index: 0, kind: input, shape index: {}]
  %s1 = inlined_call_operand.vmem [shape: bf16[128,64], index: 1, kind: input, shape index: {}]
  %s2 = inlined_call_operand.vmem [shape: f32[128,16], index: 2, kind: input, shape index: {}]
  %s3 = inlined_call_operand.vmem [shape: bf16[64,32], index: 3, kind: input, shape index: {}]
  %s4 = inlined_call_operand.vmem [shape: bf16[64,32], index: 4, kind: input, shape index: {}]
  %s5 = inlined_call_operand.vmem [shape: f32[1,32], index: 5, kind: input, shape index: {}]
  %s6 = inlined_call_operand.vmem [shape: bf16[32,16], index: 6, kind: input, shape index: {}]
  %s7 = inlined_call_operand.vmem [shape: f32[1,16], index: 7, kind: input, shape index: {}]
  %s8 = inlined_call_operand.vmem [shape: f32[1,16], index: 8, kind: input, shape index: {}]
  %s9 = inlined_call_operand.vmem [shape: bf16[16,32], index: 9, kind: input, shape index: {}]
  %s10 = inlined_call_operand.vmem [shape: f32[1,32], index: 10, kind: input, shape index: {}]
  %s11 = inlined_call_operand.vmem [shape: f32[128,16], index: 11, kind: output, shape index: {0}]
  %s12 = inlined_call_operand.vmem [shape: f32[128,32], index: 12, kind: output, shape index: {1}]
  %13 = xla_tuple %s11, %s12
  %s14 = sld [smem:[#allocation0]]
  $region62: #{separator_forward.11} parent=0
    _
  %s16 = ssub.s32 1, %s14
  %s17 = scalar_select 0, %s16, %s14
  // Predicated region
  $region2: #{separator_forward.11} parent=0 // pred_check
    _
  $region3: #{separator_forward.11} parent=0 // pred_check_branch
    %19 = sbr.rel (0) target = $region5
  $region4: #{separator_forward.11} parent=0 // pred_region
    _
  $region5: #{separator_forward.11} parent=0 // pred_fallthru
    _
  // Predicated region
  $region6: #{separator_forward.11} parent=0 // pred_check
    _
  $region7: #{separator_forward.11} parent=0 // pred_check_branch
    %21 = sbr.rel (0) target = $region9
  $region8: #{separator_forward.11} parent=0 // pred_region
    _
  $region9: #{separator_forward.11} parent=0 // pred_fallthru
    _
  // Predicated region
  $region10: #{separator_forward.11} parent=0 // pred_check
    _
  $region11: #{separator_forward.11} parent=0 // pred_check_branch
    %23 = sbr.rel (0) target = $region13
  $region12: #{separator_forward.11} parent=0 // pred_region
    _
  $region13: #{separator_forward.11} parent=0 // pred_fallthru
    _
  // Predicated region
  $region14: #{separator_forward.11} parent=0 // pred_check
    _
  $region15: #{separator_forward.11} parent=0 // pred_check_branch
    %25 = sbr.rel (0) target = $region17
  $region16: #{separator_forward.11} parent=0 // pred_region
    _
  $region17: #{separator_forward.11} parent=0 // pred_fallthru
    _
  // Predicated region
  $region18: #{separator_forward.11} parent=0 // pred_check
    _
  $region19: #{separator_forward.11} parent=0 // pred_check_branch
    %27 = sbr.rel (0) target = $region21
  $region20: #{separator_forward.11} parent=0 // pred_region
    _
  $region21: #{separator_forward.11} parent=0 // pred_fallthru
    _
  // Predicated region
  $region22: #{separator_forward.11} parent=0 // pred_check
    _
  $region23: #{separator_forward.11} parent=0 // pred_check_branch
    %29 = sbr.rel (0) target = $region25
  $region24: #{separator_forward.11} parent=0 // pred_region
    _
  $region25: #{separator_forward.11} parent=0 // pred_fallthru
    _
  // Predicated region
  $region26: #{separator_forward.11} parent=0 // pred_check
    _
  $region27: #{separator_forward.11} parent=0 // pred_check_branch
    %31 = sbr.rel (0) target = $region29
  $region28: #{separator_forward.11} parent=0 // pred_region
    _
  $region29: #{separator_forward.11} parent=0 // pred_fallthru
    _
  // Predicated region
  $region30: #{separator_forward.11} parent=0 // pred_check
    _
  $region31: #{separator_forward.11} parent=0 // pred_check_branch
    %33 = sbr.rel (0) target = $region33
  $region32: #{separator_forward.11} parent=0 // pred_region
    _
  $region33: #{separator_forward.11} parent=0 // pred_fallthru
    _
  // Predicated region
  $region34: #{separator_forward.11} parent=0 // pred_check
    _
  $region35: #{separator_forward.11} parent=0 // pred_check_branch
    %35 = sbr.rel (0) target = $region37
  $region36: #{separator_forward.11} parent=0 // pred_region
    _
  $region37: #{separator_forward.11} parent=0 // pred_fallthru
    _
  // Predicated region
  $region38: #{separator_forward.11} parent=0 // pred_check
    _
  $region39: #{separator_forward.11} parent=0 // pred_check_branch
    %37 = sbr.rel (0) target = $region41
  $region40: #{separator_forward.11} parent=0 // pred_region
    _
  $region41: #{separator_forward.11} parent=0 // pred_fallthru
    _
  // Predicated region
  $region42: #{separator_forward.11} parent=0 // pred_check
    _
  $region43: #{separator_forward.11} parent=0 // pred_check_branch
    %39 = sbr.rel (0) target = $region45
  $region44: #{separator_forward.11} parent=0 // pred_region
    _
  $region45: #{separator_forward.11} parent=0 // pred_fallthru
    _
  %v41 = vld [vmem:[%s0] sm:$0xf]
  %v42 = vld [vmem:[%s0 + $0x4] sm:$0xf]
  %v43 = vld [vmem:[%s0 + $0x8] sm:$0xf]
  %v44 = vld [vmem:[%s0 + $0xc] sm:$0xf]
  %v45 = vld [vmem:[%s0 + $0x10] sm:$0xf]
  %v46 = vld [vmem:[%s0 + $0x14] sm:$0xf]
  %v47 = vld [vmem:[%s0 + $0x18] sm:$0xf]
  %v48 = vld [vmem:[%s0 + $0x1c] sm:$0xf]
  %v49 = vld [vmem:[%s0 + $0x20] sm:$0xf]
  %v50 = vld [vmem:[%s0 + $0x24] sm:$0xf]
  %v51 = vld [vmem:[%s0 + $0x28] sm:$0xf]
  %v52 = vld [vmem:[%s0 + $0x2c] sm:$0xf]
  %v53 = vld [vmem:[%s0 + $0x30] sm:$0xf]
  %v54 = vld [vmem:[%s0 + $0x34] sm:$0xf]
  %v55 = vld [vmem:[%s0 + $0x38] sm:$0xf]
  %v56 = vld [vmem:[%s0 + $0x3c] sm:$0xf]
  %v57 = vld [vmem:[%s3] sm:$0xf]
  %v58 = vld [vmem:[%s3 + $0x4] sm:$0xf]
  %v59 = vld [vmem:[%s3 + $0x8] sm:$0xf]
  %v60 = vld [vmem:[%s3 + $0xc] sm:$0xf]
  %v61 = vld [vmem:[%s3 + $0x10] sm:$0xf]
  %v62 = vld [vmem:[%s3 + $0x14] sm:$0xf]
  %v63 = vld [vmem:[%s3 + $0x18] sm:$0xf]
  %v64 = vld [vmem:[%s3 + $0x1c] sm:$0xf]
  %v65 = vld [vmem:[%s1] sm:$0xf]
  %v66 = vld [vmem:[%s1 + $0x4] sm:$0xf]
  %v67 = vld [vmem:[%s1 + $0x8] sm:$0xf]
  %v68 = vld [vmem:[%s1 + $0xc] sm:$0xf]
  %v69 = vld [vmem:[%s1 + $0x10] sm:$0xf]
  %v70 = vld [vmem:[%s1 + $0x14] sm:$0xf]
  %v71 = vld [vmem:[%s1 + $0x18] sm:$0xf]
  %v72 = vld [vmem:[%s1 + $0x1c] sm:$0xf]
  %v73 = vld [vmem:[%s1 + $0x20] sm:$0xf]
  %v74 = vld [vmem:[%s1 + $0x24] sm:$0xf]
  %v75 = vld [vmem:[%s1 + $0x28] sm:$0xf]
  %v76 = vld [vmem:[%s1 + $0x2c] sm:$0xf]
  %v77 = vld [vmem:[%s1 + $0x30] sm:$0xf]
  %v78 = vld [vmem:[%s1 + $0x34] sm:$0xf]
  %v79 = vld [vmem:[%s1 + $0x38] sm:$0xf]
  %v80 = vld [vmem:[%s1 + $0x3c] sm:$0xf]
  %v81 = vld [vmem:[%s4] sm:$0xf]
  %v82 = vld [vmem:[%s4 + $0x4] sm:$0xf]
  %v83 = vld [vmem:[%s4 + $0x8] sm:$0xf]
  %v84 = vld [vmem:[%s4 + $0xc] sm:$0xf]
  %v85 = vld [vmem:[%s4 + $0x10] sm:$0xf]
  %v86 = vld [vmem:[%s4 + $0x14] sm:$0xf]
  %v87 = vld [vmem:[%s4 + $0x18] sm:$0xf]
  %v88 = vld [vmem:[%s4 + $0x1c] sm:$0xf]
  %v105 = vunpack.c.l.b16 %v65
  %v106 = vunpack.c.l.b16 %v66
  %v107 = vunpack.c.l.b16 %v67
  %v108 = vunpack.c.l.b16 %v68
  %v109 = vunpack.c.l.b16 %v69
  %v110 = vunpack.c.l.b16 %v70
  %v111 = vunpack.c.l.b16 %v71
  %v112 = vunpack.c.l.b16 %v72
  %v113 = vunpack.c.l.b16 %v73
  %v114 = vunpack.c.l.b16 %v74
  %v115 = vunpack.c.l.b16 %v75
  %v116 = vunpack.c.l.b16 %v76
  %v117 = vunpack.c.l.b16 %v77
  %v118 = vunpack.c.l.b16 %v78
  %v119 = vunpack.c.l.b16 %v79
  %v120 = vunpack.c.l.b16 %v80
  %v121 = vpack.c.b16 %v106, %v105
  %v122 = vpack.c.b16 %v108, %v107
  %v123 = vpack.c.b16 %v110, %v109
  %v124 = vpack.c.b16 %v112, %v111
  %v125 = vpack.c.b16 %v114, %v113
  %v126 = vpack.c.b16 %v116, %v115
  %v127 = vpack.c.b16 %v118, %v117
  %v128 = vpack.c.b16 %v120, %v119
  %v137 = vunpack.c.l.b16 %v81
  %v138 = vunpack.c.l.b16 %v82
  %v139 = vunpack.c.l.b16 %v83
  %v140 = vunpack.c.l.b16 %v84
  %v141 = vunpack.c.l.b16 %v85
  %v142 = vunpack.c.l.b16 %v86
  %v143 = vunpack.c.l.b16 %v87
  %v144 = vunpack.c.l.b16 %v88
  %v145 = vpack.c.b16 %v138, %v137
  %v146 = vpack.c.b16 %v140, %v139
  %v147 = vpack.c.b16 %v142, %v141
  %v148 = vpack.c.b16 %v144, %v143
  %vm153 = vcmask 523264
  %v155 = vsel %vm153, %v121, 0
  %v158 = vsel %vm153, %v122, 0
  %v161 = vsel %vm153, %v123, 0
  %v164 = vsel %vm153, %v124, 0
  %v167 = vsel %vm153, %v125, 0
  %v170 = vsel %vm153, %v126, 0
  %v173 = vsel %vm153, %v127, 0
  %v176 = vsel %vm153, %v128, 0
  %178 = vmatprep.subr.bf16.mxu0 0
  %179 = vmatpush1.bf16.msra.mxu0 %v145
  %180 = vmatprep.subr.bf16.mxu0 0
  %181 = vmatpush1.bf16.msra.mxu0 %v146
  %182 = vmatprep.subr.bf16.mxu0 0
  %183 = vmatpush1.bf16.msra.mxu0 %v147
  %184 = vmatprep.subr.bf16.mxu0 0
  %185 = vmatpush1.bf16.msra.mxu0 %v148
  %186 = vmatprep.subr.bf16.mxu0 0
  %187 = vmatpush1.bf16.msra.mxu0 0
  %188 = vmatprep.subr.bf16.mxu0 0
  %189 = vmatpush1.bf16.msra.mxu0 0
  %190 = vmatprep.subr.bf16.mxu0 0
  %191 = vmatpush1.bf16.msra.mxu0 0
  %192 = vmatprep.subr.bf16.mxu0 0
  %193 = vmatpush1.bf16.msra.mxu0 0
  %194 = vmatprep.subr.bf16.mxu0 0
  %195 = vmatpush1.bf16.msra.mxu0 0
  %196 = vmatprep.subr.bf16.mxu0 0
  %197 = vmatpush1.bf16.msra.mxu0 0
  %198 = vmatprep.subr.bf16.mxu0 0
  %199 = vmatpush1.bf16.msra.mxu0 0
  %200 = vmatprep.subr.bf16.mxu0 0
  %201 = vmatpush1.bf16.msra.mxu0 0
  %202 = vmatprep.subr.bf16.mxu0 0
  %203 = vmatpush1.bf16.msra.mxu0 0
  %204 = vmatprep.subr.bf16.mxu0 0
  %205 = vmatpush1.bf16.msra.mxu0 0
  %206 = vmatprep.subr.bf16.mxu0 0
  %207 = vmatpush1.bf16.msra.mxu0 0
  %208 = vmatprep.subr.bf16.mxu0 0
  %209 = vmatpush1.bf16.msra.mxu0 0
  %210 = vmatprep.mubr.bf16.mxu0 0
  %211 = vmatmul.mubr.bf16.gmra.mrb[0].mxu0 %v155
  %v212 = vpop.f32.mrb[0].mxu0
  %v213 = vadd.f32 0.0, %v212
  %v214 = vpop.f32.mrb[0].mxu0
  %v215 = vpop.f32.mrb[0].mxu0
  %v216 = vadd.f32 0.0, %v215
  %v217 = vpop.f32.mrb[0].mxu0
  %218 = vmatprep.mubr.bf16.mxu0 0
  %219 = vmatmul.mubr.bf16.gmra.mrb[0].mxu0 %v158
  %v220 = vpop.f32.mrb[0].mxu0
  %v221 = vadd.f32 0.0, %v220
  %v222 = vpop.f32.mrb[0].mxu0
  %v223 = vpop.f32.mrb[0].mxu0
  %v224 = vadd.f32 0.0, %v223
  %v225 = vpop.f32.mrb[0].mxu0
  %226 = vmatprep.mubr.bf16.mxu0 0
  %227 = vmatmul.mubr.bf16.gmra.mrb[0].mxu0 %v161
  %v228 = vpop.f32.mrb[0].mxu0
  %v229 = vadd.f32 0.0, %v228
  %v230 = vpop.f32.mrb[0].mxu0
  %v231 = vpop.f32.mrb[0].mxu0
  %v232 = vadd.f32 0.0, %v231
  %v233 = vpop.f32.mrb[0].mxu0
  %234 = vmatprep.mubr.bf16.mxu0 0
  %235 = vmatmul.mubr.bf16.gmra.mrb[0].mxu0 %v164
  %v236 = vpop.f32.mrb[0].mxu0
  %v237 = vadd.f32 0.0, %v236
  %v238 = vpop.f32.mrb[0].mxu0
  %v239 = vpop.f32.mrb[0].mxu0
  %v240 = vadd.f32 0.0, %v239
  %v241 = vpop.f32.mrb[0].mxu0
  %242 = vmatprep.mubr.bf16.mxu0 0
  %243 = vmatmul.mubr.bf16.gmra.mrb[0].mxu0 %v167
  %v244 = vpop.f32.mrb[0].mxu0
  %v245 = vadd.f32 0.0, %v244
  %v246 = vpop.f32.mrb[0].mxu0
  %v247 = vpop.f32.mrb[0].mxu0
  %v248 = vadd.f32 0.0, %v247
  %v249 = vpop.f32.mrb[0].mxu0
  %250 = vmatprep.mubr.bf16.mxu0 0
  %251 = vmatmul.mubr.bf16.gmra.mrb[0].mxu0 %v170
  %v252 = vpop.f32.mrb[0].mxu0
  %v253 = vadd.f32 0.0, %v252
  %v254 = vpop.f32.mrb[0].mxu0
  %v255 = vpop.f32.mrb[0].mxu0
  %v256 = vadd.f32 0.0, %v255
  %v257 = vpop.f32.mrb[0].mxu0
  %258 = vmatprep.mubr.bf16.mxu0 0
  %259 = vmatmul.mubr.bf16.gmra.mrb[0].mxu0 %v173
  %v260 = vpop.f32.mrb[0].mxu0
  %v261 = vadd.f32 0.0, %v260
  %v262 = vpop.f32.mrb[0].mxu0
  %v263 = vpop.f32.mrb[0].mxu0
  %v264 = vadd.f32 0.0, %v263
  %v265 = vpop.f32.mrb[0].mxu0
  %266 = vmatprep.mubr.bf16.mxu0 0
  %267 = vmatmul.mubr.bf16.gmra.mrb[0].mxu0 %v176
  %v268 = vpop.f32.mrb[0].mxu0
  %v269 = vadd.f32 0.0, %v268
  %v270 = vpop.f32.mrb[0].mxu0
  %v271 = vpop.f32.mrb[0].mxu0
  %v272 = vadd.f32 0.0, %v271
  %v273 = vpop.f32.mrb[0].mxu0
  %274 = vdwg.mxu0
  %v291 = vunpack.c.l.b16 %v41
  %v292 = vunpack.c.l.b16 %v42
  %v293 = vunpack.c.l.b16 %v43
  %v294 = vunpack.c.l.b16 %v44
  %v295 = vunpack.c.l.b16 %v45
  %v296 = vunpack.c.l.b16 %v46
  %v297 = vunpack.c.l.b16 %v47
  %v298 = vunpack.c.l.b16 %v48
  %v299 = vunpack.c.l.b16 %v49
  %v300 = vunpack.c.l.b16 %v50
  %v301 = vunpack.c.l.b16 %v51
  %v302 = vunpack.c.l.b16 %v52
  %v303 = vunpack.c.l.b16 %v53
  %v304 = vunpack.c.l.b16 %v54
  %v305 = vunpack.c.l.b16 %v55
  %v306 = vunpack.c.l.b16 %v56
  %v307 = vpack.c.b16 %v292, %v291
  %v308 = vpack.c.b16 %v294, %v293
  %v309 = vpack.c.b16 %v296, %v295
  %v310 = vpack.c.b16 %v298, %v297
  %v311 = vpack.c.b16 %v300, %v299
  %v312 = vpack.c.b16 %v302, %v301
  %v313 = vpack.c.b16 %v304, %v303
  %v314 = vpack.c.b16 %v306, %v305
  %v323 = vunpack.c.l.b16 %v57
  %v324 = vunpack.c.l.b16 %v58
  %v325 = vunpack.c.l.b16 %v59
  %v326 = vunpack.c.l.b16 %v60
  %v327 = vunpack.c.l.b16 %v61
  %v328 = vunpack.c.l.b16 %v62
  %v329 = vunpack.c.l.b16 %v63
  %v330 = vunpack.c.l.b16 %v64
  %v331 = vpack.c.b16 %v324, %v323
  %v332 = vpack.c.b16 %v326, %v325
  %v333 = vpack.c.b16 %v328, %v327
  %v334 = vpack.c.b16 %v330, %v329
  %v340 = vsel %vm153, %v307, 0
  %v343 = vsel %vm153, %v308, 0
  %v346 = vsel %vm153, %v309, 0
  %v349 = vsel %vm153, %v310, 0
  %v352 = vsel %vm153, %v311, 0
  %v355 = vsel %vm153, %v312, 0
  %v358 = vsel %vm153, %v313, 0
  %v361 = vsel %vm153, %v314, 0
  %363 = vmatprep.subr.bf16.mxu0 0
  %364 = vmatpush1.bf16.msra.mxu0 %v331
  %365 = vmatprep.subr.bf16.mxu0 0
  %366 = vmatpush1.bf16.msra.mxu0 %v332
  %367 = vmatprep.subr.bf16.mxu0 0
  %368 = vmatpush1.bf16.msra.mxu0 %v333
  %369 = vmatprep.subr.bf16.mxu0 0
  %370 = vmatpush1.bf16.msra.mxu0 %v334
  %371 = vmatprep.subr.bf16.mxu0 0
  %372 = vmatpush1.bf16.msra.mxu0 0
  %373 = vmatprep.subr.bf16.mxu0 0
  %374 = vmatpush1.bf16.msra.mxu0 0
  %375 = vmatprep.subr.bf16.mxu0 0
  %376 = vmatpush1.bf16.msra.mxu0 0
  %377 = vmatprep.subr.bf16.mxu0 0
  %378 = vmatpush1.bf16.msra.mxu0 0
  %379 = vmatprep.subr.bf16.mxu0 0
  %380 = vmatpush1.bf16.msra.mxu0 0
  %381 = vmatprep.subr.bf16.mxu0 0
  %382 = vmatpush1.bf16.msra.mxu0 0
  %383 = vmatprep.subr.bf16.mxu0 0
  %384 = vmatpush1.bf16.msra.mxu0 0
  %385 = vmatprep.subr.bf16.mxu0 0
  %386 = vmatpush1.bf16.msra.mxu0 0
  %387 = vmatprep.subr.bf16.mxu0 0
  %388 = vmatpush1.bf16.msra.mxu0 0
  %389 = vmatprep.subr.bf16.mxu0 0
  %390 = vmatpush1.bf16.msra.mxu0 0
  %391 = vmatprep.subr.bf16.mxu0 0
  %392 = vmatpush1.bf16.msra.mxu0 0
  %393 = vmatprep.subr.bf16.mxu0 0
  %394 = vmatpush1.bf16.msra.mxu0 0
  %395 = vmatprep.mubr.bf16.mxu0 0
  %396 = vmatmul.mubr.bf16.gmra.mrb[0].mxu0 %v340
  %v397 = vpop.f32.mrb[0].mxu0
  %v398 = vadd.f32 %v213, %v397
  %v399 = vpop.f32.mrb[0].mxu0
  %v400 = vpop.f32.mrb[0].mxu0
  %v401 = vadd.f32 %v216, %v400
  %v402 = vpop.f32.mrb[0].mxu0
  %403 = vmatprep.mubr.bf16.mxu0 0
  %404 = vmatmul.mubr.bf16.gmra.mrb[0].mxu0 %v343
  %v405 = vpop.f32.mrb[0].mxu0
  %v406 = vadd.f32 %v221, %v405
  %v407 = vpop.f32.mrb[0].mxu0
  %v408 = vpop.f32.mrb[0].mxu0
  %v409 = vadd.f32 %v224, %v408
  %v410 = vpop.f32.mrb[0].mxu0
  %411 = vmatprep.mubr.bf16.mxu0 0
  %412 = vmatmul.mubr.bf16.gmra.mrb[0].mxu0 %v346
  %v413 = vpop.f32.mrb[0].mxu0
  %v414 = vadd.f32 %v229, %v413
  %v415 = vpop.f32.mrb[0].mxu0
  %v416 = vpop.f32.mrb[0].mxu0
  %v417 = vadd.f32 %v232, %v416
  %v418 = vpop.f32.mrb[0].mxu0
  %419 = vmatprep.mubr.bf16.mxu0 0
  %420 = vmatmul.mubr.bf16.gmra.mrb[0].mxu0 %v349
  %v421 = vpop.f32.mrb[0].mxu0
  %v422 = vadd.f32 %v237, %v421
  %v423 = vpop.f32.mrb[0].mxu0
  %v424 = vpop.f32.mrb[0].mxu0
  %v425 = vadd.f32 %v240, %v424
  %v426 = vpop.f32.mrb[0].mxu0
  %427 = vmatprep.mubr.bf16.mxu0 0
  %428 = vmatmul.mubr.bf16.gmra.mrb[0].mxu0 %v352
  %v429 = vpop.f32.mrb[0].mxu0
  %v430 = vadd.f32 %v245, %v429
  %v431 = vpop.f32.mrb[0].mxu0
  %v432 = vpop.f32.mrb[0].mxu0
  %v433 = vadd.f32 %v248, %v432
  %v434 = vpop.f32.mrb[0].mxu0
  %435 = vmatprep.mubr.bf16.mxu0 0
  %436 = vmatmul.mubr.bf16.gmra.mrb[0].mxu0 %v355
  %v437 = vpop.f32.mrb[0].mxu0
  %v438 = vadd.f32 %v253, %v437
  %v439 = vpop.f32.mrb[0].mxu0
  %v440 = vpop.f32.mrb[0].mxu0
  %v441 = vadd.f32 %v256, %v440
  %v442 = vpop.f32.mrb[0].mxu0
  %443 = vmatprep.mubr.bf16.mxu0 0
  %444 = vmatmul.mubr.bf16.gmra.mrb[0].mxu0 %v358
  %v445 = vpop.f32.mrb[0].mxu0
  %v446 = vadd.f32 %v261, %v445
  %v447 = vpop.f32.mrb[0].mxu0
  %v448 = vpop.f32.mrb[0].mxu0
  %v449 = vadd.f32 %v264, %v448
  %v450 = vpop.f32.mrb[0].mxu0
  %451 = vmatprep.mubr.bf16.mxu0 0
  %452 = vmatmul.mubr.bf16.gmra.mrb[0].mxu0 %v361
  %v453 = vpop.f32.mrb[0].mxu0
  %v454 = vadd.f32 %v269, %v453
  %v455 = vpop.f32.mrb[0].mxu0
  %v456 = vpop.f32.mrb[0].mxu0
  %v457 = vadd.f32 %v272, %v456
  %v458 = vpop.f32.mrb[0].mxu0
  %459 = vdwg.mxu0
  %v460 = vld [vmem:[%s5] sm:$0x1]
  %v462 = vlaneseq
  %v463 = vshrl.u32 %v462, 7
  %v464 = vsub.s32 0, %v463
  %v465 = vrot.slane %v460, %v464
  %v467 = vadd.f32 %v398, %v465
  %v468 = vadd.f32 %v401, %v465
  %v469 = vadd.f32 %v406, %v465
  %v470 = vadd.f32 %v409, %v465
  %v471 = vadd.f32 %v414, %v465
  %v472 = vadd.f32 %v417, %v465
  %v473 = vadd.f32 %v422, %v465
  %v474 = vadd.f32 %v425, %v465
  %v475 = vadd.f32 %v430, %v465
  %v476 = vadd.f32 %v433, %v465
  %v477 = vadd.f32 %v438, %v465
  %v478 = vadd.f32 %v441, %v465
  %v479 = vadd.f32 %v446, %v465
  %v480 = vadd.f32 %v449, %v465
  %v481 = vadd.f32 %v454, %v465
  %v482 = vadd.f32 %v457, %v465
  %499 = vrot.lane.b32.xlu0 %v467, 112
  %v500 = vpop.permute.xlu0 %499
  %501 = vrot.lane.b32.xlu0 %v468, 112
  %v502 = vpop.permute.xlu0 %501
  %503 = vrot.lane.b32.xlu0 %v469, 112
  %v504 = vpop.permute.xlu0 %503
  %505 = vrot.lane.b32.xlu0 %v470, 112
  %v506 = vpop.permute.xlu0 %505
  %507 = vrot.lane.b32.xlu0 %v471, 112
  %v508 = vpop.permute.xlu0 %507
  %509 = vrot.lane.b32.xlu0 %v472, 112
  %v510 = vpop.permute.xlu0 %509
  %511 = vrot.lane.b32.xlu0 %v473, 112
  %v512 = vpop.permute.xlu0 %511
  %513 = vrot.lane.b32.xlu0 %v474, 112
  %v514 = vpop.permute.xlu0 %513
  %515 = vrot.lane.b32.xlu0 %v475, 112
  %v516 = vpop.permute.xlu0 %515
  %517 = vrot.lane.b32.xlu0 %v476, 112
  %v518 = vpop.permute.xlu0 %517
  %519 = vrot.lane.b32.xlu0 %v477, 112
  %v520 = vpop.permute.xlu0 %519
  %521 = vrot.lane.b32.xlu0 %v478, 112
  %v522 = vpop.permute.xlu0 %521
  %523 = vrot.lane.b32.xlu0 %v479, 112
  %v524 = vpop.permute.xlu0 %523
  %525 = vrot.lane.b32.xlu0 %v480, 112
  %v526 = vpop.permute.xlu0 %525
  %527 = vrot.lane.b32.xlu0 %v481, 112
  %v528 = vpop.permute.xlu0 %527
  %529 = vrot.lane.b32.xlu0 %v482, 112
  %v530 = vpop.permute.xlu0 %529
  %v547 = vmul.f32 %v467, %v500
  %v548 = vmul.f32 %v468, %v502
  %v549 = vmul.f32 %v469, %v504
  %v550 = vmul.f32 %v470, %v506
  %v551 = vmul.f32 %v471, %v508
  %v552 = vmul.f32 %v472, %v510
  %v553 = vmul.f32 %v473, %v512
  %v554 = vmul.f32 %v474, %v514
  %v555 = vmul.f32 %v475, %v516
  %v556 = vmul.f32 %v476, %v518
  %v557 = vmul.f32 %v477, %v520
  %v558 = vmul.f32 %v478, %v522
  %v559 = vmul.f32 %v479, %v524
  %v560 = vmul.f32 %v480, %v526
  %v561 = vmul.f32 %v481, %v528
  %v562 = vmul.f32 %v482, %v530
  %v563 = vld [vmem:[%s2] sm:$0xff]
  %v564 = vld [vmem:[%s2 + $0x8] sm:$0xff]
  %v565 = vld [vmem:[%s2 + $0x10] sm:$0xff]
  %v566 = vld [vmem:[%s2 + $0x18] sm:$0xff]
  %v567 = vld [vmem:[%s2 + $0x20] sm:$0xff]
  %v568 = vld [vmem:[%s2 + $0x28] sm:$0xff]
  %v569 = vld [vmem:[%s2 + $0x30] sm:$0xff]
  %v570 = vld [vmem:[%s2 + $0x38] sm:$0xff]
  %v571 = vld [vmem:[%s2 + $0x40] sm:$0xff]
  %v572 = vld [vmem:[%s2 + $0x48] sm:$0xff]
  %v573 = vld [vmem:[%s2 + $0x50] sm:$0xff]
  %v574 = vld [vmem:[%s2 + $0x58] sm:$0xff]
  %v575 = vld [vmem:[%s2 + $0x60] sm:$0xff]
  %v576 = vld [vmem:[%s2 + $0x68] sm:$0xff]
  %v577 = vld [vmem:[%s2 + $0x70] sm:$0xff]
  %v578 = vld [vmem:[%s2 + $0x78] sm:$0xff]
  %v579 = vld [vmem:[%s6] sm:$0xf]
  %v580 = vld [vmem:[%s6 + $0x4] sm:$0xf]
  %v581 = vld [vmem:[%s6 + $0x8] sm:$0xf]
  %v582 = vld [vmem:[%s6 + $0xc] sm:$0xf]
  %v583 = vpack.c.bf16 %v548, %v547
  %v584 = vpack.c.bf16 %v550, %v549
  %v585 = vpack.c.bf16 %v552, %v551
  %v586 = vpack.c.bf16 %v554, %v553
  %v587 = vpack.c.bf16 %v556, %v555
  %v588 = vpack.c.bf16 %v558, %v557
  %v589 = vpack.c.bf16 %v560, %v559
  %v590 = vpack.c.bf16 %v562, %v561
  %v591 = vpack.c.bf16 %v564, %v563
  %v592 = vpack.c.bf16 %v566, %v565
  %v593 = vpack.c.bf16 %v568, %v567
  %v594 = vpack.c.bf16 %v570, %v569
  %v595 = vpack.c.bf16 %v572, %v571
  %v596 = vpack.c.bf16 %v574, %v573
  %v597 = vpack.c.bf16 %v576, %v575
  %v598 = vpack.c.bf16 %v578, %v577
  %v601 = vunpack.c.l.b16 %v581
  %v602 = vunpack.c.l.b16 %v582
  %v603 = vpack.c.b16 %v602, %v601
  %vm605 = vcmask 130048
  %v607 = vsel %vm605, %v591, 0
  %v610 = vsel %vm605, %v592, 0
  %v613 = vsel %vm605, %v593, 0
  %v616 = vsel %vm605, %v594, 0
  %v619 = vsel %vm605, %v595, 0
  %v622 = vsel %vm605, %v596, 0
  %v625 = vsel %vm605, %v597, 0
  %v628 = vsel %vm605, %v598, 0
  %630 = vmatprep.subr.bf16.mxu0 0
  %631 = vmatpush1.bf16.msra.mxu0 %v603
  %632 = vmatprep.subr.bf16.mxu0 0
  %633 = vmatpush1.bf16.msra.mxu0 0
  %634 = vmatprep.subr.bf16.mxu0 0
  %635 = vmatpush1.bf16.msra.mxu0 0
  %636 = vmatprep.subr.bf16.mxu0 0
  %637 = vmatpush1.bf16.msra.mxu0 0
  %638 = vmatprep.subr.bf16.mxu0 0
  %639 = vmatpush1.bf16.msra.mxu0 0
  %640 = vmatprep.subr.bf16.mxu0 0
  %641 = vmatpush1.bf16.msra.mxu0 0
  %642 = vmatprep.subr.bf16.mxu0 0
  %643 = vmatpush1.bf16.msra.mxu0 0
  %644 = vmatprep.subr.bf16.mxu0 0
  %645 = vmatpush1.bf16.msra.mxu0 0
  %646 = vmatprep.subr.bf16.mxu0 0
  %647 = vmatpush1.bf16.msra.mxu0 0
  %648 = vmatprep.subr.bf16.mxu0 0
  %649 = vmatpush1.bf16.msra.mxu0 0
  %650 = vmatprep.subr.bf16.mxu0 0
  %651 = vmatpush1.bf16.msra.mxu0 0
  %652 = vmatprep.subr.bf16.mxu0 0
  %653 = vmatpush1.bf16.msra.mxu0 0
  %654 = vmatprep.subr.bf16.mxu0 0
  %655 = vmatpush1.bf16.msra.mxu0 0
  %656 = vmatprep.subr.bf16.mxu0 0
  %657 = vmatpush1.bf16.msra.mxu0 0
  %658 = vmatprep.subr.bf16.mxu0 0
  %659 = vmatpush1.bf16.msra.mxu0 0
  %660 = vmatprep.subr.bf16.mxu0 0
  %661 = vmatpush1.bf16.msra.mxu0 0
  %662 = vmatprep.mubr.bf16.mxu0 0
  %663 = vmatmul.mubr.bf16.gmra.mrb[0].mxu0 %v607
  %v664 = vpop.f32.mrb[0].mxu0
  %v665 = vadd.f32 0.0, %v664
  %v666 = vpop.f32.mrb[0].mxu0
  %v667 = vpop.f32.mrb[0].mxu0
  %v668 = vadd.f32 0.0, %v667
  %v669 = vpop.f32.mrb[0].mxu0
  %670 = vmatprep.mubr.bf16.mxu0 0
  %671 = vmatmul.mubr.bf16.gmra.mrb[0].mxu0 %v610
  %v672 = vpop.f32.mrb[0].mxu0
  %v673 = vadd.f32 0.0, %v672
  %v674 = vpop.f32.mrb[0].mxu0
  %v675 = vpop.f32.mrb[0].mxu0
  %v676 = vadd.f32 0.0, %v675
  %v677 = vpop.f32.mrb[0].mxu0
  %678 = vmatprep.mubr.bf16.mxu0 0
  %679 = vmatmul.mubr.bf16.gmra.mrb[0].mxu0 %v613
  %v680 = vpop.f32.mrb[0].mxu0
  %v681 = vadd.f32 0.0, %v680
  %v682 = vpop.f32.mrb[0].mxu0
  %v683 = vpop.f32.mrb[0].mxu0
  %v684 = vadd.f32 0.0, %v683
  %v685 = vpop.f32.mrb[0].mxu0
  %686 = vmatprep.mubr.bf16.mxu0 0
  %687 = vmatmul.mubr.bf16.gmra.mrb[0].mxu0 %v616
  %v688 = vpop.f32.mrb[0].mxu0
  %v689 = vadd.f32 0.0, %v688
  %v690 = vpop.f32.mrb[0].mxu0
  %v691 = vpop.f32.mrb[0].mxu0
  %v692 = vadd.f32 0.0, %v691
  %v693 = vpop.f32.mrb[0].mxu0
  %694 = vmatprep.mubr.bf16.mxu0 0
  %695 = vmatmul.mubr.bf16.gmra.mrb[0].mxu0 %v619
  %v696 = vpop.f32.mrb[0].mxu0
  %v697 = vadd.f32 0.0, %v696
  %v698 = vpop.f32.mrb[0].mxu0
  %v699 = vpop.f32.mrb[0].mxu0
  %v700 = vadd.f32 0.0, %v699
  %v701 = vpop.f32.mrb[0].mxu0
  %702 = vmatprep.mubr.bf16.mxu0 0
  %703 = vmatmul.mubr.bf16.gmra.mrb[0].mxu0 %v622
  %v704 = vpop.f32.mrb[0].mxu0
  %v705 = vadd.f32 0.0, %v704
  %v706 = vpop.f32.mrb[0].mxu0
  %v707 = vpop.f32.mrb[0].mxu0
  %v708 = vadd.f32 0.0, %v707
  %v709 = vpop.f32.mrb[0].mxu0
  %710 = vmatprep.mubr.bf16.mxu0 0
  %711 = vmatmul.mubr.bf16.gmra.mrb[0].mxu0 %v625
  %v712 = vpop.f32.mrb[0].mxu0
  %v713 = vadd.f32 0.0, %v712
  %v714 = vpop.f32.mrb[0].mxu0
  %v715 = vpop.f32.mrb[0].mxu0
  %v716 = vadd.f32 0.0, %v715
  %v717 = vpop.f32.mrb[0].mxu0
  %718 = vmatprep.mubr.bf16.mxu0 0
  %719 = vmatmul.mubr.bf16.gmra.mrb[0].mxu0 %v628
  %v720 = vpop.f32.mrb[0].mxu0
  %v721 = vadd.f32 0.0, %v720
  %v722 = vpop.f32.mrb[0].mxu0
  %v723 = vpop.f32.mrb[0].mxu0
  %v724 = vadd.f32 0.0, %v723
  %v725 = vpop.f32.mrb[0].mxu0
  %726 = vdwg.mxu0
  %v729 = vunpack.c.l.b16 %v579
  %v730 = vunpack.c.l.b16 %v580
  %v731 = vpack.c.b16 %v730, %v729
  %v734 = vsel %vm605, %v583, 0
  %v737 = vsel %vm605, %v584, 0
  %v740 = vsel %vm605, %v585, 0
  %v743 = vsel %vm605, %v586, 0
  %v746 = vsel %vm605, %v587, 0
  %v749 = vsel %vm605, %v588, 0
  %v752 = vsel %vm605, %v589, 0
  %v755 = vsel %vm605, %v590, 0
  %757 = vmatprep.subr.bf16.mxu0 0
  %758 = vmatpush1.bf16.msra.mxu0 %v731
  %759 = vmatprep.subr.bf16.mxu0 0
  %760 = vmatpush1.bf16.msra.mxu0 0
  %761 = vmatprep.subr.bf16.mxu0 0
  %762 = vmatpush1.bf16.msra.mxu0 0
  %763 = vmatprep.subr.bf16.mxu0 0
  %764 = vmatpush1.bf16.msra.mxu0 0
  %765 = vmatprep.subr.bf16.mxu0 0
  %766 = vmatpush1.bf16.msra.mxu0 0
  %767 = vmatprep.subr.bf16.mxu0 0
  %768 = vmatpush1.bf16.msra.mxu0 0
  %769 = vmatprep.subr.bf16.mxu0 0
  %770 = vmatpush1.bf16.msra.mxu0 0
  %771 = vmatprep.subr.bf16.mxu0 0
  %772 = vmatpush1.bf16.msra.mxu0 0
  %773 = vmatprep.subr.bf16.mxu0 0
  %774 = vmatpush1.bf16.msra.mxu0 0
  %775 = vmatprep.subr.bf16.mxu0 0
  %776 = vmatpush1.bf16.msra.mxu0 0
  %777 = vmatprep.subr.bf16.mxu0 0
  %778 = vmatpush1.bf16.msra.mxu0 0
  %779 = vmatprep.subr.bf16.mxu0 0
  %780 = vmatpush1.bf16.msra.mxu0 0
  %781 = vmatprep.subr.bf16.mxu0 0
  %782 = vmatpush1.bf16.msra.mxu0 0
  %783 = vmatprep.subr.bf16.mxu0 0
  %784 = vmatpush1.bf16.msra.mxu0 0
  %785 = vmatprep.subr.bf16.mxu0 0
  %786 = vmatpush1.bf16.msra.mxu0 0
  %787 = vmatprep.subr.bf16.mxu0 0
  %788 = vmatpush1.bf16.msra.mxu0 0
  %789 = vmatprep.mubr.bf16.mxu0 0
  %790 = vmatmul.mubr.bf16.gmra.mrb[0].mxu0 %v734
  %v791 = vpop.f32.mrb[0].mxu0
  %v792 = vadd.f32 %v665, %v791
  %v793 = vpop.f32.mrb[0].mxu0
  %v794 = vpop.f32.mrb[0].mxu0
  %v795 = vadd.f32 %v668, %v794
  %v796 = vpop.f32.mrb[0].mxu0
  %797 = vmatprep.mubr.bf16.mxu0 0
  %798 = vmatmul.mubr.bf16.gmra.mrb[0].mxu0 %v737
  %v799 = vpop.f32.mrb[0].mxu0
  %v800 = vadd.f32 %v673, %v799
  %v801 = vpop.f32.mrb[0].mxu0
  %v802 = vpop.f32.mrb[0].mxu0
  %v803 = vadd.f32 %v676, %v802
  %v804 = vpop.f32.mrb[0].mxu0
  %805 = vmatprep.mubr.bf16.mxu0 0
  %806 = vmatmul.mubr.bf16.gmra.mrb[0].mxu0 %v740
  %v807 = vpop.f32.mrb[0].mxu0
  %v808 = vadd.f32 %v681, %v807
  %v809 = vpop.f32.mrb[0].mxu0
  %v810 = vpop.f32.mrb[0].mxu0
  %v811 = vadd.f32 %v684, %v810
  %v812 = vpop.f32.mrb[0].mxu0
  %813 = vmatprep.mubr.bf16.mxu0 0
  %814 = vmatmul.mubr.bf16.gmra.mrb[0].mxu0 %v743
  %v815 = vpop.f32.mrb[0].mxu0
  %v816 = vadd.f32 %v689, %v815
  %v817 = vpop.f32.mrb[0].mxu0
  %v818 = vpop.f32.mrb[0].mxu0
  %v819 = vadd.f32 %v692, %v818
  %v820 = vpop.f32.mrb[0].mxu0
  %821 = vmatprep.mubr.bf16.mxu0 0
  %822 = vmatmul.mubr.bf16.gmra.mrb[0].mxu0 %v746
  %v823 = vpop.f32.mrb[0].mxu0
  %v824 = vadd.f32 %v697, %v823
  %v825 = vpop.f32.mrb[0].mxu0
  %v826 = vpop.f32.mrb[0].mxu0
  %v827 = vadd.f32 %v700, %v826
  %v828 = vpop.f32.mrb[0].mxu0
  %829 = vmatprep.mubr.bf16.mxu0 0
  %830 = vmatmul.mubr.bf16.gmra.mrb[0].mxu0 %v749
  %v831 = vpop.f32.mrb[0].mxu0
  %v832 = vadd.f32 %v705, %v831
  %v833 = vpop.f32.mrb[0].mxu0
  %v834 = vpop.f32.mrb[0].mxu0
  %v835 = vadd.f32 %v708, %v834
  %v836 = vpop.f32.mrb[0].mxu0
  %837 = vmatprep.mubr.bf16.mxu0 0
  %838 = vmatmul.mubr.bf16.gmra.mrb[0].mxu0 %v752
  %v839 = vpop.f32.mrb[0].mxu0
  %v840 = vadd.f32 %v713, %v839
  %v841 = vpop.f32.mrb[0].mxu0
  %v842 = vpop.f32.mrb[0].mxu0
  %v843 = vadd.f32 %v716, %v842
  %v844 = vpop.f32.mrb[0].mxu0
  %845 = vmatprep.mubr.bf16.mxu0 0
  %846 = vmatmul.mubr.bf16.gmra.mrb[0].mxu0 %v755
  %v847 = vpop.f32.mrb[0].mxu0
  %v848 = vadd.f32 %v721, %v847
  %v849 = vpop.f32.mrb[0].mxu0
  %v850 = vpop.f32.mrb[0].mxu0
  %v851 = vadd.f32 %v724, %v850
  %v852 = vpop.f32.mrb[0].mxu0
  %853 = vdwg.mxu0
  %v854 = vld [vmem:[%s7] sm:$0x1]
  %v856 = vlaneseq
  %v857 = vshrl.u32 %v856, 7
  %v858 = vsub.s32 0, %v857
  %v859 = vrot.slane %v854, %v858
  %v861 = vadd.f32 %v792, %v859
  %v862 = vadd.f32 %v795, %v859
  %v863 = vadd.f32 %v800, %v859
  %v864 = vadd.f32 %v803, %v859
  %v865 = vadd.f32 %v808, %v859
  %v866 = vadd.f32 %v811, %v859
  %v867 = vadd.f32 %v816, %v859
  %v868 = vadd.f32 %v819, %v859
  %v869 = vadd.f32 %v824, %v859
  %v870 = vadd.f32 %v827, %v859
  %v871 = vadd.f32 %v832, %v859
  %v872 = vadd.f32 %v835, %v859
  %v873 = vadd.f32 %v840, %v859
  %v874 = vadd.f32 %v843, %v859
  %v875 = vadd.f32 %v848, %v859
  %v876 = vadd.f32 %v851, %v859
  %v877 = vadd.f32 %v861, %v563
  %v878 = vadd.f32 %v862, %v564
  %v879 = vadd.f32 %v863, %v565
  %v880 = vadd.f32 %v864, %v566
  %v881 = vadd.f32 %v865, %v567
  %v882 = vadd.f32 %v866, %v568
  %v883 = vadd.f32 %v867, %v569
  %v884 = vadd.f32 %v868, %v570
  %v885 = vadd.f32 %v869, %v571
  %v886 = vadd.f32 %v870, %v572
  %v887 = vadd.f32 %v871, %v573
  %v888 = vadd.f32 %v872, %v574
  %v889 = vadd.f32 %v873, %v575
  %v890 = vadd.f32 %v874, %v576
  %v891 = vadd.f32 %v875, %v577
  %v892 = vadd.f32 %v876, %v578
  %893 = vst.msk [vmem:[%s11] sm:$0xff] %vm605, %v877
  %894 = vst.msk [vmem:[%s11 + $0x8] sm:$0xff] %vm605, %v878
  %895 = vst.msk [vmem:[%s11 + $0x10] sm:$0xff] %vm605, %v879
  %896 = vst.msk [vmem:[%s11 + $0x18] sm:$0xff] %vm605, %v880
  %897 = vst.msk [vmem:[%s11 + $0x20] sm:$0xff] %vm605, %v881
  %898 = vst.msk [vmem:[%s11 + $0x28] sm:$0xff] %vm605, %v882
  %899 = vst.msk [vmem:[%s11 + $0x30] sm:$0xff] %vm605, %v883
  %900 = vst.msk [vmem:[%s11 + $0x38] sm:$0xff] %vm605, %v884
  %901 = vst.msk [vmem:[%s11 + $0x40] sm:$0xff] %vm605, %v885
  %902 = vst.msk [vmem:[%s11 + $0x48] sm:$0xff] %vm605, %v886
  %903 = vst.msk [vmem:[%s11 + $0x50] sm:$0xff] %vm605, %v887
  %904 = vst.msk [vmem:[%s11 + $0x58] sm:$0xff] %vm605, %v888
  %905 = vst.msk [vmem:[%s11 + $0x60] sm:$0xff] %vm605, %v889
  %906 = vst.msk [vmem:[%s11 + $0x68] sm:$0xff] %vm605, %v890
  %907 = vst.msk [vmem:[%s11 + $0x70] sm:$0xff] %vm605, %v891
  %908 = vst.msk [vmem:[%s11 + $0x78] sm:$0xff] %vm605, %v892
  %vm909 = vcmp.ge.f32.partialorder %v877, 0.0
  %vm910 = vcmp.ge.f32.partialorder %v878, 0.0
  %vm911 = vcmp.ge.f32.partialorder %v879, 0.0
  %vm912 = vcmp.ge.f32.partialorder %v880, 0.0
  %vm913 = vcmp.ge.f32.partialorder %v881, 0.0
  %vm914 = vcmp.ge.f32.partialorder %v882, 0.0
  %vm915 = vcmp.ge.f32.partialorder %v883, 0.0
  %vm916 = vcmp.ge.f32.partialorder %v884, 0.0
  %vm917 = vcmp.ge.f32.partialorder %v885, 0.0
  %vm918 = vcmp.ge.f32.partialorder %v886, 0.0
  %vm919 = vcmp.ge.f32.partialorder %v887, 0.0
  %vm920 = vcmp.ge.f32.partialorder %v888, 0.0
  %vm921 = vcmp.ge.f32.partialorder %v889, 0.0
  %vm922 = vcmp.ge.f32.partialorder %v890, 0.0
  %vm923 = vcmp.ge.f32.partialorder %v891, 0.0
  %vm924 = vcmp.ge.f32.partialorder %v892, 0.0
  %v925 = vld [vmem:[%s8] sm:$0x1]
  %v927 = vlaneseq
  %v928 = vshrl.u32 %v927, 7
  %v929 = vsub.s32 0, %v928
  %v930 = vrot.slane %v925, %v929
  %v932 = vmul.f32 %v877, %v930
  %v933 = vmul.f32 %v878, %v930
  %v934 = vmul.f32 %v879, %v930
  %v935 = vmul.f32 %v880, %v930
  %v936 = vmul.f32 %v881, %v930
  %v937 = vmul.f32 %v882, %v930
  %v938 = vmul.f32 %v883, %v930
  %v939 = vmul.f32 %v884, %v930
  %v940 = vmul.f32 %v885, %v930
  %v941 = vmul.f32 %v886, %v930
  %v942 = vmul.f32 %v887, %v930
  %v943 = vmul.f32 %v888, %v930
  %v944 = vmul.f32 %v889, %v930
  %v945 = vmul.f32 %v890, %v930
  %v946 = vmul.f32 %v891, %v930
  %v947 = vmul.f32 %v892, %v930
  %v948 = vsel %vm909, %v877, %v932
  %v949 = vsel %vm910, %v878, %v933
  %v950 = vsel %vm911, %v879, %v934
  %v951 = vsel %vm912, %v880, %v935
  %v952 = vsel %vm913, %v881, %v936
  %v953 = vsel %vm914, %v882, %v937
  %v954 = vsel %vm915, %v883, %v938
  %v955 = vsel %vm916, %v884, %v939
  %v956 = vsel %vm917, %v885, %v940
  %v957 = vsel %vm918, %v886, %v941
  %v958 = vsel %vm919, %v887, %v942
  %v959 = vsel %vm920, %v888, %v943
  %v960 = vsel %vm921, %v889, %v944
  %v961 = vsel %vm922, %v890, %v945
  %v962 = vsel %vm923, %v891, %v946
  %v963 = vsel %vm924, %v892, %v947
  %v964 = vpack.c.bf16 %v949, %v948
  %v965 = vpack.c.bf16 %v951, %v950
  %v966 = vpack.c.bf16 %v953, %v952
  %v967 = vpack.c.bf16 %v955, %v954
  %v968 = vpack.c.bf16 %v957, %v956
  %v969 = vpack.c.bf16 %v959, %v958
  %v970 = vpack.c.bf16 %v961, %v960
  %v971 = vpack.c.bf16 %v963, %v962
  %v972 = vld [vmem:[%s9] sm:$0xf]
  %v973 = vld [vmem:[%s9 + $0x4] sm:$0xf]
  %v974 = vld [vmem:[%s10] sm:$0x1]
  %v976 = vlaneseq
  %v977 = vshrl.u32 %v976, 7
  %v978 = vsub.s32 0, %v977
  %v979 = vrot.slane %v974, %v978
  %v983 = vunpack.c.l.b16 %v972
  %v984 = vunpack.c.l.b16 %v973
  %v985 = vpack.c.b16 %v984, %v983
  %v988 = vsel %vm605, %v964, 0
  %v991 = vsel %vm605, %v965, 0
  %v994 = vsel %vm605, %v966, 0
  %v997 = vsel %vm605, %v967, 0
  %v1000 = vsel %vm605, %v968, 0
  %v1003 = vsel %vm605, %v969, 0
  %v1006 = vsel %vm605, %v970, 0
  %v1009 = vsel %vm605, %v971, 0
  %1011 = vmatprep.subr.bf16.mxu0 0
  %1012 = vmatpush1.bf16.msra.mxu0 %v985
  %1013 = vmatprep.subr.bf16.mxu0 0
  %1014 = vmatpush1.bf16.msra.mxu0 0
  %1015 = vmatprep.subr.bf16.mxu0 0
  %1016 = vmatpush1.bf16.msra.mxu0 0
  %1017 = vmatprep.subr.bf16.mxu0 0
  %1018 = vmatpush1.bf16.msra.mxu0 0
  %1019 = vmatprep.subr.bf16.mxu0 0
  %1020 = vmatpush1.bf16.msra.mxu0 0
  %1021 = vmatprep.subr.bf16.mxu0 0
  %1022 = vmatpush1.bf16.msra.mxu0 0
  %1023 = vmatprep.subr.bf16.mxu0 0
  %1024 = vmatpush1.bf16.msra.mxu0 0
  %1025 = vmatprep.subr.bf16.mxu0 0
  %1026 = vmatpush1.bf16.msra.mxu0 0
  %1027 = vmatprep.subr.bf16.mxu0 0
  %1028 = vmatpush1.bf16.msra.mxu0 0
  %1029 = vmatprep.subr.bf16.mxu0 0
  %1030 = vmatpush1.bf16.msra.mxu0 0
  %1031 = vmatprep.subr.bf16.mxu0 0
  %1032 = vmatpush1.bf16.msra.mxu0 0
  %1033 = vmatprep.subr.bf16.mxu0 0
  %1034 = vmatpush1.bf16.msra.mxu0 0
  %1035 = vmatprep.subr.bf16.mxu0 0
  %1036 = vmatpush1.bf16.msra.mxu0 0
  %1037 = vmatprep.subr.bf16.mxu0 0
  %1038 = vmatpush1.bf16.msra.mxu0 0
  %1039 = vmatprep.subr.bf16.mxu0 0
  %1040 = vmatpush1.bf16.msra.mxu0 0
  %1041 = vmatprep.subr.bf16.mxu0 0
  %1042 = vmatpush1.bf16.msra.mxu0 0
  %1043 = vmatprep.mubr.bf16.mxu0 0
  %1044 = vmatmul.mubr.bf16.gmra.mrb[0].mxu0 %v988
  %v1045 = vpop.f32.mrb[0].mxu0
  %v1046 = vadd.f32 %v979, %v1045
  %v1047 = vpop.f32.mrb[0].mxu0
  %v1048 = vpop.f32.mrb[0].mxu0
  %v1049 = vadd.f32 %v979, %v1048
  %v1050 = vpop.f32.mrb[0].mxu0
  %1051 = vmatprep.mubr.bf16.mxu0 0
  %1052 = vmatmul.mubr.bf16.gmra.mrb[0].mxu0 %v991
  %v1053 = vpop.f32.mrb[0].mxu0
  %v1054 = vadd.f32 %v979, %v1053
  %v1055 = vpop.f32.mrb[0].mxu0
  %v1056 = vpop.f32.mrb[0].mxu0
  %v1057 = vadd.f32 %v979, %v1056
  %v1058 = vpop.f32.mrb[0].mxu0
  %1059 = vmatprep.mubr.bf16.mxu0 0
  %1060 = vmatmul.mubr.bf16.gmra.mrb[0].mxu0 %v994
  %v1061 = vpop.f32.mrb[0].mxu0
  %v1062 = vadd.f32 %v979, %v1061
  %v1063 = vpop.f32.mrb[0].mxu0
  %v1064 = vpop.f32.mrb[0].mxu0
  %v1065 = vadd.f32 %v979, %v1064
  %v1066 = vpop.f32.mrb[0].mxu0
  %1067 = vmatprep.mubr.bf16.mxu0 0
  %1068 = vmatmul.mubr.bf16.gmra.mrb[0].mxu0 %v997
  %v1069 = vpop.f32.mrb[0].mxu0
  %v1070 = vadd.f32 %v979, %v1069
  %v1071 = vpop.f32.mrb[0].mxu0
  %v1072 = vpop.f32.mrb[0].mxu0
  %v1073 = vadd.f32 %v979, %v1072
  %v1074 = vpop.f32.mrb[0].mxu0
  %1075 = vmatprep.mubr.bf16.mxu0 0
  %1076 = vmatmul.mubr.bf16.gmra.mrb[0].mxu0 %v1000
  %v1077 = vpop.f32.mrb[0].mxu0
  %v1078 = vadd.f32 %v979, %v1077
  %v1079 = vpop.f32.mrb[0].mxu0
  %v1080 = vpop.f32.mrb[0].mxu0
  %v1081 = vadd.f32 %v979, %v1080
  %v1082 = vpop.f32.mrb[0].mxu0
  %1083 = vmatprep.mubr.bf16.mxu0 0
  %1084 = vmatmul.mubr.bf16.gmra.mrb[0].mxu0 %v1003
  %v1085 = vpop.f32.mrb[0].mxu0
  %v1086 = vadd.f32 %v979, %v1085
  %v1087 = vpop.f32.mrb[0].mxu0
  %v1088 = vpop.f32.mrb[0].mxu0
  %v1089 = vadd.f32 %v979, %v1088
  %v1090 = vpop.f32.mrb[0].mxu0
  %1091 = vmatprep.mubr.bf16.mxu0 0
  %1092 = vmatmul.mubr.bf16.gmra.mrb[0].mxu0 %v1006
  %v1093 = vpop.f32.mrb[0].mxu0
  %v1094 = vadd.f32 %v979, %v1093
  %v1095 = vpop.f32.mrb[0].mxu0
  %v1096 = vpop.f32.mrb[0].mxu0
  %v1097 = vadd.f32 %v979, %v1096
  %v1098 = vpop.f32.mrb[0].mxu0
  %1099 = vmatprep.mubr.bf16.mxu0 0
  %1100 = vmatmul.mubr.bf16.gmra.mrb[0].mxu0 %v1009
  %v1101 = vpop.f32.mrb[0].mxu0
  %v1102 = vadd.f32 %v979, %v1101
  %v1103 = vpop.f32.mrb[0].mxu0
  %v1104 = vpop.f32.mrb[0].mxu0
  %v1105 = vadd.f32 %v979, %v1104
  %v1106 = vpop.f32.mrb[0].mxu0
  %1107 = vdwg.mxu0
  %vm1108 = vcmask 261120
  %1109 = vst.msk [vmem:[%s12] sm:$0xff] %vm1108, %v1046
  %1110 = vst.msk [vmem:[%s12 + $0x8] sm:$0xff] %vm1108, %v1049
  %1111 = vst.msk [vmem:[%s12 + $0x10] sm:$0xff] %vm1108, %v1054
  %1112 = vst.msk [vmem:[%s12 + $0x18] sm:$0xff] %vm1108, %v1057
  %1113 = vst.msk [vmem:[%s12 + $0x20] sm:$0xff] %vm1108, %v1062
  %1114 = vst.msk [vmem:[%s12 + $0x28] sm:$0xff] %vm1108, %v1065
  %1115 = vst.msk [vmem:[%s12 + $0x30] sm:$0xff] %vm1108, %v1070
  %1116 = vst.msk [vmem:[%s12 + $0x38] sm:$0xff] %vm1108, %v1073
  %1117 = vst.msk [vmem:[%s12 + $0x40] sm:$0xff] %vm1108, %v1078
  %1118 = vst.msk [vmem:[%s12 + $0x48] sm:$0xff] %vm1108, %v1081
  %1119 = vst.msk [vmem:[%s12 + $0x50] sm:$0xff] %vm1108, %v1086
  %1120 = vst.msk [vmem:[%s12 + $0x58] sm:$0xff] %vm1108, %v1089
  %1121 = vst.msk [vmem:[%s12 + $0x60] sm:$0xff] %vm1108, %v1094
  %1122 = vst.msk [vmem:[%s12 + $0x68] sm:$0xff] %vm1108, %v1097
  %1123 = vst.msk [vmem:[%s12 + $0x70] sm:$0xff] %vm1108, %v1102
  %1124 = vst.msk [vmem:[%s12 + $0x78] sm:$0xff] %vm1108, %v1105
  // Predicated region
  $region46: #{separator_forward.11} parent=0 // pred_check
    _
  $region47: #{separator_forward.11} parent=0 // pred_check_branch
    %1126 = sbr.rel (0) target = $region49
  $region48: #{separator_forward.11} parent=0 // pred_region
    _
  $region49: #{separator_forward.11} parent=0 // pred_fallthru
    _
  // Predicated region
  $region50: #{separator_forward.11} parent=0 // pred_check
    _
  $region51: #{separator_forward.11} parent=0 // pred_check_branch
    %1128 = sbr.rel (0) target = $region53
  $region52: #{separator_forward.11} parent=0 // pred_region
    _
  $region53: #{separator_forward.11} parent=0 // pred_fallthru
    _
  // Predicated region
  $region54: #{separator_forward.11} parent=0 // pred_check
    _
  $region55: #{separator_forward.11} parent=0 // pred_check_branch
    %1130 = sbr.rel (0) target = $region57
  $region56: #{separator_forward.11} parent=0 // pred_region
    _
  $region57: #{separator_forward.11} parent=0 // pred_fallthru
    _
  // Predicated region
  $region58: #{separator_forward.11} parent=0 // pred_check
    _
  $region59: #{separator_forward.11} parent=0 // pred_check_branch
    %1132 = sbr.rel (0) target = $region61
  $region60: #{separator_forward.11} parent=0 // pred_region
    _
  $region61: #{separator_forward.11} parent=0 // pred_fallthru
    _

// kernel: separator_forward.15
$region0: #{separator_forward.15}
  #allocation0 [shape = 'u32[]', space=smem, size = 0x4, offset = 0x4, fixed_abs, tag = 'smem constant byte address 0x4 - core index']
  #allocation1 [shape = 'u32[144,128]{1,0:T(1,128)}', space=vmem, size = 0x12000, scoped, tag = 'internal scratch']
  %s0 = inlined_call_operand.vmem [shape: bf16[128,64], index: 0, kind: input, shape index: {}]
  %s1 = inlined_call_operand.vmem [shape: bf16[128,64], index: 1, kind: input, shape index: {}]
  %s2 = inlined_call_operand.vmem [shape: f32[128,16], index: 2, kind: input, shape index: {}]
  %s3 = inlined_call_operand.vmem [shape: bf16[64,32], index: 3, kind: input, shape index: {}]
  %s4 = inlined_call_operand.vmem [shape: bf16[64,32], index: 4, kind: input, shape index: {}]
  %s5 = inlined_call_operand.vmem [shape: f32[1,32], index: 5, kind: input, shape index: {}]
  %s6 = inlined_call_operand.vmem [shape: bf16[32,16], index: 6, kind: input, shape index: {}]
  %s7 = inlined_call_operand.vmem [shape: f32[1,16], index: 7, kind: input, shape index: {}]
  %s8 = inlined_call_operand.vmem [shape: f32[1,16], index: 8, kind: input, shape index: {}]
  %s9 = inlined_call_operand.vmem [shape: bf16[16,32], index: 9, kind: input, shape index: {}]
  %s10 = inlined_call_operand.vmem [shape: f32[1,32], index: 10, kind: input, shape index: {}]
  %s11 = inlined_call_operand.hbm [shape: f32[128,16], index: 11, kind: output, shape index: {0}]
  %s12 = inlined_call_operand.vmem [shape: f32[128,32], index: 12, kind: output, shape index: {1}]
  %13 = xla_tuple %s11, %s12
  %s14 = sld [smem:[#allocation0]]
  $region62: #{separator_forward.15} parent=0
    _
  %s16 = ssub.s32 1, %s14
  %s17 = scalar_select 0, %s16, %s14
  $region1: #{separator_forward.15} parent=0
    #allocation2 [shape = 'u8[65536]{0}', space=vmem, size = 0x10000, scoped, tag = 'output window, operand 0, single buffered']
    #allocation3 [shape = 's32[1]{0}', space=sflag, size = 0x4, scoped, tag = 'scoped memory for separator_forward.15']
    %18 = vsyncpa [#allocation3], 0
    // Predicated region
    $region2: #{separator_forward.15} parent=1 // pred_check
      _
    $region3: #{separator_forward.15} parent=1 // pred_check_branch
      %20 = sbr.rel (0) target = $region5
    $region4: #{separator_forward.15} parent=1 // pred_region
      _
    $region5: #{separator_forward.15} parent=1 // pred_fallthru
      _
    // Predicated region
    $region6: #{separator_forward.15} parent=1 // pred_check
      _
    $region7: #{separator_forward.15} parent=1 // pred_check_branch
      %22 = sbr.rel (0) target = $region9
    $region8: #{separator_forward.15} parent=1 // pred_region
      _
    $region9: #{separator_forward.15} parent=1 // pred_fallthru
      _
    // Predicated region
    $region10: #{separator_forward.15} parent=1 // pred_check
      _
    $region11: #{separator_forward.15} parent=1 // pred_check_branch
      %24 = sbr.rel (0) target = $region13
    $region12: #{separator_forward.15} parent=1 // pred_region
      _
    $region13: #{separator_forward.15} parent=1 // pred_fallthru
      _
    // Predicated region
    $region14: #{separator_forward.15} parent=1 // pred_check
      _
    $region15: #{separator_forward.15} parent=1 // pred_check_branch
      %26 = sbr.rel (0) target = $region17
    $region16: #{separator_forward.15} parent=1 // pred_region
      _
    $region17: #{separator_forward.15} parent=1 // pred_fallthru
      _
    // Predicated region
    $region18: #{separator_forward.15} parent=1 // pred_check
      _
    $region19: #{separator_forward.15} parent=1 // pred_check_branch
      %28 = sbr.rel (0) target = $region21
    $region20: #{separator_forward.15} parent=1 // pred_region
      _
    $region21: #{separator_forward.15} parent=1 // pred_fallthru
      _
    // Predicated region
    $region22: #{separator_forward.15} parent=1 // pred_check
      _
    $region23: #{separator_forward.15} parent=1 // pred_check_branch
      %30 = sbr.rel (0) target = $region25
    $region24: #{separator_forward.15} parent=1 // pred_region
      _
    $region25: #{separator_forward.15} parent=1 // pred_fallthru
      _
    // Predicated region
    $region26: #{separator_forward.15} parent=1 // pred_check
      _
    $region27: #{separator_forward.15} parent=1 // pred_check_branch
      %32 = sbr.rel (0) target = $region29
    $region28: #{separator_forward.15} parent=1 // pred_region
      _
    $region29: #{separator_forward.15} parent=1 // pred_fallthru
      _
    // Predicated region
    $region30: #{separator_forward.15} parent=1 // pred_check
      _
    $region31: #{separator_forward.15} parent=1 // pred_check_branch
      %34 = sbr.rel (0) target = $region33
    $region32: #{separator_forward.15} parent=1 // pred_region
      _
    $region33: #{separator_forward.15} parent=1 // pred_fallthru
      _
    // Predicated region
    $region34: #{separator_forward.15} parent=1 // pred_check
      _
    $region35: #{separator_forward.15} parent=1 // pred_check_branch
      %36 = sbr.rel (0) target = $region37
    $region36: #{separator_forward.15} parent=1 // pred_region
      _
    $region37: #{separator_forward.15} parent=1 // pred_fallthru
      _
    // Predicated region
    $region38: #{separator_forward.15} parent=1 // pred_check
      _
    $region39: #{separator_forward.15} parent=1 // pred_check_branch
      %38 = sbr.rel (0) target = $region41
    $region40: #{separator_forward.15} parent=1 // pred_region
      _
    $region41: #{separator_forward.15} parent=1 // pred_fallthru
      _
    // Predicated region
    $region42: #{separator_forward.15} parent=1 // pred_check
      _
    $region43: #{separator_forward.15} parent=1 // pred_check_branch
      %40 = sbr.rel (0) target = $region45
    $region44: #{separator_forward.15} parent=1 // pred_region
      _
    $region45: #{separator_forward.15} parent=1 // pred_fallthru
      _
    %v42 = vld [vmem:[%s0] sm:$0xf]
    %v43 = vld [vmem:[%s0 + $0x4] sm:$0xf]
    %v44 = vld [vmem:[%s0 + $0x8] sm:$0xf]
    %v45 = vld [vmem:[%s0 + $0xc] sm:$0xf]
    %v46 = vld [vmem:[%s0 + $0x10] sm:$0xf]
    %v47 = vld [vmem:[%s0 + $0x14] sm:$0xf]
    %v48 = vld [vmem:[%s0 + $0x18] sm:$0xf]
    %v49 = vld [vmem:[%s0 + $0x1c] sm:$0xf]
    %v50 = vld [vmem:[%s0 + $0x20] sm:$0xf]
    %v51 = vld [vmem:[%s0 + $0x24] sm:$0xf]
    %v52 = vld [vmem:[%s0 + $0x28] sm:$0xf]
    %v53 = vld [vmem:[%s0 + $0x2c] sm:$0xf]
    %v54 = vld [vmem:[%s0 + $0x30] sm:$0xf]
    %v55 = vld [vmem:[%s0 + $0x34] sm:$0xf]
    %v56 = vld [vmem:[%s0 + $0x38] sm:$0xf]
    %v57 = vld [vmem:[%s0 + $0x3c] sm:$0xf]
    %v58 = vld [vmem:[%s3] sm:$0xf]
    %v59 = vld [vmem:[%s3 + $0x4] sm:$0xf]
    %v60 = vld [vmem:[%s3 + $0x8] sm:$0xf]
    %v61 = vld [vmem:[%s3 + $0xc] sm:$0xf]
    %v62 = vld [vmem:[%s3 + $0x10] sm:$0xf]
    %v63 = vld [vmem:[%s3 + $0x14] sm:$0xf]
    %v64 = vld [vmem:[%s3 + $0x18] sm:$0xf]
    %v65 = vld [vmem:[%s3 + $0x1c] sm:$0xf]
    %v66 = vld [vmem:[%s1] sm:$0xf]
    %v67 = vld [vmem:[%s1 + $0x4] sm:$0xf]
    %v68 = vld [vmem:[%s1 + $0x8] sm:$0xf]
    %v69 = vld [vmem:[%s1 + $0xc] sm:$0xf]
    %v70 = vld [vmem:[%s1 + $0x10] sm:$0xf]
    %v71 = vld [vmem:[%s1 + $0x14] sm:$0xf]
    %v72 = vld [vmem:[%s1 + $0x18] sm:$0xf]
    %v73 = vld [vmem:[%s1 + $0x1c] sm:$0xf]
    %v74 = vld [vmem:[%s1 + $0x20] sm:$0xf]
    %v75 = vld [vmem:[%s1 + $0x24] sm:$0xf]
    %v76 = vld [vmem:[%s1 + $0x28] sm:$0xf]
    %v77 = vld [vmem:[%s1 + $0x2c] sm:$0xf]
    %v78 = vld [vmem:[%s1 + $0x30] sm:$0xf]
    %v79 = vld [vmem:[%s1 + $0x34] sm:$0xf]
    %v80 = vld [vmem:[%s1 + $0x38] sm:$0xf]
    %v81 = vld [vmem:[%s1 + $0x3c] sm:$0xf]
    %v82 = vld [vmem:[%s4] sm:$0xf]
    %v83 = vld [vmem:[%s4 + $0x4] sm:$0xf]
    %v84 = vld [vmem:[%s4 + $0x8] sm:$0xf]
    %v85 = vld [vmem:[%s4 + $0xc] sm:$0xf]
    %v86 = vld [vmem:[%s4 + $0x10] sm:$0xf]
    %v87 = vld [vmem:[%s4 + $0x14] sm:$0xf]
    %v88 = vld [vmem:[%s4 + $0x18] sm:$0xf]
    %v89 = vld [vmem:[%s4 + $0x1c] sm:$0xf]
    %v106 = vunpack.c.l.b16 %v66
    %v107 = vunpack.c.l.b16 %v67
    %v108 = vunpack.c.l.b16 %v68
    %v109 = vunpack.c.l.b16 %v69
    %v110 = vunpack.c.l.b16 %v70
    %v111 = vunpack.c.l.b16 %v71
    %v112 = vunpack.c.l.b16 %v72
    %v113 = vunpack.c.l.b16 %v73
    %v114 = vunpack.c.l.b16 %v74
    %v115 = vunpack.c.l.b16 %v75
    %v116 = vunpack.c.l.b16 %v76
    %v117 = vunpack.c.l.b16 %v77
    %v118 = vunpack.c.l.b16 %v78
    %v119 = vunpack.c.l.b16 %v79
    %v120 = vunpack.c.l.b16 %v80
    %v121 = vunpack.c.l.b16 %v81
    %v122 = vpack.c.b16 %v107, %v106
    %v123 = vpack.c.b16 %v109, %v108
    %v124 = vpack.c.b16 %v111, %v110
    %v125 = vpack.c.b16 %v113, %v112
    %v126 = vpack.c.b16 %v115, %v114
    %v127 = vpack.c.b16 %v117, %v116
    %v128 = vpack.c.b16 %v119, %v118
    %v129 = vpack.c.b16 %v121, %v120
    %v138 = vunpack.c.l.b16 %v82
    %v139 = vunpack.c.l.b16 %v83
    %v140 = vunpack.c.l.b16 %v84
    %v141 = vunpack.c.l.b16 %v85
    %v142 = vunpack.c.l.b16 %v86
    %v143 = vunpack.c.l.b16 %v87
    %v144 = vunpack.c.l.b16 %v88
    %v145 = vunpack.c.l.b16 %v89
    %v146 = vpack.c.b16 %v139, %v138
    %v147 = vpack.c.b16 %v141, %v140
    %v148 = vpack.c.b16 %v143, %v142
    %v149 = vpack.c.b16 %v145, %v144
    %vm154 = vcmask 523264
    %v156 = vsel %vm154, %v122, 0
    %v159 = vsel %vm154, %v123, 0
    %v162 = vsel %vm154, %v124, 0
    %v165 = vsel %vm154, %v125, 0
    %v168 = vsel %vm154, %v126, 0
    %v171 = vsel %vm154, %v127, 0
    %v174 = vsel %vm154, %v128, 0
    %v177 = vsel %vm154, %v129, 0
    %179 = vmatprep.subr.bf16.mxu0 0
    %180 = vmatpush1.bf16.msra.mxu0 %v146
    %181 = vmatprep.subr.bf16.mxu0 0
    %182 = vmatpush1.bf16.msra.mxu0 %v147
    %183 = vmatprep.subr.bf16.mxu0 0
    %184 = vmatpush1.bf16.msra.mxu0 %v148
    %185 = vmatprep.subr.bf16.mxu0 0
    %186 = vmatpush1.bf16.msra.mxu0 %v149
    %187 = vmatprep.subr.bf16.mxu0 0
    %188 = vmatpush1.bf16.msra.mxu0 0
    %189 = vmatprep.subr.bf16.mxu0 0
    %190 = vmatpush1.bf16.msra.mxu0 0
    %191 = vmatprep.subr.bf16.mxu0 0
    %192 = vmatpush1.bf16.msra.mxu0 0
    %193 = vmatprep.subr.bf16.mxu0 0
    %194 = vmatpush1.bf16.msra.mxu0 0
    %195 = vmatprep.subr.bf16.mxu0 0
    %196 = vmatpush1.bf16.msra.mxu0 0
    %197 = vmatprep.subr.bf16.mxu0 0
    %198 = vmatpush1.bf16.msra.mxu0 0
    %199 = vmatprep.subr.bf16.mxu0 0
    %200 = vmatpush1.bf16.msra.mxu0 0
    %201 = vmatprep.subr.bf16.mxu0 0
    %202 = vmatpush1.bf16.msra.mxu0 0
    %203 = vmatprep.subr.bf16.mxu0 0
    %204 = vmatpush1.bf16.msra.mxu0 0
    %205 = vmatprep.subr.bf16.mxu0 0
    %206 = vmatpush1.bf16.msra.mxu0 0
    %207 = vmatprep.subr.bf16.mxu0 0
    %208 = vmatpush1.bf16.msra.mxu0 0
    %209 = vmatprep.subr.bf16.mxu0 0
    %210 = vmatpush1.bf16.msra.mxu0 0
    %211 = vmatprep.mubr.bf16.mxu0 0
    %212 = vmatmul.mubr.bf16.gmra.mrb[0].mxu0 %v156
    %v213 = vpop.f32.mrb[0].mxu0
    %v214 = vadd.f32 0.0, %v213
    %v215 = vpop.f32.mrb[0].mxu0
    %v216 = vpop.f32.mrb[0].mxu0
    %v217 = vadd.f32 0.0, %v216
    %v218 = vpop.f32.mrb[0].mxu0
    %219 = vmatprep.mubr.bf16.mxu0 0
    %220 = vmatmul.mubr.bf16.gmra.mrb[0].mxu0 %v159
    %v221 = vpop.f32.mrb[0].mxu0
    %v222 = vadd.f32 0.0, %v221
    %v223 = vpop.f32.mrb[0].mxu0
    %v224 = vpop.f32.mrb[0].mxu0
    %v225 = vadd.f32 0.0, %v224
    %v226 = vpop.f32.mrb[0].mxu0
    %227 = vmatprep.mubr.bf16.mxu0 0
    %228 = vmatmul.mubr.bf16.gmra.mrb[0].mxu0 %v162
    %v229 = vpop.f32.mrb[0].mxu0
    %v230 = vadd.f32 0.0, %v229
    %v231 = vpop.f32.mrb[0].mxu0
    %v232 = vpop.f32.mrb[0].mxu0
    %v233 = vadd.f32 0.0, %v232
    %v234 = vpop.f32.mrb[0].mxu0
    %235 = vmatprep.mubr.bf16.mxu0 0
    %236 = vmatmul.mubr.bf16.gmra.mrb[0].mxu0 %v165
    %v237 = vpop.f32.mrb[0].mxu0
    %v238 = vadd.f32 0.0, %v237
    %v239 = vpop.f32.mrb[0].mxu0
    %v240 = vpop.f32.mrb[0].mxu0
    %v241 = vadd.f32 0.0, %v240
    %v242 = vpop.f32.mrb[0].mxu0
    %243 = vmatprep.mubr.bf16.mxu0 0
    %244 = vmatmul.mubr.bf16.gmra.mrb[0].mxu0 %v168
    %v245 = vpop.f32.mrb[0].mxu0
    %v246 = vadd.f32 0.0, %v245
    %v247 = vpop.f32.mrb[0].mxu0
    %v248 = vpop.f32.mrb[0].mxu0
    %v249 = vadd.f32 0.0, %v248
    %v250 = vpop.f32.mrb[0].mxu0
    %251 = vmatprep.mubr.bf16.mxu0 0
    %252 = vmatmul.mubr.bf16.gmra.mrb[0].mxu0 %v171
    %v253 = vpop.f32.mrb[0].mxu0
    %v254 = vadd.f32 0.0, %v253
    %v255 = vpop.f32.mrb[0].mxu0
    %v256 = vpop.f32.mrb[0].mxu0
    %v257 = vadd.f32 0.0, %v256
    %v258 = vpop.f32.mrb[0].mxu0
    %259 = vmatprep.mubr.bf16.mxu0 0
    %260 = vmatmul.mubr.bf16.gmra.mrb[0].mxu0 %v174
    %v261 = vpop.f32.mrb[0].mxu0
    %v262 = vadd.f32 0.0, %v261
    %v263 = vpop.f32.mrb[0].mxu0
    %v264 = vpop.f32.mrb[0].mxu0
    %v265 = vadd.f32 0.0, %v264
    %v266 = vpop.f32.mrb[0].mxu0
    %267 = vmatprep.mubr.bf16.mxu0 0
    %268 = vmatmul.mubr.bf16.gmra.mrb[0].mxu0 %v177
    %v269 = vpop.f32.mrb[0].mxu0
    %v270 = vadd.f32 0.0, %v269
    %v271 = vpop.f32.mrb[0].mxu0
    %v272 = vpop.f32.mrb[0].mxu0
    %v273 = vadd.f32 0.0, %v272
    %v274 = vpop.f32.mrb[0].mxu0
    %275 = vdwg.mxu0
    %v292 = vunpack.c.l.b16 %v42
    %v293 = vunpack.c.l.b16 %v43
    %v294 = vunpack.c.l.b16 %v44
    %v295 = vunpack.c.l.b16 %v45
    %v296 = vunpack.c.l.b16 %v46
    %v297 = vunpack.c.l.b16 %v47
    %v298 = vunpack.c.l.b16 %v48
    %v299 = vunpack.c.l.b16 %v49
    %v300 = vunpack.c.l.b16 %v50
    %v301 = vunpack.c.l.b16 %v51
    %v302 = vunpack.c.l.b16 %v52
    %v303 = vunpack.c.l.b16 %v53
    %v304 = vunpack.c.l.b16 %v54
    %v305 = vunpack.c.l.b16 %v55
    %v306 = vunpack.c.l.b16 %v56
    %v307 = vunpack.c.l.b16 %v57
    %v308 = vpack.c.b16 %v293, %v292
    %v309 = vpack.c.b16 %v295, %v294
    %v310 = vpack.c.b16 %v297, %v296
    %v311 = vpack.c.b16 %v299, %v298
    %v312 = vpack.c.b16 %v301, %v300
    %v313 = vpack.c.b16 %v303, %v302
    %v314 = vpack.c.b16 %v305, %v304
    %v315 = vpack.c.b16 %v307, %v306
    %v324 = vunpack.c.l.b16 %v58
    %v325 = vunpack.c.l.b16 %v59
    %v326 = vunpack.c.l.b16 %v60
    %v327 = vunpack.c.l.b16 %v61
    %v328 = vunpack.c.l.b16 %v62
    %v329 = vunpack.c.l.b16 %v63
    %v330 = vunpack.c.l.b16 %v64
    %v331 = vunpack.c.l.b16 %v65
    %v332 = vpack.c.b16 %v325, %v324
    %v333 = vpack.c.b16 %v327, %v326
    %v334 = vpack.c.b16 %v329, %v328
    %v335 = vpack.c.b16 %v331, %v330
    %v341 = vsel %vm154, %v308, 0
    %v344 = vsel %vm154, %v309, 0
    %v347 = vsel %vm154, %v310, 0
    %v350 = vsel %vm154, %v311, 0
    %v353 = vsel %vm154, %v312, 0
    %v356 = vsel %vm154, %v313, 0
    %v359 = vsel %vm154, %v314, 0
    %v362 = vsel %vm154, %v315, 0
    %364 = vmatprep.subr.bf16.mxu0 0
    %365 = vmatpush1.bf16.msra.mxu0 %v332
    %366 = vmatprep.subr.bf16.mxu0 0
    %367 = vmatpush1.bf16.msra.mxu0 %v333
    %368 = vmatprep.subr.bf16.mxu0 0
    %369 = vmatpush1.bf16.msra.mxu0 %v334
    %370 = vmatprep.subr.bf16.mxu0 0
    %371 = vmatpush1.bf16.msra.mxu0 %v335
    %372 = vmatprep.subr.bf16.mxu0 0
    %373 = vmatpush1.bf16.msra.mxu0 0
    %374 = vmatprep.subr.bf16.mxu0 0
    %375 = vmatpush1.bf16.msra.mxu0 0
    %376 = vmatprep.subr.bf16.mxu0 0
    %377 = vmatpush1.bf16.msra.mxu0 0
    %378 = vmatprep.subr.bf16.mxu0 0
    %379 = vmatpush1.bf16.msra.mxu0 0
    %380 = vmatprep.subr.bf16.mxu0 0
    %381 = vmatpush1.bf16.msra.mxu0 0
    %382 = vmatprep.subr.bf16.mxu0 0
    %383 = vmatpush1.bf16.msra.mxu0 0
    %384 = vmatprep.subr.bf16.mxu0 0
    %385 = vmatpush1.bf16.msra.mxu0 0
    %386 = vmatprep.subr.bf16.mxu0 0
    %387 = vmatpush1.bf16.msra.mxu0 0
    %388 = vmatprep.subr.bf16.mxu0 0
    %389 = vmatpush1.bf16.msra.mxu0 0
    %390 = vmatprep.subr.bf16.mxu0 0
    %391 = vmatpush1.bf16.msra.mxu0 0
    %392 = vmatprep.subr.bf16.mxu0 0
    %393 = vmatpush1.bf16.msra.mxu0 0
    %394 = vmatprep.subr.bf16.mxu0 0
    %395 = vmatpush1.bf16.msra.mxu0 0
    %396 = vmatprep.mubr.bf16.mxu0 0
    %397 = vmatmul.mubr.bf16.gmra.mrb[0].mxu0 %v341
    %v398 = vpop.f32.mrb[0].mxu0
    %v399 = vadd.f32 %v214, %v398
    %v400 = vpop.f32.mrb[0].mxu0
    %v401 = vpop.f32.mrb[0].mxu0
    %v402 = vadd.f32 %v217, %v401
    %v403 = vpop.f32.mrb[0].mxu0
    %404 = vmatprep.mubr.bf16.mxu0 0
    %405 = vmatmul.mubr.bf16.gmra.mrb[0].mxu0 %v344
    %v406 = vpop.f32.mrb[0].mxu0
    %v407 = vadd.f32 %v222, %v406
    %v408 = vpop.f32.mrb[0].mxu0
    %v409 = vpop.f32.mrb[0].mxu0
    %v410 = vadd.f32 %v225, %v409
    %v411 = vpop.f32.mrb[0].mxu0
    %412 = vmatprep.mubr.bf16.mxu0 0
    %413 = vmatmul.mubr.bf16.gmra.mrb[0].mxu0 %v347
    %v414 = vpop.f32.mrb[0].mxu0
    %v415 = vadd.f32 %v230, %v414
    %v416 = vpop.f32.mrb[0].mxu0
    %v417 = vpop.f32.mrb[0].mxu0
    %v418 = vadd.f32 %v233, %v417
    %v419 = vpop.f32.mrb[0].mxu0
    %420 = vmatprep.mubr.bf16.mxu0 0
    %421 = vmatmul.mubr.bf16.gmra.mrb[0].mxu0 %v350
    %v422 = vpop.f32.mrb[0].mxu0
    %v423 = vadd.f32 %v238, %v422
    %v424 = vpop.f32.mrb[0].mxu0
    %v425 = vpop.f32.mrb[0].mxu0
    %v426 = vadd.f32 %v241, %v425
    %v427 = vpop.f32.mrb[0].mxu0
    %428 = vmatprep.mubr.bf16.mxu0 0
    %429 = vmatmul.mubr.bf16.gmra.mrb[0].mxu0 %v353
    %v430 = vpop.f32.mrb[0].mxu0
    %v431 = vadd.f32 %v246, %v430
    %v432 = vpop.f32.mrb[0].mxu0
    %v433 = vpop.f32.mrb[0].mxu0
    %v434 = vadd.f32 %v249, %v433
    %v435 = vpop.f32.mrb[0].mxu0
    %436 = vmatprep.mubr.bf16.mxu0 0
    %437 = vmatmul.mubr.bf16.gmra.mrb[0].mxu0 %v356
    %v438 = vpop.f32.mrb[0].mxu0
    %v439 = vadd.f32 %v254, %v438
    %v440 = vpop.f32.mrb[0].mxu0
    %v441 = vpop.f32.mrb[0].mxu0
    %v442 = vadd.f32 %v257, %v441
    %v443 = vpop.f32.mrb[0].mxu0
    %444 = vmatprep.mubr.bf16.mxu0 0
    %445 = vmatmul.mubr.bf16.gmra.mrb[0].mxu0 %v359
    %v446 = vpop.f32.mrb[0].mxu0
    %v447 = vadd.f32 %v262, %v446
    %v448 = vpop.f32.mrb[0].mxu0
    %v449 = vpop.f32.mrb[0].mxu0
    %v450 = vadd.f32 %v265, %v449
    %v451 = vpop.f32.mrb[0].mxu0
    %452 = vmatprep.mubr.bf16.mxu0 0
    %453 = vmatmul.mubr.bf16.gmra.mrb[0].mxu0 %v362
    %v454 = vpop.f32.mrb[0].mxu0
    %v455 = vadd.f32 %v270, %v454
    %v456 = vpop.f32.mrb[0].mxu0
    %v457 = vpop.f32.mrb[0].mxu0
    %v458 = vadd.f32 %v273, %v457
    %v459 = vpop.f32.mrb[0].mxu0
    %460 = vdwg.mxu0
    %v461 = vld [vmem:[%s5] sm:$0x1]
    %v463 = vlaneseq
    %v464 = vshrl.u32 %v463, 7
    %v465 = vsub.s32 0, %v464
    %v466 = vrot.slane %v461, %v465
    %v468 = vadd.f32 %v399, %v466
    %v469 = vadd.f32 %v402, %v466
    %v470 = vadd.f32 %v407, %v466
    %v471 = vadd.f32 %v410, %v466
    %v472 = vadd.f32 %v415, %v466
    %v473 = vadd.f32 %v418, %v466
    %v474 = vadd.f32 %v423, %v466
    %v475 = vadd.f32 %v426, %v466
    %v476 = vadd.f32 %v431, %v466
    %v477 = vadd.f32 %v434, %v466
    %v478 = vadd.f32 %v439, %v466
    %v479 = vadd.f32 %v442, %v466
    %v480 = vadd.f32 %v447, %v466
    %v481 = vadd.f32 %v450, %v466
    %v482 = vadd.f32 %v455, %v466
    %v483 = vadd.f32 %v458, %v466
    %500 = vrot.lane.b32.xlu0 %v468, 112
    %v501 = vpop.permute.xlu0 %500
    %502 = vrot.lane.b32.xlu0 %v469, 112
    %v503 = vpop.permute.xlu0 %502
    %504 = vrot.lane.b32.xlu0 %v470, 112
    %v505 = vpop.permute.xlu0 %504
    %506 = vrot.lane.b32.xlu0 %v471, 112
    %v507 = vpop.permute.xlu0 %506
    %508 = vrot.lane.b32.xlu0 %v472, 112
    %v509 = vpop.permute.xlu0 %508
    %510 = vrot.lane.b32.xlu0 %v473, 112
    %v511 = vpop.permute.xlu0 %510
    %512 = vrot.lane.b32.xlu0 %v474, 112
    %v513 = vpop.permute.xlu0 %512
    %514 = vrot.lane.b32.xlu0 %v475, 112
    %v515 = vpop.permute.xlu0 %514
    %516 = vrot.lane.b32.xlu0 %v476, 112
    %v517 = vpop.permute.xlu0 %516
    %518 = vrot.lane.b32.xlu0 %v477, 112
    %v519 = vpop.permute.xlu0 %518
    %520 = vrot.lane.b32.xlu0 %v478, 112
    %v521 = vpop.permute.xlu0 %520
    %522 = vrot.lane.b32.xlu0 %v479, 112
    %v523 = vpop.permute.xlu0 %522
    %524 = vrot.lane.b32.xlu0 %v480, 112
    %v525 = vpop.permute.xlu0 %524
    %526 = vrot.lane.b32.xlu0 %v481, 112
    %v527 = vpop.permute.xlu0 %526
    %528 = vrot.lane.b32.xlu0 %v482, 112
    %v529 = vpop.permute.xlu0 %528
    %530 = vrot.lane.b32.xlu0 %v483, 112
    %v531 = vpop.permute.xlu0 %530
    %v548 = vmul.f32 %v468, %v501
    %v549 = vmul.f32 %v469, %v503
    %v550 = vmul.f32 %v470, %v505
    %v551 = vmul.f32 %v471, %v507
    %v552 = vmul.f32 %v472, %v509
    %v553 = vmul.f32 %v473, %v511
    %v554 = vmul.f32 %v474, %v513
    %v555 = vmul.f32 %v475, %v515
    %v556 = vmul.f32 %v476, %v517
    %v557 = vmul.f32 %v477, %v519
    %v558 = vmul.f32 %v478, %v521
    %v559 = vmul.f32 %v479, %v523
    %v560 = vmul.f32 %v480, %v525
    %v561 = vmul.f32 %v481, %v527
    %v562 = vmul.f32 %v482, %v529
    %v563 = vmul.f32 %v483, %v531
    %v564 = vld [vmem:[%s2] sm:$0xff]
    %v565 = vld [vmem:[%s2 + $0x8] sm:$0xff]
    %v566 = vld [vmem:[%s2 + $0x10] sm:$0xff]
    %v567 = vld [vmem:[%s2 + $0x18] sm:$0xff]
    %v568 = vld [vmem:[%s2 + $0x20] sm:$0xff]
    %v569 = vld [vmem:[%s2 + $0x28] sm:$0xff]
    %v570 = vld [vmem:[%s2 + $0x30] sm:$0xff]
    %v571 = vld [vmem:[%s2 + $0x38] sm:$0xff]
    %v572 = vld [vmem:[%s2 + $0x40] sm:$0xff]
    %v573 = vld [vmem:[%s2 + $0x48] sm:$0xff]
    %v574 = vld [vmem:[%s2 + $0x50] sm:$0xff]
    %v575 = vld [vmem:[%s2 + $0x58] sm:$0xff]
    %v576 = vld [vmem:[%s2 + $0x60] sm:$0xff]
    %v577 = vld [vmem:[%s2 + $0x68] sm:$0xff]
    %v578 = vld [vmem:[%s2 + $0x70] sm:$0xff]
    %v579 = vld [vmem:[%s2 + $0x78] sm:$0xff]
    %v580 = vld [vmem:[%s6] sm:$0xf]
    %v581 = vld [vmem:[%s6 + $0x4] sm:$0xf]
    %v582 = vld [vmem:[%s6 + $0x8] sm:$0xf]
    %v583 = vld [vmem:[%s6 + $0xc] sm:$0xf]
    %v584 = vpack.c.bf16 %v549, %v548
    %v585 = vpack.c.bf16 %v551, %v550
    %v586 = vpack.c.bf16 %v553, %v552
    %v587 = vpack.c.bf16 %v555, %v554
    %v588 = vpack.c.bf16 %v557, %v556
    %v589 = vpack.c.bf16 %v559, %v558
    %v590 = vpack.c.bf16 %v561, %v560
    %v591 = vpack.c.bf16 %v563, %v562
    %v592 = vpack.c.bf16 %v565, %v564
    %v593 = vpack.c.bf16 %v567, %v566
    %v594 = vpack.c.bf16 %v569, %v568
    %v595 = vpack.c.bf16 %v571, %v570
    %v596 = vpack.c.bf16 %v573, %v572
    %v597 = vpack.c.bf16 %v575, %v574
    %v598 = vpack.c.bf16 %v577, %v576
    %v599 = vpack.c.bf16 %v579, %v578
    %v602 = vunpack.c.l.b16 %v582
    %v603 = vunpack.c.l.b16 %v583
    %v604 = vpack.c.b16 %v603, %v602
    %vm606 = vcmask 130048
    %v608 = vsel %vm606, %v592, 0
    %v611 = vsel %vm606, %v593, 0
    %v614 = vsel %vm606, %v594, 0
    %v617 = vsel %vm606, %v595, 0
    %v620 = vsel %vm606, %v596, 0
    %v623 = vsel %vm606, %v597, 0
    %v626 = vsel %vm606, %v598, 0
    %v629 = vsel %vm606, %v599, 0
    %631 = vmatprep.subr.bf16.mxu0 0
    %632 = vmatpush1.bf16.msra.mxu0 %v604
    %633 = vmatprep.subr.bf16.mxu0 0
    %634 = vmatpush1.bf16.msra.mxu0 0
    %635 = vmatprep.subr.bf16.mxu0 0
    %636 = vmatpush1.bf16.msra.mxu0 0
    %637 = vmatprep.subr.bf16.mxu0 0
    %638 = vmatpush1.bf16.msra.mxu0 0
    %639 = vmatprep.subr.bf16.mxu0 0
    %640 = vmatpush1.bf16.msra.mxu0 0
    %641 = vmatprep.subr.bf16.mxu0 0
    %642 = vmatpush1.bf16.msra.mxu0 0
    %643 = vmatprep.subr.bf16.mxu0 0
    %644 = vmatpush1.bf16.msra.mxu0 0
    %645 = vmatprep.subr.bf16.mxu0 0
    %646 = vmatpush1.bf16.msra.mxu0 0
    %647 = vmatprep.subr.bf16.mxu0 0
    %648 = vmatpush1.bf16.msra.mxu0 0
    %649 = vmatprep.subr.bf16.mxu0 0
    %650 = vmatpush1.bf16.msra.mxu0 0
    %651 = vmatprep.subr.bf16.mxu0 0
    %652 = vmatpush1.bf16.msra.mxu0 0
    %653 = vmatprep.subr.bf16.mxu0 0
    %654 = vmatpush1.bf16.msra.mxu0 0
    %655 = vmatprep.subr.bf16.mxu0 0
    %656 = vmatpush1.bf16.msra.mxu0 0
    %657 = vmatprep.subr.bf16.mxu0 0
    %658 = vmatpush1.bf16.msra.mxu0 0
    %659 = vmatprep.subr.bf16.mxu0 0
    %660 = vmatpush1.bf16.msra.mxu0 0
    %661 = vmatprep.subr.bf16.mxu0 0
    %662 = vmatpush1.bf16.msra.mxu0 0
    %663 = vmatprep.mubr.bf16.mxu0 0
    %664 = vmatmul.mubr.bf16.gmra.mrb[0].mxu0 %v608
    %v665 = vpop.f32.mrb[0].mxu0
    %v666 = vadd.f32 0.0, %v665
    %v667 = vpop.f32.mrb[0].mxu0
    %v668 = vpop.f32.mrb[0].mxu0
    %v669 = vadd.f32 0.0, %v668
    %v670 = vpop.f32.mrb[0].mxu0
    %671 = vmatprep.mubr.bf16.mxu0 0
    %672 = vmatmul.mubr.bf16.gmra.mrb[0].mxu0 %v611
    %v673 = vpop.f32.mrb[0].mxu0
    %v674 = vadd.f32 0.0, %v673
    %v675 = vpop.f32.mrb[0].mxu0
    %v676 = vpop.f32.mrb[0].mxu0
    %v677 = vadd.f32 0.0, %v676
    %v678 = vpop.f32.mrb[0].mxu0
    %679 = vmatprep.mubr.bf16.mxu0 0
    %680 = vmatmul.mubr.bf16.gmra.mrb[0].mxu0 %v614
    %v681 = vpop.f32.mrb[0].mxu0
    %v682 = vadd.f32 0.0, %v681
    %v683 = vpop.f32.mrb[0].mxu0
    %v684 = vpop.f32.mrb[0].mxu0
    %v685 = vadd.f32 0.0, %v684
    %v686 = vpop.f32.mrb[0].mxu0
    %687 = vmatprep.mubr.bf16.mxu0 0
    %688 = vmatmul.mubr.bf16.gmra.mrb[0].mxu0 %v617
    %v689 = vpop.f32.mrb[0].mxu0
    %v690 = vadd.f32 0.0, %v689
    %v691 = vpop.f32.mrb[0].mxu0
    %v692 = vpop.f32.mrb[0].mxu0
    %v693 = vadd.f32 0.0, %v692
    %v694 = vpop.f32.mrb[0].mxu0
    %695 = vmatprep.mubr.bf16.mxu0 0
    %696 = vmatmul.mubr.bf16.gmra.mrb[0].mxu0 %v620
    %v697 = vpop.f32.mrb[0].mxu0
    %v698 = vadd.f32 0.0, %v697
    %v699 = vpop.f32.mrb[0].mxu0
    %v700 = vpop.f32.mrb[0].mxu0
    %v701 = vadd.f32 0.0, %v700
    %v702 = vpop.f32.mrb[0].mxu0
    %703 = vmatprep.mubr.bf16.mxu0 0
    %704 = vmatmul.mubr.bf16.gmra.mrb[0].mxu0 %v623
    %v705 = vpop.f32.mrb[0].mxu0
    %v706 = vadd.f32 0.0, %v705
    %v707 = vpop.f32.mrb[0].mxu0
    %v708 = vpop.f32.mrb[0].mxu0
    %v709 = vadd.f32 0.0, %v708
    %v710 = vpop.f32.mrb[0].mxu0
    %711 = vmatprep.mubr.bf16.mxu0 0
    %712 = vmatmul.mubr.bf16.gmra.mrb[0].mxu0 %v626
    %v713 = vpop.f32.mrb[0].mxu0
    %v714 = vadd.f32 0.0, %v713
    %v715 = vpop.f32.mrb[0].mxu0
    %v716 = vpop.f32.mrb[0].mxu0
    %v717 = vadd.f32 0.0, %v716
    %v718 = vpop.f32.mrb[0].mxu0
    %719 = vmatprep.mubr.bf16.mxu0 0
    %720 = vmatmul.mubr.bf16.gmra.mrb[0].mxu0 %v629
    %v721 = vpop.f32.mrb[0].mxu0
    %v722 = vadd.f32 0.0, %v721
    %v723 = vpop.f32.mrb[0].mxu0
    %v724 = vpop.f32.mrb[0].mxu0
    %v725 = vadd.f32 0.0, %v724
    %v726 = vpop.f32.mrb[0].mxu0
    %727 = vdwg.mxu0
    %v730 = vunpack.c.l.b16 %v580
    %v731 = vunpack.c.l.b16 %v581
    %v732 = vpack.c.b16 %v731, %v730
    %v735 = vsel %vm606, %v584, 0
    %v738 = vsel %vm606, %v585, 0
    %v741 = vsel %vm606, %v586, 0
    %v744 = vsel %vm606, %v587, 0
    %v747 = vsel %vm606, %v588, 0
    %v750 = vsel %vm606, %v589, 0
    %v753 = vsel %vm606, %v590, 0
    %v756 = vsel %vm606, %v591, 0
    %758 = vmatprep.subr.bf16.mxu0 0
    %759 = vmatpush1.bf16.msra.mxu0 %v732
    %760 = vmatprep.subr.bf16.mxu0 0
    %761 = vmatpush1.bf16.msra.mxu0 0
    %762 = vmatprep.subr.bf16.mxu0 0
    %763 = vmatpush1.bf16.msra.mxu0 0
    %764 = vmatprep.subr.bf16.mxu0 0
    %765 = vmatpush1.bf16.msra.mxu0 0
    %766 = vmatprep.subr.bf16.mxu0 0
    %767 = vmatpush1.bf16.msra.mxu0 0
    %768 = vmatprep.subr.bf16.mxu0 0
    %769 = vmatpush1.bf16.msra.mxu0 0
    %770 = vmatprep.subr.bf16.mxu0 0
    %771 = vmatpush1.bf16.msra.mxu0 0
    %772 = vmatprep.subr.bf16.mxu0 0
    %773 = vmatpush1.bf16.msra.mxu0 0
    %774 = vmatprep.subr.bf16.mxu0 0
    %775 = vmatpush1.bf16.msra.mxu0 0
    %776 = vmatprep.subr.bf16.mxu0 0
    %777 = vmatpush1.bf16.msra.mxu0 0
    %778 = vmatprep.subr.bf16.mxu0 0
    %779 = vmatpush1.bf16.msra.mxu0 0
    %780 = vmatprep.subr.bf16.mxu0 0
    %781 = vmatpush1.bf16.msra.mxu0 0
    %782 = vmatprep.subr.bf16.mxu0 0
    %783 = vmatpush1.bf16.msra.mxu0 0
    %784 = vmatprep.subr.bf16.mxu0 0
    %785 = vmatpush1.bf16.msra.mxu0 0
    %786 = vmatprep.subr.bf16.mxu0 0
    %787 = vmatpush1.bf16.msra.mxu0 0
    %788 = vmatprep.subr.bf16.mxu0 0
    %789 = vmatpush1.bf16.msra.mxu0 0
    %790 = vmatprep.mubr.bf16.mxu0 0
    %791 = vmatmul.mubr.bf16.gmra.mrb[0].mxu0 %v735
    %v792 = vpop.f32.mrb[0].mxu0
    %v793 = vadd.f32 %v666, %v792
    %v794 = vpop.f32.mrb[0].mxu0
    %v795 = vpop.f32.mrb[0].mxu0
    %v796 = vadd.f32 %v669, %v795
    %v797 = vpop.f32.mrb[0].mxu0
    %798 = vmatprep.mubr.bf16.mxu0 0
    %799 = vmatmul.mubr.bf16.gmra.mrb[0].mxu0 %v738
    %v800 = vpop.f32.mrb[0].mxu0
    %v801 = vadd.f32 %v674, %v800
    %v802 = vpop.f32.mrb[0].mxu0
    %v803 = vpop.f32.mrb[0].mxu0
    %v804 = vadd.f32 %v677, %v803
    %v805 = vpop.f32.mrb[0].mxu0
    %806 = vmatprep.mubr.bf16.mxu0 0
    %807 = vmatmul.mubr.bf16.gmra.mrb[0].mxu0 %v741
    %v808 = vpop.f32.mrb[0].mxu0
    %v809 = vadd.f32 %v682, %v808
    %v810 = vpop.f32.mrb[0].mxu0
    %v811 = vpop.f32.mrb[0].mxu0
    %v812 = vadd.f32 %v685, %v811
    %v813 = vpop.f32.mrb[0].mxu0
    %814 = vmatprep.mubr.bf16.mxu0 0
    %815 = vmatmul.mubr.bf16.gmra.mrb[0].mxu0 %v744
    %v816 = vpop.f32.mrb[0].mxu0
    %v817 = vadd.f32 %v690, %v816
    %v818 = vpop.f32.mrb[0].mxu0
    %v819 = vpop.f32.mrb[0].mxu0
    %v820 = vadd.f32 %v693, %v819
    %v821 = vpop.f32.mrb[0].mxu0
    %822 = vmatprep.mubr.bf16.mxu0 0
    %823 = vmatmul.mubr.bf16.gmra.mrb[0].mxu0 %v747
    %v824 = vpop.f32.mrb[0].mxu0
    %v825 = vadd.f32 %v698, %v824
    %v826 = vpop.f32.mrb[0].mxu0
    %v827 = vpop.f32.mrb[0].mxu0
    %v828 = vadd.f32 %v701, %v827
    %v829 = vpop.f32.mrb[0].mxu0
    %830 = vmatprep.mubr.bf16.mxu0 0
    %831 = vmatmul.mubr.bf16.gmra.mrb[0].mxu0 %v750
    %v832 = vpop.f32.mrb[0].mxu0
    %v833 = vadd.f32 %v706, %v832
    %v834 = vpop.f32.mrb[0].mxu0
    %v835 = vpop.f32.mrb[0].mxu0
    %v836 = vadd.f32 %v709, %v835
    %v837 = vpop.f32.mrb[0].mxu0
    %838 = vmatprep.mubr.bf16.mxu0 0
    %839 = vmatmul.mubr.bf16.gmra.mrb[0].mxu0 %v753
    %v840 = vpop.f32.mrb[0].mxu0
    %v841 = vadd.f32 %v714, %v840
    %v842 = vpop.f32.mrb[0].mxu0
    %v843 = vpop.f32.mrb[0].mxu0
    %v844 = vadd.f32 %v717, %v843
    %v845 = vpop.f32.mrb[0].mxu0
    %846 = vmatprep.mubr.bf16.mxu0 0
    %847 = vmatmul.mubr.bf16.gmra.mrb[0].mxu0 %v756
    %v848 = vpop.f32.mrb[0].mxu0
    %v849 = vadd.f32 %v722, %v848
    %v850 = vpop.f32.mrb[0].mxu0
    %v851 = vpop.f32.mrb[0].mxu0
    %v852 = vadd.f32 %v725, %v851
    %v853 = vpop.f32.mrb[0].mxu0
    %854 = vdwg.mxu0
    %v855 = vld [vmem:[%s7] sm:$0x1]
    %v857 = vlaneseq
    %v858 = vshrl.u32 %v857, 7
    %v859 = vsub.s32 0, %v858
    %v860 = vrot.slane %v855, %v859
    %v862 = vadd.f32 %v793, %v860
    %v863 = vadd.f32 %v796, %v860
    %v864 = vadd.f32 %v801, %v860
    %v865 = vadd.f32 %v804, %v860
    %v866 = vadd.f32 %v809, %v860
    %v867 = vadd.f32 %v812, %v860
    %v868 = vadd.f32 %v817, %v860
    %v869 = vadd.f32 %v820, %v860
    %v870 = vadd.f32 %v825, %v860
    %v871 = vadd.f32 %v828, %v860
    %v872 = vadd.f32 %v833, %v860
    %v873 = vadd.f32 %v836, %v860
    %v874 = vadd.f32 %v841, %v860
    %v875 = vadd.f32 %v844, %v860
    %v876 = vadd.f32 %v849, %v860
    %v877 = vadd.f32 %v852, %v860
    %v878 = vadd.f32 %v862, %v564
    %v879 = vadd.f32 %v863, %v565
    %v880 = vadd.f32 %v864, %v566
    %v881 = vadd.f32 %v865, %v567
    %v882 = vadd.f32 %v866, %v568
    %v883 = vadd.f32 %v867, %v569
    %v884 = vadd.f32 %v868, %v570
    %v885 = vadd.f32 %v869, %v571
    %v886 = vadd.f32 %v870, %v572
    %v887 = vadd.f32 %v871, %v573
    %v888 = vadd.f32 %v872, %v574
    %v889 = vadd.f32 %v873, %v575
    %v890 = vadd.f32 %v874, %v576
    %v891 = vadd.f32 %v875, %v577
    %v892 = vadd.f32 %v876, %v578
    %v893 = vadd.f32 %v877, %v579
    %894 = vst.msk [vmem:[#allocation2] sm:$0xff] %vm606, %v878
    %895 = vst.msk [vmem:[#allocation2 + $0x8] sm:$0xff] %vm606, %v879
    %896 = vst.msk [vmem:[#allocation2 + $0x10] sm:$0xff] %vm606, %v880
    %897 = vst.msk [vmem:[#allocation2 + $0x18] sm:$0xff] %vm606, %v881
    %898 = vst.msk [vmem:[#allocation2 + $0x20] sm:$0xff] %vm606, %v882
    %899 = vst.msk [vmem:[#allocation2 + $0x28] sm:$0xff] %vm606, %v883
    %900 = vst.msk [vmem:[#allocation2 + $0x30] sm:$0xff] %vm606, %v884
    %901 = vst.msk [vmem:[#allocation2 + $0x38] sm:$0xff] %vm606, %v885
    %902 = vst.msk [vmem:[#allocation2 + $0x40] sm:$0xff] %vm606, %v886
    %903 = vst.msk [vmem:[#allocation2 + $0x48] sm:$0xff] %vm606, %v887
    %904 = vst.msk [vmem:[#allocation2 + $0x50] sm:$0xff] %vm606, %v888
    %905 = vst.msk [vmem:[#allocation2 + $0x58] sm:$0xff] %vm606, %v889
    %906 = vst.msk [vmem:[#allocation2 + $0x60] sm:$0xff] %vm606, %v890
    %907 = vst.msk [vmem:[#allocation2 + $0x68] sm:$0xff] %vm606, %v891
    %908 = vst.msk [vmem:[#allocation2 + $0x70] sm:$0xff] %vm606, %v892
    %909 = vst.msk [vmem:[#allocation2 + $0x78] sm:$0xff] %vm606, %v893
    %vm910 = vcmp.ge.f32.partialorder %v878, 0.0
    %vm911 = vcmp.ge.f32.partialorder %v879, 0.0
    %vm912 = vcmp.ge.f32.partialorder %v880, 0.0
    %vm913 = vcmp.ge.f32.partialorder %v881, 0.0
    %vm914 = vcmp.ge.f32.partialorder %v882, 0.0
    %vm915 = vcmp.ge.f32.partialorder %v883, 0.0
    %vm916 = vcmp.ge.f32.partialorder %v884, 0.0
    %vm917 = vcmp.ge.f32.partialorder %v885, 0.0
    %vm918 = vcmp.ge.f32.partialorder %v886, 0.0
    %vm919 = vcmp.ge.f32.partialorder %v887, 0.0
    %vm920 = vcmp.ge.f32.partialorder %v888, 0.0
    %vm921 = vcmp.ge.f32.partialorder %v889, 0.0
    %vm922 = vcmp.ge.f32.partialorder %v890, 0.0
    %vm923 = vcmp.ge.f32.partialorder %v891, 0.0
    %vm924 = vcmp.ge.f32.partialorder %v892, 0.0
    %vm925 = vcmp.ge.f32.partialorder %v893, 0.0
    %v926 = vld [vmem:[%s8] sm:$0x1]
    %v928 = vlaneseq
    %v929 = vshrl.u32 %v928, 7
    %v930 = vsub.s32 0, %v929
    %v931 = vrot.slane %v926, %v930
    %v933 = vmul.f32 %v878, %v931
    %v934 = vmul.f32 %v879, %v931
    %v935 = vmul.f32 %v880, %v931
    %v936 = vmul.f32 %v881, %v931
    %v937 = vmul.f32 %v882, %v931
    %v938 = vmul.f32 %v883, %v931
    %v939 = vmul.f32 %v884, %v931
    %v940 = vmul.f32 %v885, %v931
    %v941 = vmul.f32 %v886, %v931
    %v942 = vmul.f32 %v887, %v931
    %v943 = vmul.f32 %v888, %v931
    %v944 = vmul.f32 %v889, %v931
    %v945 = vmul.f32 %v890, %v931
    %v946 = vmul.f32 %v891, %v931
    %v947 = vmul.f32 %v892, %v931
    %v948 = vmul.f32 %v893, %v931
    %v949 = vsel %vm910, %v878, %v933
    %v950 = vsel %vm911, %v879, %v934
    %v951 = vsel %vm912, %v880, %v935
    %v952 = vsel %vm913, %v881, %v936
    %v953 = vsel %vm914, %v882, %v937
    %v954 = vsel %vm915, %v883, %v938
    %v955 = vsel %vm916, %v884, %v939
    %v956 = vsel %vm917, %v885, %v940
    %v957 = vsel %vm918, %v886, %v941
    %v958 = vsel %vm919, %v887, %v942
    %v959 = vsel %vm920, %v888, %v943
    %v960 = vsel %vm921, %v889, %v944
    %v961 = vsel %vm922, %v890, %v945
    %v962 = vsel %vm923, %v891, %v946
    %v963 = vsel %vm924, %v892, %v947
    %v964 = vsel %vm925, %v893, %v948
    %v965 = vpack.c.bf16 %v950, %v949
    %v966 = vpack.c.bf16 %v952, %v951
    %v967 = vpack.c.bf16 %v954, %v953
    %v968 = vpack.c.bf16 %v956, %v955
    %v969 = vpack.c.bf16 %v958, %v957
    %v970 = vpack.c.bf16 %v960, %v959
    %v971 = vpack.c.bf16 %v962, %v961
    %v972 = vpack.c.bf16 %v964, %v963
    %v973 = vld [vmem:[%s9] sm:$0xf]
    %v974 = vld [vmem:[%s9 + $0x4] sm:$0xf]
    %v975 = vld [vmem:[%s10] sm:$0x1]
    %v977 = vlaneseq
    %v978 = vshrl.u32 %v977, 7
    %v979 = vsub.s32 0, %v978
    %v980 = vrot.slane %v975, %v979
    %v984 = vunpack.c.l.b16 %v973
    %v985 = vunpack.c.l.b16 %v974
    %v986 = vpack.c.b16 %v985, %v984
    %v989 = vsel %vm606, %v965, 0
    %v992 = vsel %vm606, %v966, 0
    %v995 = vsel %vm606, %v967, 0
    %v998 = vsel %vm606, %v968, 0
    %v1001 = vsel %vm606, %v969, 0
    %v1004 = vsel %vm606, %v970, 0
    %v1007 = vsel %vm606, %v971, 0
    %v1010 = vsel %vm606, %v972, 0
    %1012 = vmatprep.subr.bf16.mxu0 0
    %1013 = vmatpush1.bf16.msra.mxu0 %v986
    %1014 = vmatprep.subr.bf16.mxu0 0
    %1015 = vmatpush1.bf16.msra.mxu0 0
    %1016 = vmatprep.subr.bf16.mxu0 0
    %1017 = vmatpush1.bf16.msra.mxu0 0
    %1018 = vmatprep.subr.bf16.mxu0 0
    %1019 = vmatpush1.bf16.msra.mxu0 0
    %1020 = vmatprep.subr.bf16.mxu0 0
    %1021 = vmatpush1.bf16.msra.mxu0 0
    %1022 = vmatprep.subr.bf16.mxu0 0
    %1023 = vmatpush1.bf16.msra.mxu0 0
    %1024 = vmatprep.subr.bf16.mxu0 0
    %1025 = vmatpush1.bf16.msra.mxu0 0
    %1026 = vmatprep.subr.bf16.mxu0 0
    %1027 = vmatpush1.bf16.msra.mxu0 0
    %1028 = vmatprep.subr.bf16.mxu0 0
    %1029 = vmatpush1.bf16.msra.mxu0 0
    %1030 = vmatprep.subr.bf16.mxu0 0
    %1031 = vmatpush1.bf16.msra.mxu0 0
    %1032 = vmatprep.subr.bf16.mxu0 0
    %1033 = vmatpush1.bf16.msra.mxu0 0
    %1034 = vmatprep.subr.bf16.mxu0 0
    %1035 = vmatpush1.bf16.msra.mxu0 0
    %1036 = vmatprep.subr.bf16.mxu0 0
    %1037 = vmatpush1.bf16.msra.mxu0 0
    %1038 = vmatprep.subr.bf16.mxu0 0
    %1039 = vmatpush1.bf16.msra.mxu0 0
    %1040 = vmatprep.subr.bf16.mxu0 0
    %1041 = vmatpush1.bf16.msra.mxu0 0
    %1042 = vmatprep.subr.bf16.mxu0 0
    %1043 = vmatpush1.bf16.msra.mxu0 0
    %1044 = vmatprep.mubr.bf16.mxu0 0
    %1045 = vmatmul.mubr.bf16.gmra.mrb[0].mxu0 %v989
    %v1046 = vpop.f32.mrb[0].mxu0
    %v1047 = vadd.f32 %v980, %v1046
    %v1048 = vpop.f32.mrb[0].mxu0
    %v1049 = vpop.f32.mrb[0].mxu0
    %v1050 = vadd.f32 %v980, %v1049
    %v1051 = vpop.f32.mrb[0].mxu0
    %1052 = vmatprep.mubr.bf16.mxu0 0
    %1053 = vmatmul.mubr.bf16.gmra.mrb[0].mxu0 %v992
    %v1054 = vpop.f32.mrb[0].mxu0
    %v1055 = vadd.f32 %v980, %v1054
    %v1056 = vpop.f32.mrb[0].mxu0
    %v1057 = vpop.f32.mrb[0].mxu0
    %v1058 = vadd.f32 %v980, %v1057
    %v1059 = vpop.f32.mrb[0].mxu0
    %1060 = vmatprep.mubr.bf16.mxu0 0
    %1061 = vmatmul.mubr.bf16.gmra.mrb[0].mxu0 %v995
    %v1062 = vpop.f32.mrb[0].mxu0
    %v1063 = vadd.f32 %v980, %v1062
    %v1064 = vpop.f32.mrb[0].mxu0
    %v1065 = vpop.f32.mrb[0].mxu0
    %v1066 = vadd.f32 %v980, %v1065
    %v1067 = vpop.f32.mrb[0].mxu0
    %1068 = vmatprep.mubr.bf16.mxu0 0
    %1069 = vmatmul.mubr.bf16.gmra.mrb[0].mxu0 %v998
    %v1070 = vpop.f32.mrb[0].mxu0
    %v1071 = vadd.f32 %v980, %v1070
    %v1072 = vpop.f32.mrb[0].mxu0
    %v1073 = vpop.f32.mrb[0].mxu0
    %v1074 = vadd.f32 %v980, %v1073
    %v1075 = vpop.f32.mrb[0].mxu0
    %1076 = vmatprep.mubr.bf16.mxu0 0
    %1077 = vmatmul.mubr.bf16.gmra.mrb[0].mxu0 %v1001
    %v1078 = vpop.f32.mrb[0].mxu0
    %v1079 = vadd.f32 %v980, %v1078
    %v1080 = vpop.f32.mrb[0].mxu0
    %v1081 = vpop.f32.mrb[0].mxu0
    %v1082 = vadd.f32 %v980, %v1081
    %v1083 = vpop.f32.mrb[0].mxu0
    %1084 = vmatprep.mubr.bf16.mxu0 0
    %1085 = vmatmul.mubr.bf16.gmra.mrb[0].mxu0 %v1004
    %v1086 = vpop.f32.mrb[0].mxu0
    %v1087 = vadd.f32 %v980, %v1086
    %v1088 = vpop.f32.mrb[0].mxu0
    %v1089 = vpop.f32.mrb[0].mxu0
    %v1090 = vadd.f32 %v980, %v1089
    %v1091 = vpop.f32.mrb[0].mxu0
    %1092 = vmatprep.mubr.bf16.mxu0 0
    %1093 = vmatmul.mubr.bf16.gmra.mrb[0].mxu0 %v1007
    %v1094 = vpop.f32.mrb[0].mxu0
    %v1095 = vadd.f32 %v980, %v1094
    %v1096 = vpop.f32.mrb[0].mxu0
    %v1097 = vpop.f32.mrb[0].mxu0
    %v1098 = vadd.f32 %v980, %v1097
    %v1099 = vpop.f32.mrb[0].mxu0
    %1100 = vmatprep.mubr.bf16.mxu0 0
    %1101 = vmatmul.mubr.bf16.gmra.mrb[0].mxu0 %v1010
    %v1102 = vpop.f32.mrb[0].mxu0
    %v1103 = vadd.f32 %v980, %v1102
    %v1104 = vpop.f32.mrb[0].mxu0
    %v1105 = vpop.f32.mrb[0].mxu0
    %v1106 = vadd.f32 %v980, %v1105
    %v1107 = vpop.f32.mrb[0].mxu0
    %1108 = vdwg.mxu0
    %vm1109 = vcmask 261120
    %1110 = vst.msk [vmem:[%s12] sm:$0xff] %vm1109, %v1047
    %1111 = vst.msk [vmem:[%s12 + $0x8] sm:$0xff] %vm1109, %v1050
    %1112 = vst.msk [vmem:[%s12 + $0x10] sm:$0xff] %vm1109, %v1055
    %1113 = vst.msk [vmem:[%s12 + $0x18] sm:$0xff] %vm1109, %v1058
    %1114 = vst.msk [vmem:[%s12 + $0x20] sm:$0xff] %vm1109, %v1063
    %1115 = vst.msk [vmem:[%s12 + $0x28] sm:$0xff] %vm1109, %v1066
    %1116 = vst.msk [vmem:[%s12 + $0x30] sm:$0xff] %vm1109, %v1071
    %1117 = vst.msk [vmem:[%s12 + $0x38] sm:$0xff] %vm1109, %v1074
    %1118 = vst.msk [vmem:[%s12 + $0x40] sm:$0xff] %vm1109, %v1079
    %1119 = vst.msk [vmem:[%s12 + $0x48] sm:$0xff] %vm1109, %v1082
    %1120 = vst.msk [vmem:[%s12 + $0x50] sm:$0xff] %vm1109, %v1087
    %1121 = vst.msk [vmem:[%s12 + $0x58] sm:$0xff] %vm1109, %v1090
    %1122 = vst.msk [vmem:[%s12 + $0x60] sm:$0xff] %vm1109, %v1095
    %1123 = vst.msk [vmem:[%s12 + $0x68] sm:$0xff] %vm1109, %v1098
    %1124 = vst.msk [vmem:[%s12 + $0x70] sm:$0xff] %vm1109, %v1103
    %1125 = vst.msk [vmem:[%s12 + $0x78] sm:$0xff] %vm1109, %v1106
    // Predicated region
    $region46: #{separator_forward.15} parent=1 // pred_check
      _
    $region47: #{separator_forward.15} parent=1 // pred_check_branch
      %1127 = sbr.rel (0) target = $region49
    $region48: #{separator_forward.15} parent=1 // pred_region
      %s1129 = ssub.s32 2048, 2048
      %1130 = vsyncadd [#allocation3], %s1129
      %s1131 = sshll.u32 [#allocation2], 4
      %s1132 = int_to_ptr.vmem [resolvable:$true] %s1131
      %1137 = dma.vmem_to_hbm [thread:$0]  %s1132, 2048, %s11, [#allocation3], 128, 128, 8
    $region49: #{separator_forward.15} parent=1 // pred_fallthru
      _
    // Predicated region
    $region50: #{separator_forward.15} parent=1 // pred_check
      _
    $region51: #{separator_forward.15} parent=1 // pred_check_branch
      %1139 = sbr.rel (0) target = $region53
    $region52: #{separator_forward.15} parent=1 // pred_region
      _
    $region53: #{separator_forward.15} parent=1 // pred_fallthru
      _
    // Predicated region
    $region54: #{separator_forward.15} parent=1 // pred_check
      _
    $region55: #{separator_forward.15} parent=1 // pred_check_branch
      %1141 = sbr.rel (0) target = $region57
    $region56: #{separator_forward.15} parent=1 // pred_region
      %1142 = dma.done [#allocation3], 2048
    $region57: #{separator_forward.15} parent=1 // pred_fallthru
      _
    // Predicated region
    $region58: #{separator_forward.15} parent=1 // pred_check
      _
    $region59: #{separator_forward.15} parent=1 // pred_check_branch
      %1144 = sbr.rel (0) target = $region61
    $region60: #{separator_forward.15} parent=1 // pred_region
      _
    $region61: #{separator_forward.15} parent=1 // pred_fallthru
      _
    %1145 = vsyncpa [#allocation3], 1

// kernel: separator_forward.9
$region0: #{separator_forward.9}
  #allocation0 [shape = 'u32[]', space=smem, size = 0x4, offset = 0x4, fixed_abs, tag = 'smem constant byte address 0x4 - core index']
  #allocation1 [shape = 'u32[144,128]{1,0:T(1,128)}', space=vmem, size = 0x12000, scoped, tag = 'internal scratch']
  %s0 = inlined_call_operand.vmem [shape: bf16[128,64], index: 0, kind: input, shape index: {}]
  %s1 = inlined_call_operand.vmem [shape: bf16[128,64], index: 1, kind: input, shape index: {}]
  %s2 = inlined_call_operand.vmem [shape: f32[128,16], index: 2, kind: input, shape index: {}]
  %s3 = inlined_call_operand.vmem [shape: bf16[64,32], index: 3, kind: input, shape index: {}]
  %s4 = inlined_call_operand.vmem [shape: bf16[64,32], index: 4, kind: input, shape index: {}]
  %s5 = inlined_call_operand.vmem [shape: f32[1,32], index: 5, kind: input, shape index: {}]
  %s6 = inlined_call_operand.vmem [shape: bf16[32,16], index: 6, kind: input, shape index: {}]
  %s7 = inlined_call_operand.vmem [shape: f32[1,16], index: 7, kind: input, shape index: {}]
  %s8 = inlined_call_operand.vmem [shape: f32[128,16], index: 8, kind: output, shape index: {}]
  %s9 = sld [smem:[#allocation0]]
  $region42: #{separator_forward.9} parent=0
    _
  %s11 = ssub.s32 1, %s9
  %s12 = scalar_select 0, %s11, %s9
  // Predicated region
  $region2: #{separator_forward.9} parent=0 // pred_check
    _
  $region3: #{separator_forward.9} parent=0 // pred_check_branch
    %14 = sbr.rel (0) target = $region5
  $region4: #{separator_forward.9} parent=0 // pred_region
    _
  $region5: #{separator_forward.9} parent=0 // pred_fallthru
    _
  // Predicated region
  $region6: #{separator_forward.9} parent=0 // pred_check
    _
  $region7: #{separator_forward.9} parent=0 // pred_check_branch
    %16 = sbr.rel (0) target = $region9
  $region8: #{separator_forward.9} parent=0 // pred_region
    _
  $region9: #{separator_forward.9} parent=0 // pred_fallthru
    _
  // Predicated region
  $region10: #{separator_forward.9} parent=0 // pred_check
    _
  $region11: #{separator_forward.9} parent=0 // pred_check_branch
    %18 = sbr.rel (0) target = $region13
  $region12: #{separator_forward.9} parent=0 // pred_region
    _
  $region13: #{separator_forward.9} parent=0 // pred_fallthru
    _
  // Predicated region
  $region14: #{separator_forward.9} parent=0 // pred_check
    _
  $region15: #{separator_forward.9} parent=0 // pred_check_branch
    %20 = sbr.rel (0) target = $region17
  $region16: #{separator_forward.9} parent=0 // pred_region
    _
  $region17: #{separator_forward.9} parent=0 // pred_fallthru
    _
  // Predicated region
  $region18: #{separator_forward.9} parent=0 // pred_check
    _
  $region19: #{separator_forward.9} parent=0 // pred_check_branch
    %22 = sbr.rel (0) target = $region21
  $region20: #{separator_forward.9} parent=0 // pred_region
    _
  $region21: #{separator_forward.9} parent=0 // pred_fallthru
    _
  // Predicated region
  $region22: #{separator_forward.9} parent=0 // pred_check
    _
  $region23: #{separator_forward.9} parent=0 // pred_check_branch
    %24 = sbr.rel (0) target = $region25
  $region24: #{separator_forward.9} parent=0 // pred_region
    _
  $region25: #{separator_forward.9} parent=0 // pred_fallthru
    _
  // Predicated region
  $region26: #{separator_forward.9} parent=0 // pred_check
    _
  $region27: #{separator_forward.9} parent=0 // pred_check_branch
    %26 = sbr.rel (0) target = $region29
  $region28: #{separator_forward.9} parent=0 // pred_region
    _
  $region29: #{separator_forward.9} parent=0 // pred_fallthru
    _
  // Predicated region
  $region30: #{separator_forward.9} parent=0 // pred_check
    _
  $region31: #{separator_forward.9} parent=0 // pred_check_branch
    %28 = sbr.rel (0) target = $region33
  $region32: #{separator_forward.9} parent=0 // pred_region
    _
  $region33: #{separator_forward.9} parent=0 // pred_fallthru
    _
  %v30 = vld [vmem:[%s0] sm:$0xf]
  %v31 = vld [vmem:[%s0 + $0x4] sm:$0xf]
  %v32 = vld [vmem:[%s0 + $0x8] sm:$0xf]
  %v33 = vld [vmem:[%s0 + $0xc] sm:$0xf]
  %v34 = vld [vmem:[%s0 + $0x10] sm:$0xf]
  %v35 = vld [vmem:[%s0 + $0x14] sm:$0xf]
  %v36 = vld [vmem:[%s0 + $0x18] sm:$0xf]
  %v37 = vld [vmem:[%s0 + $0x1c] sm:$0xf]
  %v38 = vld [vmem:[%s0 + $0x20] sm:$0xf]
  %v39 = vld [vmem:[%s0 + $0x24] sm:$0xf]
  %v40 = vld [vmem:[%s0 + $0x28] sm:$0xf]
  %v41 = vld [vmem:[%s0 + $0x2c] sm:$0xf]
  %v42 = vld [vmem:[%s0 + $0x30] sm:$0xf]
  %v43 = vld [vmem:[%s0 + $0x34] sm:$0xf]
  %v44 = vld [vmem:[%s0 + $0x38] sm:$0xf]
  %v45 = vld [vmem:[%s0 + $0x3c] sm:$0xf]
  %v46 = vld [vmem:[%s3] sm:$0xf]
  %v47 = vld [vmem:[%s3 + $0x4] sm:$0xf]
  %v48 = vld [vmem:[%s3 + $0x8] sm:$0xf]
  %v49 = vld [vmem:[%s3 + $0xc] sm:$0xf]
  %v50 = vld [vmem:[%s3 + $0x10] sm:$0xf]
  %v51 = vld [vmem:[%s3 + $0x14] sm:$0xf]
  %v52 = vld [vmem:[%s3 + $0x18] sm:$0xf]
  %v53 = vld [vmem:[%s3 + $0x1c] sm:$0xf]
  %v54 = vld [vmem:[%s1] sm:$0xf]
  %v55 = vld [vmem:[%s1 + $0x4] sm:$0xf]
  %v56 = vld [vmem:[%s1 + $0x8] sm:$0xf]
  %v57 = vld [vmem:[%s1 + $0xc] sm:$0xf]
  %v58 = vld [vmem:[%s1 + $0x10] sm:$0xf]
  %v59 = vld [vmem:[%s1 + $0x14] sm:$0xf]
  %v60 = vld [vmem:[%s1 + $0x18] sm:$0xf]
  %v61 = vld [vmem:[%s1 + $0x1c] sm:$0xf]
  %v62 = vld [vmem:[%s1 + $0x20] sm:$0xf]
  %v63 = vld [vmem:[%s1 + $0x24] sm:$0xf]
  %v64 = vld [vmem:[%s1 + $0x28] sm:$0xf]
  %v65 = vld [vmem:[%s1 + $0x2c] sm:$0xf]
  %v66 = vld [vmem:[%s1 + $0x30] sm:$0xf]
  %v67 = vld [vmem:[%s1 + $0x34] sm:$0xf]
  %v68 = vld [vmem:[%s1 + $0x38] sm:$0xf]
  %v69 = vld [vmem:[%s1 + $0x3c] sm:$0xf]
  %v70 = vld [vmem:[%s4] sm:$0xf]
  %v71 = vld [vmem:[%s4 + $0x4] sm:$0xf]
  %v72 = vld [vmem:[%s4 + $0x8] sm:$0xf]
  %v73 = vld [vmem:[%s4 + $0xc] sm:$0xf]
  %v74 = vld [vmem:[%s4 + $0x10] sm:$0xf]
  %v75 = vld [vmem:[%s4 + $0x14] sm:$0xf]
  %v76 = vld [vmem:[%s4 + $0x18] sm:$0xf]
  %v77 = vld [vmem:[%s4 + $0x1c] sm:$0xf]
  %v94 = vunpack.c.l.b16 %v54
  %v95 = vunpack.c.l.b16 %v55
  %v96 = vunpack.c.l.b16 %v56
  %v97 = vunpack.c.l.b16 %v57
  %v98 = vunpack.c.l.b16 %v58
  %v99 = vunpack.c.l.b16 %v59
  %v100 = vunpack.c.l.b16 %v60
  %v101 = vunpack.c.l.b16 %v61
  %v102 = vunpack.c.l.b16 %v62
  %v103 = vunpack.c.l.b16 %v63
  %v104 = vunpack.c.l.b16 %v64
  %v105 = vunpack.c.l.b16 %v65
  %v106 = vunpack.c.l.b16 %v66
  %v107 = vunpack.c.l.b16 %v67
  %v108 = vunpack.c.l.b16 %v68
  %v109 = vunpack.c.l.b16 %v69
  %v110 = vpack.c.b16 %v95, %v94
  %v111 = vpack.c.b16 %v97, %v96
  %v112 = vpack.c.b16 %v99, %v98
  %v113 = vpack.c.b16 %v101, %v100
  %v114 = vpack.c.b16 %v103, %v102
  %v115 = vpack.c.b16 %v105, %v104
  %v116 = vpack.c.b16 %v107, %v106
  %v117 = vpack.c.b16 %v109, %v108
  %v126 = vunpack.c.l.b16 %v70
  %v127 = vunpack.c.l.b16 %v71
  %v128 = vunpack.c.l.b16 %v72
  %v129 = vunpack.c.l.b16 %v73
  %v130 = vunpack.c.l.b16 %v74
  %v131 = vunpack.c.l.b16 %v75
  %v132 = vunpack.c.l.b16 %v76
  %v133 = vunpack.c.l.b16 %v77
  %v134 = vpack.c.b16 %v127, %v126
  %v135 = vpack.c.b16 %v129, %v128
  %v136 = vpack.c.b16 %v131, %v130
  %v137 = vpack.c.b16 %v133, %v132
  %vm142 = vcmask 523264
  %v144 = vsel %vm142, %v110, 0
  %v147 = vsel %vm142, %v111, 0
  %v150 = vsel %vm142, %v112, 0
  %v153 = vsel %vm142, %v113, 0
  %v156 = vsel %vm142, %v114, 0
  %v159 = vsel %vm142, %v115, 0
  %v162 = vsel %vm142, %v116, 0
  %v165 = vsel %vm142, %v117, 0
  %167 = vmatprep.subr.bf16.mxu0 0
  %168 = vmatpush1.bf16.msra.mxu0 %v134
  %169 = vmatprep.subr.bf16.mxu0 0
  %170 = vmatpush1.bf16.msra.mxu0 %v135
  %171 = vmatprep.subr.bf16.mxu0 0
  %172 = vmatpush1.bf16.msra.mxu0 %v136
  %173 = vmatprep.subr.bf16.mxu0 0
  %174 = vmatpush1.bf16.msra.mxu0 %v137
  %175 = vmatprep.subr.bf16.mxu0 0
  %176 = vmatpush1.bf16.msra.mxu0 0
  %177 = vmatprep.subr.bf16.mxu0 0
  %178 = vmatpush1.bf16.msra.mxu0 0
  %179 = vmatprep.subr.bf16.mxu0 0
  %180 = vmatpush1.bf16.msra.mxu0 0
  %181 = vmatprep.subr.bf16.mxu0 0
  %182 = vmatpush1.bf16.msra.mxu0 0
  %183 = vmatprep.subr.bf16.mxu0 0
  %184 = vmatpush1.bf16.msra.mxu0 0
  %185 = vmatprep.subr.bf16.mxu0 0
  %186 = vmatpush1.bf16.msra.mxu0 0
  %187 = vmatprep.subr.bf16.mxu0 0
  %188 = vmatpush1.bf16.msra.mxu0 0
  %189 = vmatprep.subr.bf16.mxu0 0
  %190 = vmatpush1.bf16.msra.mxu0 0
  %191 = vmatprep.subr.bf16.mxu0 0
  %192 = vmatpush1.bf16.msra.mxu0 0
  %193 = vmatprep.subr.bf16.mxu0 0
  %194 = vmatpush1.bf16.msra.mxu0 0
  %195 = vmatprep.subr.bf16.mxu0 0
  %196 = vmatpush1.bf16.msra.mxu0 0
  %197 = vmatprep.subr.bf16.mxu0 0
  %198 = vmatpush1.bf16.msra.mxu0 0
  %199 = vmatprep.mubr.bf16.mxu0 0
  %200 = vmatmul.mubr.bf16.gmra.mrb[0].mxu0 %v144
  %v201 = vpop.f32.mrb[0].mxu0
  %v202 = vadd.f32 0.0, %v201
  %v203 = vpop.f32.mrb[0].mxu0
  %v204 = vpop.f32.mrb[0].mxu0
  %v205 = vadd.f32 0.0, %v204
  %v206 = vpop.f32.mrb[0].mxu0
  %207 = vmatprep.mubr.bf16.mxu0 0
  %208 = vmatmul.mubr.bf16.gmra.mrb[0].mxu0 %v147
  %v209 = vpop.f32.mrb[0].mxu0
  %v210 = vadd.f32 0.0, %v209
  %v211 = vpop.f32.mrb[0].mxu0
  %v212 = vpop.f32.mrb[0].mxu0
  %v213 = vadd.f32 0.0, %v212
  %v214 = vpop.f32.mrb[0].mxu0
  %215 = vmatprep.mubr.bf16.mxu0 0
  %216 = vmatmul.mubr.bf16.gmra.mrb[0].mxu0 %v150
  %v217 = vpop.f32.mrb[0].mxu0
  %v218 = vadd.f32 0.0, %v217
  %v219 = vpop.f32.mrb[0].mxu0
  %v220 = vpop.f32.mrb[0].mxu0
  %v221 = vadd.f32 0.0, %v220
  %v222 = vpop.f32.mrb[0].mxu0
  %223 = vmatprep.mubr.bf16.mxu0 0
  %224 = vmatmul.mubr.bf16.gmra.mrb[0].mxu0 %v153
  %v225 = vpop.f32.mrb[0].mxu0
  %v226 = vadd.f32 0.0, %v225
  %v227 = vpop.f32.mrb[0].mxu0
  %v228 = vpop.f32.mrb[0].mxu0
  %v229 = vadd.f32 0.0, %v228
  %v230 = vpop.f32.mrb[0].mxu0
  %231 = vmatprep.mubr.bf16.mxu0 0
  %232 = vmatmul.mubr.bf16.gmra.mrb[0].mxu0 %v156
  %v233 = vpop.f32.mrb[0].mxu0
  %v234 = vadd.f32 0.0, %v233
  %v235 = vpop.f32.mrb[0].mxu0
  %v236 = vpop.f32.mrb[0].mxu0
  %v237 = vadd.f32 0.0, %v236
  %v238 = vpop.f32.mrb[0].mxu0
  %239 = vmatprep.mubr.bf16.mxu0 0
  %240 = vmatmul.mubr.bf16.gmra.mrb[0].mxu0 %v159
  %v241 = vpop.f32.mrb[0].mxu0
  %v242 = vadd.f32 0.0, %v241
  %v243 = vpop.f32.mrb[0].mxu0
  %v244 = vpop.f32.mrb[0].mxu0
  %v245 = vadd.f32 0.0, %v244
  %v246 = vpop.f32.mrb[0].mxu0
  %247 = vmatprep.mubr.bf16.mxu0 0
  %248 = vmatmul.mubr.bf16.gmra.mrb[0].mxu0 %v162
  %v249 = vpop.f32.mrb[0].mxu0
  %v250 = vadd.f32 0.0, %v249
  %v251 = vpop.f32.mrb[0].mxu0
  %v252 = vpop.f32.mrb[0].mxu0
  %v253 = vadd.f32 0.0, %v252
  %v254 = vpop.f32.mrb[0].mxu0
  %255 = vmatprep.mubr.bf16.mxu0 0
  %256 = vmatmul.mubr.bf16.gmra.mrb[0].mxu0 %v165
  %v257 = vpop.f32.mrb[0].mxu0
  %v258 = vadd.f32 0.0, %v257
  %v259 = vpop.f32.mrb[0].mxu0
  %v260 = vpop.f32.mrb[0].mxu0
  %v261 = vadd.f32 0.0, %v260
  %v262 = vpop.f32.mrb[0].mxu0
  %263 = vdwg.mxu0
  %v280 = vunpack.c.l.b16 %v30
  %v281 = vunpack.c.l.b16 %v31
  %v282 = vunpack.c.l.b16 %v32
  %v283 = vunpack.c.l.b16 %v33
  %v284 = vunpack.c.l.b16 %v34
  %v285 = vunpack.c.l.b16 %v35
  %v286 = vunpack.c.l.b16 %v36
  %v287 = vunpack.c.l.b16 %v37
  %v288 = vunpack.c.l.b16 %v38
  %v289 = vunpack.c.l.b16 %v39
  %v290 = vunpack.c.l.b16 %v40
  %v291 = vunpack.c.l.b16 %v41
  %v292 = vunpack.c.l.b16 %v42
  %v293 = vunpack.c.l.b16 %v43
  %v294 = vunpack.c.l.b16 %v44
  %v295 = vunpack.c.l.b16 %v45
  %v296 = vpack.c.b16 %v281, %v280
  %v297 = vpack.c.b16 %v283, %v282
  %v298 = vpack.c.b16 %v285, %v284
  %v299 = vpack.c.b16 %v287, %v286
  %v300 = vpack.c.b16 %v289, %v288
  %v301 = vpack.c.b16 %v291, %v290
  %v302 = vpack.c.b16 %v293, %v292
  %v303 = vpack.c.b16 %v295, %v294
  %v312 = vunpack.c.l.b16 %v46
  %v313 = vunpack.c.l.b16 %v47
  %v314 = vunpack.c.l.b16 %v48
  %v315 = vunpack.c.l.b16 %v49
  %v316 = vunpack.c.l.b16 %v50
  %v317 = vunpack.c.l.b16 %v51
  %v318 = vunpack.c.l.b16 %v52
  %v319 = vunpack.c.l.b16 %v53
  %v320 = vpack.c.b16 %v313, %v312
  %v321 = vpack.c.b16 %v315, %v314
  %v322 = vpack.c.b16 %v317, %v316
  %v323 = vpack.c.b16 %v319, %v318
  %v329 = vsel %vm142, %v296, 0
  %v332 = vsel %vm142, %v297, 0
  %v335 = vsel %vm142, %v298, 0
  %v338 = vsel %vm142, %v299, 0
  %v341 = vsel %vm142, %v300, 0
  %v344 = vsel %vm142, %v301, 0
  %v347 = vsel %vm142, %v302, 0
  %v350 = vsel %vm142, %v303, 0
  %352 = vmatprep.subr.bf16.mxu0 0
  %353 = vmatpush1.bf16.msra.mxu0 %v320
  %354 = vmatprep.subr.bf16.mxu0 0
  %355 = vmatpush1.bf16.msra.mxu0 %v321
  %356 = vmatprep.subr.bf16.mxu0 0
  %357 = vmatpush1.bf16.msra.mxu0 %v322
  %358 = vmatprep.subr.bf16.mxu0 0
  %359 = vmatpush1.bf16.msra.mxu0 %v323
  %360 = vmatprep.subr.bf16.mxu0 0
  %361 = vmatpush1.bf16.msra.mxu0 0
  %362 = vmatprep.subr.bf16.mxu0 0
  %363 = vmatpush1.bf16.msra.mxu0 0
  %364 = vmatprep.subr.bf16.mxu0 0
  %365 = vmatpush1.bf16.msra.mxu0 0
  %366 = vmatprep.subr.bf16.mxu0 0
  %367 = vmatpush1.bf16.msra.mxu0 0
  %368 = vmatprep.subr.bf16.mxu0 0
  %369 = vmatpush1.bf16.msra.mxu0 0
  %370 = vmatprep.subr.bf16.mxu0 0
  %371 = vmatpush1.bf16.msra.mxu0 0
  %372 = vmatprep.subr.bf16.mxu0 0
  %373 = vmatpush1.bf16.msra.mxu0 0
  %374 = vmatprep.subr.bf16.mxu0 0
  %375 = vmatpush1.bf16.msra.mxu0 0
  %376 = vmatprep.subr.bf16.mxu0 0
  %377 = vmatpush1.bf16.msra.mxu0 0
  %378 = vmatprep.subr.bf16.mxu0 0
  %379 = vmatpush1.bf16.msra.mxu0 0
  %380 = vmatprep.subr.bf16.mxu0 0
  %381 = vmatpush1.bf16.msra.mxu0 0
  %382 = vmatprep.subr.bf16.mxu0 0
  %383 = vmatpush1.bf16.msra.mxu0 0
  %384 = vmatprep.mubr.bf16.mxu0 0
  %385 = vmatmul.mubr.bf16.gmra.mrb[0].mxu0 %v329
  %v386 = vpop.f32.mrb[0].mxu0
  %v387 = vadd.f32 %v202, %v386
  %v388 = vpop.f32.mrb[0].mxu0
  %v389 = vpop.f32.mrb[0].mxu0
  %v390 = vadd.f32 %v205, %v389
  %v391 = vpop.f32.mrb[0].mxu0
  %392 = vmatprep.mubr.bf16.mxu0 0
  %393 = vmatmul.mubr.bf16.gmra.mrb[0].mxu0 %v332
  %v394 = vpop.f32.mrb[0].mxu0
  %v395 = vadd.f32 %v210, %v394
  %v396 = vpop.f32.mrb[0].mxu0
  %v397 = vpop.f32.mrb[0].mxu0
  %v398 = vadd.f32 %v213, %v397
  %v399 = vpop.f32.mrb[0].mxu0
  %400 = vmatprep.mubr.bf16.mxu0 0
  %401 = vmatmul.mubr.bf16.gmra.mrb[0].mxu0 %v335
  %v402 = vpop.f32.mrb[0].mxu0
  %v403 = vadd.f32 %v218, %v402
  %v404 = vpop.f32.mrb[0].mxu0
  %v405 = vpop.f32.mrb[0].mxu0
  %v406 = vadd.f32 %v221, %v405
  %v407 = vpop.f32.mrb[0].mxu0
  %408 = vmatprep.mubr.bf16.mxu0 0
  %409 = vmatmul.mubr.bf16.gmra.mrb[0].mxu0 %v338
  %v410 = vpop.f32.mrb[0].mxu0
  %v411 = vadd.f32 %v226, %v410
  %v412 = vpop.f32.mrb[0].mxu0
  %v413 = vpop.f32.mrb[0].mxu0
  %v414 = vadd.f32 %v229, %v413
  %v415 = vpop.f32.mrb[0].mxu0
  %416 = vmatprep.mubr.bf16.mxu0 0
  %417 = vmatmul.mubr.bf16.gmra.mrb[0].mxu0 %v341
  %v418 = vpop.f32.mrb[0].mxu0
  %v419 = vadd.f32 %v234, %v418
  %v420 = vpop.f32.mrb[0].mxu0
  %v421 = vpop.f32.mrb[0].mxu0
  %v422 = vadd.f32 %v237, %v421
  %v423 = vpop.f32.mrb[0].mxu0
  %424 = vmatprep.mubr.bf16.mxu0 0
  %425 = vmatmul.mubr.bf16.gmra.mrb[0].mxu0 %v344
  %v426 = vpop.f32.mrb[0].mxu0
  %v427 = vadd.f32 %v242, %v426
  %v428 = vpop.f32.mrb[0].mxu0
  %v429 = vpop.f32.mrb[0].mxu0
  %v430 = vadd.f32 %v245, %v429
  %v431 = vpop.f32.mrb[0].mxu0
  %432 = vmatprep.mubr.bf16.mxu0 0
  %433 = vmatmul.mubr.bf16.gmra.mrb[0].mxu0 %v347
  %v434 = vpop.f32.mrb[0].mxu0
  %v435 = vadd.f32 %v250, %v434
  %v436 = vpop.f32.mrb[0].mxu0
  %v437 = vpop.f32.mrb[0].mxu0
  %v438 = vadd.f32 %v253, %v437
  %v439 = vpop.f32.mrb[0].mxu0
  %440 = vmatprep.mubr.bf16.mxu0 0
  %441 = vmatmul.mubr.bf16.gmra.mrb[0].mxu0 %v350
  %v442 = vpop.f32.mrb[0].mxu0
  %v443 = vadd.f32 %v258, %v442
  %v444 = vpop.f32.mrb[0].mxu0
  %v445 = vpop.f32.mrb[0].mxu0
  %v446 = vadd.f32 %v261, %v445
  %v447 = vpop.f32.mrb[0].mxu0
  %448 = vdwg.mxu0
  %v449 = vld [vmem:[%s5] sm:$0x1]
  %v451 = vlaneseq
  %v452 = vshrl.u32 %v451, 7
  %v453 = vsub.s32 0, %v452
  %v454 = vrot.slane %v449, %v453
  %v456 = vadd.f32 %v387, %v454
  %v457 = vadd.f32 %v390, %v454
  %v458 = vadd.f32 %v395, %v454
  %v459 = vadd.f32 %v398, %v454
  %v460 = vadd.f32 %v403, %v454
  %v461 = vadd.f32 %v406, %v454
  %v462 = vadd.f32 %v411, %v454
  %v463 = vadd.f32 %v414, %v454
  %v464 = vadd.f32 %v419, %v454
  %v465 = vadd.f32 %v422, %v454
  %v466 = vadd.f32 %v427, %v454
  %v467 = vadd.f32 %v430, %v454
  %v468 = vadd.f32 %v435, %v454
  %v469 = vadd.f32 %v438, %v454
  %v470 = vadd.f32 %v443, %v454
  %v471 = vadd.f32 %v446, %v454
  %488 = vrot.lane.b32.xlu0 %v456, 112
  %v489 = vpop.permute.xlu0 %488
  %490 = vrot.lane.b32.xlu0 %v457, 112
  %v491 = vpop.permute.xlu0 %490
  %492 = vrot.lane.b32.xlu0 %v458, 112
  %v493 = vpop.permute.xlu0 %492
  %494 = vrot.lane.b32.xlu0 %v459, 112
  %v495 = vpop.permute.xlu0 %494
  %496 = vrot.lane.b32.xlu0 %v460, 112
  %v497 = vpop.permute.xlu0 %496
  %498 = vrot.lane.b32.xlu0 %v461, 112
  %v499 = vpop.permute.xlu0 %498
  %500 = vrot.lane.b32.xlu0 %v462, 112
  %v501 = vpop.permute.xlu0 %500
  %502 = vrot.lane.b32.xlu0 %v463, 112
  %v503 = vpop.permute.xlu0 %502
  %504 = vrot.lane.b32.xlu0 %v464, 112
  %v505 = vpop.permute.xlu0 %504
  %506 = vrot.lane.b32.xlu0 %v465, 112
  %v507 = vpop.permute.xlu0 %506
  %508 = vrot.lane.b32.xlu0 %v466, 112
  %v509 = vpop.permute.xlu0 %508
  %510 = vrot.lane.b32.xlu0 %v467, 112
  %v511 = vpop.permute.xlu0 %510
  %512 = vrot.lane.b32.xlu0 %v468, 112
  %v513 = vpop.permute.xlu0 %512
  %514 = vrot.lane.b32.xlu0 %v469, 112
  %v515 = vpop.permute.xlu0 %514
  %516 = vrot.lane.b32.xlu0 %v470, 112
  %v517 = vpop.permute.xlu0 %516
  %518 = vrot.lane.b32.xlu0 %v471, 112
  %v519 = vpop.permute.xlu0 %518
  %v536 = vmul.f32 %v456, %v489
  %v537 = vmul.f32 %v457, %v491
  %v538 = vmul.f32 %v458, %v493
  %v539 = vmul.f32 %v459, %v495
  %v540 = vmul.f32 %v460, %v497
  %v541 = vmul.f32 %v461, %v499
  %v542 = vmul.f32 %v462, %v501
  %v543 = vmul.f32 %v463, %v503
  %v544 = vmul.f32 %v464, %v505
  %v545 = vmul.f32 %v465, %v507
  %v546 = vmul.f32 %v466, %v509
  %v547 = vmul.f32 %v467, %v511
  %v548 = vmul.f32 %v468, %v513
  %v549 = vmul.f32 %v469, %v515
  %v550 = vmul.f32 %v470, %v517
  %v551 = vmul.f32 %v471, %v519
  %v552 = vld [vmem:[%s2] sm:$0xff]
  %v553 = vld [vmem:[%s2 + $0x8] sm:$0xff]
  %v554 = vld [vmem:[%s2 + $0x10] sm:$0xff]
  %v555 = vld [vmem:[%s2 + $0x18] sm:$0xff]
  %v556 = vld [vmem:[%s2 + $0x20] sm:$0xff]
  %v557 = vld [vmem:[%s2 + $0x28] sm:$0xff]
  %v558 = vld [vmem:[%s2 + $0x30] sm:$0xff]
  %v559 = vld [vmem:[%s2 + $0x38] sm:$0xff]
  %v560 = vld [vmem:[%s2 + $0x40] sm:$0xff]
  %v561 = vld [vmem:[%s2 + $0x48] sm:$0xff]
  %v562 = vld [vmem:[%s2 + $0x50] sm:$0xff]
  %v563 = vld [vmem:[%s2 + $0x58] sm:$0xff]
  %v564 = vld [vmem:[%s2 + $0x60] sm:$0xff]
  %v565 = vld [vmem:[%s2 + $0x68] sm:$0xff]
  %v566 = vld [vmem:[%s2 + $0x70] sm:$0xff]
  %v567 = vld [vmem:[%s2 + $0x78] sm:$0xff]
  %v568 = vld [vmem:[%s6] sm:$0xf]
  %v569 = vld [vmem:[%s6 + $0x4] sm:$0xf]
  %v570 = vld [vmem:[%s6 + $0x8] sm:$0xf]
  %v571 = vld [vmem:[%s6 + $0xc] sm:$0xf]
  %v572 = vpack.c.bf16 %v537, %v536
  %v573 = vpack.c.bf16 %v539, %v538
  %v574 = vpack.c.bf16 %v541, %v540
  %v575 = vpack.c.bf16 %v543, %v542
  %v576 = vpack.c.bf16 %v545, %v544
  %v577 = vpack.c.bf16 %v547, %v546
  %v578 = vpack.c.bf16 %v549, %v548
  %v579 = vpack.c.bf16 %v551, %v550
  %v580 = vpack.c.bf16 %v553, %v552
  %v581 = vpack.c.bf16 %v555, %v554
  %v582 = vpack.c.bf16 %v557, %v556
  %v583 = vpack.c.bf16 %v559, %v558
  %v584 = vpack.c.bf16 %v561, %v560
  %v585 = vpack.c.bf16 %v563, %v562
  %v586 = vpack.c.bf16 %v565, %v564
  %v587 = vpack.c.bf16 %v567, %v566
  %v590 = vunpack.c.l.b16 %v570
  %v591 = vunpack.c.l.b16 %v571
  %v592 = vpack.c.b16 %v591, %v590
  %vm594 = vcmask 130048
  %v596 = vsel %vm594, %v580, 0
  %v599 = vsel %vm594, %v581, 0
  %v602 = vsel %vm594, %v582, 0
  %v605 = vsel %vm594, %v583, 0
  %v608 = vsel %vm594, %v584, 0
  %v611 = vsel %vm594, %v585, 0
  %v614 = vsel %vm594, %v586, 0
  %v617 = vsel %vm594, %v587, 0
  %619 = vmatprep.subr.bf16.mxu0 0
  %620 = vmatpush1.bf16.msra.mxu0 %v592
  %621 = vmatprep.subr.bf16.mxu0 0
  %622 = vmatpush1.bf16.msra.mxu0 0
  %623 = vmatprep.subr.bf16.mxu0 0
  %624 = vmatpush1.bf16.msra.mxu0 0
  %625 = vmatprep.subr.bf16.mxu0 0
  %626 = vmatpush1.bf16.msra.mxu0 0
  %627 = vmatprep.subr.bf16.mxu0 0
  %628 = vmatpush1.bf16.msra.mxu0 0
  %629 = vmatprep.subr.bf16.mxu0 0
  %630 = vmatpush1.bf16.msra.mxu0 0
  %631 = vmatprep.subr.bf16.mxu0 0
  %632 = vmatpush1.bf16.msra.mxu0 0
  %633 = vmatprep.subr.bf16.mxu0 0
  %634 = vmatpush1.bf16.msra.mxu0 0
  %635 = vmatprep.subr.bf16.mxu0 0
  %636 = vmatpush1.bf16.msra.mxu0 0
  %637 = vmatprep.subr.bf16.mxu0 0
  %638 = vmatpush1.bf16.msra.mxu0 0
  %639 = vmatprep.subr.bf16.mxu0 0
  %640 = vmatpush1.bf16.msra.mxu0 0
  %641 = vmatprep.subr.bf16.mxu0 0
  %642 = vmatpush1.bf16.msra.mxu0 0
  %643 = vmatprep.subr.bf16.mxu0 0
  %644 = vmatpush1.bf16.msra.mxu0 0
  %645 = vmatprep.subr.bf16.mxu0 0
  %646 = vmatpush1.bf16.msra.mxu0 0
  %647 = vmatprep.subr.bf16.mxu0 0
  %648 = vmatpush1.bf16.msra.mxu0 0
  %649 = vmatprep.subr.bf16.mxu0 0
  %650 = vmatpush1.bf16.msra.mxu0 0
  %651 = vmatprep.mubr.bf16.mxu0 0
  %652 = vmatmul.mubr.bf16.gmra.mrb[0].mxu0 %v596
  %v653 = vpop.f32.mrb[0].mxu0
  %v654 = vadd.f32 0.0, %v653
  %v655 = vpop.f32.mrb[0].mxu0
  %v656 = vpop.f32.mrb[0].mxu0
  %v657 = vadd.f32 0.0, %v656
  %v658 = vpop.f32.mrb[0].mxu0
  %659 = vmatprep.mubr.bf16.mxu0 0
  %660 = vmatmul.mubr.bf16.gmra.mrb[0].mxu0 %v599
  %v661 = vpop.f32.mrb[0].mxu0
  %v662 = vadd.f32 0.0, %v661
  %v663 = vpop.f32.mrb[0].mxu0
  %v664 = vpop.f32.mrb[0].mxu0
  %v665 = vadd.f32 0.0, %v664
  %v666 = vpop.f32.mrb[0].mxu0
  %667 = vmatprep.mubr.bf16.mxu0 0
  %668 = vmatmul.mubr.bf16.gmra.mrb[0].mxu0 %v602
  %v669 = vpop.f32.mrb[0].mxu0
  %v670 = vadd.f32 0.0, %v669
  %v671 = vpop.f32.mrb[0].mxu0
  %v672 = vpop.f32.mrb[0].mxu0
  %v673 = vadd.f32 0.0, %v672
  %v674 = vpop.f32.mrb[0].mxu0
  %675 = vmatprep.mubr.bf16.mxu0 0
  %676 = vmatmul.mubr.bf16.gmra.mrb[0].mxu0 %v605
  %v677 = vpop.f32.mrb[0].mxu0
  %v678 = vadd.f32 0.0, %v677
  %v679 = vpop.f32.mrb[0].mxu0
  %v680 = vpop.f32.mrb[0].mxu0
  %v681 = vadd.f32 0.0, %v680
  %v682 = vpop.f32.mrb[0].mxu0
  %683 = vmatprep.mubr.bf16.mxu0 0
  %684 = vmatmul.mubr.bf16.gmra.mrb[0].mxu0 %v608
  %v685 = vpop.f32.mrb[0].mxu0
  %v686 = vadd.f32 0.0, %v685
  %v687 = vpop.f32.mrb[0].mxu0
  %v688 = vpop.f32.mrb[0].mxu0
  %v689 = vadd.f32 0.0, %v688
  %v690 = vpop.f32.mrb[0].mxu0
  %691 = vmatprep.mubr.bf16.mxu0 0
  %692 = vmatmul.mubr.bf16.gmra.mrb[0].mxu0 %v611
  %v693 = vpop.f32.mrb[0].mxu0
  %v694 = vadd.f32 0.0, %v693
  %v695 = vpop.f32.mrb[0].mxu0
  %v696 = vpop.f32.mrb[0].mxu0
  %v697 = vadd.f32 0.0, %v696
  %v698 = vpop.f32.mrb[0].mxu0
  %699 = vmatprep.mubr.bf16.mxu0 0
  %700 = vmatmul.mubr.bf16.gmra.mrb[0].mxu0 %v614
  %v701 = vpop.f32.mrb[0].mxu0
  %v702 = vadd.f32 0.0, %v701
  %v703 = vpop.f32.mrb[0].mxu0
  %v704 = vpop.f32.mrb[0].mxu0
  %v705 = vadd.f32 0.0, %v704
  %v706 = vpop.f32.mrb[0].mxu0
  %707 = vmatprep.mubr.bf16.mxu0 0
  %708 = vmatmul.mubr.bf16.gmra.mrb[0].mxu0 %v617
  %v709 = vpop.f32.mrb[0].mxu0
  %v710 = vadd.f32 0.0, %v709
  %v711 = vpop.f32.mrb[0].mxu0
  %v712 = vpop.f32.mrb[0].mxu0
  %v713 = vadd.f32 0.0, %v712
  %v714 = vpop.f32.mrb[0].mxu0
  %715 = vdwg.mxu0
  %v718 = vunpack.c.l.b16 %v568
  %v719 = vunpack.c.l.b16 %v569
  %v720 = vpack.c.b16 %v719, %v718
  %v723 = vsel %vm594, %v572, 0
  %v726 = vsel %vm594, %v573, 0
  %v729 = vsel %vm594, %v574, 0
  %v732 = vsel %vm594, %v575, 0
  %v735 = vsel %vm594, %v576, 0
  %v738 = vsel %vm594, %v577, 0
  %v741 = vsel %vm594, %v578, 0
  %v744 = vsel %vm594, %v579, 0
  %746 = vmatprep.subr.bf16.mxu0 0
  %747 = vmatpush1.bf16.msra.mxu0 %v720
  %748 = vmatprep.subr.bf16.mxu0 0
  %749 = vmatpush1.bf16.msra.mxu0 0
  %750 = vmatprep.subr.bf16.mxu0 0
  %751 = vmatpush1.bf16.msra.mxu0 0
  %752 = vmatprep.subr.bf16.mxu0 0
  %753 = vmatpush1.bf16.msra.mxu0 0
  %754 = vmatprep.subr.bf16.mxu0 0
  %755 = vmatpush1.bf16.msra.mxu0 0
  %756 = vmatprep.subr.bf16.mxu0 0
  %757 = vmatpush1.bf16.msra.mxu0 0
  %758 = vmatprep.subr.bf16.mxu0 0
  %759 = vmatpush1.bf16.msra.mxu0 0
  %760 = vmatprep.subr.bf16.mxu0 0
  %761 = vmatpush1.bf16.msra.mxu0 0
  %762 = vmatprep.subr.bf16.mxu0 0
  %763 = vmatpush1.bf16.msra.mxu0 0
  %764 = vmatprep.subr.bf16.mxu0 0
  %765 = vmatpush1.bf16.msra.mxu0 0
  %766 = vmatprep.subr.bf16.mxu0 0
  %767 = vmatpush1.bf16.msra.mxu0 0
  %768 = vmatprep.subr.bf16.mxu0 0
  %769 = vmatpush1.bf16.msra.mxu0 0
  %770 = vmatprep.subr.bf16.mxu0 0
  %771 = vmatpush1.bf16.msra.mxu0 0
  %772 = vmatprep.subr.bf16.mxu0 0
  %773 = vmatpush1.bf16.msra.mxu0 0
  %774 = vmatprep.subr.bf16.mxu0 0
  %775 = vmatpush1.bf16.msra.mxu0 0
  %776 = vmatprep.subr.bf16.mxu0 0
  %777 = vmatpush1.bf16.msra.mxu0 0
  %778 = vmatprep.mubr.bf16.mxu0 0
  %779 = vmatmul.mubr.bf16.gmra.mrb[0].mxu0 %v723
  %v780 = vpop.f32.mrb[0].mxu0
  %v781 = vadd.f32 %v654, %v780
  %v782 = vpop.f32.mrb[0].mxu0
  %v783 = vpop.f32.mrb[0].mxu0
  %v784 = vadd.f32 %v657, %v783
  %v785 = vpop.f32.mrb[0].mxu0
  %786 = vmatprep.mubr.bf16.mxu0 0
  %787 = vmatmul.mubr.bf16.gmra.mrb[0].mxu0 %v726
  %v788 = vpop.f32.mrb[0].mxu0
  %v789 = vadd.f32 %v662, %v788
  %v790 = vpop.f32.mrb[0].mxu0
  %v791 = vpop.f32.mrb[0].mxu0
  %v792 = vadd.f32 %v665, %v791
  %v793 = vpop.f32.mrb[0].mxu0
  %794 = vmatprep.mubr.bf16.mxu0 0
  %795 = vmatmul.mubr.bf16.gmra.mrb[0].mxu0 %v729
  %v796 = vpop.f32.mrb[0].mxu0
  %v797 = vadd.f32 %v670, %v796
  %v798 = vpop.f32.mrb[0].mxu0
  %v799 = vpop.f32.mrb[0].mxu0
  %v800 = vadd.f32 %v673, %v799
  %v801 = vpop.f32.mrb[0].mxu0
  %802 = vmatprep.mubr.bf16.mxu0 0
  %803 = vmatmul.mubr.bf16.gmra.mrb[0].mxu0 %v732
  %v804 = vpop.f32.mrb[0].mxu0
  %v805 = vadd.f32 %v678, %v804
  %v806 = vpop.f32.mrb[0].mxu0
  %v807 = vpop.f32.mrb[0].mxu0
  %v808 = vadd.f32 %v681, %v807
  %v809 = vpop.f32.mrb[0].mxu0
  %810 = vmatprep.mubr.bf16.mxu0 0
  %811 = vmatmul.mubr.bf16.gmra.mrb[0].mxu0 %v735
  %v812 = vpop.f32.mrb[0].mxu0
  %v813 = vadd.f32 %v686, %v812
  %v814 = vpop.f32.mrb[0].mxu0
  %v815 = vpop.f32.mrb[0].mxu0
  %v816 = vadd.f32 %v689, %v815
  %v817 = vpop.f32.mrb[0].mxu0
  %818 = vmatprep.mubr.bf16.mxu0 0
  %819 = vmatmul.mubr.bf16.gmra.mrb[0].mxu0 %v738
  %v820 = vpop.f32.mrb[0].mxu0
  %v821 = vadd.f32 %v694, %v820
  %v822 = vpop.f32.mrb[0].mxu0
  %v823 = vpop.f32.mrb[0].mxu0
  %v824 = vadd.f32 %v697, %v823
  %v825 = vpop.f32.mrb[0].mxu0
  %826 = vmatprep.mubr.bf16.mxu0 0
  %827 = vmatmul.mubr.bf16.gmra.mrb[0].mxu0 %v741
  %v828 = vpop.f32.mrb[0].mxu0
  %v829 = vadd.f32 %v702, %v828
  %v830 = vpop.f32.mrb[0].mxu0
  %v831 = vpop.f32.mrb[0].mxu0
  %v832 = vadd.f32 %v705, %v831
  %v833 = vpop.f32.mrb[0].mxu0
  %834 = vmatprep.mubr.bf16.mxu0 0
  %835 = vmatmul.mubr.bf16.gmra.mrb[0].mxu0 %v744
  %v836 = vpop.f32.mrb[0].mxu0
  %v837 = vadd.f32 %v710, %v836
  %v838 = vpop.f32.mrb[0].mxu0
  %v839 = vpop.f32.mrb[0].mxu0
  %v840 = vadd.f32 %v713, %v839
  %v841 = vpop.f32.mrb[0].mxu0
  %842 = vdwg.mxu0
  %v843 = vld [vmem:[%s7] sm:$0x1]
  %v845 = vlaneseq
  %v846 = vshrl.u32 %v845, 7
  %v847 = vsub.s32 0, %v846
  %v848 = vrot.slane %v843, %v847
  %v850 = vadd.f32 %v781, %v848
  %v851 = vadd.f32 %v784, %v848
  %v852 = vadd.f32 %v789, %v848
  %v853 = vadd.f32 %v792, %v848
  %v854 = vadd.f32 %v797, %v848
  %v855 = vadd.f32 %v800, %v848
  %v856 = vadd.f32 %v805, %v848
  %v857 = vadd.f32 %v808, %v848
  %v858 = vadd.f32 %v813, %v848
  %v859 = vadd.f32 %v816, %v848
  %v860 = vadd.f32 %v821, %v848
  %v861 = vadd.f32 %v824, %v848
  %v862 = vadd.f32 %v829, %v848
  %v863 = vadd.f32 %v832, %v848
  %v864 = vadd.f32 %v837, %v848
  %v865 = vadd.f32 %v840, %v848
  %v866 = vadd.f32 %v850, %v552
  %v867 = vadd.f32 %v851, %v553
  %v868 = vadd.f32 %v852, %v554
  %v869 = vadd.f32 %v853, %v555
  %v870 = vadd.f32 %v854, %v556
  %v871 = vadd.f32 %v855, %v557
  %v872 = vadd.f32 %v856, %v558
  %v873 = vadd.f32 %v857, %v559
  %v874 = vadd.f32 %v858, %v560
  %v875 = vadd.f32 %v859, %v561
  %v876 = vadd.f32 %v860, %v562
  %v877 = vadd.f32 %v861, %v563
  %v878 = vadd.f32 %v862, %v564
  %v879 = vadd.f32 %v863, %v565
  %v880 = vadd.f32 %v864, %v566
  %v881 = vadd.f32 %v865, %v567
  %882 = vst.msk [vmem:[%s8] sm:$0xff] %vm594, %v866
  %883 = vst.msk [vmem:[%s8 + $0x8] sm:$0xff] %vm594, %v867
  %884 = vst.msk [vmem:[%s8 + $0x10] sm:$0xff] %vm594, %v868
  %885 = vst.msk [vmem:[%s8 + $0x18] sm:$0xff] %vm594, %v869
  %886 = vst.msk [vmem:[%s8 + $0x20] sm:$0xff] %vm594, %v870
  %887 = vst.msk [vmem:[%s8 + $0x28] sm:$0xff] %vm594, %v871
  %888 = vst.msk [vmem:[%s8 + $0x30] sm:$0xff] %vm594, %v872
  %889 = vst.msk [vmem:[%s8 + $0x38] sm:$0xff] %vm594, %v873
  %890 = vst.msk [vmem:[%s8 + $0x40] sm:$0xff] %vm594, %v874
  %891 = vst.msk [vmem:[%s8 + $0x48] sm:$0xff] %vm594, %v875
  %892 = vst.msk [vmem:[%s8 + $0x50] sm:$0xff] %vm594, %v876
  %893 = vst.msk [vmem:[%s8 + $0x58] sm:$0xff] %vm594, %v877
  %894 = vst.msk [vmem:[%s8 + $0x60] sm:$0xff] %vm594, %v878
  %895 = vst.msk [vmem:[%s8 + $0x68] sm:$0xff] %vm594, %v879
  %896 = vst.msk [vmem:[%s8 + $0x70] sm:$0xff] %vm594, %v880
  %897 = vst.msk [vmem:[%s8 + $0x78] sm:$0xff] %vm594, %v881
  // Predicated region
  $region34: #{separator_forward.9} parent=0 // pred_check
    _
  $region35: #{separator_forward.9} parent=0 // pred_check_branch
    %899 = sbr.rel (0) target = $region37
  $region36: #{separator_forward.9} parent=0 // pred_region
    _
  $region37: #{separator_forward.9} parent=0 // pred_fallthru
    _
  // Predicated region
  $region38: #{separator_forward.9} parent=0 // pred_check
    _
  $region39: #{separator_forward.9} parent=0 // pred_check_branch
    %901 = sbr.rel (0) target = $region41
  $region40: #{separator_forward.9} parent=0 // pred_region
    _
  $region41: #{separator_forward.9} parent=0 // pred_fallthru
    _

// kernel: separator_forward.8
$region0: #{separator_forward.8}
  #allocation0 [shape = 'u32[]', space=smem, size = 0x4, offset = 0x4, fixed_abs, tag = 'smem constant byte address 0x4 - core index']
  #allocation1 [shape = 'u32[144,128]{1,0:T(1,128)}', space=vmem, size = 0x12000, scoped, tag = 'internal scratch']
  #allocation2 [shape = 'f32[16,64]{1,0:T(8,128)}', space=vmem, size = 0x2000, scoped, tag = 'scratch operand']
  #allocation3 [shape = 'f32[16,64]{1,0:T(8,128)}', space=vmem, size = 0x2000, scoped, tag = 'scratch operand']
  #allocation4 [shape = 'f32[16,64]{1,0:T(8,128)}', space=vmem, size = 0x2000, scoped, tag = 'scratch operand']
  #allocation5 [shape = 'f32[16,64]{1,0:T(8,128)}', space=vmem, size = 0x2000, scoped, tag = 'scratch operand']
  %s0 = inlined_call_operand.vmem [shape: f32[8,16,16], index: 0, kind: input, shape index: {}, may-alias: {0,1}]
  %s1 = inlined_call_operand.vmem [shape: f32[8,16,16], index: 1, kind: input, shape index: {}, may-alias: {0,1}]
  %s2 = inlined_call_operand.vmem [shape: bf16[16,256], index: 2, kind: input, shape index: {}]
  %s3 = inlined_call_operand.vmem [shape: bf16[16,256], index: 3, kind: input, shape index: {}]
  %s4 = inlined_call_operand.vmem [shape: bf16[64,256], index: 4, kind: input, shape index: {}]
  %s5 = inlined_call_operand.vmem [shape: bf16[64,256], index: 5, kind: input, shape index: {}]
  %s6 = inlined_call_operand.vmem [shape: f32[1,256], index: 6, kind: input, shape index: {}]
  %s7 = inlined_call_operand.vmem [shape: f32[1,256], index: 7, kind: input, shape index: {}]
  %s8 = inlined_call_operand.vmem [shape: bf16[8,16,64], index: 8, kind: output, shape index: {0}]
  %s9 = inlined_call_operand.vmem [shape: bf16[8,16,64], index: 9, kind: output, shape index: {1}]
  %10 = xla_tuple %s8, %s9
  %s11 = sld [smem:[#allocation0]]
  $region54: #{separator_forward.8} parent=0
    _
  %s13 = ssub.s32 1, %s11
  %s14 = scalar_select 0, %s13, %s11
  // Predicated region
  $region2: #{separator_forward.8} parent=0 // pred_check
    _
  $region3: #{separator_forward.8} parent=0 // pred_check_branch
    %16 = sbr.rel (0) target = $region5
  $region4: #{separator_forward.8} parent=0 // pred_region
    _
  $region5: #{separator_forward.8} parent=0 // pred_fallthru
    _
  // Predicated region
  $region6: #{separator_forward.8} parent=0 // pred_check
    _
  $region7: #{separator_forward.8} parent=0 // pred_check_branch
    %18 = sbr.rel (0) target = $region9
  $region8: #{separator_forward.8} parent=0 // pred_region
    %s19 = ssub.s32 0, 0
    %s20 = smul.u32 8, %s19
    %p21 = scmp.lt.s32.totalorder %s20, 7
    %s22 = scalar_select %p21, %s20, 7
    %s23 = smul.addr %s22, 2
    %s24 = smul.addr %s23, 8
    %s25 = scalar_lea.vmem %s1, %s24
    %s26 = ssub.s32 0, 0
    %s27 = smul.u32 8, %s26
  $region9: #{separator_forward.8} parent=0 // pred_fallthru
    _
  // Predicated region
  $region10: #{separator_forward.8} parent=0 // pred_check
    _
  $region11: #{separator_forward.8} parent=0 // pred_check_branch
    %29 = sbr.rel (0) target = $region13
  $region12: #{separator_forward.8} parent=0 // pred_region
    _
  $region13: #{separator_forward.8} parent=0 // pred_fallthru
    _
  // Predicated region
  $region14: #{separator_forward.8} parent=0 // pred_check
    _
  $region15: #{separator_forward.8} parent=0 // pred_check_branch
    %31 = sbr.rel (0) target = $region17
  $region16: #{separator_forward.8} parent=0 // pred_region
    _
  $region17: #{separator_forward.8} parent=0 // pred_fallthru
    _
  // Predicated region
  $region18: #{separator_forward.8} parent=0 // pred_check
    _
  $region19: #{separator_forward.8} parent=0 // pred_check_branch
    %33 = sbr.rel (0) target = $region21
  $region20: #{separator_forward.8} parent=0 // pred_region
    _
  $region21: #{separator_forward.8} parent=0 // pred_fallthru
    _
  // Predicated region
  $region22: #{separator_forward.8} parent=0 // pred_check
    _
  $region23: #{separator_forward.8} parent=0 // pred_check_branch
    %35 = sbr.rel (0) target = $region25
  $region24: #{separator_forward.8} parent=0 // pred_region
    _
  $region25: #{separator_forward.8} parent=0 // pred_fallthru
    _
  // Predicated region
  $region26: #{separator_forward.8} parent=0 // pred_check
    _
  $region27: #{separator_forward.8} parent=0 // pred_check_branch
    %37 = sbr.rel (0) target = $region29
  $region28: #{separator_forward.8} parent=0 // pred_region
    _
  $region29: #{separator_forward.8} parent=0 // pred_fallthru
    _
  // Predicated region
  $region30: #{separator_forward.8} parent=0 // pred_check
    _
  $region31: #{separator_forward.8} parent=0 // pred_check_branch
    %39 = sbr.rel (0) target = $region33
  $region32: #{separator_forward.8} parent=0 // pred_region
    _
  $region33: #{separator_forward.8} parent=0 // pred_fallthru
    _
  %s40 = ssub.s32 0, 0
  %s41 = smul.u32 8, %s40
  %p42 = scmp.lt.s32.totalorder %s41, 7
  %s43 = scalar_select %p42, %s41, 7
  %s44 = smul.addr %s43, 2
  %s45 = smul.addr %s44, 8
  %s46 = scalar_lea.vmem %s1, %s45
  %s47 = ssub.s32 0, 0
  %s48 = smul.u32 8, %s47
  %p49 = scmp.lt.s32.totalorder %s48, 7
  %s50 = scalar_select %p49, %s48, 7
  %s51 = smul.addr %s50, 2
  %s52 = smul.addr %s51, 4
  %s53 = scalar_lea.vmem %s9, %s52
  %s54 = ssub.s32 0, 0
  %s55 = smul.u32 8, %s54
  %p56 = scmp.lt.s32.totalorder %s55, 7
  %s57 = scalar_select %p56, %s55, 7
  %s58 = smul.addr %s57, 2
  %s59 = smul.addr %s58, 8
  %s60 = scalar_lea.vmem %s1, %s59
  %s61 = ssub.s32 0, 0
  %s62 = smul.u32 8, %s61
  %s63 = ssub.s32 0, 0
  %s64 = smul.u32 8, %s63
  %p65 = scmp.lt.s32.totalorder %s64, 7
  %s66 = scalar_select %p65, %s64, 7
  %s67 = smul.addr %s66, 2
  %s68 = smul.addr %s67, 4
  %s69 = scalar_lea.vmem %s9, %s68
  %s70 = ssub.s32 0, 0
  %s71 = smul.u32 8, %s70
  %p73 = scmp.eq.s32.totalorder 0, 0
  // Predicated region
  $region34: #{separator_forward.8} parent=0 // pred_check
    %p74 = pneg %p73
  $region35: #{separator_forward.8} parent=0 // pred_check_branch
    %76 = sbr.rel (%p74) target = $region37
  $region36: #{separator_forward.8} parent=0 // pred_region
    %vm77 = vcmask 523264
    %78 = vst.msk [vmem:[#allocation2] sm:$0xff] %vm77, 0.0
    %79 = vst.msk [vmem:[#allocation2 + $0x8] sm:$0xff] %vm77, 0.0
    %80 = vst.msk [vmem:[#allocation3] sm:$0xff] %vm77, 0.0
    %81 = vst.msk [vmem:[#allocation3 + $0x8] sm:$0xff] %vm77, 0.0
    %82 = vst.msk [vmem:[#allocation4] sm:$0xff] %vm77, 0.0
    %83 = vst.msk [vmem:[#allocation4 + $0x8] sm:$0xff] %vm77, 0.0
    %84 = vst.msk [vmem:[#allocation5] sm:$0xff] %vm77, 0.0
    %85 = vst.msk [vmem:[#allocation5 + $0x8] sm:$0xff] %vm77, 0.0
  $region37: #{separator_forward.8} parent=0 // pred_fallthru
    _
  %v86 = vld [vmem:[%s0] sm:$0xff]
  %v87 = vld [vmem:[%s0 + $0x8] sm:$0xff]
  %v88 = vpack.c.bf16 %v87, %v86
  %v89 = vld [vmem:[%s2] sm:$0xff]
  %v90 = vld [vmem:[%s2 + $0x8] sm:$0xff]
  %v91 = vld [vmem:[#allocation2] sm:$0xff]
  %v92 = vld [vmem:[#allocation2 + $0x8] sm:$0xff]
  %v93 = vpack.c.bf16 %v92, %v91
  %v94 = vld [vmem:[%s4] sm:$0xff]
  %v95 = vld [vmem:[%s4 + $0x8] sm:$0xff]
  %v96 = vld [vmem:[%s4 + $0x10] sm:$0xff]
  %v97 = vld [vmem:[%s4 + $0x18] sm:$0xff]
  %v98 = vld [vmem:[%s4 + $0x20] sm:$0xff]
  %v99 = vld [vmem:[%s4 + $0x28] sm:$0xff]
  %v100 = vld [vmem:[%s4 + $0x30] sm:$0xff]
  %v101 = vld [vmem:[%s4 + $0x38] sm:$0xff]
  %v110 = vunpack.c.l.b16 %v94
  %v111 = vunpack.c.h.b16 %v94
  %v112 = vunpack.c.l.b16 %v95
  %v113 = vunpack.c.h.b16 %v95
  %v114 = vunpack.c.l.b16 %v96
  %v115 = vunpack.c.h.b16 %v96
  %v116 = vunpack.c.l.b16 %v97
  %v117 = vunpack.c.h.b16 %v97
  %v118 = vunpack.c.l.b16 %v98
  %v119 = vunpack.c.h.b16 %v98
  %v120 = vunpack.c.l.b16 %v99
  %v121 = vunpack.c.h.b16 %v99
  %v122 = vunpack.c.l.b16 %v100
  %v123 = vunpack.c.h.b16 %v100
  %v124 = vunpack.c.l.b16 %v101
  %v125 = vunpack.c.h.b16 %v101
  %v126 = vpack.c.b16 %v112, %v110
  %v127 = vpack.c.b16 %v113, %v111
  %v128 = vpack.c.b16 %v116, %v114
  %v129 = vpack.c.b16 %v117, %v115
  %v130 = vpack.c.b16 %v120, %v118
  %v131 = vpack.c.b16 %v121, %v119
  %v132 = vpack.c.b16 %v124, %v122
  %v133 = vpack.c.b16 %v125, %v123
  %vm142 = vcmask 523264
  %v144 = vsel %vm142, %v93, 0
  %146 = vmatprep.subr.bf16.mxu0 %v127
  %147 = vmatpush1.bf16.msra.mxu0 %v126
  %148 = vmatprep.subr.bf16.mxu0 %v129
  %149 = vmatpush1.bf16.msra.mxu0 %v128
  %150 = vmatprep.subr.bf16.mxu0 %v131
  %151 = vmatpush1.bf16.msra.mxu0 %v130
  %152 = vmatprep.subr.bf16.mxu0 %v133
  %153 = vmatpush1.bf16.msra.mxu0 %v132
  %154 = vmatprep.subr.bf16.mxu0 0
  %155 = vmatpush1.bf16.msra.mxu0 0
  %156 = vmatprep.subr.bf16.mxu0 0
  %157 = vmatpush1.bf16.msra.mxu0 0
  %158 = vmatprep.subr.bf16.mxu0 0
  %159 = vmatpush1.bf16.msra.mxu0 0
  %160 = vmatprep.subr.bf16.mxu0 0
  %161 = vmatpush1.bf16.msra.mxu0 0
  %162 = vmatprep.subr.bf16.mxu0 0
  %163 = vmatpush1.bf16.msra.mxu0 0
  %164 = vmatprep.subr.bf16.mxu0 0
  %165 = vmatpush1.bf16.msra.mxu0 0
  %166 = vmatprep.subr.bf16.mxu0 0
  %167 = vmatpush1.bf16.msra.mxu0 0
  %168 = vmatprep.subr.bf16.mxu0 0
  %169 = vmatpush1.bf16.msra.mxu0 0
  %170 = vmatprep.subr.bf16.mxu0 0
  %171 = vmatpush1.bf16.msra.mxu0 0
  %172 = vmatprep.subr.bf16.mxu0 0
  %173 = vmatpush1.bf16.msra.mxu0 0
  %174 = vmatprep.subr.bf16.mxu0 0
  %175 = vmatpush1.bf16.msra.mxu0 0
  %176 = vmatprep.subr.bf16.mxu0 0
  %177 = vmatpush1.bf16.msra.mxu0 0
  %178 = vmatprep.mubr.bf16.mxu0 0
  %179 = vmatmul.mubr.bf16.gmra.mrb[0].mxu0 %v144
  %v180 = vpop.f32.mrb[0].mxu0
  %v181 = vadd.f32 0.0, %v180
  %v182 = vpop.f32.mrb[0].mxu0
  %v183 = vadd.f32 0.0, %v182
  %v184 = vpop.f32.mrb[0].mxu0
  %v185 = vadd.f32 0.0, %v184
  %v186 = vpop.f32.mrb[0].mxu0
  %v187 = vadd.f32 0.0, %v186
  %188 = vdwg.mxu0
  %v191 = vunpack.c.l.b16 %v89
  %v192 = vunpack.c.h.b16 %v89
  %v193 = vunpack.c.l.b16 %v90
  %v194 = vunpack.c.h.b16 %v90
  %v195 = vpack.c.b16 %v193, %v191
  %v196 = vpack.c.b16 %v194, %v192
  %vm199 = vcmask 130048
  %v201 = vsel %vm199, %v88, 0
  %203 = vmatprep.subr.bf16.mxu0 %v196
  %204 = vmatpush1.bf16.msra.mxu0 %v195
  %205 = vmatprep.subr.bf16.mxu0 0
  %206 = vmatpush1.bf16.msra.mxu0 0
  %207 = vmatprep.subr.bf16.mxu0 0
  %208 = vmatpush1.bf16.msra.mxu0 0
  %209 = vmatprep.subr.bf16.mxu0 0
  %210 = vmatpush1.bf16.msra.mxu0 0
  %211 = vmatprep.subr.bf16.mxu0 0
  %212 = vmatpush1.bf16.msra.mxu0 0
  %213 = vmatprep.subr.bf16.mxu0 0
  %214 = vmatpush1.bf16.msra.mxu0 0
  %215 = vmatprep.subr.bf16.mxu0 0
  %216 = vmatpush1.bf16.msra.mxu0 0
  %217 = vmatprep.subr.bf16.mxu0 0
  %218 = vmatpush1.bf16.msra.mxu0 0
  %219 = vmatprep.subr.bf16.mxu0 0
  %220 = vmatpush1.bf16.msra.mxu0 0
  %221 = vmatprep.subr.bf16.mxu0 0
  %222 = vmatpush1.bf16.msra.mxu0 0
  %223 = vmatprep.subr.bf16.mxu0 0
  %224 = vmatpush1.bf16.msra.mxu0 0
  %225 = vmatprep.subr.bf16.mxu0 0
  %226 = vmatpush1.bf16.msra.mxu0 0
  %227 = vmatprep.subr.bf16.mxu0 0
  %228 = vmatpush1.bf16.msra.mxu0 0
  %229 = vmatprep.subr.bf16.mxu0 0
  %230 = vmatpush1.bf16.msra.mxu0 0
  %231 = vmatprep.subr.bf16.mxu0 0
  %232 = vmatpush1.bf16.msra.mxu0 0
  %233 = vmatprep.subr.bf16.mxu0 0
  %234 = vmatpush1.bf16.msra.mxu0 0
  %235 = vmatprep.mubr.bf16.mxu0 0
  %236 = vmatmul.mubr.bf16.gmra.mrb[0].mxu0 %v201
  %v237 = vpop.f32.mrb[0].mxu0
  %v238 = vadd.f32 %v181, %v237
  %v239 = vpop.f32.mrb[0].mxu0
  %v240 = vadd.f32 %v183, %v239
  %v241 = vpop.f32.mrb[0].mxu0
  %v242 = vadd.f32 %v185, %v241
  %v243 = vpop.f32.mrb[0].mxu0
  %v244 = vadd.f32 %v187, %v243
  %245 = vdwg.mxu0
  %v246 = vld [vmem:[%s6] sm:$0x3]
  %v248 = vlaneseq
  %v249 = vshrl.u32 %v248, 7
  %v250 = vsub.s32 0, %v249
  %v251 = vrot.slane %v246, %v250
  %v252 = vlaneseq
  %v253 = vshrl.u32 %v252, 7
  %v254 = vsub.s32 1, %v253
  %v255 = vrot.slane %v246, %v254
  %v258 = vadd.f32 %v238, %v251
  %v259 = vadd.f32 %v240, %v255
  %v260 = vadd.f32 %v242, %v251
  %v261 = vadd.f32 %v244, %v255
  %v262 = vxor.u32 %v258, 2147483648
  %v263 = vxor.u32 %v260, 2147483648
  %v264 = vmul.f32 %v262, 1.442695
  %v265 = vpow.pop %v264
  %v266 = vmul.f32 %v263, 1.442695
  %v267 = vpow.pop %v266
  %v268 = vadd.f32 %v265, 1.0
  %v269 = vadd.f32 %v267, 1.0
  %v270 = vrcp.pop %v268
  %v271 = vmul.f32 1.0, %v270
  %v272 = vrcp.pop %v269
  %v273 = vmul.f32 1.0, %v272
  %v274 = vtanh.pop %v259
  %v275 = vtanh.pop %v261
  %v276 = vxor.u32 %v259, 2147483648
  %v277 = vxor.u32 %v261, 2147483648
  %v278 = vmul.f32 %v276, 1.442695
  %v279 = vpow.pop %v278
  %v280 = vmul.f32 %v277, 1.442695
  %v281 = vpow.pop %v280
  %v282 = vadd.f32 %v279, 1.0
  %v283 = vadd.f32 %v281, 1.0
  %v284 = vrcp.pop %v282
  %v285 = vmul.f32 1.0, %v284
  %v286 = vrcp.pop %v283
  %v287 = vmul.f32 1.0, %v286
  %v288 = vld [vmem:[#allocation3] sm:$0xff]
  %v289 = vld [vmem:[#allocation3 + $0x8] sm:$0xff]
  %292 = vrot.lane.b32.xlu0 %v288, 64
  %v293 = vpop.permute.xlu0 %292
  %294 = vrot.lane.b32.xlu0 %v289, 64
  %v295 = vpop.permute.xlu0 %294
  %v298 = vmul.f32 %v271, %v293
  %v299 = vmul.f32 %v273, %v295
  %v300 = vmul.f32 %v271, %v274
  %v301 = vmul.f32 %v273, %v275
  %304 = vrot.lane.b32.xlu0 %v300, 64
  %v305 = vpop.permute.xlu0 %304
  %306 = vrot.lane.b32.xlu0 %v301, 64
  %v307 = vpop.permute.xlu0 %306
  %v310 = vadd.f32 %v298, %v305
  %v311 = vadd.f32 %v299, %v307
  %v312 = vtanh.pop %v310
  %v313 = vtanh.pop %v311
  %v314 = vmul.f32 %v285, %v312
  %v315 = vmul.f32 %v287, %v313
  %318 = vrot.lane.b32.xlu0 %v310, 64
  %v319 = vpop.permute.xlu0 %318
  %320 = vrot.lane.b32.xlu0 %v311, 64
  %v321 = vpop.permute.xlu0 %320
  %324 = vst.msk [vmem:[#allocation3] sm:$0xff] %vm142, %v319
  %325 = vst.msk [vmem:[#allocation3 + $0x8] sm:$0xff] %vm142, %v321
  %328 = vrot.lane.b32.xlu0 %v314, 64
  %v329 = vpop.permute.xlu0 %328
  %330 = vrot.lane.b32.xlu0 %v315, 64
  %v331 = vpop.permute.xlu0 %330
  %334 = vst.msk [vmem:[#allocation2] sm:$0xff] %vm142, %v329
  %335 = vst.msk [vmem:[#allocation2 + $0x8] sm:$0xff] %vm142, %v331
  %v336 = vpack.c.bf16 %v315, %v314
  %v338 = vunpack.c.l.b16 %v336
  %v339 = vunpack.c.h.b16 %v336
  %v340 = vpack.c.b16 %v338, %v338
  %v341 = vpack.c.b16 %v339, %v339
  %342 = vrot.lane.b32.xlu0 %v340, 64
  %v343 = vpop.permute.xlu0 %342
  %344 = vrot.lane.b32.xlu0 %v341, 64
  %v345 = vpop.permute.xlu0 %344
  %vm348 = vcmask 519168
  %349 = vst.msk [vmem:[%s8] sm:$0xf] %vm348, %v343
  %350 = vst.msk [vmem:[%s8 + $0x4] sm:$0xf] %vm348, %v345
  %s351 = scalar_lea.vmem %s60, 112
  %v352 = vld [vmem:[%s351] sm:$0xff]
  %v353 = vld [vmem:[%s351 + $0x8] sm:$0xff]
  %v354 = vpack.c.bf16 %v353, %v352
  %v355 = vld [vmem:[%s3] sm:$0xff]
  %v356 = vld [vmem:[%s3 + $0x8] sm:$0xff]
  %v357 = vld [vmem:[#allocation4] sm:$0xff]
  %v358 = vld [vmem:[#allocation4 + $0x8] sm:$0xff]
  %v359 = vpack.c.bf16 %v358, %v357
  %v360 = vld [vmem:[%s5] sm:$0xff]
  %v361 = vld [vmem:[%s5 + $0x8] sm:$0xff]
  %v362 = vld [vmem:[%s5 + $0x10] sm:$0xff]
  %v363 = vld [vmem:[%s5 + $0x18] sm:$0xff]
  %v364 = vld [vmem:[%s5 + $0x20] sm:$0xff]
  %v365 = vld [vmem:[%s5 + $0x28] sm:$0xff]
  %v366 = vld [vmem:[%s5 + $0x30] sm:$0xff]
  %v367 = vld [vmem:[%s5 + $0x38] sm:$0xff]
  %v376 = vunpack.c.l.b16 %v360
  %v377 = vunpack.c.h.b16 %v360
  %v378 = vunpack.c.l.b16 %v361
  %v379 = vunpack.c.h.b16 %v361
  %v380 = vunpack.c.l.b16 %v362
  %v381 = vunpack.c.h.b16 %v362
  %v382 = vunpack.c.l.b16 %v363
  %v383 = vunpack.c.h.b16 %v363
  %v384 = vunpack.c.l.b16 %v364
  %v385 = vunpack.c.h.b16 %v364
  %v386 = vunpack.c.l.b16 %v365
  %v387 = vunpack.c.h.b16 %v365
  %v388 = vunpack.c.l.b16 %v366
  %v389 = vunpack.c.h.b16 %v366
  %v390 = vunpack.c.l.b16 %v367
  %v391 = vunpack.c.h.b16 %v367
  %v392 = vpack.c.b16 %v378, %v376
  %v393 = vpack.c.b16 %v379, %v377
  %v394 = vpack.c.b16 %v382, %v380
  %v395 = vpack.c.b16 %v383, %v381
  %v396 = vpack.c.b16 %v386, %v384
  %v397 = vpack.c.b16 %v387, %v385
  %v398 = vpack.c.b16 %v390, %v388
  %v399 = vpack.c.b16 %v391, %v389
  %v409 = vsel %vm142, %v359, 0
  %411 = vmatprep.subr.bf16.mxu0 %v393
  %412 = vmatpush1.bf16.msra.mxu0 %v392
  %413 = vmatprep.subr.bf16.mxu0 %v395
  %414 = vmatpush1.bf16.msra.mxu0 %v394
  %415 = vmatprep.subr.bf16.mxu0 %v397
  %416 = vmatpush1.bf16.msra.mxu0 %v396
  %417 = vmatprep.subr.bf16.mxu0 %v399
  %418 = vmatpush1.bf16.msra.mxu0 %v398
  %419 = vmatprep.subr.bf16.mxu0 0
  %420 = vmatpush1.bf16.msra.mxu0 0
  %421 = vmatprep.subr.bf16.mxu0 0
  %422 = vmatpush1.bf16.msra.mxu0 0
  %423 = vmatprep.subr.bf16.mxu0 0
  %424 = vmatpush1.bf16.msra.mxu0 0
  %425 = vmatprep.subr.bf16.mxu0 0
  %426 = vmatpush1.bf16.msra.mxu0 0
  %427 = vmatprep.subr.bf16.mxu0 0
  %428 = vmatpush1.bf16.msra.mxu0 0
  %429 = vmatprep.subr.bf16.mxu0 0
  %430 = vmatpush1.bf16.msra.mxu0 0
  %431 = vmatprep.subr.bf16.mxu0 0
  %432 = vmatpush1.bf16.msra.mxu0 0
  %433 = vmatprep.subr.bf16.mxu0 0
  %434 = vmatpush1.bf16.msra.mxu0 0
  %435 = vmatprep.subr.bf16.mxu0 0
  %436 = vmatpush1.bf16.msra.mxu0 0
  %437 = vmatprep.subr.bf16.mxu0 0
  %438 = vmatpush1.bf16.msra.mxu0 0
  %439 = vmatprep.subr.bf16.mxu0 0
  %440 = vmatpush1.bf16.msra.mxu0 0
  %441 = vmatprep.subr.bf16.mxu0 0
  %442 = vmatpush1.bf16.msra.mxu0 0
  %443 = vmatprep.mubr.bf16.mxu0 0
  %444 = vmatmul.mubr.bf16.gmra.mrb[0].mxu0 %v409
  %v445 = vpop.f32.mrb[0].mxu0
  %v446 = vadd.f32 0.0, %v445
  %v447 = vpop.f32.mrb[0].mxu0
  %v448 = vadd.f32 0.0, %v447
  %v449 = vpop.f32.mrb[0].mxu0
  %v450 = vadd.f32 0.0, %v449
  %v451 = vpop.f32.mrb[0].mxu0
  %v452 = vadd.f32 0.0, %v451
  %453 = vdwg.mxu0
  %v456 = vunpack.c.l.b16 %v355
  %v457 = vunpack.c.h.b16 %v355
  %v458 = vunpack.c.l.b16 %v356
  %v459 = vunpack.c.h.b16 %v356
  %v460 = vpack.c.b16 %v458, %v456
  %v461 = vpack.c.b16 %v459, %v457
  %v465 = vsel %vm199, %v354, 0
  %467 = vmatprep.subr.bf16.mxu0 %v461
  %468 = vmatpush1.bf16.msra.mxu0 %v460
  %469 = vmatprep.subr.bf16.mxu0 0
  %470 = vmatpush1.bf16.msra.mxu0 0
  %471 = vmatprep.subr.bf16.mxu0 0
  %472 = vmatpush1.bf16.msra.mxu0 0
  %473 = vmatprep.subr.bf16.mxu0 0
  %474 = vmatpush1.bf16.msra.mxu0 0
  %475 = vmatprep.subr.bf16.mxu0 0
  %476 = vmatpush1.bf16.msra.mxu0 0
  %477 = vmatprep.subr.bf16.mxu0 0
  %478 = vmatpush1.bf16.msra.mxu0 0
  %479 = vmatprep.subr.bf16.mxu0 0
  %480 = vmatpush1.bf16.msra.mxu0 0
  %481 = vmatprep.subr.bf16.mxu0 0
  %482 = vmatpush1.bf16.msra.mxu0 0
  %483 = vmatprep.subr.bf16.mxu0 0
  %484 = vmatpush1.bf16.msra.mxu0 0
  %485 = vmatprep.subr.bf16.mxu0 0
  %486 = vmatpush1.bf16.msra.mxu0 0
  %487 = vmatprep.subr.bf16.mxu0 0
  %488 = vmatpush1.bf16.msra.mxu0 0
  %489 = vmatprep.subr.bf16.mxu0 0
  %490 = vmatpush1.bf16.msra.mxu0 0
  %491 = vmatprep.subr.bf16.mxu0 0
  %492 = vmatpush1.bf16.msra.mxu0 0
  %493 = vmatprep.subr.bf16.mxu0 0
  %494 = vmatpush1.bf16.msra.mxu0 0
  %495 = vmatprep.subr.bf16.mxu0 0
  %496 = vmatpush1.bf16.msra.mxu0 0
  %497 = vmatprep.subr.bf16.mxu0 0
  %498 = vmatpush1.bf16.msra.mxu0 0
  %499 = vmatprep.mubr.bf16.mxu0 0
  %500 = vmatmul.mubr.bf16.gmra.mrb[0].mxu0 %v465
  %v501 = vpop.f32.mrb[0].mxu0
  %v502 = vadd.f32 %v446, %v501
  %v503 = vpop.f32.mrb[0].mxu0
  %v504 = vadd.f32 %v448, %v503
  %v505 = vpop.f32.mrb[0].mxu0
  %v506 = vadd.f32 %v450, %v505
  %v507 = vpop.f32.mrb[0].mxu0
  %v508 = vadd.f32 %v452, %v507
  %509 = vdwg.mxu0
  %v510 = vld [vmem:[%s7] sm:$0x3]
  %v512 = vlaneseq
  %v513 = vshrl.u32 %v512, 7
  %v514 = vsub.s32 0, %v513
  %v515 = vrot.slane %v510, %v514
  %v516 = vlaneseq
  %v517 = vshrl.u32 %v516, 7
  %v518 = vsub.s32 1, %v517
  %v519 = vrot.slane %v510, %v518
  %v522 = vadd.f32 %v502, %v515
  %v523 = vadd.f32 %v504, %v519
  %v524 = vadd.f32 %v506, %v515
  %v525 = vadd.f32 %v508, %v519
  %v526 = vxor.u32 %v522, 2147483648
  %v527 = vxor.u32 %v524, 2147483648
  %v528 = vmul.f32 %v526, 1.442695
  %v529 = vpow.pop %v528
  %v530 = vmul.f32 %v527, 1.442695
  %v531 = vpow.pop %v530
  %v532 = vadd.f32 %v529, 1.0
  %v533 = vadd.f32 %v531, 1.0
  %v534 = vrcp.pop %v532
  %v535 = vmul.f32 1.0, %v534
  %v536 = vrcp.pop %v533
  %v537 = vmul.f32 1.0, %v536
  %v538 = vtanh.pop %v523
  %v539 = vtanh.pop %v525
  %v540 = vxor.u32 %v523, 2147483648
  %v541 = vxor.u32 %v525, 2147483648
  %v542 = vmul.f32 %v540, 1.442695
  %v543 = vpow.pop %v542
  %v544 = vmul.f32 %v541, 1.442695
  %v545 = vpow.pop %v544
  %v546 = vadd.f32 %v543, 1.0
  %v547 = vadd.f32 %v545, 1.0
  %v548 = vrcp.pop %v546
  %v549 = vmul.f32 1.0, %v548
  %v550 = vrcp.pop %v547
  %v551 = vmul.f32 1.0, %v550
  %v552 = vld [vmem:[#allocation5] sm:$0xff]
  %v553 = vld [vmem:[#allocation5 + $0x8] sm:$0xff]
  %556 = vrot.lane.b32.xlu0 %v552, 64
  %v557 = vpop.permute.xlu0 %556
  %558 = vrot.lane.b32.xlu0 %v553, 64
  %v559 = vpop.permute.xlu0 %558
  %v562 = vmul.f32 %v535, %v557
  %v563 = vmul.f32 %v537, %v559
  %v564 = vmul.f32 %v535, %v538
  %v565 = vmul.f32 %v537, %v539
  %568 = vrot.lane.b32.xlu0 %v564, 64
  %v569 = vpop.permute.xlu0 %568
  %570 = vrot.lane.b32.xlu0 %v565, 64
  %v571 = vpop.permute.xlu0 %570
  %v574 = vadd.f32 %v562, %v569
  %v575 = vadd.f32 %v563, %v571
  %v576 = vtanh.pop %v574
  %v577 = vtanh.pop %v575
  %v578 = vmul.f32 %v549, %v576
  %v579 = vmul.f32 %v551, %v577
  %582 = vrot.lane.b32.xlu0 %v574, 64
  %v583 = vpop.permute.xlu0 %582
  %584 = vrot.lane.b32.xlu0 %v575, 64
  %v585 = vpop.permute.xlu0 %584
  %588 = vst.msk [vmem:[#allocation5] sm:$0xff] %vm142, %v583
  %589 = vst.msk [vmem:[#allocation5 + $0x8] sm:$0xff] %vm142, %v585
  %592 = vrot.lane.b32.xlu0 %v578, 64
  %v593 = vpop.permute.xlu0 %592
  %594 = vrot.lane.b32.xlu0 %v579, 64
  %v595 = vpop.permute.xlu0 %594
  %598 = vst.msk [vmem:[#allocation4] sm:$0xff] %vm142, %v593
  %599 = vst.msk [vmem:[#allocation4 + $0x8] sm:$0xff] %vm142, %v595
  %v600 = vpack.c.bf16 %v579, %v578
  %v602 = vunpack.c.l.b16 %v600
  %v603 = vunpack.c.h.b16 %v600
  %v604 = vpack.c.b16 %v602, %v602
  %v605 = vpack.c.b16 %v603, %v603
  %606 = vrot.lane.b32.xlu0 %v604, 64
  %v607 = vpop.permute.xlu0 %606
  %608 = vrot.lane.b32.xlu0 %v605, 64
  %v609 = vpop.permute.xlu0 %608
  %s612 = scalar_lea.vmem %s69, 56
  %613 = vst.msk [vmem:[%s612] sm:$0xf] %vm348, %v607
  %614 = vst.msk [vmem:[%s612 + $0x4] sm:$0xf] %vm348, %v609
  %s615 = scalar_lea.vmem %s0, 16
  %v616 = vld [vmem:[%s615] sm:$0xff]
  %v617 = vld [vmem:[%s615 + $0x8] sm:$0xff]
  %v618 = vpack.c.bf16 %v617, %v616
  %v619 = vld [vmem:[%s2] sm:$0xff]
  %v620 = vld [vmem:[%s2 + $0x8] sm:$0xff]
  %v621 = vld [vmem:[#allocation2] sm:$0xff]
  %v622 = vld [vmem:[#allocation2 + $0x8] sm:$0xff]
  %v623 = vpack.c.bf16 %v622, %v621
  %v624 = vld [vmem:[%s4] sm:$0xff]
  %v625 = vld [vmem:[%s4 + $0x8] sm:$0xff]
  %v626 = vld [vmem:[%s4 + $0x10] sm:$0xff]
  %v627 = vld [vmem:[%s4 + $0x18] sm:$0xff]
  %v628 = vld [vmem:[%s4 + $0x20] sm:$0xff]
  %v629 = vld [vmem:[%s4 + $0x28] sm:$0xff]
  %v630 = vld [vmem:[%s4 + $0x30] sm:$0xff]
  %v631 = vld [vmem:[%s4 + $0x38] sm:$0xff]
  %v640 = vunpack.c.l.b16 %v624
  %v641 = vunpack.c.h.b16 %v624
  %v642 = vunpack.c.l.b16 %v625
  %v643 = vunpack.c.h.b16 %v625
  %v644 = vunpack.c.l.b16 %v626
  %v645 = vunpack.c.h.b16 %v626
  %v646 = vunpack.c.l.b16 %v627
  %v647 = vunpack.c.h.b16 %v627
  %v648 = vunpack.c.l.b16 %v628
  %v649 = vunpack.c.h.b16 %v628
  %v650 = vunpack.c.l.b16 %v629
  %v651 = vunpack.c.h.b16 %v629
  %v652 = vunpack.c.l.b16 %v630
  %v653 = vunpack.c.h.b16 %v630
  %v654 = vunpack.c.l.b16 %v631
  %v655 = vunpack.c.h.b16 %v631
  %v656 = vpack.c.b16 %v642, %v640
  %v657 = vpack.c.b16 %v643, %v641
  %v658 = vpack.c.b16 %v646, %v644
  %v659 = vpack.c.b16 %v647, %v645
  %v660 = vpack.c.b16 %v650, %v648
  %v661 = vpack.c.b16 %v651, %v649
  %v662 = vpack.c.b16 %v654, %v652
  %v663 = vpack.c.b16 %v655, %v653
  %v673 = vsel %vm142, %v623, 0
  %675 = vmatprep.subr.bf16.mxu0 %v657
  %676 = vmatpush1.bf16.msra.mxu0 %v656
  %677 = vmatprep.subr.bf16.mxu0 %v659
  %678 = vmatpush1.bf16.msra.mxu0 %v658
  %679 = vmatprep.subr.bf16.mxu0 %v661
  %680 = vmatpush1.bf16.msra.mxu0 %v660
  %681 = vmatprep.subr.bf16.mxu0 %v663
  %682 = vmatpush1.bf16.msra.mxu0 %v662
  %683 = vmatprep.subr.bf16.mxu0 0
  %684 = vmatpush1.bf16.msra.mxu0 0
  %685 = vmatprep.subr.bf16.mxu0 0
  %686 = vmatpush1.bf16.msra.mxu0 0
  %687 = vmatprep.subr.bf16.mxu0 0
  %688 = vmatpush1.bf16.msra.mxu0 0
  %689 = vmatprep.subr.bf16.mxu0 0
  %690 = vmatpush1.bf16.msra.mxu0 0
  %691 = vmatprep.subr.bf16.mxu0 0
  %692 = vmatpush1.bf16.msra.mxu0 0
  %693 = vmatprep.subr.bf16.mxu0 0
  %694 = vmatpush1.bf16.msra.mxu0 0
  %695 = vmatprep.subr.bf16.mxu0 0
  %696 = vmatpush1.bf16.msra.mxu0 0
  %697 = vmatprep.subr.bf16.mxu0 0
  %698 = vmatpush1.bf16.msra.mxu0 0
  %699 = vmatprep.subr.bf16.mxu0 0
  %700 = vmatpush1.bf16.msra.mxu0 0
  %701 = vmatprep.subr.bf16.mxu0 0
  %702 = vmatpush1.bf16.msra.mxu0 0
  %703 = vmatprep.subr.bf16.mxu0 0
  %704 = vmatpush1.bf16.msra.mxu0 0
  %705 = vmatprep.subr.bf16.mxu0 0
  %706 = vmatpush1.bf16.msra.mxu0 0
  %707 = vmatprep.mubr.bf16.mxu0 0
  %708 = vmatmul.mubr.bf16.gmra.mrb[0].mxu0 %v673
  %v709 = vpop.f32.mrb[0].mxu0
  %v710 = vadd.f32 0.0, %v709
  %v711 = vpop.f32.mrb[0].mxu0
  %v712 = vadd.f32 0.0, %v711
  %v713 = vpop.f32.mrb[0].mxu0
  %v714 = vadd.f32 0.0, %v713
  %v715 = vpop.f32.mrb[0].mxu0
  %v716 = vadd.f32 0.0, %v715
  %717 = vdwg.mxu0
  %v720 = vunpack.c.l.b16 %v619
  %v721 = vunpack.c.h.b16 %v619
  %v722 = vunpack.c.l.b16 %v620
  %v723 = vunpack.c.h.b16 %v620
  %v724 = vpack.c.b16 %v722, %v720
  %v725 = vpack.c.b16 %v723, %v721
  %v729 = vsel %vm199, %v618, 0
  %731 = vmatprep.subr.bf16.mxu0 %v725
  %732 = vmatpush1.bf16.msra.mxu0 %v724
  %733 = vmatprep.subr.bf16.mxu0 0
  %734 = vmatpush1.bf16.msra.mxu0 0
  %735 = vmatprep.subr.bf16.mxu0 0
  %736 = vmatpush1.bf16.msra.mxu0 0
  %737 = vmatprep.subr.bf16.mxu0 0
  %738 = vmatpush1.bf16.msra.mxu0 0
  %739 = vmatprep.subr.bf16.mxu0 0
  %740 = vmatpush1.bf16.msra.mxu0 0
  %741 = vmatprep.subr.bf16.mxu0 0
  %742 = vmatpush1.bf16.msra.mxu0 0
  %743 = vmatprep.subr.bf16.mxu0 0
  %744 = vmatpush1.bf16.msra.mxu0 0
  %745 = vmatprep.subr.bf16.mxu0 0
  %746 = vmatpush1.bf16.msra.mxu0 0
  %747 = vmatprep.subr.bf16.mxu0 0
  %748 = vmatpush1.bf16.msra.mxu0 0
  %749 = vmatprep.subr.bf16.mxu0 0
  %750 = vmatpush1.bf16.msra.mxu0 0
  %751 = vmatprep.subr.bf16.mxu0 0
  %752 = vmatpush1.bf16.msra.mxu0 0
  %753 = vmatprep.subr.bf16.mxu0 0
  %754 = vmatpush1.bf16.msra.mxu0 0
  %755 = vmatprep.subr.bf16.mxu0 0
  %756 = vmatpush1.bf16.msra.mxu0 0
  %757 = vmatprep.subr.bf16.mxu0 0
  %758 = vmatpush1.bf16.msra.mxu0 0
  %759 = vmatprep.subr.bf16.mxu0 0
  %760 = vmatpush1.bf16.msra.mxu0 0
  %761 = vmatprep.subr.bf16.mxu0 0
  %762 = vmatpush1.bf16.msra.mxu0 0
  %763 = vmatprep.mubr.bf16.mxu0 0
  %764 = vmatmul.mubr.bf16.gmra.mrb[0].mxu0 %v729
  %v765 = vpop.f32.mrb[0].mxu0
  %v766 = vadd.f32 %v710, %v765
  %v767 = vpop.f32.mrb[0].mxu0
  %v768 = vadd.f32 %v712, %v767
  %v769 = vpop.f32.mrb[0].mxu0
  %v770 = vadd.f32 %v714, %v769
  %v771 = vpop.f32.mrb[0].mxu0
  %v772 = vadd.f32 %v716, %v771
  %773 = vdwg.mxu0
  %v774 = vld [vmem:[%s6] sm:$0x3]
  %v776 = vlaneseq
  %v777 = vshrl.u32 %v776, 7
  %v778 = vsub.s32 0, %v777
  %v779 = vrot.slane %v774, %v778
  %v780 = vlaneseq
  %v781 = vshrl.u32 %v780, 7
  %v782 = vsub.s32 1, %v781
  %v783 = vrot.slane %v774, %v782
  %v786 = vadd.f32 %v766, %v779
  %v787 = vadd.f32 %v768, %v783
  %v788 = vadd.f32 %v770, %v779
  %v789 = vadd.f32 %v772, %v783
  %v790 = vxor.u32 %v786, 2147483648
  %v791 = vxor.u32 %v788, 2147483648
  %v792 = vmul.f32 %v790, 1.442695
  %v793 = vpow.pop %v792
  %v794 = vmul.f32 %v791, 1.442695
  %v795 = vpow.pop %v794
  %v796 = vadd.f32 %v793, 1.0
  %v797 = vadd.f32 %v795, 1.0
  %v798 = vrcp.pop %v796
  %v799 = vmul.f32 1.0, %v798
  %v800 = vrcp.pop %v797
  %v801 = vmul.f32 1.0, %v800
  %v802 = vtanh.pop %v787
  %v803 = vtanh.pop %v789
  %v804 = vxor.u32 %v787, 2147483648
  %v805 = vxor.u32 %v789, 2147483648
  %v806 = vmul.f32 %v804, 1.442695
  %v807 = vpow.pop %v806
  %v808 = vmul.f32 %v805, 1.442695
  %v809 = vpow.pop %v808
  %v810 = vadd.f32 %v807, 1.0
  %v811 = vadd.f32 %v809, 1.0
  %v812 = vrcp.pop %v810
  %v813 = vmul.f32 1.0, %v812
  %v814 = vrcp.pop %v811
  %v815 = vmul.f32 1.0, %v814
  %v816 = vld [vmem:[#allocation3] sm:$0xff]
  %v817 = vld [vmem:[#allocation3 + $0x8] sm:$0xff]
  %820 = vrot.lane.b32.xlu0 %v816, 64
  %v821 = vpop.permute.xlu0 %820
  %822 = vrot.lane.b32.xlu0 %v817, 64
  %v823 = vpop.permute.xlu0 %822
  %v826 = vmul.f32 %v799, %v821
  %v827 = vmul.f32 %v801, %v823
  %v828 = vmul.f32 %v799, %v802
  %v829 = vmul.f32 %v801, %v803
  %832 = vrot.lane.b32.xlu0 %v828, 64
  %v833 = vpop.permute.xlu0 %832
  %834 = vrot.lane.b32.xlu0 %v829, 64
  %v835 = vpop.permute.xlu0 %834
  %v838 = vadd.f32 %v826, %v833
  %v839 = vadd.f32 %v827, %v835
  %v840 = vtanh.pop %v838
  %v841 = vtanh.pop %v839
  %v842 = vmul.f32 %v813, %v840
  %v843 = vmul.f32 %v815, %v841
  %846 = vrot.lane.b32.xlu0 %v838, 64
  %v847 = vpop.permute.xlu0 %846
  %848 = vrot.lane.b32.xlu0 %v839, 64
  %v849 = vpop.permute.xlu0 %848
  %852 = vst.msk [vmem:[#allocation3] sm:$0xff] %vm142, %v847
  %853 = vst.msk [vmem:[#allocation3 + $0x8] sm:$0xff] %vm142, %v849
  %856 = vrot.lane.b32.xlu0 %v842, 64
  %v857 = vpop.permute.xlu0 %856
  %858 = vrot.lane.b32.xlu0 %v843, 64
  %v859 = vpop.permute.xlu0 %858
  %862 = vst.msk [vmem:[#allocation2] sm:$0xff] %vm142, %v857
  %863 = vst.msk [vmem:[#allocation2 + $0x8] sm:$0xff] %vm142, %v859
  %v864 = vpack.c.bf16 %v843, %v842
  %v866 = vunpack.c.l.b16 %v864
  %v867 = vunpack.c.h.b16 %v864
  %v868 = vpack.c.b16 %v866, %v866
  %v869 = vpack.c.b16 %v867, %v867
  %870 = vrot.lane.b32.xlu0 %v868, 64
  %v871 = vpop.permute.xlu0 %870
  %872 = vrot.lane.b32.xlu0 %v869, 64
  %v873 = vpop.permute.xlu0 %872
  %s876 = scalar_lea.vmem %s8, 8
  %877 = vst.msk [vmem:[%s876] sm:$0xf] %vm348, %v871
  %878 = vst.msk [vmem:[%s876 + $0x4] sm:$0xf] %vm348, %v873
  %s879 = scalar_lea.vmem %s60, 96
  %v880 = vld [vmem:[%s879] sm:$0xff]
  %v881 = vld [vmem:[%s879 + $0x8] sm:$0xff]
  %v882 = vpack.c.bf16 %v881, %v880
  %v883 = vld [vmem:[%s3] sm:$0xff]
  %v884 = vld [vmem:[%s3 + $0x8] sm:$0xff]
  %v885 = vld [vmem:[#allocation4] sm:$0xff]
  %v886 = vld [vmem:[#allocation4 + $0x8] sm:$0xff]
  %v887 = vpack.c.bf16 %v886, %v885
  %v888 = vld [vmem:[%s5] sm:$0xff]
  %v889 = vld [vmem:[%s5 + $0x8] sm:$0xff]
  %v890 = vld [vmem:[%s5 + $0x10] sm:$0xff]
  %v891 = vld [vmem:[%s5 + $0x18] sm:$0xff]
  %v892 = vld [vmem:[%s5 + $0x20] sm:$0xff]
  %v893 = vld [vmem:[%s5 + $0x28] sm:$0xff]
  %v894 = vld [vmem:[%s5 + $0x30] sm:$0xff]
  %v895 = vld [vmem:[%s5 + $0x38] sm:$0xff]
  %v904 = vunpack.c.l.b16 %v888
  %v905 = vunpack.c.h.b16 %v888
  %v906 = vunpack.c.l.b16 %v889
  %v907 = vunpack.c.h.b16 %v889
  %v908 = vunpack.c.l.b16 %v890
  %v909 = vunpack.c.h.b16 %v890
  %v910 = vunpack.c.l.b16 %v891
  %v911 = vunpack.c.h.b16 %v891
  %v912 = vunpack.c.l.b16 %v892
  %v913 = vunpack.c.h.b16 %v892
  %v914 = vunpack.c.l.b16 %v893
  %v915 = vunpack.c.h.b16 %v893
  %v916 = vunpack.c.l.b16 %v894
  %v917 = vunpack.c.h.b16 %v894
  %v918 = vunpack.c.l.b16 %v895
  %v919 = vunpack.c.h.b16 %v895
  %v920 = vpack.c.b16 %v906, %v904
  %v921 = vpack.c.b16 %v907, %v905
  %v922 = vpack.c.b16 %v910, %v908
  %v923 = vpack.c.b16 %v911, %v909
  %v924 = vpack.c.b16 %v914, %v912
  %v925 = vpack.c.b16 %v915, %v913
  %v926 = vpack.c.b16 %v918, %v916
  %v927 = vpack.c.b16 %v919, %v917
  %v937 = vsel %vm142, %v887, 0
  %939 = vmatprep.subr.bf16.mxu0 %v921
  %940 = vmatpush1.bf16.msra.mxu0 %v920
  %941 = vmatprep.subr.bf16.mxu0 %v923
  %942 = vmatpush1.bf16.msra.mxu0 %v922
  %943 = vmatprep.subr.bf16.mxu0 %v925
  %944 = vmatpush1.bf16.msra.mxu0 %v924
  %945 = vmatprep.subr.bf16.mxu0 %v927
  %946 = vmatpush1.bf16.msra.mxu0 %v926
  %947 = vmatprep.subr.bf16.mxu0 0
  %948 = vmatpush1.bf16.msra.mxu0 0
  %949 = vmatprep.subr.bf16.mxu0 0
  %950 = vmatpush1.bf16.msra.mxu0 0
  %951 = vmatprep.subr.bf16.mxu0 0
  %952 = vmatpush1.bf16.msra.mxu0 0
  %953 = vmatprep.subr.bf16.mxu0 0
  %954 = vmatpush1.bf16.msra.mxu0 0
  %955 = vmatprep.subr.bf16.mxu0 0
  %956 = vmatpush1.bf16.msra.mxu0 0
  %957 = vmatprep.subr.bf16.mxu0 0
  %958 = vmatpush1.bf16.msra.mxu0 0
  %959 = vmatprep.subr.bf16.mxu0 0
  %960 = vmatpush1.bf16.msra.mxu0 0
  %961 = vmatprep.subr.bf16.mxu0 0
  %962 = vmatpush1.bf16.msra.mxu0 0
  %963 = vmatprep.subr.bf16.mxu0 0
  %964 = vmatpush1.bf16.msra.mxu0 0
  %965 = vmatprep.subr.bf16.mxu0 0
  %966 = vmatpush1.bf16.msra.mxu0 0
  %967 = vmatprep.subr.bf16.mxu0 0
  %968 = vmatpush1.bf16.msra.mxu0 0
  %969 = vmatprep.subr.bf16.mxu0 0
  %970 = vmatpush1.bf16.msra.mxu0 0
  %971 = vmatprep.mubr.bf16.mxu0 0
  %972 = vmatmul.mubr.bf16.gmra.mrb[0].mxu0 %v937
  %v973 = vpop.f32.mrb[0].mxu0
  %v974 = vadd.f32 0.0, %v973
  %v975 = vpop.f32.mrb[0].mxu0
  %v976 = vadd.f32 0.0, %v975
  %v977 = vpop.f32.mrb[0].mxu0
  %v978 = vadd.f32 0.0, %v977
  %v979 = vpop.f32.mrb[0].mxu0
  %v980 = vadd.f32 0.0, %v979
  %981 = vdwg.mxu0
  %v984 = vunpack.c.l.b16 %v883
  %v985 = vunpack.c.h.b16 %v883
  %v986 = vunpack.c.l.b16 %v884
  %v987 = vunpack.c.h.b16 %v884
  %v988 = vpack.c.b16 %v986, %v984
  %v989 = vpack.c.b16 %v987, %v985
  %v993 = vsel %vm199, %v882, 0
  %995 = vmatprep.subr.bf16.mxu0 %v989
  %996 = vmatpush1.bf16.msra.mxu0 %v988
  %997 = vmatprep.subr.bf16.mxu0 0
  %998 = vmatpush1.bf16.msra.mxu0 0
  %999 = vmatprep.subr.bf16.mxu0 0
  %1000 = vmatpush1.bf16.msra.mxu0 0
  %1001 = vmatprep.subr.bf16.mxu0 0
  %1002 = vmatpush1.bf16.msra.mxu0 0
  %1003 = vmatprep.subr.bf16.mxu0 0
  %1004 = vmatpush1.bf16.msra.mxu0 0
  %1005 = vmatprep.subr.bf16.mxu0 0
  %1006 = vmatpush1.bf16.msra.mxu0 0
  %1007 = vmatprep.subr.bf16.mxu0 0
  %1008 = vmatpush1.bf16.msra.mxu0 0
  %1009 = vmatprep.subr.bf16.mxu0 0
  %1010 = vmatpush1.bf16.msra.mxu0 0
  %1011 = vmatprep.subr.bf16.mxu0 0
  %1012 = vmatpush1.bf16.msra.mxu0 0
  %1013 = vmatprep.subr.bf16.mxu0 0
  %1014 = vmatpush1.bf16.msra.mxu0 0
  %1015 = vmatprep.subr.bf16.mxu0 0
  %1016 = vmatpush1.bf16.msra.mxu0 0
  %1017 = vmatprep.subr.bf16.mxu0 0
  %1018 = vmatpush1.bf16.msra.mxu0 0
  %1019 = vmatprep.subr.bf16.mxu0 0
  %1020 = vmatpush1.bf16.msra.mxu0 0
  %1021 = vmatprep.subr.bf16.mxu0 0
  %1022 = vmatpush1.bf16.msra.mxu0 0
  %1023 = vmatprep.subr.bf16.mxu0 0
  %1024 = vmatpush1.bf16.msra.mxu0 0
  %1025 = vmatprep.subr.bf16.mxu0 0
  %1026 = vmatpush1.bf16.msra.mxu0 0
  %1027 = vmatprep.mubr.bf16.mxu0 0
  %1028 = vmatmul.mubr.bf16.gmra.mrb[0].mxu0 %v993
  %v1029 = vpop.f32.mrb[0].mxu0
  %v1030 = vadd.f32 %v974, %v1029
  %v1031 = vpop.f32.mrb[0].mxu0
  %v1032 = vadd.f32 %v976, %v1031
  %v1033 = vpop.f32.mrb[0].mxu0
  %v1034 = vadd.f32 %v978, %v1033
  %v1035 = vpop.f32.mrb[0].mxu0
  %v1036 = vadd.f32 %v980, %v1035
  %1037 = vdwg.mxu0
  %v1038 = vld [vmem:[%s7] sm:$0x3]
  %v1040 = vlaneseq
  %v1041 = vshrl.u32 %v1040, 7
  %v1042 = vsub.s32 0, %v1041
  %v1043 = vrot.slane %v1038, %v1042
  %v1044 = vlaneseq
  %v1045 = vshrl.u32 %v1044, 7
  %v1046 = vsub.s32 1, %v1045
  %v1047 = vrot.slane %v1038, %v1046
  %v1050 = vadd.f32 %v1030, %v1043
  %v1051 = vadd.f32 %v1032, %v1047
  %v1052 = vadd.f32 %v1034, %v1043
  %v1053 = vadd.f32 %v1036, %v1047
  %v1054 = vxor.u32 %v1050, 2147483648
  %v1055 = vxor.u32 %v1052, 2147483648
  %v1056 = vmul.f32 %v1054, 1.442695
  %v1057 = vpow.pop %v1056
  %v1058 = vmul.f32 %v1055, 1.442695
  %v1059 = vpow.pop %v1058
  %v1060 = vadd.f32 %v1057, 1.0
  %v1061 = vadd.f32 %v1059, 1.0
  %v1062 = vrcp.pop %v1060
  %v1063 = vmul.f32 1.0, %v1062
  %v1064 = vrcp.pop %v1061
  %v1065 = vmul.f32 1.0, %v1064
  %v1066 = vtanh.pop %v1051
  %v1067 = vtanh.pop %v1053
  %v1068 = vxor.u32 %v1051, 2147483648
  %v1069 = vxor.u32 %v1053, 2147483648
  %v1070 = vmul.f32 %v1068, 1.442695
  %v1071 = vpow.pop %v1070
  %v1072 = vmul.f32 %v1069, 1.442695
  %v1073 = vpow.pop %v1072
  %v1074 = vadd.f32 %v1071, 1.0
  %v1075 = vadd.f32 %v1073, 1.0
  %v1076 = vrcp.pop %v1074
  %v1077 = vmul.f32 1.0, %v1076
  %v1078 = vrcp.pop %v1075
  %v1079 = vmul.f32 1.0, %v1078
  %v1080 = vld [vmem:[#allocation5] sm:$0xff]
  %v1081 = vld [vmem:[#allocation5 + $0x8] sm:$0xff]
  %1084 = vrot.lane.b32.xlu0 %v1080, 64
  %v1085 = vpop.permute.xlu0 %1084
  %1086 = vrot.lane.b32.xlu0 %v1081, 64
  %v1087 = vpop.permute.xlu0 %1086
  %v1090 = vmul.f32 %v1063, %v1085
  %v1091 = vmul.f32 %v1065, %v1087
  %v1092 = vmul.f32 %v1063, %v1066
  %v1093 = vmul.f32 %v1065, %v1067
  %1096 = vrot.lane.b32.xlu0 %v1092, 64
  %v1097 = vpop.permute.xlu0 %1096
  %1098 = vrot.lane.b32.xlu0 %v1093, 64
  %v1099 = vpop.permute.xlu0 %1098
  %v1102 = vadd.f32 %v1090, %v1097
  %v1103 = vadd.f32 %v1091, %v1099
  %v1104 = vtanh.pop %v1102
  %v1105 = vtanh.pop %v1103
  %v1106 = vmul.f32 %v1077, %v1104
  %v1107 = vmul.f32 %v1079, %v1105
  %1110 = vrot.lane.b32.xlu0 %v1102, 64
  %v1111 = vpop.permute.xlu0 %1110
  %1112 = vrot.lane.b32.xlu0 %v1103, 64
  %v1113 = vpop.permute.xlu0 %1112
  %1116 = vst.msk [vmem:[#allocation5] sm:$0xff] %vm142, %v1111
  %1117 = vst.msk [vmem:[#allocation5 + $0x8] sm:$0xff] %vm142, %v1113
  %1120 = vrot.lane.b32.xlu0 %v1106, 64
  %v1121 = vpop.permute.xlu0 %1120
  %1122 = vrot.lane.b32.xlu0 %v1107, 64
  %v1123 = vpop.permute.xlu0 %1122
  %1126 = vst.msk [vmem:[#allocation4] sm:$0xff] %vm142, %v1121
  %1127 = vst.msk [vmem:[#allocation4 + $0x8] sm:$0xff] %vm142, %v1123
  %v1128 = vpack.c.bf16 %v1107, %v1106
  %v1130 = vunpack.c.l.b16 %v1128
  %v1131 = vunpack.c.h.b16 %v1128
  %v1132 = vpack.c.b16 %v1130, %v1130
  %v1133 = vpack.c.b16 %v1131, %v1131
  %1134 = vrot.lane.b32.xlu0 %v1132, 64
  %v1135 = vpop.permute.xlu0 %1134
  %1136 = vrot.lane.b32.xlu0 %v1133, 64
  %v1137 = vpop.permute.xlu0 %1136
  %s1140 = scalar_lea.vmem %s69, 48
  %1141 = vst.msk [vmem:[%s1140] sm:$0xf] %vm348, %v1135
  %1142 = vst.msk [vmem:[%s1140 + $0x4] sm:$0xf] %vm348, %v1137
  %s1143 = scalar_lea.vmem %s0, 32
  %v1144 = vld [vmem:[%s1143] sm:$0xff]
  %v1145 = vld [vmem:[%s1143 + $0x8] sm:$0xff]
  %v1146 = vpack.c.bf16 %v1145, %v1144
  %v1147 = vld [vmem:[%s2] sm:$0xff]
  %v1148 = vld [vmem:[%s2 + $0x8] sm:$0xff]
  %v1149 = vld [vmem:[#allocation2] sm:$0xff]
  %v1150 = vld [vmem:[#allocation2 + $0x8] sm:$0xff]
  %v1151 = vpack.c.bf16 %v1150, %v1149
  %v1152 = vld [vmem:[%s4] sm:$0xff]
  %v1153 = vld [vmem:[%s4 + $0x8] sm:$0xff]
  %v1154 = vld [vmem:[%s4 + $0x10] sm:$0xff]
  %v1155 = vld [vmem:[%s4 + $0x18] sm:$0xff]
  %v1156 = vld [vmem:[%s4 + $0x20] sm:$0xff]
  %v1157 = vld [vmem:[%s4 + $0x28] sm:$0xff]
  %v1158 = vld [vmem:[%s4 + $0x30] sm:$0xff]
  %v1159 = vld [vmem:[%s4 + $0x38] sm:$0xff]
  %v1168 = vunpack.c.l.b16 %v1152
  %v1169 = vunpack.c.h.b16 %v1152
  %v1170 = vunpack.c.l.b16 %v1153
  %v1171 = vunpack.c.h.b16 %v1153
  %v1172 = vunpack.c.l.b16 %v1154
  %v1173 = vunpack.c.h.b16 %v1154
  %v1174 = vunpack.c.l.b16 %v1155
  %v1175 = vunpack.c.h.b16 %v1155
  %v1176 = vunpack.c.l.b16 %v1156
  %v1177 = vunpack.c.h.b16 %v1156
  %v1178 = vunpack.c.l.b16 %v1157
  %v1179 = vunpack.c.h.b16 %v1157
  %v1180 = vunpack.c.l.b16 %v1158
  %v1181 = vunpack.c.h.b16 %v1158
  %v1182 = vunpack.c.l.b16 %v1159
  %v1183 = vunpack.c.h.b16 %v1159
  %v1184 = vpack.c.b16 %v1170, %v1168
  %v1185 = vpack.c.b16 %v1171, %v1169
  %v1186 = vpack.c.b16 %v1174, %v1172
  %v1187 = vpack.c.b16 %v1175, %v1173
  %v1188 = vpack.c.b16 %v1178, %v1176
  %v1189 = vpack.c.b16 %v1179, %v1177
  %v1190 = vpack.c.b16 %v1182, %v1180
  %v1191 = vpack.c.b16 %v1183, %v1181
  %v1201 = vsel %vm142, %v1151, 0
  %1203 = vmatprep.subr.bf16.mxu0 %v1185
  %1204 = vmatpush1.bf16.msra.mxu0 %v1184
  %1205 = vmatprep.subr.bf16.mxu0 %v1187
  %1206 = vmatpush1.bf16.msra.mxu0 %v1186
  %1207 = vmatprep.subr.bf16.mxu0 %v1189
  %1208 = vmatpush1.bf16.msra.mxu0 %v1188
  %1209 = vmatprep.subr.bf16.mxu0 %v1191
  %1210 = vmatpush1.bf16.msra.mxu0 %v1190
  %1211 = vmatprep.subr.bf16.mxu0 0
  %1212 = vmatpush1.bf16.msra.mxu0 0
  %1213 = vmatprep.subr.bf16.mxu0 0
  %1214 = vmatpush1.bf16.msra.mxu0 0
  %1215 = vmatprep.subr.bf16.mxu0 0
  %1216 = vmatpush1.bf16.msra.mxu0 0
  %1217 = vmatprep.subr.bf16.mxu0 0
  %1218 = vmatpush1.bf16.msra.mxu0 0
  %1219 = vmatprep.subr.bf16.mxu0 0
  %1220 = vmatpush1.bf16.msra.mxu0 0
  %1221 = vmatprep.subr.bf16.mxu0 0
  %1222 = vmatpush1.bf16.msra.mxu0 0
  %1223 = vmatprep.subr.bf16.mxu0 0
  %1224 = vmatpush1.bf16.msra.mxu0 0
  %1225 = vmatprep.subr.bf16.mxu0 0
  %1226 = vmatpush1.bf16.msra.mxu0 0
  %1227 = vmatprep.subr.bf16.mxu0 0
  %1228 = vmatpush1.bf16.msra.mxu0 0
  %1229 = vmatprep.subr.bf16.mxu0 0
  %1230 = vmatpush1.bf16.msra.mxu0 0
  %1231 = vmatprep.subr.bf16.mxu0 0
  %1232 = vmatpush1.bf16.msra.mxu0 0
  %1233 = vmatprep.subr.bf16.mxu0 0
  %1234 = vmatpush1.bf16.msra.mxu0 0
  %1235 = vmatprep.mubr.bf16.mxu0 0
  %1236 = vmatmul.mubr.bf16.gmra.mrb[0].mxu0 %v1201
  %v1237 = vpop.f32.mrb[0].mxu0
  %v1238 = vadd.f32 0.0, %v1237
  %v1239 = vpop.f32.mrb[0].mxu0
  %v1240 = vadd.f32 0.0, %v1239
  %v1241 = vpop.f32.mrb[0].mxu0
  %v1242 = vadd.f32 0.0, %v1241
  %v1243 = vpop.f32.mrb[0].mxu0
  %v1244 = vadd.f32 0.0, %v1243
  %1245 = vdwg.mxu0
  %v1248 = vunpack.c.l.b16 %v1147
  %v1249 = vunpack.c.h.b16 %v1147
  %v1250 = vunpack.c.l.b16 %v1148
  %v1251 = vunpack.c.h.b16 %v1148
  %v1252 = vpack.c.b16 %v1250, %v1248
  %v1253 = vpack.c.b16 %v1251, %v1249
  %v1257 = vsel %vm199, %v1146, 0
  %1259 = vmatprep.subr.bf16.mxu0 %v1253
  %1260 = vmatpush1.bf16.msra.mxu0 %v1252
  %1261 = vmatprep.subr.bf16.mxu0 0
  %1262 = vmatpush1.bf16.msra.mxu0 0
  %1263 = vmatprep.subr.bf16.mxu0 0
  %1264 = vmatpush1.bf16.msra.mxu0 0
  %1265 = vmatprep.subr.bf16.mxu0 0
  %1266 = vmatpush1.bf16.msra.mxu0 0
  %1267 = vmatprep.subr.bf16.mxu0 0
  %1268 = vmatpush1.bf16.msra.mxu0 0
  %1269 = vmatprep.subr.bf16.mxu0 0
  %1270 = vmatpush1.bf16.msra.mxu0 0
  %1271 = vmatprep.subr.bf16.mxu0 0
  %1272 = vmatpush1.bf16.msra.mxu0 0
  %1273 = vmatprep.subr.bf16.mxu0 0
  %1274 = vmatpush1.bf16.msra.mxu0 0
  %1275 = vmatprep.subr.bf16.mxu0 0
  %1276 = vmatpush1.bf16.msra.mxu0 0
  %1277 = vmatprep.subr.bf16.mxu0 0
  %1278 = vmatpush1.bf16.msra.mxu0 0
  %1279 = vmatprep.subr.bf16.mxu0 0
  %1280 = vmatpush1.bf16.msra.mxu0 0
  %1281 = vmatprep.subr.bf16.mxu0 0
  %1282 = vmatpush1.bf16.msra.mxu0 0
  %1283 = vmatprep.subr.bf16.mxu0 0
  %1284 = vmatpush1.bf16.msra.mxu0 0
  %1285 = vmatprep.subr.bf16.mxu0 0
  %1286 = vmatpush1.bf16.msra.mxu0 0
  %1287 = vmatprep.subr.bf16.mxu0 0
  %1288 = vmatpush1.bf16.msra.mxu0 0
  %1289 = vmatprep.subr.bf16.mxu0 0
  %1290 = vmatpush1.bf16.msra.mxu0 0
  %1291 = vmatprep.mubr.bf16.mxu0 0
  %1292 = vmatmul.mubr.bf16.gmra.mrb[0].mxu0 %v1257
  %v1293 = vpop.f32.mrb[0].mxu0
  %v1294 = vadd.f32 %v1238, %v1293
  %v1295 = vpop.f32.mrb[0].mxu0
  %v1296 = vadd.f32 %v1240, %v1295
  %v1297 = vpop.f32.mrb[0].mxu0
  %v1298 = vadd.f32 %v1242, %v1297
  %v1299 = vpop.f32.mrb[0].mxu0
  %v1300 = vadd.f32 %v1244, %v1299
  %1301 = vdwg.mxu0
  %v1302 = vld [vmem:[%s6] sm:$0x3]
  %v1304 = vlaneseq
  %v1305 = vshrl.u32 %v1304, 7
  %v1306 = vsub.s32 0, %v1305
  %v1307 = vrot.slane %v1302, %v1306
  %v1308 = vlaneseq
  %v1309 = vshrl.u32 %v1308, 7
  %v1310 = vsub.s32 1, %v1309
  %v1311 = vrot.slane %v1302, %v1310
  %v1314 = vadd.f32 %v1294, %v1307
  %v1315 = vadd.f32 %v1296, %v1311
  %v1316 = vadd.f32 %v1298, %v1307
  %v1317 = vadd.f32 %v1300, %v1311
  %v1318 = vxor.u32 %v1314, 2147483648
  %v1319 = vxor.u32 %v1316, 2147483648
  %v1320 = vmul.f32 %v1318, 1.442695
  %v1321 = vpow.pop %v1320
  %v1322 = vmul.f32 %v1319, 1.442695
  %v1323 = vpow.pop %v1322
  %v1324 = vadd.f32 %v1321, 1.0
  %v1325 = vadd.f32 %v1323, 1.0
  %v1326 = vrcp.pop %v1324
  %v1327 = vmul.f32 1.0, %v1326
  %v1328 = vrcp.pop %v1325
  %v1329 = vmul.f32 1.0, %v1328
  %v1330 = vtanh.pop %v1315
  %v1331 = vtanh.pop %v1317
  %v1332 = vxor.u32 %v1315, 2147483648
  %v1333 = vxor.u32 %v1317, 2147483648
  %v1334 = vmul.f32 %v1332, 1.442695
  %v1335 = vpow.pop %v1334
  %v1336 = vmul.f32 %v1333, 1.442695
  %v1337 = vpow.pop %v1336
  %v1338 = vadd.f32 %v1335, 1.0
  %v1339 = vadd.f32 %v1337, 1.0
  %v1340 = vrcp.pop %v1338
  %v1341 = vmul.f32 1.0, %v1340
  %v1342 = vrcp.pop %v1339
  %v1343 = vmul.f32 1.0, %v1342
  %v1344 = vld [vmem:[#allocation3] sm:$0xff]
  %v1345 = vld [vmem:[#allocation3 + $0x8] sm:$0xff]
  %1348 = vrot.lane.b32.xlu0 %v1344, 64
  %v1349 = vpop.permute.xlu0 %1348
  %1350 = vrot.lane.b32.xlu0 %v1345, 64
  %v1351 = vpop.permute.xlu0 %1350
  %v1354 = vmul.f32 %v1327, %v1349
  %v1355 = vmul.f32 %v1329, %v1351
  %v1356 = vmul.f32 %v1327, %v1330
  %v1357 = vmul.f32 %v1329, %v1331
  %1360 = vrot.lane.b32.xlu0 %v1356, 64
  %v1361 = vpop.permute.xlu0 %1360
  %1362 = vrot.lane.b32.xlu0 %v1357, 64
  %v1363 = vpop.permute.xlu0 %1362
  %v1366 = vadd.f32 %v1354, %v1361
  %v1367 = vadd.f32 %v1355, %v1363
  %v1368 = vtanh.pop %v1366
  %v1369 = vtanh.pop %v1367
  %v1370 = vmul.f32 %v1341, %v1368
  %v1371 = vmul.f32 %v1343, %v1369
  %1374 = vrot.lane.b32.xlu0 %v1366, 64
  %v1375 = vpop.permute.xlu0 %1374
  %1376 = vrot.lane.b32.xlu0 %v1367, 64
  %v1377 = vpop.permute.xlu0 %1376
  %1380 = vst.msk [vmem:[#allocation3] sm:$0xff] %vm142, %v1375
  %1381 = vst.msk [vmem:[#allocation3 + $0x8] sm:$0xff] %vm142, %v1377
  %1384 = vrot.lane.b32.xlu0 %v1370, 64
  %v1385 = vpop.permute.xlu0 %1384
  %1386 = vrot.lane.b32.xlu0 %v1371, 64
  %v1387 = vpop.permute.xlu0 %1386
  %1390 = vst.msk [vmem:[#allocation2] sm:$0xff] %vm142, %v1385
  %1391 = vst.msk [vmem:[#allocation2 + $0x8] sm:$0xff] %vm142, %v1387
  %v1392 = vpack.c.bf16 %v1371, %v1370
  %v1394 = vunpack.c.l.b16 %v1392
  %v1395 = vunpack.c.h.b16 %v1392
  %v1396 = vpack.c.b16 %v1394, %v1394
  %v1397 = vpack.c.b16 %v1395, %v1395
  %1398 = vrot.lane.b32.xlu0 %v1396, 64
  %v1399 = vpop.permute.xlu0 %1398
  %1400 = vrot.lane.b32.xlu0 %v1397, 64
  %v1401 = vpop.permute.xlu0 %1400
  %s1404 = scalar_lea.vmem %s8, 16
  %1405 = vst.msk [vmem:[%s1404] sm:$0xf] %vm348, %v1399
  %1406 = vst.msk [vmem:[%s1404 + $0x4] sm:$0xf] %vm348, %v1401
  %s1407 = scalar_lea.vmem %s60, 80
  %v1408 = vld [vmem:[%s1407] sm:$0xff]
  %v1409 = vld [vmem:[%s1407 + $0x8] sm:$0xff]
  %v1410 = vpack.c.bf16 %v1409, %v1408
  %v1411 = vld [vmem:[%s3] sm:$0xff]
  %v1412 = vld [vmem:[%s3 + $0x8] sm:$0xff]
  %v1413 = vld [vmem:[#allocation4] sm:$0xff]
  %v1414 = vld [vmem:[#allocation4 + $0x8] sm:$0xff]
  %v1415 = vpack.c.bf16 %v1414, %v1413
  %v1416 = vld [vmem:[%s5] sm:$0xff]
  %v1417 = vld [vmem:[%s5 + $0x8] sm:$0xff]
  %v1418 = vld [vmem:[%s5 + $0x10] sm:$0xff]
  %v1419 = vld [vmem:[%s5 + $0x18] sm:$0xff]
  %v1420 = vld [vmem:[%s5 + $0x20] sm:$0xff]
  %v1421 = vld [vmem:[%s5 + $0x28] sm:$0xff]
  %v1422 = vld [vmem:[%s5 + $0x30] sm:$0xff]
  %v1423 = vld [vmem:[%s5 + $0x38] sm:$0xff]
  %v1432 = vunpack.c.l.b16 %v1416
  %v1433 = vunpack.c.h.b16 %v1416
  %v1434 = vunpack.c.l.b16 %v1417
  %v1435 = vunpack.c.h.b16 %v1417
  %v1436 = vunpack.c.l.b16 %v1418
  %v1437 = vunpack.c.h.b16 %v1418
  %v1438 = vunpack.c.l.b16 %v1419
  %v1439 = vunpack.c.h.b16 %v1419
  %v1440 = vunpack.c.l.b16 %v1420
  %v1441 = vunpack.c.h.b16 %v1420
  %v1442 = vunpack.c.l.b16 %v1421
  %v1443 = vunpack.c.h.b16 %v1421
  %v1444 = vunpack.c.l.b16 %v1422
  %v1445 = vunpack.c.h.b16 %v1422
  %v1446 = vunpack.c.l.b16 %v1423
  %v1447 = vunpack.c.h.b16 %v1423
  %v1448 = vpack.c.b16 %v1434, %v1432
  %v1449 = vpack.c.b16 %v1435, %v1433
  %v1450 = vpack.c.b16 %v1438, %v1436
  %v1451 = vpack.c.b16 %v1439, %v1437
  %v1452 = vpack.c.b16 %v1442, %v1440
  %v1453 = vpack.c.b16 %v1443, %v1441
  %v1454 = vpack.c.b16 %v1446, %v1444
  %v1455 = vpack.c.b16 %v1447, %v1445
  %v1465 = vsel %vm142, %v1415, 0
  %1467 = vmatprep.subr.bf16.mxu0 %v1449
  %1468 = vmatpush1.bf16.msra.mxu0 %v1448
  %1469 = vmatprep.subr.bf16.mxu0 %v1451
  %1470 = vmatpush1.bf16.msra.mxu0 %v1450
  %1471 = vmatprep.subr.bf16.mxu0 %v1453
  %1472 = vmatpush1.bf16.msra.mxu0 %v1452
  %1473 = vmatprep.subr.bf16.mxu0 %v1455
  %1474 = vmatpush1.bf16.msra.mxu0 %v1454
  %1475 = vmatprep.subr.bf16.mxu0 0
  %1476 = vmatpush1.bf16.msra.mxu0 0
  %1477 = vmatprep.subr.bf16.mxu0 0
  %1478 = vmatpush1.bf16.msra.mxu0 0
  %1479 = vmatprep.subr.bf16.mxu0 0
  %1480 = vmatpush1.bf16.msra.mxu0 0
  %1481 = vmatprep.subr.bf16.mxu0 0
  %1482 = vmatpush1.bf16.msra.mxu0 0
  %1483 = vmatprep.subr.bf16.mxu0 0
  %1484 = vmatpush1.bf16.msra.mxu0 0
  %1485 = vmatprep.subr.bf16.mxu0 0
  %1486 = vmatpush1.bf16.msra.mxu0 0
  %1487 = vmatprep.subr.bf16.mxu0 0
  %1488 = vmatpush1.bf16.msra.mxu0 0
  %1489 = vmatprep.subr.bf16.mxu0 0
  %1490 = vmatpush1.bf16.msra.mxu0 0
  %1491 = vmatprep.subr.bf16.mxu0 0
  %1492 = vmatpush1.bf16.msra.mxu0 0
  %1493 = vmatprep.subr.bf16.mxu0 0
  %1494 = vmatpush1.bf16.msra.mxu0 0
  %1495 = vmatprep.subr.bf16.mxu0 0
  %1496 = vmatpush1.bf16.msra.mxu0 0
  %1497 = vmatprep.subr.bf16.mxu0 0
  %1498 = vmatpush1.bf16.msra.mxu0 0
  %1499 = vmatprep.mubr.bf16.mxu0 0
  %1500 = vmatmul.mubr.bf16.gmra.mrb[0].mxu0 %v1465
  %v1501 = vpop.f32.mrb[0].mxu0
  %v1502 = vadd.f32 0.0, %v1501
  %v1503 = vpop.f32.mrb[0].mxu0
  %v1504 = vadd.f32 0.0, %v1503
  %v1505 = vpop.f32.mrb[0].mxu0
  %v1506 = vadd.f32 0.0, %v1505
  %v1507 = vpop.f32.mrb[0].mxu0
  %v1508 = vadd.f32 0.0, %v1507
  %1509 = vdwg.mxu0
  %v1512 = vunpack.c.l.b16 %v1411
  %v1513 = vunpack.c.h.b16 %v1411
  %v1514 = vunpack.c.l.b16 %v1412
  %v1515 = vunpack.c.h.b16 %v1412
  %v1516 = vpack.c.b16 %v1514, %v1512
  %v1517 = vpack.c.b16 %v1515, %v1513
  %v1521 = vsel %vm199, %v1410, 0
  %1523 = vmatprep.subr.bf16.mxu0 %v1517
  %1524 = vmatpush1.bf16.msra.mxu0 %v1516
  %1525 = vmatprep.subr.bf16.mxu0 0
  %1526 = vmatpush1.bf16.msra.mxu0 0
  %1527 = vmatprep.subr.bf16.mxu0 0
  %1528 = vmatpush1.bf16.msra.mxu0 0
  %1529 = vmatprep.subr.bf16.mxu0 0
  %1530 = vmatpush1.bf16.msra.mxu0 0
  %1531 = vmatprep.subr.bf16.mxu0 0
  %1532 = vmatpush1.bf16.msra.mxu0 0
  %1533 = vmatprep.subr.bf16.mxu0 0
  %1534 = vmatpush1.bf16.msra.mxu0 0
  %1535 = vmatprep.subr.bf16.mxu0 0
  %1536 = vmatpush1.bf16.msra.mxu0 0
  %1537 = vmatprep.subr.bf16.mxu0 0
  %1538 = vmatpush1.bf16.msra.mxu0 0
  %1539 = vmatprep.subr.bf16.mxu0 0
  %1540 = vmatpush1.bf16.msra.mxu0 0
  %1541 = vmatprep.subr.bf16.mxu0 0
  %1542 = vmatpush1.bf16.msra.mxu0 0
  %1543 = vmatprep.subr.bf16.mxu0 0
  %1544 = vmatpush1.bf16.msra.mxu0 0
  %1545 = vmatprep.subr.bf16.mxu0 0
  %1546 = vmatpush1.bf16.msra.mxu0 0
  %1547 = vmatprep.subr.bf16.mxu0 0
  %1548 = vmatpush1.bf16.msra.mxu0 0
  %1549 = vmatprep.subr.bf16.mxu0 0
  %1550 = vmatpush1.bf16.msra.mxu0 0
  %1551 = vmatprep.subr.bf16.mxu0 0
  %1552 = vmatpush1.bf16.msra.mxu0 0
  %1553 = vmatprep.subr.bf16.mxu0 0
  %1554 = vmatpush1.bf16.msra.mxu0 0
  %1555 = vmatprep.mubr.bf16.mxu0 0
  %1556 = vmatmul.mubr.bf16.gmra.mrb[0].mxu0 %v1521
  %v1557 = vpop.f32.mrb[0].mxu0
  %v1558 = vadd.f32 %v1502, %v1557
  %v1559 = vpop.f32.mrb[0].mxu0
  %v1560 = vadd.f32 %v1504, %v1559
  %v1561 = vpop.f32.mrb[0].mxu0
  %v1562 = vadd.f32 %v1506, %v1561
  %v1563 = vpop.f32.mrb[0].mxu0
  %v1564 = vadd.f32 %v1508, %v1563
  %1565 = vdwg.mxu0
  %v1566 = vld [vmem:[%s7] sm:$0x3]
  %v1568 = vlaneseq
  %v1569 = vshrl.u32 %v1568, 7
  %v1570 = vsub.s32 0, %v1569
  %v1571 = vrot.slane %v1566, %v1570
  %v1572 = vlaneseq
  %v1573 = vshrl.u32 %v1572, 7
  %v1574 = vsub.s32 1, %v1573
  %v1575 = vrot.slane %v1566, %v1574
  %v1578 = vadd.f32 %v1558, %v1571
  %v1579 = vadd.f32 %v1560, %v1575
  %v1580 = vadd.f32 %v1562, %v1571
  %v1581 = vadd.f32 %v1564, %v1575
  %v1582 = vxor.u32 %v1578, 2147483648
  %v1583 = vxor.u32 %v1580, 2147483648
  %v1584 = vmul.f32 %v1582, 1.442695
  %v1585 = vpow.pop %v1584
  %v1586 = vmul.f32 %v1583, 1.442695
  %v1587 = vpow.pop %v1586
  %v1588 = vadd.f32 %v1585, 1.0
  %v1589 = vadd.f32 %v1587, 1.0
  %v1590 = vrcp.pop %v1588
  %v1591 = vmul.f32 1.0, %v1590
  %v1592 = vrcp.pop %v1589
  %v1593 = vmul.f32 1.0, %v1592
  %v1594 = vtanh.pop %v1579
  %v1595 = vtanh.pop %v1581
  %v1596 = vxor.u32 %v1579, 2147483648
  %v1597 = vxor.u32 %v1581, 2147483648
  %v1598 = vmul.f32 %v1596, 1.442695
  %v1599 = vpow.pop %v1598
  %v1600 = vmul.f32 %v1597, 1.442695
  %v1601 = vpow.pop %v1600
  %v1602 = vadd.f32 %v1599, 1.0
  %v1603 = vadd.f32 %v1601, 1.0
  %v1604 = vrcp.pop %v1602
  %v1605 = vmul.f32 1.0, %v1604
  %v1606 = vrcp.pop %v1603
  %v1607 = vmul.f32 1.0, %v1606
  %v1608 = vld [vmem:[#allocation5] sm:$0xff]
  %v1609 = vld [vmem:[#allocation5 + $0x8] sm:$0xff]
  %1612 = vrot.lane.b32.xlu0 %v1608, 64
  %v1613 = vpop.permute.xlu0 %1612
  %1614 = vrot.lane.b32.xlu0 %v1609, 64
  %v1615 = vpop.permute.xlu0 %1614
  %v1618 = vmul.f32 %v1591, %v1613
  %v1619 = vmul.f32 %v1593, %v1615
  %v1620 = vmul.f32 %v1591, %v1594
  %v1621 = vmul.f32 %v1593, %v1595
  %1624 = vrot.lane.b32.xlu0 %v1620, 64
  %v1625 = vpop.permute.xlu0 %1624
  %1626 = vrot.lane.b32.xlu0 %v1621, 64
  %v1627 = vpop.permute.xlu0 %1626
  %v1630 = vadd.f32 %v1618, %v1625
  %v1631 = vadd.f32 %v1619, %v1627
  %v1632 = vtanh.pop %v1630
  %v1633 = vtanh.pop %v1631
  %v1634 = vmul.f32 %v1605, %v1632
  %v1635 = vmul.f32 %v1607, %v1633
  %1638 = vrot.lane.b32.xlu0 %v1630, 64
  %v1639 = vpop.permute.xlu0 %1638
  %1640 = vrot.lane.b32.xlu0 %v1631, 64
  %v1641 = vpop.permute.xlu0 %1640
  %1644 = vst.msk [vmem:[#allocation5] sm:$0xff] %vm142, %v1639
  %1645 = vst.msk [vmem:[#allocation5 + $0x8] sm:$0xff] %vm142, %v1641
  %1648 = vrot.lane.b32.xlu0 %v1634, 64
  %v1649 = vpop.permute.xlu0 %1648
  %1650 = vrot.lane.b32.xlu0 %v1635, 64
  %v1651 = vpop.permute.xlu0 %1650
  %1654 = vst.msk [vmem:[#allocation4] sm:$0xff] %vm142, %v1649
  %1655 = vst.msk [vmem:[#allocation4 + $0x8] sm:$0xff] %vm142, %v1651
  %v1656 = vpack.c.bf16 %v1635, %v1634
  %v1658 = vunpack.c.l.b16 %v1656
  %v1659 = vunpack.c.h.b16 %v1656
  %v1660 = vpack.c.b16 %v1658, %v1658
  %v1661 = vpack.c.b16 %v1659, %v1659
  %1662 = vrot.lane.b32.xlu0 %v1660, 64
  %v1663 = vpop.permute.xlu0 %1662
  %1664 = vrot.lane.b32.xlu0 %v1661, 64
  %v1665 = vpop.permute.xlu0 %1664
  %s1668 = scalar_lea.vmem %s69, 40
  %1669 = vst.msk [vmem:[%s1668] sm:$0xf] %vm348, %v1663
  %1670 = vst.msk [vmem:[%s1668 + $0x4] sm:$0xf] %vm348, %v1665
  %s1671 = scalar_lea.vmem %s0, 48
  %v1672 = vld [vmem:[%s1671] sm:$0xff]
  %v1673 = vld [vmem:[%s1671 + $0x8] sm:$0xff]
  %v1674 = vpack.c.bf16 %v1673, %v1672
  %v1675 = vld [vmem:[%s2] sm:$0xff]
  %v1676 = vld [vmem:[%s2 + $0x8] sm:$0xff]
  %v1677 = vld [vmem:[#allocation2] sm:$0xff]
  %v1678 = vld [vmem:[#allocation2 + $0x8] sm:$0xff]
  %v1679 = vpack.c.bf16 %v1678, %v1677
  %v1680 = vld [vmem:[%s4] sm:$0xff]
  %v1681 = vld [vmem:[%s4 + $0x8] sm:$0xff]
  %v1682 = vld [vmem:[%s4 + $0x10] sm:$0xff]
  %v1683 = vld [vmem:[%s4 + $0x18] sm:$0xff]
  %v1684 = vld [vmem:[%s4 + $0x20] sm:$0xff]
  %v1685 = vld [vmem:[%s4 + $0x28] sm:$0xff]
  %v1686 = vld [vmem:[%s4 + $0x30] sm:$0xff]
  %v1687 = vld [vmem:[%s4 + $0x38] sm:$0xff]
  %v1696 = vunpack.c.l.b16 %v1680
  %v1697 = vunpack.c.h.b16 %v1680
  %v1698 = vunpack.c.l.b16 %v1681
  %v1699 = vunpack.c.h.b16 %v1681
  %v1700 = vunpack.c.l.b16 %v1682
  %v1701 = vunpack.c.h.b16 %v1682
  %v1702 = vunpack.c.l.b16 %v1683
  %v1703 = vunpack.c.h.b16 %v1683
  %v1704 = vunpack.c.l.b16 %v1684
  %v1705 = vunpack.c.h.b16 %v1684
  %v1706 = vunpack.c.l.b16 %v1685
  %v1707 = vunpack.c.h.b16 %v1685
  %v1708 = vunpack.c.l.b16 %v1686
  %v1709 = vunpack.c.h.b16 %v1686
  %v1710 = vunpack.c.l.b16 %v1687
  %v1711 = vunpack.c.h.b16 %v1687
  %v1712 = vpack.c.b16 %v1698, %v1696
  %v1713 = vpack.c.b16 %v1699, %v1697
  %v1714 = vpack.c.b16 %v1702, %v1700
  %v1715 = vpack.c.b16 %v1703, %v1701
  %v1716 = vpack.c.b16 %v1706, %v1704
  %v1717 = vpack.c.b16 %v1707, %v1705
  %v1718 = vpack.c.b16 %v1710, %v1708
  %v1719 = vpack.c.b16 %v1711, %v1709
  %v1729 = vsel %vm142, %v1679, 0
  %1731 = vmatprep.subr.bf16.mxu0 %v1713
  %1732 = vmatpush1.bf16.msra.mxu0 %v1712
  %1733 = vmatprep.subr.bf16.mxu0 %v1715
  %1734 = vmatpush1.bf16.msra.mxu0 %v1714
  %1735 = vmatprep.subr.bf16.mxu0 %v1717
  %1736 = vmatpush1.bf16.msra.mxu0 %v1716
  %1737 = vmatprep.subr.bf16.mxu0 %v1719
  %1738 = vmatpush1.bf16.msra.mxu0 %v1718
  %1739 = vmatprep.subr.bf16.mxu0 0
  %1740 = vmatpush1.bf16.msra.mxu0 0
  %1741 = vmatprep.subr.bf16.mxu0 0
  %1742 = vmatpush1.bf16.msra.mxu0 0
  %1743 = vmatprep.subr.bf16.mxu0 0
  %1744 = vmatpush1.bf16.msra.mxu0 0
  %1745 = vmatprep.subr.bf16.mxu0 0
  %1746 = vmatpush1.bf16.msra.mxu0 0
  %1747 = vmatprep.subr.bf16.mxu0 0
  %1748 = vmatpush1.bf16.msra.mxu0 0
  %1749 = vmatprep.subr.bf16.mxu0 0
  %1750 = vmatpush1.bf16.msra.mxu0 0
  %1751 = vmatprep.subr.bf16.mxu0 0
  %1752 = vmatpush1.bf16.msra.mxu0 0
  %1753 = vmatprep.subr.bf16.mxu0 0
  %1754 = vmatpush1.bf16.msra.mxu0 0
  %1755 = vmatprep.subr.bf16.mxu0 0
  %1756 = vmatpush1.bf16.msra.mxu0 0
  %1757 = vmatprep.subr.bf16.mxu0 0
  %1758 = vmatpush1.bf16.msra.mxu0 0
  %1759 = vmatprep.subr.bf16.mxu0 0
  %1760 = vmatpush1.bf16.msra.mxu0 0
  %1761 = vmatprep.subr.bf16.mxu0 0
  %1762 = vmatpush1.bf16.msra.mxu0 0
  %1763 = vmatprep.mubr.bf16.mxu0 0
  %1764 = vmatmul.mubr.bf16.gmra.mrb[0].mxu0 %v1729
  %v1765 = vpop.f32.mrb[0].mxu0
  %v1766 = vadd.f32 0.0, %v1765
  %v1767 = vpop.f32.mrb[0].mxu0
  %v1768 = vadd.f32 0.0, %v1767
  %v1769 = vpop.f32.mrb[0].mxu0
  %v1770 = vadd.f32 0.0, %v1769
  %v1771 = vpop.f32.mrb[0].mxu0
  %v1772 = vadd.f32 0.0, %v1771
  %1773 = vdwg.mxu0
  %v1776 = vunpack.c.l.b16 %v1675
  %v1777 = vunpack.c.h.b16 %v1675
  %v1778 = vunpack.c.l.b16 %v1676
  %v1779 = vunpack.c.h.b16 %v1676
  %v1780 = vpack.c.b16 %v1778, %v1776
  %v1781 = vpack.c.b16 %v1779, %v1777
  %v1785 = vsel %vm199, %v1674, 0
  %1787 = vmatprep.subr.bf16.mxu0 %v1781
  %1788 = vmatpush1.bf16.msra.mxu0 %v1780
  %1789 = vmatprep.subr.bf16.mxu0 0
  %1790 = vmatpush1.bf16.msra.mxu0 0
  %1791 = vmatprep.subr.bf16.mxu0 0
  %1792 = vmatpush1.bf16.msra.mxu0 0
  %1793 = vmatprep.subr.bf16.mxu0 0
  %1794 = vmatpush1.bf16.msra.mxu0 0
  %1795 = vmatprep.subr.bf16.mxu0 0
  %1796 = vmatpush1.bf16.msra.mxu0 0
  %1797 = vmatprep.subr.bf16.mxu0 0
  %1798 = vmatpush1.bf16.msra.mxu0 0
  %1799 = vmatprep.subr.bf16.mxu0 0
  %1800 = vmatpush1.bf16.msra.mxu0 0
  %1801 = vmatprep.subr.bf16.mxu0 0
  %1802 = vmatpush1.bf16.msra.mxu0 0
  %1803 = vmatprep.subr.bf16.mxu0 0
  %1804 = vmatpush1.bf16.msra.mxu0 0
  %1805 = vmatprep.subr.bf16.mxu0 0
  %1806 = vmatpush1.bf16.msra.mxu0 0
  %1807 = vmatprep.subr.bf16.mxu0 0
  %1808 = vmatpush1.bf16.msra.mxu0 0
  %1809 = vmatprep.subr.bf16.mxu0 0
  %1810 = vmatpush1.bf16.msra.mxu0 0
  %1811 = vmatprep.subr.bf16.mxu0 0
  %1812 = vmatpush1.bf16.msra.mxu0 0
  %1813 = vmatprep.subr.bf16.mxu0 0
  %1814 = vmatpush1.bf16.msra.mxu0 0
  %1815 = vmatprep.subr.bf16.mxu0 0
  %1816 = vmatpush1.bf16.msra.mxu0 0
  %1817 = vmatprep.subr.bf16.mxu0 0
  %1818 = vmatpush1.bf16.msra.mxu0 0
  %1819 = vmatprep.mubr.bf16.mxu0 0
  %1820 = vmatmul.mubr.bf16.gmra.mrb[0].mxu0 %v1785
  %v1821 = vpop.f32.mrb[0].mxu0
  %v1822 = vadd.f32 %v1766, %v1821
  %v1823 = vpop.f32.mrb[0].mxu0
  %v1824 = vadd.f32 %v1768, %v1823
  %v1825 = vpop.f32.mrb[0].mxu0
  %v1826 = vadd.f32 %v1770, %v1825
  %v1827 = vpop.f32.mrb[0].mxu0
  %v1828 = vadd.f32 %v1772, %v1827
  %1829 = vdwg.mxu0
  %v1830 = vld [vmem:[%s6] sm:$0x3]
  %v1832 = vlaneseq
  %v1833 = vshrl.u32 %v1832, 7
  %v1834 = vsub.s32 0, %v1833
  %v1835 = vrot.slane %v1830, %v1834
  %v1836 = vlaneseq
  %v1837 = vshrl.u32 %v1836, 7
  %v1838 = vsub.s32 1, %v1837
  %v1839 = vrot.slane %v1830, %v1838
  %v1842 = vadd.f32 %v1822, %v1835
  %v1843 = vadd.f32 %v1824, %v1839
  %v1844 = vadd.f32 %v1826, %v1835
  %v1845 = vadd.f32 %v1828, %v1839
  %v1846 = vxor.u32 %v1842, 2147483648
  %v1847 = vxor.u32 %v1844, 2147483648
  %v1848 = vmul.f32 %v1846, 1.442695
  %v1849 = vpow.pop %v1848
  %v1850 = vmul.f32 %v1847, 1.442695
  %v1851 = vpow.pop %v1850
  %v1852 = vadd.f32 %v1849, 1.0
  %v1853 = vadd.f32 %v1851, 1.0
  %v1854 = vrcp.pop %v1852
  %v1855 = vmul.f32 1.0, %v1854
  %v1856 = vrcp.pop %v1853
  %v1857 = vmul.f32 1.0, %v1856
  %v1858 = vtanh.pop %v1843
  %v1859 = vtanh.pop %v1845
  %v1860 = vxor.u32 %v1843, 2147483648
  %v1861 = vxor.u32 %v1845, 2147483648
  %v1862 = vmul.f32 %v1860, 1.442695
  %v1863 = vpow.pop %v1862
  %v1864 = vmul.f32 %v1861, 1.442695
  %v1865 = vpow.pop %v1864
  %v1866 = vadd.f32 %v1863, 1.0
  %v1867 = vadd.f32 %v1865, 1.0
  %v1868 = vrcp.pop %v1866
  %v1869 = vmul.f32 1.0, %v1868
  %v1870 = vrcp.pop %v1867
  %v1871 = vmul.f32 1.0, %v1870
  %v1872 = vld [vmem:[#allocation3] sm:$0xff]
  %v1873 = vld [vmem:[#allocation3 + $0x8] sm:$0xff]
  %1876 = vrot.lane.b32.xlu0 %v1872, 64
  %v1877 = vpop.permute.xlu0 %1876
  %1878 = vrot.lane.b32.xlu0 %v1873, 64
  %v1879 = vpop.permute.xlu0 %1878
  %v1882 = vmul.f32 %v1855, %v1877
  %v1883 = vmul.f32 %v1857, %v1879
  %v1884 = vmul.f32 %v1855, %v1858
  %v1885 = vmul.f32 %v1857, %v1859
  %1888 = vrot.lane.b32.xlu0 %v1884, 64
  %v1889 = vpop.permute.xlu0 %1888
  %1890 = vrot.lane.b32.xlu0 %v1885, 64
  %v1891 = vpop.permute.xlu0 %1890
  %v1894 = vadd.f32 %v1882, %v1889
  %v1895 = vadd.f32 %v1883, %v1891
  %v1896 = vtanh.pop %v1894
  %v1897 = vtanh.pop %v1895
  %v1898 = vmul.f32 %v1869, %v1896
  %v1899 = vmul.f32 %v1871, %v1897
  %1902 = vrot.lane.b32.xlu0 %v1894, 64
  %v1903 = vpop.permute.xlu0 %1902
  %1904 = vrot.lane.b32.xlu0 %v1895, 64
  %v1905 = vpop.permute.xlu0 %1904
  %1908 = vst.msk [vmem:[#allocation3] sm:$0xff] %vm142, %v1903
  %1909 = vst.msk [vmem:[#allocation3 + $0x8] sm:$0xff] %vm142, %v1905
  %1912 = vrot.lane.b32.xlu0 %v1898, 64
  %v1913 = vpop.permute.xlu0 %1912
  %1914 = vrot.lane.b32.xlu0 %v1899, 64
  %v1915 = vpop.permute.xlu0 %1914
  %1918 = vst.msk [vmem:[#allocation2] sm:$0xff] %vm142, %v1913
  %1919 = vst.msk [vmem:[#allocation2 + $0x8] sm:$0xff] %vm142, %v1915
  %v1920 = vpack.c.bf16 %v1899, %v1898
  %v1922 = vunpack.c.l.b16 %v1920
  %v1923 = vunpack.c.h.b16 %v1920
  %v1924 = vpack.c.b16 %v1922, %v1922
  %v1925 = vpack.c.b16 %v1923, %v1923
  %1926 = vrot.lane.b32.xlu0 %v1924, 64
  %v1927 = vpop.permute.xlu0 %1926
  %1928 = vrot.lane.b32.xlu0 %v1925, 64
  %v1929 = vpop.permute.xlu0 %1928
  %s1932 = scalar_lea.vmem %s8, 24
  %1933 = vst.msk [vmem:[%s1932] sm:$0xf] %vm348, %v1927
  %1934 = vst.msk [vmem:[%s1932 + $0x4] sm:$0xf] %vm348, %v1929
  %s1935 = scalar_lea.vmem %s60, 64
  %v1936 = vld [vmem:[%s1935] sm:$0xff]
  %v1937 = vld [vmem:[%s1935 + $0x8] sm:$0xff]
  %v1938 = vpack.c.bf16 %v1937, %v1936
  %v1939 = vld [vmem:[%s3] sm:$0xff]
  %v1940 = vld [vmem:[%s3 + $0x8] sm:$0xff]
  %v1941 = vld [vmem:[#allocation4] sm:$0xff]
  %v1942 = vld [vmem:[#allocation4 + $0x8] sm:$0xff]
  %v1943 = vpack.c.bf16 %v1942, %v1941
  %v1944 = vld [vmem:[%s5] sm:$0xff]
  %v1945 = vld [vmem:[%s5 + $0x8] sm:$0xff]
  %v1946 = vld [vmem:[%s5 + $0x10] sm:$0xff]
  %v1947 = vld [vmem:[%s5 + $0x18] sm:$0xff]
  %v1948 = vld [vmem:[%s5 + $0x20] sm:$0xff]
  %v1949 = vld [vmem:[%s5 + $0x28] sm:$0xff]
  %v1950 = vld [vmem:[%s5 + $0x30] sm:$0xff]
  %v1951 = vld [vmem:[%s5 + $0x38] sm:$0xff]
  %v1960 = vunpack.c.l.b16 %v1944
  %v1961 = vunpack.c.h.b16 %v1944
  %v1962 = vunpack.c.l.b16 %v1945
  %v1963 = vunpack.c.h.b16 %v1945
  %v1964 = vunpack.c.l.b16 %v1946
  %v1965 = vunpack.c.h.b16 %v1946
  %v1966 = vunpack.c.l.b16 %v1947
  %v1967 = vunpack.c.h.b16 %v1947
  %v1968 = vunpack.c.l.b16 %v1948
  %v1969 = vunpack.c.h.b16 %v1948
  %v1970 = vunpack.c.l.b16 %v1949
  %v1971 = vunpack.c.h.b16 %v1949
  %v1972 = vunpack.c.l.b16 %v1950
  %v1973 = vunpack.c.h.b16 %v1950
  %v1974 = vunpack.c.l.b16 %v1951
  %v1975 = vunpack.c.h.b16 %v1951
  %v1976 = vpack.c.b16 %v1962, %v1960
  %v1977 = vpack.c.b16 %v1963, %v1961
  %v1978 = vpack.c.b16 %v1966, %v1964
  %v1979 = vpack.c.b16 %v1967, %v1965
  %v1980 = vpack.c.b16 %v1970, %v1968
  %v1981 = vpack.c.b16 %v1971, %v1969
  %v1982 = vpack.c.b16 %v1974, %v1972
  %v1983 = vpack.c.b16 %v1975, %v1973
  %v1993 = vsel %vm142, %v1943, 0
  %1995 = vmatprep.subr.bf16.mxu0 %v1977
  %1996 = vmatpush1.bf16.msra.mxu0 %v1976
  %1997 = vmatprep.subr.bf16.mxu0 %v1979
  %1998 = vmatpush1.bf16.msra.mxu0 %v1978
  %1999 = vmatprep.subr.bf16.mxu0 %v1981
  %2000 = vmatpush1.bf16.msra.mxu0 %v1980
  %2001 = vmatprep.subr.bf16.mxu0 %v1983
  %2002 = vmatpush1.bf16.msra.mxu0 %v1982
  %2003 = vmatprep.subr.bf16.mxu0 0
  %2004 = vmatpush1.bf16.msra.mxu0 0
  %2005 = vmatprep.subr.bf16.mxu0 0
  %2006 = vmatpush1.bf16.msra.mxu0 0
  %2007 = vmatprep.subr.bf16.mxu0 0
  %2008 = vmatpush1.bf16.msra.mxu0 0
  %2009 = vmatprep.subr.bf16.mxu0 0
  %2010 = vmatpush1.bf16.msra.mxu0 0
  %2011 = vmatprep.subr.bf16.mxu0 0
  %2012 = vmatpush1.bf16.msra.mxu0 0
  %2013 = vmatprep.subr.bf16.mxu0 0
  %2014 = vmatpush1.bf16.msra.mxu0 0
  %2015 = vmatprep.subr.bf16.mxu0 0
  %2016 = vmatpush1.bf16.msra.mxu0 0
  %2017 = vmatprep.subr.bf16.mxu0 0
  %2018 = vmatpush1.bf16.msra.mxu0 0
  %2019 = vmatprep.subr.bf16.mxu0 0
  %2020 = vmatpush1.bf16.msra.mxu0 0
  %2021 = vmatprep.subr.bf16.mxu0 0
  %2022 = vmatpush1.bf16.msra.mxu0 0
  %2023 = vmatprep.subr.bf16.mxu0 0
  %2024 = vmatpush1.bf16.msra.mxu0 0
  %2025 = vmatprep.subr.bf16.mxu0 0
  %2026 = vmatpush1.bf16.msra.mxu0 0
  %2027 = vmatprep.mubr.bf16.mxu0 0
  %2028 = vmatmul.mubr.bf16.gmra.mrb[0].mxu0 %v1993
  %v2029 = vpop.f32.mrb[0].mxu0
  %v2030 = vadd.f32 0.0, %v2029
  %v2031 = vpop.f32.mrb[0].mxu0
  %v2032 = vadd.f32 0.0, %v2031
  %v2033 = vpop.f32.mrb[0].mxu0
  %v2034 = vadd.f32 0.0, %v2033
  %v2035 = vpop.f32.mrb[0].mxu0
  %v2036 = vadd.f32 0.0, %v2035
  %2037 = vdwg.mxu0
  %v2040 = vunpack.c.l.b16 %v1939
  %v2041 = vunpack.c.h.b16 %v1939
  %v2042 = vunpack.c.l.b16 %v1940
  %v2043 = vunpack.c.h.b16 %v1940
  %v2044 = vpack.c.b16 %v2042, %v2040
  %v2045 = vpack.c.b16 %v2043, %v2041
  %v2049 = vsel %vm199, %v1938, 0
  %2051 = vmatprep.subr.bf16.mxu0 %v2045
  %2052 = vmatpush1.bf16.msra.mxu0 %v2044
  %2053 = vmatprep.subr.bf16.mxu0 0
  %2054 = vmatpush1.bf16.msra.mxu0 0
  %2055 = vmatprep.subr.bf16.mxu0 0
  %2056 = vmatpush1.bf16.msra.mxu0 0
  %2057 = vmatprep.subr.bf16.mxu0 0
  %2058 = vmatpush1.bf16.msra.mxu0 0
  %2059 = vmatprep.subr.bf16.mxu0 0
  %2060 = vmatpush1.bf16.msra.mxu0 0
  %2061 = vmatprep.subr.bf16.mxu0 0
  %2062 = vmatpush1.bf16.msra.mxu0 0
  %2063 = vmatprep.subr.bf16.mxu0 0
  %2064 = vmatpush1.bf16.msra.mxu0 0
  %2065 = vmatprep.subr.bf16.mxu0 0
  %2066 = vmatpush1.bf16.msra.mxu0 0
  %2067 = vmatprep.subr.bf16.mxu0 0
  %2068 = vmatpush1.bf16.msra.mxu0 0
  %2069 = vmatprep.subr.bf16.mxu0 0
  %2070 = vmatpush1.bf16.msra.mxu0 0
  %2071 = vmatprep.subr.bf16.mxu0 0
  %2072 = vmatpush1.bf16.msra.mxu0 0
  %2073 = vmatprep.subr.bf16.mxu0 0
  %2074 = vmatpush1.bf16.msra.mxu0 0
  %2075 = vmatprep.subr.bf16.mxu0 0
  %2076 = vmatpush1.bf16.msra.mxu0 0
  %2077 = vmatprep.subr.bf16.mxu0 0
  %2078 = vmatpush1.bf16.msra.mxu0 0
  %2079 = vmatprep.subr.bf16.mxu0 0
  %2080 = vmatpush1.bf16.msra.mxu0 0
  %2081 = vmatprep.subr.bf16.mxu0 0
  %2082 = vmatpush1.bf16.msra.mxu0 0
  %2083 = vmatprep.mubr.bf16.mxu0 0
  %2084 = vmatmul.mubr.bf16.gmra.mrb[0].mxu0 %v2049
  %v2085 = vpop.f32.mrb[0].mxu0
  %v2086 = vadd.f32 %v2030, %v2085
  %v2087 = vpop.f32.mrb[0].mxu0
  %v2088 = vadd.f32 %v2032, %v2087
  %v2089 = vpop.f32.mrb[0].mxu0
  %v2090 = vadd.f32 %v2034, %v2089
  %v2091 = vpop.f32.mrb[0].mxu0
  %v2092 = vadd.f32 %v2036, %v2091
  %2093 = vdwg.mxu0
  %v2094 = vld [vmem:[%s7] sm:$0x3]
  %v2096 = vlaneseq
  %v2097 = vshrl.u32 %v2096, 7
  %v2098 = vsub.s32 0, %v2097
  %v2099 = vrot.slane %v2094, %v2098
  %v2100 = vlaneseq
  %v2101 = vshrl.u32 %v2100, 7
  %v2102 = vsub.s32 1, %v2101
  %v2103 = vrot.slane %v2094, %v2102
  %v2106 = vadd.f32 %v2086, %v2099
  %v2107 = vadd.f32 %v2088, %v2103
  %v2108 = vadd.f32 %v2090, %v2099
  %v2109 = vadd.f32 %v2092, %v2103
  %v2110 = vxor.u32 %v2106, 2147483648
  %v2111 = vxor.u32 %v2108, 2147483648
  %v2112 = vmul.f32 %v2110, 1.442695
  %v2113 = vpow.pop %v2112
  %v2114 = vmul.f32 %v2111, 1.442695
  %v2115 = vpow.pop %v2114
  %v2116 = vadd.f32 %v2113, 1.0
  %v2117 = vadd.f32 %v2115, 1.0
  %v2118 = vrcp.pop %v2116
  %v2119 = vmul.f32 1.0, %v2118
  %v2120 = vrcp.pop %v2117
  %v2121 = vmul.f32 1.0, %v2120
  %v2122 = vtanh.pop %v2107
  %v2123 = vtanh.pop %v2109
  %v2124 = vxor.u32 %v2107, 2147483648
  %v2125 = vxor.u32 %v2109, 2147483648
  %v2126 = vmul.f32 %v2124, 1.442695
  %v2127 = vpow.pop %v2126
  %v2128 = vmul.f32 %v2125, 1.442695
  %v2129 = vpow.pop %v2128
  %v2130 = vadd.f32 %v2127, 1.0
  %v2131 = vadd.f32 %v2129, 1.0
  %v2132 = vrcp.pop %v2130
  %v2133 = vmul.f32 1.0, %v2132
  %v2134 = vrcp.pop %v2131
  %v2135 = vmul.f32 1.0, %v2134
  %v2136 = vld [vmem:[#allocation5] sm:$0xff]
  %v2137 = vld [vmem:[#allocation5 + $0x8] sm:$0xff]
  %2140 = vrot.lane.b32.xlu0 %v2136, 64
  %v2141 = vpop.permute.xlu0 %2140
  %2142 = vrot.lane.b32.xlu0 %v2137, 64
  %v2143 = vpop.permute.xlu0 %2142
  %v2146 = vmul.f32 %v2119, %v2141
  %v2147 = vmul.f32 %v2121, %v2143
  %v2148 = vmul.f32 %v2119, %v2122
  %v2149 = vmul.f32 %v2121, %v2123
  %2152 = vrot.lane.b32.xlu0 %v2148, 64
  %v2153 = vpop.permute.xlu0 %2152
  %2154 = vrot.lane.b32.xlu0 %v2149, 64
  %v2155 = vpop.permute.xlu0 %2154
  %v2158 = vadd.f32 %v2146, %v2153
  %v2159 = vadd.f32 %v2147, %v2155
  %v2160 = vtanh.pop %v2158
  %v2161 = vtanh.pop %v2159
  %v2162 = vmul.f32 %v2133, %v2160
  %v2163 = vmul.f32 %v2135, %v2161
  %2166 = vrot.lane.b32.xlu0 %v2158, 64
  %v2167 = vpop.permute.xlu0 %2166
  %2168 = vrot.lane.b32.xlu0 %v2159, 64
  %v2169 = vpop.permute.xlu0 %2168
  %2172 = vst.msk [vmem:[#allocation5] sm:$0xff] %vm142, %v2167
  %2173 = vst.msk [vmem:[#allocation5 + $0x8] sm:$0xff] %vm142, %v2169
  %2176 = vrot.lane.b32.xlu0 %v2162, 64
  %v2177 = vpop.permute.xlu0 %2176
  %2178 = vrot.lane.b32.xlu0 %v2163, 64
  %v2179 = vpop.permute.xlu0 %2178
  %2182 = vst.msk [vmem:[#allocation4] sm:$0xff] %vm142, %v2177
  %2183 = vst.msk [vmem:[#allocation4 + $0x8] sm:$0xff] %vm142, %v2179
  %v2184 = vpack.c.bf16 %v2163, %v2162
  %v2186 = vunpack.c.l.b16 %v2184
  %v2187 = vunpack.c.h.b16 %v2184
  %v2188 = vpack.c.b16 %v2186, %v2186
  %v2189 = vpack.c.b16 %v2187, %v2187
  %2190 = vrot.lane.b32.xlu0 %v2188, 64
  %v2191 = vpop.permute.xlu0 %2190
  %2192 = vrot.lane.b32.xlu0 %v2189, 64
  %v2193 = vpop.permute.xlu0 %2192
  %s2196 = scalar_lea.vmem %s69, 32
  %2197 = vst.msk [vmem:[%s2196] sm:$0xf] %vm348, %v2191
  %2198 = vst.msk [vmem:[%s2196 + $0x4] sm:$0xf] %vm348, %v2193
  %s2199 = scalar_lea.vmem %s0, 64
  %v2200 = vld [vmem:[%s2199] sm:$0xff]
  %v2201 = vld [vmem:[%s2199 + $0x8] sm:$0xff]
  %v2202 = vpack.c.bf16 %v2201, %v2200
  %v2203 = vld [vmem:[%s2] sm:$0xff]
  %v2204 = vld [vmem:[%s2 + $0x8] sm:$0xff]
  %v2205 = vld [vmem:[#allocation2] sm:$0xff]
  %v2206 = vld [vmem:[#allocation2 + $0x8] sm:$0xff]
  %v2207 = vpack.c.bf16 %v2206, %v2205
  %v2208 = vld [vmem:[%s4] sm:$0xff]
  %v2209 = vld [vmem:[%s4 + $0x8] sm:$0xff]
  %v2210 = vld [vmem:[%s4 + $0x10] sm:$0xff]
  %v2211 = vld [vmem:[%s4 + $0x18] sm:$0xff]
  %v2212 = vld [vmem:[%s4 + $0x20] sm:$0xff]
  %v2213 = vld [vmem:[%s4 + $0x28] sm:$0xff]
  %v2214 = vld [vmem:[%s4 + $0x30] sm:$0xff]
  %v2215 = vld [vmem:[%s4 + $0x38] sm:$0xff]
  %v2224 = vunpack.c.l.b16 %v2208
  %v2225 = vunpack.c.h.b16 %v2208
  %v2226 = vunpack.c.l.b16 %v2209
  %v2227 = vunpack.c.h.b16 %v2209
  %v2228 = vunpack.c.l.b16 %v2210
  %v2229 = vunpack.c.h.b16 %v2210
  %v2230 = vunpack.c.l.b16 %v2211
  %v2231 = vunpack.c.h.b16 %v2211
  %v2232 = vunpack.c.l.b16 %v2212
  %v2233 = vunpack.c.h.b16 %v2212
  %v2234 = vunpack.c.l.b16 %v2213
  %v2235 = vunpack.c.h.b16 %v2213
  %v2236 = vunpack.c.l.b16 %v2214
  %v2237 = vunpack.c.h.b16 %v2214
  %v2238 = vunpack.c.l.b16 %v2215
  %v2239 = vunpack.c.h.b16 %v2215
  %v2240 = vpack.c.b16 %v2226, %v2224
  %v2241 = vpack.c.b16 %v2227, %v2225
  %v2242 = vpack.c.b16 %v2230, %v2228
  %v2243 = vpack.c.b16 %v2231, %v2229
  %v2244 = vpack.c.b16 %v2234, %v2232
  %v2245 = vpack.c.b16 %v2235, %v2233
  %v2246 = vpack.c.b16 %v2238, %v2236
  %v2247 = vpack.c.b16 %v2239, %v2237
  %v2257 = vsel %vm142, %v2207, 0
  %2259 = vmatprep.subr.bf16.mxu0 %v2241
  %2260 = vmatpush1.bf16.msra.mxu0 %v2240
  %2261 = vmatprep.subr.bf16.mxu0 %v2243
  %2262 = vmatpush1.bf16.msra.mxu0 %v2242
  %2263 = vmatprep.subr.bf16.mxu0 %v2245
  %2264 = vmatpush1.bf16.msra.mxu0 %v2244
  %2265 = vmatprep.subr.bf16.mxu0 %v2247
  %2266 = vmatpush1.bf16.msra.mxu0 %v2246
  %2267 = vmatprep.subr.bf16.mxu0 0
  %2268 = vmatpush1.bf16.msra.mxu0 0
  %2269 = vmatprep.subr.bf16.mxu0 0
  %2270 = vmatpush1.bf16.msra.mxu0 0
  %2271 = vmatprep.subr.bf16.mxu0 0
  %2272 = vmatpush1.bf16.msra.mxu0 0
  %2273 = vmatprep.subr.bf16.mxu0 0
  %2274 = vmatpush1.bf16.msra.mxu0 0
  %2275 = vmatprep.subr.bf16.mxu0 0
  %2276 = vmatpush1.bf16.msra.mxu0 0
  %2277 = vmatprep.subr.bf16.mxu0 0
  %2278 = vmatpush1.bf16.msra.mxu0 0
  %2279 = vmatprep.subr.bf16.mxu0 0
  %2280 = vmatpush1.bf16.msra.mxu0 0
  %2281 = vmatprep.subr.bf16.mxu0 0
  %2282 = vmatpush1.bf16.msra.mxu0 0
  %2283 = vmatprep.subr.bf16.mxu0 0
  %2284 = vmatpush1.bf16.msra.mxu0 0
  %2285 = vmatprep.subr.bf16.mxu0 0
  %2286 = vmatpush1.bf16.msra.mxu0 0
  %2287 = vmatprep.subr.bf16.mxu0 0
  %2288 = vmatpush1.bf16.msra.mxu0 0
  %2289 = vmatprep.subr.bf16.mxu0 0
  %2290 = vmatpush1.bf16.msra.mxu0 0
  %2291 = vmatprep.mubr.bf16.mxu0 0
  %2292 = vmatmul.mubr.bf16.gmra.mrb[0].mxu0 %v2257
  %v2293 = vpop.f32.mrb[0].mxu0
  %v2294 = vadd.f32 0.0, %v2293
  %v2295 = vpop.f32.mrb[0].mxu0
  %v2296 = vadd.f32 0.0, %v2295
  %v2297 = vpop.f32.mrb[0].mxu0
  %v2298 = vadd.f32 0.0, %v2297
  %v2299 = vpop.f32.mrb[0].mxu0
  %v2300 = vadd.f32 0.0, %v2299
  %2301 = vdwg.mxu0
  %v2304 = vunpack.c.l.b16 %v2203
  %v2305 = vunpack.c.h.b16 %v2203
  %v2306 = vunpack.c.l.b16 %v2204
  %v2307 = vunpack.c.h.b16 %v2204
  %v2308 = vpack.c.b16 %v2306, %v2304
  %v2309 = vpack.c.b16 %v2307, %v2305
  %v2313 = vsel %vm199, %v2202, 0
  %2315 = vmatprep.subr.bf16.mxu0 %v2309
  %2316 = vmatpush1.bf16.msra.mxu0 %v2308
  %2317 = vmatprep.subr.bf16.mxu0 0
  %2318 = vmatpush1.bf16.msra.mxu0 0
  %2319 = vmatprep.subr.bf16.mxu0 0
  %2320 = vmatpush1.bf16.msra.mxu0 0
  %2321 = vmatprep.subr.bf16.mxu0 0
  %2322 = vmatpush1.bf16.msra.mxu0 0
  %2323 = vmatprep.subr.bf16.mxu0 0
  %2324 = vmatpush1.bf16.msra.mxu0 0
  %2325 = vmatprep.subr.bf16.mxu0 0
  %2326 = vmatpush1.bf16.msra.mxu0 0
  %2327 = vmatprep.subr.bf16.mxu0 0
  %2328 = vmatpush1.bf16.msra.mxu0 0
  %2329 = vmatprep.subr.bf16.mxu0 0
  %2330 = vmatpush1.bf16.msra.mxu0 0
  %2331 = vmatprep.subr.bf16.mxu0 0
  %2332 = vmatpush1.bf16.msra.mxu0 0
  %2333 = vmatprep.subr.bf16.mxu0 0
  %2334 = vmatpush1.bf16.msra.mxu0 0
  %2335 = vmatprep.subr.bf16.mxu0 0
  %2336 = vmatpush1.bf16.msra.mxu0 0
  %2337 = vmatprep.subr.bf16.mxu0 0
  %2338 = vmatpush1.bf16.msra.mxu0 0
  %2339 = vmatprep.subr.bf16.mxu0 0
  %2340 = vmatpush1.bf16.msra.mxu0 0
  %2341 = vmatprep.subr.bf16.mxu0 0
  %2342 = vmatpush1.bf16.msra.mxu0 0
  %2343 = vmatprep.subr.bf16.mxu0 0
  %2344 = vmatpush1.bf16.msra.mxu0 0
  %2345 = vmatprep.subr.bf16.mxu0 0
  %2346 = vmatpush1.bf16.msra.mxu0 0
  %2347 = vmatprep.mubr.bf16.mxu0 0
  %2348 = vmatmul.mubr.bf16.gmra.mrb[0].mxu0 %v2313
  %v2349 = vpop.f32.mrb[0].mxu0
  %v2350 = vadd.f32 %v2294, %v2349
  %v2351 = vpop.f32.mrb[0].mxu0
  %v2352 = vadd.f32 %v2296, %v2351
  %v2353 = vpop.f32.mrb[0].mxu0
  %v2354 = vadd.f32 %v2298, %v2353
  %v2355 = vpop.f32.mrb[0].mxu0
  %v2356 = vadd.f32 %v2300, %v2355
  %2357 = vdwg.mxu0
  %v2358 = vld [vmem:[%s6] sm:$0x3]
  %v2360 = vlaneseq
  %v2361 = vshrl.u32 %v2360, 7
  %v2362 = vsub.s32 0, %v2361
  %v2363 = vrot.slane %v2358, %v2362
  %v2364 = vlaneseq
  %v2365 = vshrl.u32 %v2364, 7
  %v2366 = vsub.s32 1, %v2365
  %v2367 = vrot.slane %v2358, %v2366
  %v2370 = vadd.f32 %v2350, %v2363
  %v2371 = vadd.f32 %v2352, %v2367
  %v2372 = vadd.f32 %v2354, %v2363
  %v2373 = vadd.f32 %v2356, %v2367
  %v2374 = vxor.u32 %v2370, 2147483648
  %v2375 = vxor.u32 %v2372, 2147483648
  %v2376 = vmul.f32 %v2374, 1.442695
  %v2377 = vpow.pop %v2376
  %v2378 = vmul.f32 %v2375, 1.442695
  %v2379 = vpow.pop %v2378
  %v2380 = vadd.f32 %v2377, 1.0
  %v2381 = vadd.f32 %v2379, 1.0
  %v2382 = vrcp.pop %v2380
  %v2383 = vmul.f32 1.0, %v2382
  %v2384 = vrcp.pop %v2381
  %v2385 = vmul.f32 1.0, %v2384
  %v2386 = vtanh.pop %v2371
  %v2387 = vtanh.pop %v2373
  %v2388 = vxor.u32 %v2371, 2147483648
  %v2389 = vxor.u32 %v2373, 2147483648
  %v2390 = vmul.f32 %v2388, 1.442695
  %v2391 = vpow.pop %v2390
  %v2392 = vmul.f32 %v2389, 1.442695
  %v2393 = vpow.pop %v2392
  %v2394 = vadd.f32 %v2391, 1.0
  %v2395 = vadd.f32 %v2393, 1.0
  %v2396 = vrcp.pop %v2394
  %v2397 = vmul.f32 1.0, %v2396
  %v2398 = vrcp.pop %v2395
  %v2399 = vmul.f32 1.0, %v2398
  %v2400 = vld [vmem:[#allocation3] sm:$0xff]
  %v2401 = vld [vmem:[#allocation3 + $0x8] sm:$0xff]
  %2404 = vrot.lane.b32.xlu0 %v2400, 64
  %v2405 = vpop.permute.xlu0 %2404
  %2406 = vrot.lane.b32.xlu0 %v2401, 64
  %v2407 = vpop.permute.xlu0 %2406
  %v2410 = vmul.f32 %v2383, %v2405
  %v2411 = vmul.f32 %v2385, %v2407
  %v2412 = vmul.f32 %v2383, %v2386
  %v2413 = vmul.f32 %v2385, %v2387
  %2416 = vrot.lane.b32.xlu0 %v2412, 64
  %v2417 = vpop.permute.xlu0 %2416
  %2418 = vrot.lane.b32.xlu0 %v2413, 64
  %v2419 = vpop.permute.xlu0 %2418
  %v2422 = vadd.f32 %v2410, %v2417
  %v2423 = vadd.f32 %v2411, %v2419
  %v2424 = vtanh.pop %v2422
  %v2425 = vtanh.pop %v2423
  %v2426 = vmul.f32 %v2397, %v2424
  %v2427 = vmul.f32 %v2399, %v2425
  %2430 = vrot.lane.b32.xlu0 %v2422, 64
  %v2431 = vpop.permute.xlu0 %2430
  %2432 = vrot.lane.b32.xlu0 %v2423, 64
  %v2433 = vpop.permute.xlu0 %2432
  %2436 = vst.msk [vmem:[#allocation3] sm:$0xff] %vm142, %v2431
  %2437 = vst.msk [vmem:[#allocation3 + $0x8] sm:$0xff] %vm142, %v2433
  %2440 = vrot.lane.b32.xlu0 %v2426, 64
  %v2441 = vpop.permute.xlu0 %2440
  %2442 = vrot.lane.b32.xlu0 %v2427, 64
  %v2443 = vpop.permute.xlu0 %2442
  %2446 = vst.msk [vmem:[#allocation2] sm:$0xff] %vm142, %v2441
  %2447 = vst.msk [vmem:[#allocation2 + $0x8] sm:$0xff] %vm142, %v2443
  %v2448 = vpack.c.bf16 %v2427, %v2426
  %v2450 = vunpack.c.l.b16 %v2448
  %v2451 = vunpack.c.h.b16 %v2448
  %v2452 = vpack.c.b16 %v2450, %v2450
  %v2453 = vpack.c.b16 %v2451, %v2451
  %2454 = vrot.lane.b32.xlu0 %v2452, 64
  %v2455 = vpop.permute.xlu0 %2454
  %2456 = vrot.lane.b32.xlu0 %v2453, 64
  %v2457 = vpop.permute.xlu0 %2456
  %s2460 = scalar_lea.vmem %s8, 32
  %2461 = vst.msk [vmem:[%s2460] sm:$0xf] %vm348, %v2455
  %2462 = vst.msk [vmem:[%s2460 + $0x4] sm:$0xf] %vm348, %v2457
  %s2463 = scalar_lea.vmem %s60, 48
  %v2464 = vld [vmem:[%s2463] sm:$0xff]
  %v2465 = vld [vmem:[%s2463 + $0x8] sm:$0xff]
  %v2466 = vpack.c.bf16 %v2465, %v2464
  %v2467 = vld [vmem:[%s3] sm:$0xff]
  %v2468 = vld [vmem:[%s3 + $0x8] sm:$0xff]
  %v2469 = vld [vmem:[#allocation4] sm:$0xff]
  %v2470 = vld [vmem:[#allocation4 + $0x8] sm:$0xff]
  %v2471 = vpack.c.bf16 %v2470, %v2469
  %v2472 = vld [vmem:[%s5] sm:$0xff]
  %v2473 = vld [vmem:[%s5 + $0x8] sm:$0xff]
  %v2474 = vld [vmem:[%s5 + $0x10] sm:$0xff]
  %v2475 = vld [vmem:[%s5 + $0x18] sm:$0xff]
  %v2476 = vld [vmem:[%s5 + $0x20] sm:$0xff]
  %v2477 = vld [vmem:[%s5 + $0x28] sm:$0xff]
  %v2478 = vld [vmem:[%s5 + $0x30] sm:$0xff]
  %v2479 = vld [vmem:[%s5 + $0x38] sm:$0xff]
  %v2488 = vunpack.c.l.b16 %v2472
  %v2489 = vunpack.c.h.b16 %v2472
  %v2490 = vunpack.c.l.b16 %v2473
  %v2491 = vunpack.c.h.b16 %v2473
  %v2492 = vunpack.c.l.b16 %v2474
  %v2493 = vunpack.c.h.b16 %v2474
  %v2494 = vunpack.c.l.b16 %v2475
  %v2495 = vunpack.c.h.b16 %v2475
  %v2496 = vunpack.c.l.b16 %v2476
  %v2497 = vunpack.c.h.b16 %v2476
  %v2498 = vunpack.c.l.b16 %v2477
  %v2499 = vunpack.c.h.b16 %v2477
  %v2500 = vunpack.c.l.b16 %v2478
  %v2501 = vunpack.c.h.b16 %v2478
  %v2502 = vunpack.c.l.b16 %v2479
  %v2503 = vunpack.c.h.b16 %v2479
  %v2504 = vpack.c.b16 %v2490, %v2488
  %v2505 = vpack.c.b16 %v2491, %v2489
  %v2506 = vpack.c.b16 %v2494, %v2492
  %v2507 = vpack.c.b16 %v2495, %v2493
  %v2508 = vpack.c.b16 %v2498, %v2496
  %v2509 = vpack.c.b16 %v2499, %v2497
  %v2510 = vpack.c.b16 %v2502, %v2500
  %v2511 = vpack.c.b16 %v2503, %v2501
  %v2521 = vsel %vm142, %v2471, 0
  %2523 = vmatprep.subr.bf16.mxu0 %v2505
  %2524 = vmatpush1.bf16.msra.mxu0 %v2504
  %2525 = vmatprep.subr.bf16.mxu0 %v2507
  %2526 = vmatpush1.bf16.msra.mxu0 %v2506
  %2527 = vmatprep.subr.bf16.mxu0 %v2509
  %2528 = vmatpush1.bf16.msra.mxu0 %v2508
  %2529 = vmatprep.subr.bf16.mxu0 %v2511
  %2530 = vmatpush1.bf16.msra.mxu0 %v2510
  %2531 = vmatprep.subr.bf16.mxu0 0
  %2532 = vmatpush1.bf16.msra.mxu0 0
  %2533 = vmatprep.subr.bf16.mxu0 0
  %2534 = vmatpush1.bf16.msra.mxu0 0
  %2535 = vmatprep.subr.bf16.mxu0 0
  %2536 = vmatpush1.bf16.msra.mxu0 0
  %2537 = vmatprep.subr.bf16.mxu0 0
  %2538 = vmatpush1.bf16.msra.mxu0 0
  %2539 = vmatprep.subr.bf16.mxu0 0
  %2540 = vmatpush1.bf16.msra.mxu0 0
  %2541 = vmatprep.subr.bf16.mxu0 0
  %2542 = vmatpush1.bf16.msra.mxu0 0
  %2543 = vmatprep.subr.bf16.mxu0 0
  %2544 = vmatpush1.bf16.msra.mxu0 0
  %2545 = vmatprep.subr.bf16.mxu0 0
  %2546 = vmatpush1.bf16.msra.mxu0 0
  %2547 = vmatprep.subr.bf16.mxu0 0
  %2548 = vmatpush1.bf16.msra.mxu0 0
  %2549 = vmatprep.subr.bf16.mxu0 0
  %2550 = vmatpush1.bf16.msra.mxu0 0
  %2551 = vmatprep.subr.bf16.mxu0 0
  %2552 = vmatpush1.bf16.msra.mxu0 0
  %2553 = vmatprep.subr.bf16.mxu0 0
  %2554 = vmatpush1.bf16.msra.mxu0 0
  %2555 = vmatprep.mubr.bf16.mxu0 0
  %2556 = vmatmul.mubr.bf16.gmra.mrb[0].mxu0 %v2521
  %v2557 = vpop.f32.mrb[0].mxu0
  %v2558 = vadd.f32 0.0, %v2557
  %v2559 = vpop.f32.mrb[0].mxu0
  %v2560 = vadd.f32 0.0, %v2559
  %v2561 = vpop.f32.mrb[0].mxu0
  %v2562 = vadd.f32 0.0, %v2561
  %v2563 = vpop.f32.mrb[0].mxu0
  %v2564 = vadd.f32 0.0, %v2563
  %2565 = vdwg.mxu0
  %v2568 = vunpack.c.l.b16 %v2467
  %v2569 = vunpack.c.h.b16 %v2467
  %v2570 = vunpack.c.l.b16 %v2468
  %v2571 = vunpack.c.h.b16 %v2468
  %v2572 = vpack.c.b16 %v2570, %v2568
  %v2573 = vpack.c.b16 %v2571, %v2569
  %v2577 = vsel %vm199, %v2466, 0
  %2579 = vmatprep.subr.bf16.mxu0 %v2573
  %2580 = vmatpush1.bf16.msra.mxu0 %v2572
  %2581 = vmatprep.subr.bf16.mxu0 0
  %2582 = vmatpush1.bf16.msra.mxu0 0
  %2583 = vmatprep.subr.bf16.mxu0 0
  %2584 = vmatpush1.bf16.msra.mxu0 0
  %2585 = vmatprep.subr.bf16.mxu0 0
  %2586 = vmatpush1.bf16.msra.mxu0 0
  %2587 = vmatprep.subr.bf16.mxu0 0
  %2588 = vmatpush1.bf16.msra.mxu0 0
  %2589 = vmatprep.subr.bf16.mxu0 0
  %2590 = vmatpush1.bf16.msra.mxu0 0
  %2591 = vmatprep.subr.bf16.mxu0 0
  %2592 = vmatpush1.bf16.msra.mxu0 0
  %2593 = vmatprep.subr.bf16.mxu0 0
  %2594 = vmatpush1.bf16.msra.mxu0 0
  %2595 = vmatprep.subr.bf16.mxu0 0
  %2596 = vmatpush1.bf16.msra.mxu0 0
  %2597 = vmatprep.subr.bf16.mxu0 0
  %2598 = vmatpush1.bf16.msra.mxu0 0
  %2599 = vmatprep.subr.bf16.mxu0 0
  %2600 = vmatpush1.bf16.msra.mxu0 0
  %2601 = vmatprep.subr.bf16.mxu0 0
  %2602 = vmatpush1.bf16.msra.mxu0 0
  %2603 = vmatprep.subr.bf16.mxu0 0
  %2604 = vmatpush1.bf16.msra.mxu0 0
  %2605 = vmatprep.subr.bf16.mxu0 0
  %2606 = vmatpush1.bf16.msra.mxu0 0
  %2607 = vmatprep.subr.bf16.mxu0 0
  %2608 = vmatpush1.bf16.msra.mxu0 0
  %2609 = vmatprep.subr.bf16.mxu0 0
  %2610 = vmatpush1.bf16.msra.mxu0 0
  %2611 = vmatprep.mubr.bf16.mxu0 0
  %2612 = vmatmul.mubr.bf16.gmra.mrb[0].mxu0 %v2577
  %v2613 = vpop.f32.mrb[0].mxu0
  %v2614 = vadd.f32 %v2558, %v2613
  %v2615 = vpop.f32.mrb[0].mxu0
  %v2616 = vadd.f32 %v2560, %v2615
  %v2617 = vpop.f32.mrb[0].mxu0
  %v2618 = vadd.f32 %v2562, %v2617
  %v2619 = vpop.f32.mrb[0].mxu0
  %v2620 = vadd.f32 %v2564, %v2619
  %2621 = vdwg.mxu0
  %v2622 = vld [vmem:[%s7] sm:$0x3]
  %v2624 = vlaneseq
  %v2625 = vshrl.u32 %v2624, 7
  %v2626 = vsub.s32 0, %v2625
  %v2627 = vrot.slane %v2622, %v2626
  %v2628 = vlaneseq
  %v2629 = vshrl.u32 %v2628, 7
  %v2630 = vsub.s32 1, %v2629
  %v2631 = vrot.slane %v2622, %v2630
  %v2634 = vadd.f32 %v2614, %v2627
  %v2635 = vadd.f32 %v2616, %v2631
  %v2636 = vadd.f32 %v2618, %v2627
  %v2637 = vadd.f32 %v2620, %v2631
  %v2638 = vxor.u32 %v2634, 2147483648
  %v2639 = vxor.u32 %v2636, 2147483648
  %v2640 = vmul.f32 %v2638, 1.442695
  %v2641 = vpow.pop %v2640
  %v2642 = vmul.f32 %v2639, 1.442695
  %v2643 = vpow.pop %v2642
  %v2644 = vadd.f32 %v2641, 1.0
  %v2645 = vadd.f32 %v2643, 1.0
  %v2646 = vrcp.pop %v2644
  %v2647 = vmul.f32 1.0, %v2646
  %v2648 = vrcp.pop %v2645
  %v2649 = vmul.f32 1.0, %v2648
  %v2650 = vtanh.pop %v2635
  %v2651 = vtanh.pop %v2637
  %v2652 = vxor.u32 %v2635, 2147483648
  %v2653 = vxor.u32 %v2637, 2147483648
  %v2654 = vmul.f32 %v2652, 1.442695
  %v2655 = vpow.pop %v2654
  %v2656 = vmul.f32 %v2653, 1.442695
  %v2657 = vpow.pop %v2656
  %v2658 = vadd.f32 %v2655, 1.0
  %v2659 = vadd.f32 %v2657, 1.0
  %v2660 = vrcp.pop %v2658
  %v2661 = vmul.f32 1.0, %v2660
  %v2662 = vrcp.pop %v2659
  %v2663 = vmul.f32 1.0, %v2662
  %v2664 = vld [vmem:[#allocation5] sm:$0xff]
  %v2665 = vld [vmem:[#allocation5 + $0x8] sm:$0xff]
  %2668 = vrot.lane.b32.xlu0 %v2664, 64
  %v2669 = vpop.permute.xlu0 %2668
  %2670 = vrot.lane.b32.xlu0 %v2665, 64
  %v2671 = vpop.permute.xlu0 %2670
  %v2674 = vmul.f32 %v2647, %v2669
  %v2675 = vmul.f32 %v2649, %v2671
  %v2676 = vmul.f32 %v2647, %v2650
  %v2677 = vmul.f32 %v2649, %v2651
  %2680 = vrot.lane.b32.xlu0 %v2676, 64
  %v2681 = vpop.permute.xlu0 %2680
  %2682 = vrot.lane.b32.xlu0 %v2677, 64
  %v2683 = vpop.permute.xlu0 %2682
  %v2686 = vadd.f32 %v2674, %v2681
  %v2687 = vadd.f32 %v2675, %v2683
  %v2688 = vtanh.pop %v2686
  %v2689 = vtanh.pop %v2687
  %v2690 = vmul.f32 %v2661, %v2688
  %v2691 = vmul.f32 %v2663, %v2689
  %2694 = vrot.lane.b32.xlu0 %v2686, 64
  %v2695 = vpop.permute.xlu0 %2694
  %2696 = vrot.lane.b32.xlu0 %v2687, 64
  %v2697 = vpop.permute.xlu0 %2696
  %2700 = vst.msk [vmem:[#allocation5] sm:$0xff] %vm142, %v2695
  %2701 = vst.msk [vmem:[#allocation5 + $0x8] sm:$0xff] %vm142, %v2697
  %2704 = vrot.lane.b32.xlu0 %v2690, 64
  %v2705 = vpop.permute.xlu0 %2704
  %2706 = vrot.lane.b32.xlu0 %v2691, 64
  %v2707 = vpop.permute.xlu0 %2706
  %2710 = vst.msk [vmem:[#allocation4] sm:$0xff] %vm142, %v2705
  %2711 = vst.msk [vmem:[#allocation4 + $0x8] sm:$0xff] %vm142, %v2707
  %v2712 = vpack.c.bf16 %v2691, %v2690
  %v2714 = vunpack.c.l.b16 %v2712
  %v2715 = vunpack.c.h.b16 %v2712
  %v2716 = vpack.c.b16 %v2714, %v2714
  %v2717 = vpack.c.b16 %v2715, %v2715
  %2718 = vrot.lane.b32.xlu0 %v2716, 64
  %v2719 = vpop.permute.xlu0 %2718
  %2720 = vrot.lane.b32.xlu0 %v2717, 64
  %v2721 = vpop.permute.xlu0 %2720
  %s2724 = scalar_lea.vmem %s69, 24
  %2725 = vst.msk [vmem:[%s2724] sm:$0xf] %vm348, %v2719
  %2726 = vst.msk [vmem:[%s2724 + $0x4] sm:$0xf] %vm348, %v2721
  %s2727 = scalar_lea.vmem %s0, 80
  %v2728 = vld [vmem:[%s2727] sm:$0xff]
  %v2729 = vld [vmem:[%s2727 + $0x8] sm:$0xff]
  %v2730 = vpack.c.bf16 %v2729, %v2728
  %v2731 = vld [vmem:[%s2] sm:$0xff]
  %v2732 = vld [vmem:[%s2 + $0x8] sm:$0xff]
  %v2733 = vld [vmem:[#allocation2] sm:$0xff]
  %v2734 = vld [vmem:[#allocation2 + $0x8] sm:$0xff]
  %v2735 = vpack.c.bf16 %v2734, %v2733
  %v2736 = vld [vmem:[%s4] sm:$0xff]
  %v2737 = vld [vmem:[%s4 + $0x8] sm:$0xff]
  %v2738 = vld [vmem:[%s4 + $0x10] sm:$0xff]
  %v2739 = vld [vmem:[%s4 + $0x18] sm:$0xff]
  %v2740 = vld [vmem:[%s4 + $0x20] sm:$0xff]
  %v2741 = vld [vmem:[%s4 + $0x28] sm:$0xff]
  %v2742 = vld [vmem:[%s4 + $0x30] sm:$0xff]
  %v2743 = vld [vmem:[%s4 + $0x38] sm:$0xff]
  %v2752 = vunpack.c.l.b16 %v2736
  %v2753 = vunpack.c.h.b16 %v2736
  %v2754 = vunpack.c.l.b16 %v2737
  %v2755 = vunpack.c.h.b16 %v2737
  %v2756 = vunpack.c.l.b16 %v2738
  %v2757 = vunpack.c.h.b16 %v2738
  %v2758 = vunpack.c.l.b16 %v2739
  %v2759 = vunpack.c.h.b16 %v2739
  %v2760 = vunpack.c.l.b16 %v2740
  %v2761 = vunpack.c.h.b16 %v2740
  %v2762 = vunpack.c.l.b16 %v2741
  %v2763 = vunpack.c.h.b16 %v2741
  %v2764 = vunpack.c.l.b16 %v2742
  %v2765 = vunpack.c.h.b16 %v2742
  %v2766 = vunpack.c.l.b16 %v2743
  %v2767 = vunpack.c.h.b16 %v2743
  %v2768 = vpack.c.b16 %v2754, %v2752
  %v2769 = vpack.c.b16 %v2755, %v2753
  %v2770 = vpack.c.b16 %v2758, %v2756
  %v2771 = vpack.c.b16 %v2759, %v2757
  %v2772 = vpack.c.b16 %v2762, %v2760
  %v2773 = vpack.c.b16 %v2763, %v2761
  %v2774 = vpack.c.b16 %v2766, %v2764
  %v2775 = vpack.c.b16 %v2767, %v2765
  %v2785 = vsel %vm142, %v2735, 0
  %2787 = vmatprep.subr.bf16.mxu0 %v2769
  %2788 = vmatpush1.bf16.msra.mxu0 %v2768
  %2789 = vmatprep.subr.bf16.mxu0 %v2771
  %2790 = vmatpush1.bf16.msra.mxu0 %v2770
  %2791 = vmatprep.subr.bf16.mxu0 %v2773
  %2792 = vmatpush1.bf16.msra.mxu0 %v2772
  %2793 = vmatprep.subr.bf16.mxu0 %v2775
  %2794 = vmatpush1.bf16.msra.mxu0 %v2774
  %2795 = vmatprep.subr.bf16.mxu0 0
  %2796 = vmatpush1.bf16.msra.mxu0 0
  %2797 = vmatprep.subr.bf16.mxu0 0
  %2798 = vmatpush1.bf16.msra.mxu0 0
  %2799 = vmatprep.subr.bf16.mxu0 0
  %2800 = vmatpush1.bf16.msra.mxu0 0
  %2801 = vmatprep.subr.bf16.mxu0 0
  %2802 = vmatpush1.bf16.msra.mxu0 0
  %2803 = vmatprep.subr.bf16.mxu0 0
  %2804 = vmatpush1.bf16.msra.mxu0 0
  %2805 = vmatprep.subr.bf16.mxu0 0
  %2806 = vmatpush1.bf16.msra.mxu0 0
  %2807 = vmatprep.subr.bf16.mxu0 0
  %2808 = vmatpush1.bf16.msra.mxu0 0
  %2809 = vmatprep.subr.bf16.mxu0 0
  %2810 = vmatpush1.bf16.msra.mxu0 0
  %2811 = vmatprep.subr.bf16.mxu0 0
  %2812 = vmatpush1.bf16.msra.mxu0 0
  %2813 = vmatprep.subr.bf16.mxu0 0
  %2814 = vmatpush1.bf16.msra.mxu0 0
  %2815 = vmatprep.subr.bf16.mxu0 0
  %2816 = vmatpush1.bf16.msra.mxu0 0
  %2817 = vmatprep.subr.bf16.mxu0 0
  %2818 = vmatpush1.bf16.msra.mxu0 0
  %2819 = vmatprep.mubr.bf16.mxu0 0
  %2820 = vmatmul.mubr.bf16.gmra.mrb[0].mxu0 %v2785
  %v2821 = vpop.f32.mrb[0].mxu0
  %v2822 = vadd.f32 0.0, %v2821
  %v2823 = vpop.f32.mrb[0].mxu0
  %v2824 = vadd.f32 0.0, %v2823
  %v2825 = vpop.f32.mrb[0].mxu0
  %v2826 = vadd.f32 0.0, %v2825
  %v2827 = vpop.f32.mrb[0].mxu0
  %v2828 = vadd.f32 0.0, %v2827
  %2829 = vdwg.mxu0
  %v2832 = vunpack.c.l.b16 %v2731
  %v2833 = vunpack.c.h.b16 %v2731
  %v2834 = vunpack.c.l.b16 %v2732
  %v2835 = vunpack.c.h.b16 %v2732
  %v2836 = vpack.c.b16 %v2834, %v2832
  %v2837 = vpack.c.b16 %v2835, %v2833
  %v2841 = vsel %vm199, %v2730, 0
  %2843 = vmatprep.subr.bf16.mxu0 %v2837
  %2844 = vmatpush1.bf16.msra.mxu0 %v2836
  %2845 = vmatprep.subr.bf16.mxu0 0
  %2846 = vmatpush1.bf16.msra.mxu0 0
  %2847 = vmatprep.subr.bf16.mxu0 0
  %2848 = vmatpush1.bf16.msra.mxu0 0
  %2849 = vmatprep.subr.bf16.mxu0 0
  %2850 = vmatpush1.bf16.msra.mxu0 0
  %2851 = vmatprep.subr.bf16.mxu0 0
  %2852 = vmatpush1.bf16.msra.mxu0 0
  %2853 = vmatprep.subr.bf16.mxu0 0
  %2854 = vmatpush1.bf16.msra.mxu0 0
  %2855 = vmatprep.subr.bf16.mxu0 0
  %2856 = vmatpush1.bf16.msra.mxu0 0
  %2857 = vmatprep.subr.bf16.mxu0 0
  %2858 = vmatpush1.bf16.msra.mxu0 0
  %2859 = vmatprep.subr.bf16.mxu0 0
  %2860 = vmatpush1.bf16.msra.mxu0 0
  %2861 = vmatprep.subr.bf16.mxu0 0
  %2862 = vmatpush1.bf16.msra.mxu0 0
  %2863 = vmatprep.subr.bf16.mxu0 0
  %2864 = vmatpush1.bf16.msra.mxu0 0
  %2865 = vmatprep.subr.bf16.mxu0 0
  %2866 = vmatpush1.bf16.msra.mxu0 0
  %2867 = vmatprep.subr.bf16.mxu0 0
  %2868 = vmatpush1.bf16.msra.mxu0 0
  %2869 = vmatprep.subr.bf16.mxu0 0
  %2870 = vmatpush1.bf16.msra.mxu0 0
  %2871 = vmatprep.subr.bf16.mxu0 0
  %2872 = vmatpush1.bf16.msra.mxu0 0
  %2873 = vmatprep.subr.bf16.mxu0 0
  %2874 = vmatpush1.bf16.msra.mxu0 0
  %2875 = vmatprep.mubr.bf16.mxu0 0
  %2876 = vmatmul.mubr.bf16.gmra.mrb[0].mxu0 %v2841
  %v2877 = vpop.f32.mrb[0].mxu0
  %v2878 = vadd.f32 %v2822, %v2877
  %v2879 = vpop.f32.mrb[0].mxu0
  %v2880 = vadd.f32 %v2824, %v2879
  %v2881 = vpop.f32.mrb[0].mxu0
  %v2882 = vadd.f32 %v2826, %v2881
  %v2883 = vpop.f32.mrb[0].mxu0
  %v2884 = vadd.f32 %v2828, %v2883
  %2885 = vdwg.mxu0
  %v2886 = vld [vmem:[%s6] sm:$0x3]
  %v2888 = vlaneseq
  %v2889 = vshrl.u32 %v2888, 7
  %v2890 = vsub.s32 0, %v2889
  %v2891 = vrot.slane %v2886, %v2890
  %v2892 = vlaneseq
  %v2893 = vshrl.u32 %v2892, 7
  %v2894 = vsub.s32 1, %v2893
  %v2895 = vrot.slane %v2886, %v2894
  %v2898 = vadd.f32 %v2878, %v2891
  %v2899 = vadd.f32 %v2880, %v2895
  %v2900 = vadd.f32 %v2882, %v2891
  %v2901 = vadd.f32 %v2884, %v2895
  %v2902 = vxor.u32 %v2898, 2147483648
  %v2903 = vxor.u32 %v2900, 2147483648
  %v2904 = vmul.f32 %v2902, 1.442695
  %v2905 = vpow.pop %v2904
  %v2906 = vmul.f32 %v2903, 1.442695
  %v2907 = vpow.pop %v2906
  %v2908 = vadd.f32 %v2905, 1.0
  %v2909 = vadd.f32 %v2907, 1.0
  %v2910 = vrcp.pop %v2908
  %v2911 = vmul.f32 1.0, %v2910
  %v2912 = vrcp.pop %v2909
  %v2913 = vmul.f32 1.0, %v2912
  %v2914 = vtanh.pop %v2899
  %v2915 = vtanh.pop %v2901
  %v2916 = vxor.u32 %v2899, 2147483648
  %v2917 = vxor.u32 %v2901, 2147483648
  %v2918 = vmul.f32 %v2916, 1.442695
  %v2919 = vpow.pop %v2918
  %v2920 = vmul.f32 %v2917, 1.442695
  %v2921 = vpow.pop %v2920
  %v2922 = vadd.f32 %v2919, 1.0
  %v2923 = vadd.f32 %v2921, 1.0
  %v2924 = vrcp.pop %v2922
  %v2925 = vmul.f32 1.0, %v2924
  %v2926 = vrcp.pop %v2923
  %v2927 = vmul.f32 1.0, %v2926
  %v2928 = vld [vmem:[#allocation3] sm:$0xff]
  %v2929 = vld [vmem:[#allocation3 + $0x8] sm:$0xff]
  %2932 = vrot.lane.b32.xlu0 %v2928, 64
  %v2933 = vpop.permute.xlu0 %2932
  %2934 = vrot.lane.b32.xlu0 %v2929, 64
  %v2935 = vpop.permute.xlu0 %2934
  %v2938 = vmul.f32 %v2911, %v2933
  %v2939 = vmul.f32 %v2913, %v2935
  %v2940 = vmul.f32 %v2911, %v2914
  %v2941 = vmul.f32 %v2913, %v2915
  %2944 = vrot.lane.b32.xlu0 %v2940, 64
  %v2945 = vpop.permute.xlu0 %2944
  %2946 = vrot.lane.b32.xlu0 %v2941, 64
  %v2947 = vpop.permute.xlu0 %2946
  %v2950 = vadd.f32 %v2938, %v2945
  %v2951 = vadd.f32 %v2939, %v2947
  %v2952 = vtanh.pop %v2950
  %v2953 = vtanh.pop %v2951
  %v2954 = vmul.f32 %v2925, %v2952
  %v2955 = vmul.f32 %v2927, %v2953
  %2958 = vrot.lane.b32.xlu0 %v2950, 64
  %v2959 = vpop.permute.xlu0 %2958
  %2960 = vrot.lane.b32.xlu0 %v2951, 64
  %v2961 = vpop.permute.xlu0 %2960
  %2964 = vst.msk [vmem:[#allocation3] sm:$0xff] %vm142, %v2959
  %2965 = vst.msk [vmem:[#allocation3 + $0x8] sm:$0xff] %vm142, %v2961
  %2968 = vrot.lane.b32.xlu0 %v2954, 64
  %v2969 = vpop.permute.xlu0 %2968
  %2970 = vrot.lane.b32.xlu0 %v2955, 64
  %v2971 = vpop.permute.xlu0 %2970
  %2974 = vst.msk [vmem:[#allocation2] sm:$0xff] %vm142, %v2969
  %2975 = vst.msk [vmem:[#allocation2 + $0x8] sm:$0xff] %vm142, %v2971
  %v2976 = vpack.c.bf16 %v2955, %v2954
  %v2978 = vunpack.c.l.b16 %v2976
  %v2979 = vunpack.c.h.b16 %v2976
  %v2980 = vpack.c.b16 %v2978, %v2978
  %v2981 = vpack.c.b16 %v2979, %v2979
  %2982 = vrot.lane.b32.xlu0 %v2980, 64
  %v2983 = vpop.permute.xlu0 %2982
  %2984 = vrot.lane.b32.xlu0 %v2981, 64
  %v2985 = vpop.permute.xlu0 %2984
  %s2988 = scalar_lea.vmem %s8, 40
  %2989 = vst.msk [vmem:[%s2988] sm:$0xf] %vm348, %v2983
  %2990 = vst.msk [vmem:[%s2988 + $0x4] sm:$0xf] %vm348, %v2985
  %s2991 = scalar_lea.vmem %s60, 32
  %v2992 = vld [vmem:[%s2991] sm:$0xff]
  %v2993 = vld [vmem:[%s2991 + $0x8] sm:$0xff]
  %v2994 = vpack.c.bf16 %v2993, %v2992
  %v2995 = vld [vmem:[%s3] sm:$0xff]
  %v2996 = vld [vmem:[%s3 + $0x8] sm:$0xff]
  %v2997 = vld [vmem:[#allocation4] sm:$0xff]
  %v2998 = vld [vmem:[#allocation4 + $0x8] sm:$0xff]
  %v2999 = vpack.c.bf16 %v2998, %v2997
  %v3000 = vld [vmem:[%s5] sm:$0xff]
  %v3001 = vld [vmem:[%s5 + $0x8] sm:$0xff]
  %v3002 = vld [vmem:[%s5 + $0x10] sm:$0xff]
  %v3003 = vld [vmem:[%s5 + $0x18] sm:$0xff]
  %v3004 = vld [vmem:[%s5 + $0x20] sm:$0xff]
  %v3005 = vld [vmem:[%s5 + $0x28] sm:$0xff]
  %v3006 = vld [vmem:[%s5 + $0x30] sm:$0xff]
  %v3007 = vld [vmem:[%s5 + $0x38] sm:$0xff]
  %v3016 = vunpack.c.l.b16 %v3000
  %v3017 = vunpack.c.h.b16 %v3000
  %v3018 = vunpack.c.l.b16 %v3001
  %v3019 = vunpack.c.h.b16 %v3001
  %v3020 = vunpack.c.l.b16 %v3002
  %v3021 = vunpack.c.h.b16 %v3002
  %v3022 = vunpack.c.l.b16 %v3003
  %v3023 = vunpack.c.h.b16 %v3003
  %v3024 = vunpack.c.l.b16 %v3004
  %v3025 = vunpack.c.h.b16 %v3004
  %v3026 = vunpack.c.l.b16 %v3005
  %v3027 = vunpack.c.h.b16 %v3005
  %v3028 = vunpack.c.l.b16 %v3006
  %v3029 = vunpack.c.h.b16 %v3006
  %v3030 = vunpack.c.l.b16 %v3007
  %v3031 = vunpack.c.h.b16 %v3007
  %v3032 = vpack.c.b16 %v3018, %v3016
  %v3033 = vpack.c.b16 %v3019, %v3017
  %v3034 = vpack.c.b16 %v3022, %v3020
  %v3035 = vpack.c.b16 %v3023, %v3021
  %v3036 = vpack.c.b16 %v3026, %v3024
  %v3037 = vpack.c.b16 %v3027, %v3025
  %v3038 = vpack.c.b16 %v3030, %v3028
  %v3039 = vpack.c.b16 %v3031, %v3029
  %v3049 = vsel %vm142, %v2999, 0
  %3051 = vmatprep.subr.bf16.mxu0 %v3033
  %3052 = vmatpush1.bf16.msra.mxu0 %v3032
  %3053 = vmatprep.subr.bf16.mxu0 %v3035
  %3054 = vmatpush1.bf16.msra.mxu0 %v3034
  %3055 = vmatprep.subr.bf16.mxu0 %v3037
  %3056 = vmatpush1.bf16.msra.mxu0 %v3036
  %3057 = vmatprep.subr.bf16.mxu0 %v3039
  %3058 = vmatpush1.bf16.msra.mxu0 %v3038
  %3059 = vmatprep.subr.bf16.mxu0 0
  %3060 = vmatpush1.bf16.msra.mxu0 0
  %3061 = vmatprep.subr.bf16.mxu0 0
  %3062 = vmatpush1.bf16.msra.mxu0 0
  %3063 = vmatprep.subr.bf16.mxu0 0
  %3064 = vmatpush1.bf16.msra.mxu0 0
  %3065 = vmatprep.subr.bf16.mxu0 0
  %3066 = vmatpush1.bf16.msra.mxu0 0
  %3067 = vmatprep.subr.bf16.mxu0 0
  %3068 = vmatpush1.bf16.msra.mxu0 0
  %3069 = vmatprep.subr.bf16.mxu0 0
  %3070 = vmatpush1.bf16.msra.mxu0 0
  %3071 = vmatprep.subr.bf16.mxu0 0
  %3072 = vmatpush1.bf16.msra.mxu0 0
  %3073 = vmatprep.subr.bf16.mxu0 0
  %3074 = vmatpush1.bf16.msra.mxu0 0
  %3075 = vmatprep.subr.bf16.mxu0 0
  %3076 = vmatpush1.bf16.msra.mxu0 0
  %3077 = vmatprep.subr.bf16.mxu0 0
  %3078 = vmatpush1.bf16.msra.mxu0 0
  %3079 = vmatprep.subr.bf16.mxu0 0
  %3080 = vmatpush1.bf16.msra.mxu0 0
  %3081 = vmatprep.subr.bf16.mxu0 0
  %3082 = vmatpush1.bf16.msra.mxu0 0
  %3083 = vmatprep.mubr.bf16.mxu0 0
  %3084 = vmatmul.mubr.bf16.gmra.mrb[0].mxu0 %v3049
  %v3085 = vpop.f32.mrb[0].mxu0
  %v3086 = vadd.f32 0.0, %v3085
  %v3087 = vpop.f32.mrb[0].mxu0
  %v3088 = vadd.f32 0.0, %v3087
  %v3089 = vpop.f32.mrb[0].mxu0
  %v3090 = vadd.f32 0.0, %v3089
  %v3091 = vpop.f32.mrb[0].mxu0
  %v3092 = vadd.f32 0.0, %v3091
  %3093 = vdwg.mxu0
  %v3096 = vunpack.c.l.b16 %v2995
  %v3097 = vunpack.c.h.b16 %v2995
  %v3098 = vunpack.c.l.b16 %v2996
  %v3099 = vunpack.c.h.b16 %v2996
  %v3100 = vpack.c.b16 %v3098, %v3096
  %v3101 = vpack.c.b16 %v3099, %v3097
  %v3105 = vsel %vm199, %v2994, 0
  %3107 = vmatprep.subr.bf16.mxu0 %v3101
  %3108 = vmatpush1.bf16.msra.mxu0 %v3100
  %3109 = vmatprep.subr.bf16.mxu0 0
  %3110 = vmatpush1.bf16.msra.mxu0 0
  %3111 = vmatprep.subr.bf16.mxu0 0
  %3112 = vmatpush1.bf16.msra.mxu0 0
  %3113 = vmatprep.subr.bf16.mxu0 0
  %3114 = vmatpush1.bf16.msra.mxu0 0
  %3115 = vmatprep.subr.bf16.mxu0 0
  %3116 = vmatpush1.bf16.msra.mxu0 0
  %3117 = vmatprep.subr.bf16.mxu0 0
  %3118 = vmatpush1.bf16.msra.mxu0 0
  %3119 = vmatprep.subr.bf16.mxu0 0
  %3120 = vmatpush1.bf16.msra.mxu0 0
  %3121 = vmatprep.subr.bf16.mxu0 0
  %3122 = vmatpush1.bf16.msra.mxu0 0
  %3123 = vmatprep.subr.bf16.mxu0 0
  %3124 = vmatpush1.bf16.msra.mxu0 0
  %3125 = vmatprep.subr.bf16.mxu0 0
  %3126 = vmatpush1.bf16.msra.mxu0 0
  %3127 = vmatprep.subr.bf16.mxu0 0
  %3128 = vmatpush1.bf16.msra.mxu0 0
  %3129 = vmatprep.subr.bf16.mxu0 0
  %3130 = vmatpush1.bf16.msra.mxu0 0
  %3131 = vmatprep.subr.bf16.mxu0 0
  %3132 = vmatpush1.bf16.msra.mxu0 0
  %3133 = vmatprep.subr.bf16.mxu0 0
  %3134 = vmatpush1.bf16.msra.mxu0 0
  %3135 = vmatprep.subr.bf16.mxu0 0
  %3136 = vmatpush1.bf16.msra.mxu0 0
  %3137 = vmatprep.subr.bf16.mxu0 0
  %3138 = vmatpush1.bf16.msra.mxu0 0
  %3139 = vmatprep.mubr.bf16.mxu0 0
  %3140 = vmatmul.mubr.bf16.gmra.mrb[0].mxu0 %v3105
  %v3141 = vpop.f32.mrb[0].mxu0
  %v3142 = vadd.f32 %v3086, %v3141
  %v3143 = vpop.f32.mrb[0].mxu0
  %v3144 = vadd.f32 %v3088, %v3143
  %v3145 = vpop.f32.mrb[0].mxu0
  %v3146 = vadd.f32 %v3090, %v3145
  %v3147 = vpop.f32.mrb[0].mxu0
  %v3148 = vadd.f32 %v3092, %v3147
  %3149 = vdwg.mxu0
  %v3150 = vld [vmem:[%s7] sm:$0x3]
  %v3152 = vlaneseq
  %v3153 = vshrl.u32 %v3152, 7
  %v3154 = vsub.s32 0, %v3153
  %v3155 = vrot.slane %v3150, %v3154
  %v3156 = vlaneseq
  %v3157 = vshrl.u32 %v3156, 7
  %v3158 = vsub.s32 1, %v3157
  %v3159 = vrot.slane %v3150, %v3158
  %v3162 = vadd.f32 %v3142, %v3155
  %v3163 = vadd.f32 %v3144, %v3159
  %v3164 = vadd.f32 %v3146, %v3155
  %v3165 = vadd.f32 %v3148, %v3159
  %v3166 = vxor.u32 %v3162, 2147483648
  %v3167 = vxor.u32 %v3164, 2147483648
  %v3168 = vmul.f32 %v3166, 1.442695
  %v3169 = vpow.pop %v3168
  %v3170 = vmul.f32 %v3167, 1.442695
  %v3171 = vpow.pop %v3170
  %v3172 = vadd.f32 %v3169, 1.0
  %v3173 = vadd.f32 %v3171, 1.0
  %v3174 = vrcp.pop %v3172
  %v3175 = vmul.f32 1.0, %v3174
  %v3176 = vrcp.pop %v3173
  %v3177 = vmul.f32 1.0, %v3176
  %v3178 = vtanh.pop %v3163
  %v3179 = vtanh.pop %v3165
  %v3180 = vxor.u32 %v3163, 2147483648
  %v3181 = vxor.u32 %v3165, 2147483648
  %v3182 = vmul.f32 %v3180, 1.442695
  %v3183 = vpow.pop %v3182
  %v3184 = vmul.f32 %v3181, 1.442695
  %v3185 = vpow.pop %v3184
  %v3186 = vadd.f32 %v3183, 1.0
  %v3187 = vadd.f32 %v3185, 1.0
  %v3188 = vrcp.pop %v3186
  %v3189 = vmul.f32 1.0, %v3188
  %v3190 = vrcp.pop %v3187
  %v3191 = vmul.f32 1.0, %v3190
  %v3192 = vld [vmem:[#allocation5] sm:$0xff]
  %v3193 = vld [vmem:[#allocation5 + $0x8] sm:$0xff]
  %3196 = vrot.lane.b32.xlu0 %v3192, 64
  %v3197 = vpop.permute.xlu0 %3196
  %3198 = vrot.lane.b32.xlu0 %v3193, 64
  %v3199 = vpop.permute.xlu0 %3198
  %v3202 = vmul.f32 %v3175, %v3197
  %v3203 = vmul.f32 %v3177, %v3199
  %v3204 = vmul.f32 %v3175, %v3178
  %v3205 = vmul.f32 %v3177, %v3179
  %3208 = vrot.lane.b32.xlu0 %v3204, 64
  %v3209 = vpop.permute.xlu0 %3208
  %3210 = vrot.lane.b32.xlu0 %v3205, 64
  %v3211 = vpop.permute.xlu0 %3210
  %v3214 = vadd.f32 %v3202, %v3209
  %v3215 = vadd.f32 %v3203, %v3211
  %v3216 = vtanh.pop %v3214
  %v3217 = vtanh.pop %v3215
  %v3218 = vmul.f32 %v3189, %v3216
  %v3219 = vmul.f32 %v3191, %v3217
  %3222 = vrot.lane.b32.xlu0 %v3214, 64
  %v3223 = vpop.permute.xlu0 %3222
  %3224 = vrot.lane.b32.xlu0 %v3215, 64
  %v3225 = vpop.permute.xlu0 %3224
  %3228 = vst.msk [vmem:[#allocation5] sm:$0xff] %vm142, %v3223
  %3229 = vst.msk [vmem:[#allocation5 + $0x8] sm:$0xff] %vm142, %v3225
  %3232 = vrot.lane.b32.xlu0 %v3218, 64
  %v3233 = vpop.permute.xlu0 %3232
  %3234 = vrot.lane.b32.xlu0 %v3219, 64
  %v3235 = vpop.permute.xlu0 %3234
  %3238 = vst.msk [vmem:[#allocation4] sm:$0xff] %vm142, %v3233
  %3239 = vst.msk [vmem:[#allocation4 + $0x8] sm:$0xff] %vm142, %v3235
  %v3240 = vpack.c.bf16 %v3219, %v3218
  %v3242 = vunpack.c.l.b16 %v3240
  %v3243 = vunpack.c.h.b16 %v3240
  %v3244 = vpack.c.b16 %v3242, %v3242
  %v3245 = vpack.c.b16 %v3243, %v3243
  %3246 = vrot.lane.b32.xlu0 %v3244, 64
  %v3247 = vpop.permute.xlu0 %3246
  %3248 = vrot.lane.b32.xlu0 %v3245, 64
  %v3249 = vpop.permute.xlu0 %3248
  %s3252 = scalar_lea.vmem %s69, 16
  %3253 = vst.msk [vmem:[%s3252] sm:$0xf] %vm348, %v3247
  %3254 = vst.msk [vmem:[%s3252 + $0x4] sm:$0xf] %vm348, %v3249
  %s3255 = scalar_lea.vmem %s0, 96
  %v3256 = vld [vmem:[%s3255] sm:$0xff]
  %v3257 = vld [vmem:[%s3255 + $0x8] sm:$0xff]
  %v3258 = vpack.c.bf16 %v3257, %v3256
  %v3259 = vld [vmem:[%s2] sm:$0xff]
  %v3260 = vld [vmem:[%s2 + $0x8] sm:$0xff]
  %v3261 = vld [vmem:[#allocation2] sm:$0xff]
  %v3262 = vld [vmem:[#allocation2 + $0x8] sm:$0xff]
  %v3263 = vpack.c.bf16 %v3262, %v3261
  %v3264 = vld [vmem:[%s4] sm:$0xff]
  %v3265 = vld [vmem:[%s4 + $0x8] sm:$0xff]
  %v3266 = vld [vmem:[%s4 + $0x10] sm:$0xff]
  %v3267 = vld [vmem:[%s4 + $0x18] sm:$0xff]
  %v3268 = vld [vmem:[%s4 + $0x20] sm:$0xff]
  %v3269 = vld [vmem:[%s4 + $0x28] sm:$0xff]
  %v3270 = vld [vmem:[%s4 + $0x30] sm:$0xff]
  %v3271 = vld [vmem:[%s4 + $0x38] sm:$0xff]
  %v3280 = vunpack.c.l.b16 %v3264
  %v3281 = vunpack.c.h.b16 %v3264
  %v3282 = vunpack.c.l.b16 %v3265
  %v3283 = vunpack.c.h.b16 %v3265
  %v3284 = vunpack.c.l.b16 %v3266
  %v3285 = vunpack.c.h.b16 %v3266
  %v3286 = vunpack.c.l.b16 %v3267
  %v3287 = vunpack.c.h.b16 %v3267
  %v3288 = vunpack.c.l.b16 %v3268
  %v3289 = vunpack.c.h.b16 %v3268
  %v3290 = vunpack.c.l.b16 %v3269
  %v3291 = vunpack.c.h.b16 %v3269
  %v3292 = vunpack.c.l.b16 %v3270
  %v3293 = vunpack.c.h.b16 %v3270
  %v3294 = vunpack.c.l.b16 %v3271
  %v3295 = vunpack.c.h.b16 %v3271
  %v3296 = vpack.c.b16 %v3282, %v3280
  %v3297 = vpack.c.b16 %v3283, %v3281
  %v3298 = vpack.c.b16 %v3286, %v3284
  %v3299 = vpack.c.b16 %v3287, %v3285
  %v3300 = vpack.c.b16 %v3290, %v3288
  %v3301 = vpack.c.b16 %v3291, %v3289
  %v3302 = vpack.c.b16 %v3294, %v3292
  %v3303 = vpack.c.b16 %v3295, %v3293
  %v3313 = vsel %vm142, %v3263, 0
  %3315 = vmatprep.subr.bf16.mxu0 %v3297
  %3316 = vmatpush1.bf16.msra.mxu0 %v3296
  %3317 = vmatprep.subr.bf16.mxu0 %v3299
  %3318 = vmatpush1.bf16.msra.mxu0 %v3298
  %3319 = vmatprep.subr.bf16.mxu0 %v3301
  %3320 = vmatpush1.bf16.msra.mxu0 %v3300
  %3321 = vmatprep.subr.bf16.mxu0 %v3303
  %3322 = vmatpush1.bf16.msra.mxu0 %v3302
  %3323 = vmatprep.subr.bf16.mxu0 0
  %3324 = vmatpush1.bf16.msra.mxu0 0
  %3325 = vmatprep.subr.bf16.mxu0 0
  %3326 = vmatpush1.bf16.msra.mxu0 0
  %3327 = vmatprep.subr.bf16.mxu0 0
  %3328 = vmatpush1.bf16.msra.mxu0 0
  %3329 = vmatprep.subr.bf16.mxu0 0
  %3330 = vmatpush1.bf16.msra.mxu0 0
  %3331 = vmatprep.subr.bf16.mxu0 0
  %3332 = vmatpush1.bf16.msra.mxu0 0
  %3333 = vmatprep.subr.bf16.mxu0 0
  %3334 = vmatpush1.bf16.msra.mxu0 0
  %3335 = vmatprep.subr.bf16.mxu0 0
  %3336 = vmatpush1.bf16.msra.mxu0 0
  %3337 = vmatprep.subr.bf16.mxu0 0
  %3338 = vmatpush1.bf16.msra.mxu0 0
  %3339 = vmatprep.subr.bf16.mxu0 0
  %3340 = vmatpush1.bf16.msra.mxu0 0
  %3341 = vmatprep.subr.bf16.mxu0 0
  %3342 = vmatpush1.bf16.msra.mxu0 0
  %3343 = vmatprep.subr.bf16.mxu0 0
  %3344 = vmatpush1.bf16.msra.mxu0 0
  %3345 = vmatprep.subr.bf16.mxu0 0
  %3346 = vmatpush1.bf16.msra.mxu0 0
  %3347 = vmatprep.mubr.bf16.mxu0 0
  %3348 = vmatmul.mubr.bf16.gmra.mrb[0].mxu0 %v3313
  %v3349 = vpop.f32.mrb[0].mxu0
  %v3350 = vadd.f32 0.0, %v3349
  %v3351 = vpop.f32.mrb[0].mxu0
  %v3352 = vadd.f32 0.0, %v3351
  %v3353 = vpop.f32.mrb[0].mxu0
  %v3354 = vadd.f32 0.0, %v3353
  %v3355 = vpop.f32.mrb[0].mxu0
  %v3356 = vadd.f32 0.0, %v3355
  %3357 = vdwg.mxu0
  %v3360 = vunpack.c.l.b16 %v3259
  %v3361 = vunpack.c.h.b16 %v3259
  %v3362 = vunpack.c.l.b16 %v3260
  %v3363 = vunpack.c.h.b16 %v3260
  %v3364 = vpack.c.b16 %v3362, %v3360
  %v3365 = vpack.c.b16 %v3363, %v3361
  %v3369 = vsel %vm199, %v3258, 0
  %3371 = vmatprep.subr.bf16.mxu0 %v3365
  %3372 = vmatpush1.bf16.msra.mxu0 %v3364
  %3373 = vmatprep.subr.bf16.mxu0 0
  %3374 = vmatpush1.bf16.msra.mxu0 0
  %3375 = vmatprep.subr.bf16.mxu0 0
  %3376 = vmatpush1.bf16.msra.mxu0 0
  %3377 = vmatprep.subr.bf16.mxu0 0
  %3378 = vmatpush1.bf16.msra.mxu0 0
  %3379 = vmatprep.subr.bf16.mxu0 0
  %3380 = vmatpush1.bf16.msra.mxu0 0
  %3381 = vmatprep.subr.bf16.mxu0 0
  %3382 = vmatpush1.bf16.msra.mxu0 0
  %3383 = vmatprep.subr.bf16.mxu0 0
  %3384 = vmatpush1.bf16.msra.mxu0 0
  %3385 = vmatprep.subr.bf16.mxu0 0
  %3386 = vmatpush1.bf16.msra.mxu0 0
  %3387 = vmatprep.subr.bf16.mxu0 0
  %3388 = vmatpush1.bf16.msra.mxu0 0
  %3389 = vmatprep.subr.bf16.mxu0 0
  %3390 = vmatpush1.bf16.msra.mxu0 0
  %3391 = vmatprep.subr.bf16.mxu0 0
  %3392 = vmatpush1.bf16.msra.mxu0 0
  %3393 = vmatprep.subr.bf16.mxu0 0
  %3394 = vmatpush1.bf16.msra.mxu0 0
  %3395 = vmatprep.subr.bf16.mxu0 0
  %3396 = vmatpush1.bf16.msra.mxu0 0
  %3397 = vmatprep.subr.bf16.mxu0 0
  %3398 = vmatpush1.bf16.msra.mxu0 0
  %3399 = vmatprep.subr.bf16.mxu0 0
  %3400 = vmatpush1.bf16.msra.mxu0 0
  %3401 = vmatprep.subr.bf16.mxu0 0
  %3402 = vmatpush1.bf16.msra.mxu0 0
  %3403 = vmatprep.mubr.bf16.mxu0 0
  %3404 = vmatmul.mubr.bf16.gmra.mrb[0].mxu0 %v3369
  %v3405 = vpop.f32.mrb[0].mxu0
  %v3406 = vadd.f32 %v3350, %v3405
  %v3407 = vpop.f32.mrb[0].mxu0
  %v3408 = vadd.f32 %v3352, %v3407
  %v3409 = vpop.f32.mrb[0].mxu0
  %v3410 = vadd.f32 %v3354, %v3409
  %v3411 = vpop.f32.mrb[0].mxu0
  %v3412 = vadd.f32 %v3356, %v3411
  %3413 = vdwg.mxu0
  %v3414 = vld [vmem:[%s6] sm:$0x3]
  %v3416 = vlaneseq
  %v3417 = vshrl.u32 %v3416, 7
  %v3418 = vsub.s32 0, %v3417
  %v3419 = vrot.slane %v3414, %v3418
  %v3420 = vlaneseq
  %v3421 = vshrl.u32 %v3420, 7
  %v3422 = vsub.s32 1, %v3421
  %v3423 = vrot.slane %v3414, %v3422
  %v3426 = vadd.f32 %v3406, %v3419
  %v3427 = vadd.f32 %v3408, %v3423
  %v3428 = vadd.f32 %v3410, %v3419
  %v3429 = vadd.f32 %v3412, %v3423
  %v3430 = vxor.u32 %v3426, 2147483648
  %v3431 = vxor.u32 %v3428, 2147483648
  %v3432 = vmul.f32 %v3430, 1.442695
  %v3433 = vpow.pop %v3432
  %v3434 = vmul.f32 %v3431, 1.442695
  %v3435 = vpow.pop %v3434
  %v3436 = vadd.f32 %v3433, 1.0
  %v3437 = vadd.f32 %v3435, 1.0
  %v3438 = vrcp.pop %v3436
  %v3439 = vmul.f32 1.0, %v3438
  %v3440 = vrcp.pop %v3437
  %v3441 = vmul.f32 1.0, %v3440
  %v3442 = vtanh.pop %v3427
  %v3443 = vtanh.pop %v3429
  %v3444 = vxor.u32 %v3427, 2147483648
  %v3445 = vxor.u32 %v3429, 2147483648
  %v3446 = vmul.f32 %v3444, 1.442695
  %v3447 = vpow.pop %v3446
  %v3448 = vmul.f32 %v3445, 1.442695
  %v3449 = vpow.pop %v3448
  %v3450 = vadd.f32 %v3447, 1.0
  %v3451 = vadd.f32 %v3449, 1.0
  %v3452 = vrcp.pop %v3450
  %v3453 = vmul.f32 1.0, %v3452
  %v3454 = vrcp.pop %v3451
  %v3455 = vmul.f32 1.0, %v3454
  %v3456 = vld [vmem:[#allocation3] sm:$0xff]
  %v3457 = vld [vmem:[#allocation3 + $0x8] sm:$0xff]
  %3460 = vrot.lane.b32.xlu0 %v3456, 64
  %v3461 = vpop.permute.xlu0 %3460
  %3462 = vrot.lane.b32.xlu0 %v3457, 64
  %v3463 = vpop.permute.xlu0 %3462
  %v3466 = vmul.f32 %v3439, %v3461
  %v3467 = vmul.f32 %v3441, %v3463
  %v3468 = vmul.f32 %v3439, %v3442
  %v3469 = vmul.f32 %v3441, %v3443
  %3472 = vrot.lane.b32.xlu0 %v3468, 64
  %v3473 = vpop.permute.xlu0 %3472
  %3474 = vrot.lane.b32.xlu0 %v3469, 64
  %v3475 = vpop.permute.xlu0 %3474
  %v3478 = vadd.f32 %v3466, %v3473
  %v3479 = vadd.f32 %v3467, %v3475
  %v3480 = vtanh.pop %v3478
  %v3481 = vtanh.pop %v3479
  %v3482 = vmul.f32 %v3453, %v3480
  %v3483 = vmul.f32 %v3455, %v3481
  %3486 = vrot.lane.b32.xlu0 %v3478, 64
  %v3487 = vpop.permute.xlu0 %3486
  %3488 = vrot.lane.b32.xlu0 %v3479, 64
  %v3489 = vpop.permute.xlu0 %3488
  %3492 = vst.msk [vmem:[#allocation3] sm:$0xff] %vm142, %v3487
  %3493 = vst.msk [vmem:[#allocation3 + $0x8] sm:$0xff] %vm142, %v3489
  %3496 = vrot.lane.b32.xlu0 %v3482, 64
  %v3497 = vpop.permute.xlu0 %3496
  %3498 = vrot.lane.b32.xlu0 %v3483, 64
  %v3499 = vpop.permute.xlu0 %3498
  %3502 = vst.msk [vmem:[#allocation2] sm:$0xff] %vm142, %v3497
  %3503 = vst.msk [vmem:[#allocation2 + $0x8] sm:$0xff] %vm142, %v3499
  %v3504 = vpack.c.bf16 %v3483, %v3482
  %v3506 = vunpack.c.l.b16 %v3504
  %v3507 = vunpack.c.h.b16 %v3504
  %v3508 = vpack.c.b16 %v3506, %v3506
  %v3509 = vpack.c.b16 %v3507, %v3507
  %3510 = vrot.lane.b32.xlu0 %v3508, 64
  %v3511 = vpop.permute.xlu0 %3510
  %3512 = vrot.lane.b32.xlu0 %v3509, 64
  %v3513 = vpop.permute.xlu0 %3512
  %s3516 = scalar_lea.vmem %s8, 48
  %3517 = vst.msk [vmem:[%s3516] sm:$0xf] %vm348, %v3511
  %3518 = vst.msk [vmem:[%s3516 + $0x4] sm:$0xf] %vm348, %v3513
  %s3519 = scalar_lea.vmem %s60, 16
  %v3520 = vld [vmem:[%s3519] sm:$0xff]
  %v3521 = vld [vmem:[%s3519 + $0x8] sm:$0xff]
  %v3522 = vpack.c.bf16 %v3521, %v3520
  %v3523 = vld [vmem:[%s3] sm:$0xff]
  %v3524 = vld [vmem:[%s3 + $0x8] sm:$0xff]
  %v3525 = vld [vmem:[#allocation4] sm:$0xff]
  %v3526 = vld [vmem:[#allocation4 + $0x8] sm:$0xff]
  %v3527 = vpack.c.bf16 %v3526, %v3525
  %v3528 = vld [vmem:[%s5] sm:$0xff]
  %v3529 = vld [vmem:[%s5 + $0x8] sm:$0xff]
  %v3530 = vld [vmem:[%s5 + $0x10] sm:$0xff]
  %v3531 = vld [vmem:[%s5 + $0x18] sm:$0xff]
  %v3532 = vld [vmem:[%s5 + $0x20] sm:$0xff]
  %v3533 = vld [vmem:[%s5 + $0x28] sm:$0xff]
  %v3534 = vld [vmem:[%s5 + $0x30] sm:$0xff]
  %v3535 = vld [vmem:[%s5 + $0x38] sm:$0xff]
  %v3544 = vunpack.c.l.b16 %v3528
  %v3545 = vunpack.c.h.b16 %v3528
  %v3546 = vunpack.c.l.b16 %v3529
  %v3547 = vunpack.c.h.b16 %v3529
  %v3548 = vunpack.c.l.b16 %v3530
  %v3549 = vunpack.c.h.b16 %v3530
  %v3550 = vunpack.c.l.b16 %v3531
  %v3551 = vunpack.c.h.b16 %v3531
  %v3552 = vunpack.c.l.b16 %v3532
  %v3553 = vunpack.c.h.b16 %v3532
  %v3554 = vunpack.c.l.b16 %v3533
  %v3555 = vunpack.c.h.b16 %v3533
  %v3556 = vunpack.c.l.b16 %v3534
  %v3557 = vunpack.c.h.b16 %v3534
  %v3558 = vunpack.c.l.b16 %v3535
  %v3559 = vunpack.c.h.b16 %v3535
  %v3560 = vpack.c.b16 %v3546, %v3544
  %v3561 = vpack.c.b16 %v3547, %v3545
  %v3562 = vpack.c.b16 %v3550, %v3548
  %v3563 = vpack.c.b16 %v3551, %v3549
  %v3564 = vpack.c.b16 %v3554, %v3552
  %v3565 = vpack.c.b16 %v3555, %v3553
  %v3566 = vpack.c.b16 %v3558, %v3556
  %v3567 = vpack.c.b16 %v3559, %v3557
  %v3577 = vsel %vm142, %v3527, 0
  %3579 = vmatprep.subr.bf16.mxu0 %v3561
  %3580 = vmatpush1.bf16.msra.mxu0 %v3560
  %3581 = vmatprep.subr.bf16.mxu0 %v3563
  %3582 = vmatpush1.bf16.msra.mxu0 %v3562
  %3583 = vmatprep.subr.bf16.mxu0 %v3565
  %3584 = vmatpush1.bf16.msra.mxu0 %v3564
  %3585 = vmatprep.subr.bf16.mxu0 %v3567
  %3586 = vmatpush1.bf16.msra.mxu0 %v3566
  %3587 = vmatprep.subr.bf16.mxu0 0
  %3588 = vmatpush1.bf16.msra.mxu0 0
  %3589 = vmatprep.subr.bf16.mxu0 0
  %3590 = vmatpush1.bf16.msra.mxu0 0
  %3591 = vmatprep.subr.bf16.mxu0 0
  %3592 = vmatpush1.bf16.msra.mxu0 0
  %3593 = vmatprep.subr.bf16.mxu0 0
  %3594 = vmatpush1.bf16.msra.mxu0 0
  %3595 = vmatprep.subr.bf16.mxu0 0
  %3596 = vmatpush1.bf16.msra.mxu0 0
  %3597 = vmatprep.subr.bf16.mxu0 0
  %3598 = vmatpush1.bf16.msra.mxu0 0
  %3599 = vmatprep.subr.bf16.mxu0 0
  %3600 = vmatpush1.bf16.msra.mxu0 0
  %3601 = vmatprep.subr.bf16.mxu0 0
  %3602 = vmatpush1.bf16.msra.mxu0 0
  %3603 = vmatprep.subr.bf16.mxu0 0
  %3604 = vmatpush1.bf16.msra.mxu0 0
  %3605 = vmatprep.subr.bf16.mxu0 0
  %3606 = vmatpush1.bf16.msra.mxu0 0
  %3607 = vmatprep.subr.bf16.mxu0 0
  %3608 = vmatpush1.bf16.msra.mxu0 0
  %3609 = vmatprep.subr.bf16.mxu0 0
  %3610 = vmatpush1.bf16.msra.mxu0 0
  %3611 = vmatprep.mubr.bf16.mxu0 0
  %3612 = vmatmul.mubr.bf16.gmra.mrb[0].mxu0 %v3577
  %v3613 = vpop.f32.mrb[0].mxu0
  %v3614 = vadd.f32 0.0, %v3613
  %v3615 = vpop.f32.mrb[0].mxu0
  %v3616 = vadd.f32 0.0, %v3615
  %v3617 = vpop.f32.mrb[0].mxu0
  %v3618 = vadd.f32 0.0, %v3617
  %v3619 = vpop.f32.mrb[0].mxu0
  %v3620 = vadd.f32 0.0, %v3619
  %3621 = vdwg.mxu0
  %v3624 = vunpack.c.l.b16 %v3523
  %v3625 = vunpack.c.h.b16 %v3523
  %v3626 = vunpack.c.l.b16 %v3524
  %v3627 = vunpack.c.h.b16 %v3524
  %v3628 = vpack.c.b16 %v3626, %v3624
  %v3629 = vpack.c.b16 %v3627, %v3625
  %v3633 = vsel %vm199, %v3522, 0
  %3635 = vmatprep.subr.bf16.mxu0 %v3629
  %3636 = vmatpush1.bf16.msra.mxu0 %v3628
  %3637 = vmatprep.subr.bf16.mxu0 0
  %3638 = vmatpush1.bf16.msra.mxu0 0
  %3639 = vmatprep.subr.bf16.mxu0 0
  %3640 = vmatpush1.bf16.msra.mxu0 0
  %3641 = vmatprep.subr.bf16.mxu0 0
  %3642 = vmatpush1.bf16.msra.mxu0 0
  %3643 = vmatprep.subr.bf16.mxu0 0
  %3644 = vmatpush1.bf16.msra.mxu0 0
  %3645 = vmatprep.subr.bf16.mxu0 0
  %3646 = vmatpush1.bf16.msra.mxu0 0
  %3647 = vmatprep.subr.bf16.mxu0 0
  %3648 = vmatpush1.bf16.msra.mxu0 0
  %3649 = vmatprep.subr.bf16.mxu0 0
  %3650 = vmatpush1.bf16.msra.mxu0 0
  %3651 = vmatprep.subr.bf16.mxu0 0
  %3652 = vmatpush1.bf16.msra.mxu0 0
  %3653 = vmatprep.subr.bf16.mxu0 0
  %3654 = vmatpush1.bf16.msra.mxu0 0
  %3655 = vmatprep.subr.bf16.mxu0 0
  %3656 = vmatpush1.bf16.msra.mxu0 0
  %3657 = vmatprep.subr.bf16.mxu0 0
  %3658 = vmatpush1.bf16.msra.mxu0 0
  %3659 = vmatprep.subr.bf16.mxu0 0
  %3660 = vmatpush1.bf16.msra.mxu0 0
  %3661 = vmatprep.subr.bf16.mxu0 0
  %3662 = vmatpush1.bf16.msra.mxu0 0
  %3663 = vmatprep.subr.bf16.mxu0 0
  %3664 = vmatpush1.bf16.msra.mxu0 0
  %3665 = vmatprep.subr.bf16.mxu0 0
  %3666 = vmatpush1.bf16.msra.mxu0 0
  %3667 = vmatprep.mubr.bf16.mxu0 0
  %3668 = vmatmul.mubr.bf16.gmra.mrb[0].mxu0 %v3633
  %v3669 = vpop.f32.mrb[0].mxu0
  %v3670 = vadd.f32 %v3614, %v3669
  %v3671 = vpop.f32.mrb[0].mxu0
  %v3672 = vadd.f32 %v3616, %v3671
  %v3673 = vpop.f32.mrb[0].mxu0
  %v3674 = vadd.f32 %v3618, %v3673
  %v3675 = vpop.f32.mrb[0].mxu0
  %v3676 = vadd.f32 %v3620, %v3675
  %3677 = vdwg.mxu0
  %v3678 = vld [vmem:[%s7] sm:$0x3]
  %v3680 = vlaneseq
  %v3681 = vshrl.u32 %v3680, 7
  %v3682 = vsub.s32 0, %v3681
  %v3683 = vrot.slane %v3678, %v3682
  %v3684 = vlaneseq
  %v3685 = vshrl.u32 %v3684, 7
  %v3686 = vsub.s32 1, %v3685
  %v3687 = vrot.slane %v3678, %v3686
  %v3690 = vadd.f32 %v3670, %v3683
  %v3691 = vadd.f32 %v3672, %v3687
  %v3692 = vadd.f32 %v3674, %v3683
  %v3693 = vadd.f32 %v3676, %v3687
  %v3694 = vxor.u32 %v3690, 2147483648
  %v3695 = vxor.u32 %v3692, 2147483648
  %v3696 = vmul.f32 %v3694, 1.442695
  %v3697 = vpow.pop %v3696
  %v3698 = vmul.f32 %v3695, 1.442695
  %v3699 = vpow.pop %v3698
  %v3700 = vadd.f32 %v3697, 1.0
  %v3701 = vadd.f32 %v3699, 1.0
  %v3702 = vrcp.pop %v3700
  %v3703 = vmul.f32 1.0, %v3702
  %v3704 = vrcp.pop %v3701
  %v3705 = vmul.f32 1.0, %v3704
  %v3706 = vtanh.pop %v3691
  %v3707 = vtanh.pop %v3693
  %v3708 = vxor.u32 %v3691, 2147483648
  %v3709 = vxor.u32 %v3693, 2147483648
  %v3710 = vmul.f32 %v3708, 1.442695
  %v3711 = vpow.pop %v3710
  %v3712 = vmul.f32 %v3709, 1.442695
  %v3713 = vpow.pop %v3712
  %v3714 = vadd.f32 %v3711, 1.0
  %v3715 = vadd.f32 %v3713, 1.0
  %v3716 = vrcp.pop %v3714
  %v3717 = vmul.f32 1.0, %v3716
  %v3718 = vrcp.pop %v3715
  %v3719 = vmul.f32 1.0, %v3718
  %v3720 = vld [vmem:[#allocation5] sm:$0xff]
  %v3721 = vld [vmem:[#allocation5 + $0x8] sm:$0xff]
  %3724 = vrot.lane.b32.xlu0 %v3720, 64
  %v3725 = vpop.permute.xlu0 %3724
  %3726 = vrot.lane.b32.xlu0 %v3721, 64
  %v3727 = vpop.permute.xlu0 %3726
  %v3730 = vmul.f32 %v3703, %v3725
  %v3731 = vmul.f32 %v3705, %v3727
  %v3732 = vmul.f32 %v3703, %v3706
  %v3733 = vmul.f32 %v3705, %v3707
  %3736 = vrot.lane.b32.xlu0 %v3732, 64
  %v3737 = vpop.permute.xlu0 %3736
  %3738 = vrot.lane.b32.xlu0 %v3733, 64
  %v3739 = vpop.permute.xlu0 %3738
  %v3742 = vadd.f32 %v3730, %v3737
  %v3743 = vadd.f32 %v3731, %v3739
  %v3744 = vtanh.pop %v3742
  %v3745 = vtanh.pop %v3743
  %v3746 = vmul.f32 %v3717, %v3744
  %v3747 = vmul.f32 %v3719, %v3745
  %3750 = vrot.lane.b32.xlu0 %v3742, 64
  %v3751 = vpop.permute.xlu0 %3750
  %3752 = vrot.lane.b32.xlu0 %v3743, 64
  %v3753 = vpop.permute.xlu0 %3752
  %3756 = vst.msk [vmem:[#allocation5] sm:$0xff] %vm142, %v3751
  %3757 = vst.msk [vmem:[#allocation5 + $0x8] sm:$0xff] %vm142, %v3753
  %3760 = vrot.lane.b32.xlu0 %v3746, 64
  %v3761 = vpop.permute.xlu0 %3760
  %3762 = vrot.lane.b32.xlu0 %v3747, 64
  %v3763 = vpop.permute.xlu0 %3762
  %3766 = vst.msk [vmem:[#allocation4] sm:$0xff] %vm142, %v3761
  %3767 = vst.msk [vmem:[#allocation4 + $0x8] sm:$0xff] %vm142, %v3763
  %v3768 = vpack.c.bf16 %v3747, %v3746
  %v3770 = vunpack.c.l.b16 %v3768
  %v3771 = vunpack.c.h.b16 %v3768
  %v3772 = vpack.c.b16 %v3770, %v3770
  %v3773 = vpack.c.b16 %v3771, %v3771
  %3774 = vrot.lane.b32.xlu0 %v3772, 64
  %v3775 = vpop.permute.xlu0 %3774
  %3776 = vrot.lane.b32.xlu0 %v3773, 64
  %v3777 = vpop.permute.xlu0 %3776
  %s3780 = scalar_lea.vmem %s69, 8
  %3781 = vst.msk [vmem:[%s3780] sm:$0xf] %vm348, %v3775
  %3782 = vst.msk [vmem:[%s3780 + $0x4] sm:$0xf] %vm348, %v3777
  %s3783 = scalar_lea.vmem %s0, 112
  %v3784 = vld [vmem:[%s3783] sm:$0xff]
  %v3785 = vld [vmem:[%s3783 + $0x8] sm:$0xff]
  %v3786 = vpack.c.bf16 %v3785, %v3784
  %v3787 = vld [vmem:[%s2] sm:$0xff]
  %v3788 = vld [vmem:[%s2 + $0x8] sm:$0xff]
  %v3789 = vld [vmem:[#allocation2] sm:$0xff]
  %v3790 = vld [vmem:[#allocation2 + $0x8] sm:$0xff]
  %v3791 = vpack.c.bf16 %v3790, %v3789
  %v3792 = vld [vmem:[%s4] sm:$0xff]
  %v3793 = vld [vmem:[%s4 + $0x8] sm:$0xff]
  %v3794 = vld [vmem:[%s4 + $0x10] sm:$0xff]
  %v3795 = vld [vmem:[%s4 + $0x18] sm:$0xff]
  %v3796 = vld [vmem:[%s4 + $0x20] sm:$0xff]
  %v3797 = vld [vmem:[%s4 + $0x28] sm:$0xff]
  %v3798 = vld [vmem:[%s4 + $0x30] sm:$0xff]
  %v3799 = vld [vmem:[%s4 + $0x38] sm:$0xff]
  %v3808 = vunpack.c.l.b16 %v3792
  %v3809 = vunpack.c.h.b16 %v3792
  %v3810 = vunpack.c.l.b16 %v3793
  %v3811 = vunpack.c.h.b16 %v3793
  %v3812 = vunpack.c.l.b16 %v3794
  %v3813 = vunpack.c.h.b16 %v3794
  %v3814 = vunpack.c.l.b16 %v3795
  %v3815 = vunpack.c.h.b16 %v3795
  %v3816 = vunpack.c.l.b16 %v3796
  %v3817 = vunpack.c.h.b16 %v3796
  %v3818 = vunpack.c.l.b16 %v3797
  %v3819 = vunpack.c.h.b16 %v3797
  %v3820 = vunpack.c.l.b16 %v3798
  %v3821 = vunpack.c.h.b16 %v3798
  %v3822 = vunpack.c.l.b16 %v3799
  %v3823 = vunpack.c.h.b16 %v3799
  %v3824 = vpack.c.b16 %v3810, %v3808
  %v3825 = vpack.c.b16 %v3811, %v3809
  %v3826 = vpack.c.b16 %v3814, %v3812
  %v3827 = vpack.c.b16 %v3815, %v3813
  %v3828 = vpack.c.b16 %v3818, %v3816
  %v3829 = vpack.c.b16 %v3819, %v3817
  %v3830 = vpack.c.b16 %v3822, %v3820
  %v3831 = vpack.c.b16 %v3823, %v3821
  %v3841 = vsel %vm142, %v3791, 0
  %3843 = vmatprep.subr.bf16.mxu0 %v3825
  %3844 = vmatpush1.bf16.msra.mxu0 %v3824
  %3845 = vmatprep.subr.bf16.mxu0 %v3827
  %3846 = vmatpush1.bf16.msra.mxu0 %v3826
  %3847 = vmatprep.subr.bf16.mxu0 %v3829
  %3848 = vmatpush1.bf16.msra.mxu0 %v3828
  %3849 = vmatprep.subr.bf16.mxu0 %v3831
  %3850 = vmatpush1.bf16.msra.mxu0 %v3830
  %3851 = vmatprep.subr.bf16.mxu0 0
  %3852 = vmatpush1.bf16.msra.mxu0 0
  %3853 = vmatprep.subr.bf16.mxu0 0
  %3854 = vmatpush1.bf16.msra.mxu0 0
  %3855 = vmatprep.subr.bf16.mxu0 0
  %3856 = vmatpush1.bf16.msra.mxu0 0
  %3857 = vmatprep.subr.bf16.mxu0 0
  %3858 = vmatpush1.bf16.msra.mxu0 0
  %3859 = vmatprep.subr.bf16.mxu0 0
  %3860 = vmatpush1.bf16.msra.mxu0 0
  %3861 = vmatprep.subr.bf16.mxu0 0
  %3862 = vmatpush1.bf16.msra.mxu0 0
  %3863 = vmatprep.subr.bf16.mxu0 0
  %3864 = vmatpush1.bf16.msra.mxu0 0
  %3865 = vmatprep.subr.bf16.mxu0 0
  %3866 = vmatpush1.bf16.msra.mxu0 0
  %3867 = vmatprep.subr.bf16.mxu0 0
  %3868 = vmatpush1.bf16.msra.mxu0 0
  %3869 = vmatprep.subr.bf16.mxu0 0
  %3870 = vmatpush1.bf16.msra.mxu0 0
  %3871 = vmatprep.subr.bf16.mxu0 0
  %3872 = vmatpush1.bf16.msra.mxu0 0
  %3873 = vmatprep.subr.bf16.mxu0 0
  %3874 = vmatpush1.bf16.msra.mxu0 0
  %3875 = vmatprep.mubr.bf16.mxu0 0
  %3876 = vmatmul.mubr.bf16.gmra.mrb[0].mxu0 %v3841
  %v3877 = vpop.f32.mrb[0].mxu0
  %v3878 = vadd.f32 0.0, %v3877
  %v3879 = vpop.f32.mrb[0].mxu0
  %v3880 = vadd.f32 0.0, %v3879
  %v3881 = vpop.f32.mrb[0].mxu0
  %v3882 = vadd.f32 0.0, %v3881
  %v3883 = vpop.f32.mrb[0].mxu0
  %v3884 = vadd.f32 0.0, %v3883
  %3885 = vdwg.mxu0
  %v3888 = vunpack.c.l.b16 %v3787
  %v3889 = vunpack.c.h.b16 %v3787
  %v3890 = vunpack.c.l.b16 %v3788
  %v3891 = vunpack.c.h.b16 %v3788
  %v3892 = vpack.c.b16 %v3890, %v3888
  %v3893 = vpack.c.b16 %v3891, %v3889
  %v3897 = vsel %vm199, %v3786, 0
  %3899 = vmatprep.subr.bf16.mxu0 %v3893
  %3900 = vmatpush1.bf16.msra.mxu0 %v3892
  %3901 = vmatprep.subr.bf16.mxu0 0
  %3902 = vmatpush1.bf16.msra.mxu0 0
  %3903 = vmatprep.subr.bf16.mxu0 0
  %3904 = vmatpush1.bf16.msra.mxu0 0
  %3905 = vmatprep.subr.bf16.mxu0 0
  %3906 = vmatpush1.bf16.msra.mxu0 0
  %3907 = vmatprep.subr.bf16.mxu0 0
  %3908 = vmatpush1.bf16.msra.mxu0 0
  %3909 = vmatprep.subr.bf16.mxu0 0
  %3910 = vmatpush1.bf16.msra.mxu0 0
  %3911 = vmatprep.subr.bf16.mxu0 0
  %3912 = vmatpush1.bf16.msra.mxu0 0
  %3913 = vmatprep.subr.bf16.mxu0 0
  %3914 = vmatpush1.bf16.msra.mxu0 0
  %3915 = vmatprep.subr.bf16.mxu0 0
  %3916 = vmatpush1.bf16.msra.mxu0 0
  %3917 = vmatprep.subr.bf16.mxu0 0
  %3918 = vmatpush1.bf16.msra.mxu0 0
  %3919 = vmatprep.subr.bf16.mxu0 0
  %3920 = vmatpush1.bf16.msra.mxu0 0
  %3921 = vmatprep.subr.bf16.mxu0 0
  %3922 = vmatpush1.bf16.msra.mxu0 0
  %3923 = vmatprep.subr.bf16.mxu0 0
  %3924 = vmatpush1.bf16.msra.mxu0 0
  %3925 = vmatprep.subr.bf16.mxu0 0
  %3926 = vmatpush1.bf16.msra.mxu0 0
  %3927 = vmatprep.subr.bf16.mxu0 0
  %3928 = vmatpush1.bf16.msra.mxu0 0
  %3929 = vmatprep.subr.bf16.mxu0 0
  %3930 = vmatpush1.bf16.msra.mxu0 0
  %3931 = vmatprep.mubr.bf16.mxu0 0
  %3932 = vmatmul.mubr.bf16.gmra.mrb[0].mxu0 %v3897
  %v3933 = vpop.f32.mrb[0].mxu0
  %v3934 = vadd.f32 %v3878, %v3933
  %v3935 = vpop.f32.mrb[0].mxu0
  %v3936 = vadd.f32 %v3880, %v3935
  %v3937 = vpop.f32.mrb[0].mxu0
  %v3938 = vadd.f32 %v3882, %v3937
  %v3939 = vpop.f32.mrb[0].mxu0
  %v3940 = vadd.f32 %v3884, %v3939
  %3941 = vdwg.mxu0
  %v3942 = vld [vmem:[%s6] sm:$0x3]
  %v3944 = vlaneseq
  %v3945 = vshrl.u32 %v3944, 7
  %v3946 = vsub.s32 0, %v3945
  %v3947 = vrot.slane %v3942, %v3946
  %v3948 = vlaneseq
  %v3949 = vshrl.u32 %v3948, 7
  %v3950 = vsub.s32 1, %v3949
  %v3951 = vrot.slane %v3942, %v3950
  %v3954 = vadd.f32 %v3934, %v3947
  %v3955 = vadd.f32 %v3936, %v3951
  %v3956 = vadd.f32 %v3938, %v3947
  %v3957 = vadd.f32 %v3940, %v3951
  %v3958 = vxor.u32 %v3954, 2147483648
  %v3959 = vxor.u32 %v3956, 2147483648
  %v3960 = vmul.f32 %v3958, 1.442695
  %v3961 = vpow.pop %v3960
  %v3962 = vmul.f32 %v3959, 1.442695
  %v3963 = vpow.pop %v3962
  %v3964 = vadd.f32 %v3961, 1.0
  %v3965 = vadd.f32 %v3963, 1.0
  %v3966 = vrcp.pop %v3964
  %v3967 = vmul.f32 1.0, %v3966
  %v3968 = vrcp.pop %v3965
  %v3969 = vmul.f32 1.0, %v3968
  %v3970 = vtanh.pop %v3955
  %v3971 = vtanh.pop %v3957
  %v3972 = vxor.u32 %v3955, 2147483648
  %v3973 = vxor.u32 %v3957, 2147483648
  %v3974 = vmul.f32 %v3972, 1.442695
  %v3975 = vpow.pop %v3974
  %v3976 = vmul.f32 %v3973, 1.442695
  %v3977 = vpow.pop %v3976
  %v3978 = vadd.f32 %v3975, 1.0
  %v3979 = vadd.f32 %v3977, 1.0
  %v3980 = vrcp.pop %v3978
  %v3981 = vmul.f32 1.0, %v3980
  %v3982 = vrcp.pop %v3979
  %v3983 = vmul.f32 1.0, %v3982
  %v3984 = vld [vmem:[#allocation3] sm:$0xff]
  %v3985 = vld [vmem:[#allocation3 + $0x8] sm:$0xff]
  %3988 = vrot.lane.b32.xlu0 %v3984, 64
  %v3989 = vpop.permute.xlu0 %3988
  %3990 = vrot.lane.b32.xlu0 %v3985, 64
  %v3991 = vpop.permute.xlu0 %3990
  %v3994 = vmul.f32 %v3967, %v3989
  %v3995 = vmul.f32 %v3969, %v3991
  %v3996 = vmul.f32 %v3967, %v3970
  %v3997 = vmul.f32 %v3969, %v3971
  %4000 = vrot.lane.b32.xlu0 %v3996, 64
  %v4001 = vpop.permute.xlu0 %4000
  %4002 = vrot.lane.b32.xlu0 %v3997, 64
  %v4003 = vpop.permute.xlu0 %4002
  %v4006 = vadd.f32 %v3994, %v4001
  %v4007 = vadd.f32 %v3995, %v4003
  %v4008 = vtanh.pop %v4006
  %v4009 = vtanh.pop %v4007
  %v4010 = vmul.f32 %v3981, %v4008
  %v4011 = vmul.f32 %v3983, %v4009
  %4014 = vrot.lane.b32.xlu0 %v4006, 64
  %v4015 = vpop.permute.xlu0 %4014
  %4016 = vrot.lane.b32.xlu0 %v4007, 64
  %v4017 = vpop.permute.xlu0 %4016
  %4020 = vst.msk [vmem:[#allocation3] sm:$0xff] %vm142, %v4015
  %4021 = vst.msk [vmem:[#allocation3 + $0x8] sm:$0xff] %vm142, %v4017
  %4024 = vrot.lane.b32.xlu0 %v4010, 64
  %v4025 = vpop.permute.xlu0 %4024
  %4026 = vrot.lane.b32.xlu0 %v4011, 64
  %v4027 = vpop.permute.xlu0 %4026
  %4030 = vst.msk [vmem:[#allocation2] sm:$0xff] %vm142, %v4025
  %4031 = vst.msk [vmem:[#allocation2 + $0x8] sm:$0xff] %vm142, %v4027
  %v4032 = vpack.c.bf16 %v4011, %v4010
  %v4034 = vunpack.c.l.b16 %v4032
  %v4035 = vunpack.c.h.b16 %v4032
  %v4036 = vpack.c.b16 %v4034, %v4034
  %v4037 = vpack.c.b16 %v4035, %v4035
  %4038 = vrot.lane.b32.xlu0 %v4036, 64
  %v4039 = vpop.permute.xlu0 %4038
  %4040 = vrot.lane.b32.xlu0 %v4037, 64
  %v4041 = vpop.permute.xlu0 %4040
  %s4044 = scalar_lea.vmem %s8, 56
  %4045 = vst.msk [vmem:[%s4044] sm:$0xf] %vm348, %v4039
  %4046 = vst.msk [vmem:[%s4044 + $0x4] sm:$0xf] %vm348, %v4041
  %v4047 = vld [vmem:[%s60] sm:$0xff]
  %v4048 = vld [vmem:[%s60 + $0x8] sm:$0xff]
  %v4049 = vpack.c.bf16 %v4048, %v4047
  %v4050 = vld [vmem:[%s3] sm:$0xff]
  %v4051 = vld [vmem:[%s3 + $0x8] sm:$0xff]
  %v4052 = vld [vmem:[#allocation4] sm:$0xff]
  %v4053 = vld [vmem:[#allocation4 + $0x8] sm:$0xff]
  %v4054 = vpack.c.bf16 %v4053, %v4052
  %v4055 = vld [vmem:[%s5] sm:$0xff]
  %v4056 = vld [vmem:[%s5 + $0x8] sm:$0xff]
  %v4057 = vld [vmem:[%s5 + $0x10] sm:$0xff]
  %v4058 = vld [vmem:[%s5 + $0x18] sm:$0xff]
  %v4059 = vld [vmem:[%s5 + $0x20] sm:$0xff]
  %v4060 = vld [vmem:[%s5 + $0x28] sm:$0xff]
  %v4061 = vld [vmem:[%s5 + $0x30] sm:$0xff]
  %v4062 = vld [vmem:[%s5 + $0x38] sm:$0xff]
  %v4071 = vunpack.c.l.b16 %v4055
  %v4072 = vunpack.c.h.b16 %v4055
  %v4073 = vunpack.c.l.b16 %v4056
  %v4074 = vunpack.c.h.b16 %v4056
  %v4075 = vunpack.c.l.b16 %v4057
  %v4076 = vunpack.c.h.b16 %v4057
  %v4077 = vunpack.c.l.b16 %v4058
  %v4078 = vunpack.c.h.b16 %v4058
  %v4079 = vunpack.c.l.b16 %v4059
  %v4080 = vunpack.c.h.b16 %v4059
  %v4081 = vunpack.c.l.b16 %v4060
  %v4082 = vunpack.c.h.b16 %v4060
  %v4083 = vunpack.c.l.b16 %v4061
  %v4084 = vunpack.c.h.b16 %v4061
  %v4085 = vunpack.c.l.b16 %v4062
  %v4086 = vunpack.c.h.b16 %v4062
  %v4087 = vpack.c.b16 %v4073, %v4071
  %v4088 = vpack.c.b16 %v4074, %v4072
  %v4089 = vpack.c.b16 %v4077, %v4075
  %v4090 = vpack.c.b16 %v4078, %v4076
  %v4091 = vpack.c.b16 %v4081, %v4079
  %v4092 = vpack.c.b16 %v4082, %v4080
  %v4093 = vpack.c.b16 %v4085, %v4083
  %v4094 = vpack.c.b16 %v4086, %v4084
  %v4104 = vsel %vm142, %v4054, 0
  %4106 = vmatprep.subr.bf16.mxu0 %v4088
  %4107 = vmatpush1.bf16.msra.mxu0 %v4087
  %4108 = vmatprep.subr.bf16.mxu0 %v4090
  %4109 = vmatpush1.bf16.msra.mxu0 %v4089
  %4110 = vmatprep.subr.bf16.mxu0 %v4092
  %4111 = vmatpush1.bf16.msra.mxu0 %v4091
  %4112 = vmatprep.subr.bf16.mxu0 %v4094
  %4113 = vmatpush1.bf16.msra.mxu0 %v4093
  %4114 = vmatprep.subr.bf16.mxu0 0
  %4115 = vmatpush1.bf16.msra.mxu0 0
  %4116 = vmatprep.subr.bf16.mxu0 0
  %4117 = vmatpush1.bf16.msra.mxu0 0
  %4118 = vmatprep.subr.bf16.mxu0 0
  %4119 = vmatpush1.bf16.msra.mxu0 0
  %4120 = vmatprep.subr.bf16.mxu0 0
  %4121 = vmatpush1.bf16.msra.mxu0 0
  %4122 = vmatprep.subr.bf16.mxu0 0
  %4123 = vmatpush1.bf16.msra.mxu0 0
  %4124 = vmatprep.subr.bf16.mxu0 0
  %4125 = vmatpush1.bf16.msra.mxu0 0
  %4126 = vmatprep.subr.bf16.mxu0 0
  %4127 = vmatpush1.bf16.msra.mxu0 0
  %4128 = vmatprep.subr.bf16.mxu0 0
  %4129 = vmatpush1.bf16.msra.mxu0 0
  %4130 = vmatprep.subr.bf16.mxu0 0
  %4131 = vmatpush1.bf16.msra.mxu0 0
  %4132 = vmatprep.subr.bf16.mxu0 0
  %4133 = vmatpush1.bf16.msra.mxu0 0
  %4134 = vmatprep.subr.bf16.mxu0 0
  %4135 = vmatpush1.bf16.msra.mxu0 0
  %4136 = vmatprep.subr.bf16.mxu0 0
  %4137 = vmatpush1.bf16.msra.mxu0 0
  %4138 = vmatprep.mubr.bf16.mxu0 0
  %4139 = vmatmul.mubr.bf16.gmra.mrb[0].mxu0 %v4104
  %v4140 = vpop.f32.mrb[0].mxu0
  %v4141 = vadd.f32 0.0, %v4140
  %v4142 = vpop.f32.mrb[0].mxu0
  %v4143 = vadd.f32 0.0, %v4142
  %v4144 = vpop.f32.mrb[0].mxu0
  %v4145 = vadd.f32 0.0, %v4144
  %v4146 = vpop.f32.mrb[0].mxu0
  %v4147 = vadd.f32 0.0, %v4146
  %4148 = vdwg.mxu0
  %v4151 = vunpack.c.l.b16 %v4050
  %v4152 = vunpack.c.h.b16 %v4050
  %v4153 = vunpack.c.l.b16 %v4051
  %v4154 = vunpack.c.h.b16 %v4051
  %v4155 = vpack.c.b16 %v4153, %v4151
  %v4156 = vpack.c.b16 %v4154, %v4152
  %v4160 = vsel %vm199, %v4049, 0
  %4162 = vmatprep.subr.bf16.mxu0 %v4156
  %4163 = vmatpush1.bf16.msra.mxu0 %v4155
  %4164 = vmatprep.subr.bf16.mxu0 0
  %4165 = vmatpush1.bf16.msra.mxu0 0
  %4166 = vmatprep.subr.bf16.mxu0 0
  %4167 = vmatpush1.bf16.msra.mxu0 0
  %4168 = vmatprep.subr.bf16.mxu0 0
  %4169 = vmatpush1.bf16.msra.mxu0 0
  %4170 = vmatprep.subr.bf16.mxu0 0
  %4171 = vmatpush1.bf16.msra.mxu0 0
  %4172 = vmatprep.subr.bf16.mxu0 0
  %4173 = vmatpush1.bf16.msra.mxu0 0
  %4174 = vmatprep.subr.bf16.mxu0 0
  %4175 = vmatpush1.bf16.msra.mxu0 0
  %4176 = vmatprep.subr.bf16.mxu0 0
  %4177 = vmatpush1.bf16.msra.mxu0 0
  %4178 = vmatprep.subr.bf16.mxu0 0
  %4179 = vmatpush1.bf16.msra.mxu0 0
  %4180 = vmatprep.subr.bf16.mxu0 0
  %4181 = vmatpush1.bf16.msra.mxu0 0
  %4182 = vmatprep.subr.bf16.mxu0 0
  %4183 = vmatpush1.bf16.msra.mxu0 0
  %4184 = vmatprep.subr.bf16.mxu0 0
  %4185 = vmatpush1.bf16.msra.mxu0 0
  %4186 = vmatprep.subr.bf16.mxu0 0
  %4187 = vmatpush1.bf16.msra.mxu0 0
  %4188 = vmatprep.subr.bf16.mxu0 0
  %4189 = vmatpush1.bf16.msra.mxu0 0
  %4190 = vmatprep.subr.bf16.mxu0 0
  %4191 = vmatpush1.bf16.msra.mxu0 0
  %4192 = vmatprep.subr.bf16.mxu0 0
  %4193 = vmatpush1.bf16.msra.mxu0 0
  %4194 = vmatprep.mubr.bf16.mxu0 0
  %4195 = vmatmul.mubr.bf16.gmra.mrb[0].mxu0 %v4160
  %v4196 = vpop.f32.mrb[0].mxu0
  %v4197 = vadd.f32 %v4141, %v4196
  %v4198 = vpop.f32.mrb[0].mxu0
  %v4199 = vadd.f32 %v4143, %v4198
  %v4200 = vpop.f32.mrb[0].mxu0
  %v4201 = vadd.f32 %v4145, %v4200
  %v4202 = vpop.f32.mrb[0].mxu0
  %v4203 = vadd.f32 %v4147, %v4202
  %4204 = vdwg.mxu0
  %v4205 = vld [vmem:[%s7] sm:$0x3]
  %v4207 = vlaneseq
  %v4208 = vshrl.u32 %v4207, 7
  %v4209 = vsub.s32 0, %v4208
  %v4210 = vrot.slane %v4205, %v4209
  %v4211 = vlaneseq
  %v4212 = vshrl.u32 %v4211, 7
  %v4213 = vsub.s32 1, %v4212
  %v4214 = vrot.slane %v4205, %v4213
  %v4217 = vadd.f32 %v4197, %v4210
  %v4218 = vadd.f32 %v4199, %v4214
  %v4219 = vadd.f32 %v4201, %v4210
  %v4220 = vadd.f32 %v4203, %v4214
  %v4221 = vxor.u32 %v4217, 2147483648
  %v4222 = vxor.u32 %v4219, 2147483648
  %v4223 = vmul.f32 %v4221, 1.442695
  %v4224 = vpow.pop %v4223
  %v4225 = vmul.f32 %v4222, 1.442695
  %v4226 = vpow.pop %v4225
  %v4227 = vadd.f32 %v4224, 1.0
  %v4228 = vadd.f32 %v4226, 1.0
  %v4229 = vrcp.pop %v4227
  %v4230 = vmul.f32 1.0, %v4229
  %v4231 = vrcp.pop %v4228
  %v4232 = vmul.f32 1.0, %v4231
  %v4233 = vtanh.pop %v4218
  %v4234 = vtanh.pop %v4220
  %v4235 = vxor.u32 %v4218, 2147483648
  %v4236 = vxor.u32 %v4220, 2147483648
  %v4237 = vmul.f32 %v4235, 1.442695
  %v4238 = vpow.pop %v4237
  %v4239 = vmul.f32 %v4236, 1.442695
  %v4240 = vpow.pop %v4239
  %v4241 = vadd.f32 %v4238, 1.0
  %v4242 = vadd.f32 %v4240, 1.0
  %v4243 = vrcp.pop %v4241
  %v4244 = vmul.f32 1.0, %v4243
  %v4245 = vrcp.pop %v4242
  %v4246 = vmul.f32 1.0, %v4245
  %v4247 = vld [vmem:[#allocation5] sm:$0xff]
  %v4248 = vld [vmem:[#allocation5 + $0x8] sm:$0xff]
  %4251 = vrot.lane.b32.xlu0 %v4247, 64
  %v4252 = vpop.permute.xlu0 %4251
  %4253 = vrot.lane.b32.xlu0 %v4248, 64
  %v4254 = vpop.permute.xlu0 %4253
  %v4257 = vmul.f32 %v4230, %v4252
  %v4258 = vmul.f32 %v4232, %v4254
  %v4259 = vmul.f32 %v4230, %v4233
  %v4260 = vmul.f32 %v4232, %v4234
  %4263 = vrot.lane.b32.xlu0 %v4259, 64
  %v4264 = vpop.permute.xlu0 %4263
  %4265 = vrot.lane.b32.xlu0 %v4260, 64
  %v4266 = vpop.permute.xlu0 %4265
  %v4269 = vadd.f32 %v4257, %v4264
  %v4270 = vadd.f32 %v4258, %v4266
  %v4271 = vtanh.pop %v4269
  %v4272 = vtanh.pop %v4270
  %v4273 = vmul.f32 %v4244, %v4271
  %v4274 = vmul.f32 %v4246, %v4272
  %4277 = vrot.lane.b32.xlu0 %v4269, 64
  %v4278 = vpop.permute.xlu0 %4277
  %4279 = vrot.lane.b32.xlu0 %v4270, 64
  %v4280 = vpop.permute.xlu0 %4279
  %4283 = vst.msk [vmem:[#allocation5] sm:$0xff] %vm142, %v4278
  %4284 = vst.msk [vmem:[#allocation5 + $0x8] sm:$0xff] %vm142, %v4280
  %4287 = vrot.lane.b32.xlu0 %v4273, 64
  %v4288 = vpop.permute.xlu0 %4287
  %4289 = vrot.lane.b32.xlu0 %v4274, 64
  %v4290 = vpop.permute.xlu0 %4289
  %4293 = vst.msk [vmem:[#allocation4] sm:$0xff] %vm142, %v4288
  %4294 = vst.msk [vmem:[#allocation4 + $0x8] sm:$0xff] %vm142, %v4290
  %v4295 = vpack.c.bf16 %v4274, %v4273
  %v4297 = vunpack.c.l.b16 %v4295
  %v4298 = vunpack.c.h.b16 %v4295
  %v4299 = vpack.c.b16 %v4297, %v4297
  %v4300 = vpack.c.b16 %v4298, %v4298
  %4301 = vrot.lane.b32.xlu0 %v4299, 64
  %v4302 = vpop.permute.xlu0 %4301
  %4303 = vrot.lane.b32.xlu0 %v4300, 64
  %v4304 = vpop.permute.xlu0 %4303
  %4307 = vst.msk [vmem:[%s69] sm:$0xf] %vm348, %v4302
  %4308 = vst.msk [vmem:[%s69 + $0x4] sm:$0xf] %vm348, %v4304
  %s4309 = ssub.s32 0, 0
  %s4310 = smul.u32 8, %s4309
  %p4311 = scmp.lt.s32.totalorder %s4310, 7
  %s4312 = scalar_select %p4311, %s4310, 7
  %s4313 = smul.addr %s4312, 2
  %s4314 = smul.addr %s4313, 4
  %s4315 = scalar_lea.vmem %s9, %s4314
  // Predicated region
  $region38: #{separator_forward.8} parent=0 // pred_check
    _
  $region39: #{separator_forward.8} parent=0 // pred_check_branch
    %4317 = sbr.rel (0) target = $region41
  $region40: #{separator_forward.8} parent=0 // pred_region
    _
  $region41: #{separator_forward.8} parent=0 // pred_fallthru
    _
  // Predicated region
  $region42: #{separator_forward.8} parent=0 // pred_check
    _
  $region43: #{separator_forward.8} parent=0 // pred_check_branch
    %4319 = sbr.rel (0) target = $region45
  $region44: #{separator_forward.8} parent=0 // pred_region
    %s4320 = ssub.s32 0, 0
    %s4321 = smul.u32 8, %s4320
  $region45: #{separator_forward.8} parent=0 // pred_fallthru
    _
  // Predicated region
  $region46: #{separator_forward.8} parent=0 // pred_check
    _
  $region47: #{separator_forward.8} parent=0 // pred_check_branch
    %4323 = sbr.rel (0) target = $region49
  $region48: #{separator_forward.8} parent=0 // pred_region
    _
  $region49: #{separator_forward.8} parent=0 // pred_fallthru
    _
  // Predicated region
  $region50: #{separator_forward.8} parent=0 // pred_check
    _
  $region51: #{separator_forward.8} parent=0 // pred_check_branch
    %4325 = sbr.rel (0) target = $region53
  $region52: #{separator_forward.8} parent=0 // pred_region
    %s4326 = ssub.s32 0, 0
    %s4327 = smul.u32 8, %s4326
    %p4328 = scmp.lt.s32.totalorder %s4327, 7
    %s4329 = scalar_select %p4328, %s4327, 7
    %s4330 = smul.addr %s4329, 2
    %s4331 = smul.addr %s4330, 4
    %s4332 = scalar_lea.vmem %s9, %s4331
  $region53: #{separator_forward.8} parent=0 // pred_fallthru
    _

</llo_original>
